<compile_context>
chip_gen: v5e
topology: v5e:2x2
jax: 0.10.0
libtpu: 0.0.40
codegen_flags: <defaults>
</compile_context>

<pallas_src>
import numpy as np
import jax
import jax.numpy as jnp
from jax.experimental import pallas as pl
from jax.experimental.pallas import tpu as pltpu


def _round_up(v, m):
    return (v + m - 1) // m * m


def _vmem_capacity_bytes():
    try:
        info = pltpu.get_tpu_info()
        cap = getattr(info, "vmem_capacity_bytes", None)
        if cap:
            return int(cap)
    except Exception:
        pass
    return 64 * 1024 * 1024  # v7x-safe fallback


def _vmem_bytes_estimate(TR, Wp, Cp, Pp):
    """Rough per-step VMEM footprint (double-buffered where the pipeline does so)."""
    LEN1 = (TR + 2) * Wp
    LEN2 = TR * Wp
    WIN = LEN1 + 2 * Wp + 24
    win_buf = 2 * WIN * Cp * 2                      # 2-slot bf16 input window scratch
    out1e = (LEN1 + 32) * Pp * 2                    # bf16 conv2-input scratch
    f32_tmp = (2 * LEN1 + 2 * LEN2) * Pp * 4        # acc1/out1/acc2/result live values
    weights = 2 * (9 * Cp * Pp + 9 * Pp * Pp + Cp * Pp) * 2
    mask = 2 * LEN1 * 128 * 4                       # (LEN1,1) block is lane-padded
    out_blk = 2 * LEN2 * Pp * 2                     # double-buffered bf16 output tile
    return win_buf + out1e + f32_tmp + weights + mask + out_blk + (2 << 20)


def _pick_tile_rows(H, Wp, Cp, Pp, budget_bytes, max_tr=None):
    """Largest row tile that divides H and fits the VMEM budget."""
    cap = H if max_tr is None else min(H, max_tr)
    best = 1
    for tr in range(1, cap + 1):
        if H % tr == 0 and _vmem_bytes_estimate(tr, Wp, Cp, Pp) <= budget_bytes:
            best = tr
    return best


# ----------------------------- fused Pallas kernel -------------------------- #

def _make_kernel(TR, Wp, Pp, WIN, n_rt):
    LEN1 = (TR + 2) * Wp     # out1 window: TR output rows + one halo row each side
    LEN2 = TR * Wp           # output tile (pad columns sliced off on host)
    XOFF = 16                # window offset of pseudo-row (t*TR - 1), column 0
    EX = 16                  # zero margin around out1 (keeps corner taps in bounds,
                             #  16 keeps bf16 sublane packing aligned)

    def kernel(m_ref, w1_ref, b1_ref, w2_ref, b2_ref, ws_ref, bs_ref, x_hbm,
               o_ref, x_buf, x_sem, out1e_ref):
        b = pl.program_id(0)
        t = pl.program_id(1)

        def start_fetch(tile, slot):
            start = pl.multiple_of(tile * LEN2, 8)
            pltpu.make_async_copy(x_hbm.at[b, pl.ds(start, WIN), :],
                                  x_buf.at[slot], x_sem.at[slot]).start()

        # Prime the pipeline on the first row tile of this image ...
        @pl.when(t == 0)
        def _():
            start_fetch(0, 0)

        # ... and prefetch the next tile's window while the current one is computed.
        @pl.when(t + 1 < n_rt)
        def _():
            start_fetch(t + 1, (t + 1) % 2)

        slot = t % 2
        pltpu.make_async_copy(
            x_hbm.at[b, pl.ds(pl.multiple_of(t * LEN2, 8), WIN), :],
            x_buf.at[slot], x_sem.at[slot]).wait()

        win = x_buf[slot]                                   # (WIN, Cp) bf16, no casts

        # ---- conv1 (3x3, pad 1) as 9 shifted MXU matmuls; BN1 scale folded in w1 ----
        acc1 = jnp.zeros((LEN1, Pp), jnp.float32)
        for kh in range(3):
            for kw in range(3):
                off = XOFF + kh * Wp + (kw - 1)
                acc1 = acc1 + jnp.dot(win[off:off + LEN1, :], w1_ref[kh * 3 + kw],
                                      preferred_element_type=jnp.float32)

        # BN1 bias + ReLU, zero halo rows / pad columns (mask), single bf16 cast, and
        # write into the persistent conv2-input scratch whose margins are zeroed.
        out1 = jnp.maximum(acc1 + b1_ref[...], 0.0) * m_ref[0]
        out1e_ref[0:EX, :] = jnp.zeros((EX, Pp), jnp.bfloat16)
        out1e_ref[EX:EX + LEN1, :] = out1.astype(jnp.bfloat16)
        out1e_ref[EX + LEN1:EX + LEN1 + EX, :] = jnp.zeros((EX, Pp), jnp.bfloat16)

        # ---- conv2 (3x3, pad 1) over the on-chip out1; BN2 scale folded in w2 ----
        acc2 = jnp.zeros((LEN2, Pp), jnp.float32)
        for kh in range(3):
            for kw in range(3):
                off = EX + kh * Wp + (kw - 1)
                acc2 = acc2 + jnp.dot(out1e_ref[off:off + LEN2, :], w2_ref[kh * 3 + kw],
                                      preferred_element_type=jnp.float32)

        # ---- 1x1 conv shortcut (BN_s folded in ws) + residual add + final ReLU ----
        xs = win[2 * Wp + XOFF:2 * Wp + XOFF + LEN2, :]
        sc = jnp.dot(xs, ws_ref[...], preferred_element_type=jnp.float32)
        o_ref[0] = jnp.maximum(acc2 + b2_ref[...] + sc + bs_ref[...],
                               0.0).astype(o_ref.dtype)

    return kernel


# ------------------------------ host-side glue ------------------------------ #

def basic_block_forward(x_nchw, params, *, eps=1e-5, max_tile_rows=None):
    """Forward of BasicBlock(in_planes, planes, stride=1, is_forward=True), NCHW in/out."""
    B, Cin, H, W = x_nchw.shape
    P = params["w1"].shape[0]

    Wp = _round_up(W + 2, 8)        # padded flat row stride (sublane-aligned row shifts)
    Cp = _round_up(Cin, 128)        # lane-pad input channels
    Pp = _round_up(P, 128)          # lane-pad output channels (lane-dense stores)

    cap = _vmem_capacity_bytes()
    TR = _pick_tile_rows(H, Wp, Cp, Pp,
                         budget_bytes=min(int(cap * 0.35), 48 << 20),
                         max_tr=max_tile_rows)
    n_rt = H // TR
    LEN1 = (TR + 2) * Wp
    LEN2 = TR * Wp
    XOFF = 16
    WIN = LEN1 + 2 * Wp + XOFF + 8  # per-tile bf16 input window (rows + halo + margin)
    FRONT = Wp + XOFF               # flat zero margin before the padded grid
    BACK = Wp + XOFF + 8
    NF = FRONT + (H + 2) * Wp + BACK

    # ---- activations: NCHW -> zero-padded NHWC grid -> flat (B, NF, Cp) bf16 in HBM ----
    x_nhwc = jnp.transpose(x_nchw, (0, 2, 3, 1)).astype(jnp.bfloat16)
    xg = jnp.zeros((B, H + 2, Wp, Cp), jnp.bfloat16)
    xg = xg.at[:, 1:H + 1, 1:W + 1, :Cin].set(x_nhwc)
    x_flat = jnp.zeros((B, NF, Cp), jnp.bfloat16)
    x_flat = x_flat.at[:, FRONT:FRONT + (H + 2) * Wp, :].set(
        xg.reshape(B, (H + 2) * Wp, Cp))

    # ---- weights: fold BN scale, pad channels, tap-major layout, bf16 ----
    def fold(g, bta, m, v):
        s = g / jnp.sqrt(v + eps)
        return s, bta - m * s

    s1, b1 = fold(params["bn1_gamma"], params["bn1_beta"],
                  params["bn1_mean"], params["bn1_var"])
    s2, b2 = fold(params["bn2_gamma"], params["bn2_beta"],
                  params["bn2_mean"], params["bn2_var"])
    ss, bs = fold(params["bns_gamma"], params["bns_beta"],
                  params["bns_mean"], params["bns_var"])

    def pack3x3(w_oihw, scale, cin, cout):
        w = jnp.transpose(w_oihw, (2, 3, 1, 0)) * scale[None, None, None, :]  # (3,3,cin,cout)
        wp = jnp.zeros((3, 3, _round_up(cin, 128), _round_up(cout, 128)), jnp.float32)
        wp = wp.at[:, :, :cin, :cout].set(w)
        return wp.reshape(9, wp.shape[2], wp.shape[3]).astype(jnp.bfloat16)

    w1_k = pack3x3(params["w1"], s1, Cin, P)                     # (9, Cp, Pp)
    w2_k = pack3x3(params["w2"], s2, P, P)                       # (9, Pp, Pp)
    ws = params["ws"][:, :, 0, 0].T * ss[None, :]                # (Cin, P)
    ws_k = jnp.zeros((Cp, Pp), jnp.float32).at[:Cin, :P].set(ws).astype(jnp.bfloat16)

    def pad_bias(bb):
        return jnp.zeros((1, Pp), jnp.float32).at[0, :P].set(bb.astype(jnp.float32))

    b1_k, b2_k, bs_k = pad_bias(b1), pad_bias(b2), pad_bias(bs)

    # ---- per-tile validity mask for the zero-padded out1 window (halo rows / pad cols) ----
    mask_np = np.zeros((n_rt, LEN1, 1), np.float32)
    for t in range(n_rt):
        for i in range(TR + 2):
            hh = t * TR - 1 + i
            if 0 <= hh < H:
                mask_np[t, i * Wp + 1:i * Wp + 1 + W, 0] = 1.0
    mask = jnp.asarray(mask_np)

    kernel = _make_kernel(TR, Wp, Pp, WIN, n_rt)
    EX = 16
    vmem_limit = int(max(32 << 20, min(cap * 4 // 5, 100 << 20)))

    out_flat = pl.pallas_call(
        kernel,
        out_shape=jax.ShapeDtypeStruct((B, n_rt * LEN2, Pp), jnp.bfloat16),
        grid=(B, n_rt),
        in_specs=[
            pl.BlockSpec((1, LEN1, 1), lambda b, t: (t, 0, 0)),    # out1 zero-pad mask
            pl.BlockSpec((9, Cp, Pp), lambda b, t: (0, 0, 0)),     # w1 taps (BN1 folded)
            pl.BlockSpec((1, Pp), lambda b, t: (0, 0)),            # bn1 bias
            pl.BlockSpec((9, Pp, Pp), lambda b, t: (0, 0, 0)),     # w2 taps (BN2 folded)
            pl.BlockSpec((1, Pp), lambda b, t: (0, 0)),            # bn2 bias
            pl.BlockSpec((Cp, Pp), lambda b, t: (0, 0)),           # 1x1 shortcut weight
            pl.BlockSpec((1, Pp), lambda b, t: (0, 0)),            # shortcut bn bias
            pl.BlockSpec(memory_space=pl.ANY),                     # x (flat, padded, HBM)
        ],
        out_specs=pl.BlockSpec((1, LEN2, Pp), lambda b, t: (b, t, 0)),
        scratch_shapes=[
            pltpu.VMEM((2, WIN, Cp), jnp.bfloat16),                # double-buffered window
            pltpu.SemaphoreType.DMA((2,)),
            pltpu.VMEM((LEN1 + 2 * EX, Pp), jnp.bfloat16),         # out1 + zero margins
        ],
        compiler_params=pltpu.CompilerParams(
            dimension_semantics=("parallel", "arbitrary"),
            vmem_limit_bytes=vmem_limit),
    )(mask, w1_k, b1_k, w2_k, b2_k, ws_k, bs_k, x_flat)

    # NOTE: when chaining BasicBlocks the flat padded (spatial, channel) bf16 layout could
    # be fed straight into the next block; here we unpack to NCHW f32 to match the module.
    out = out_flat.reshape(B, H, Wp, Pp)[:, :, 1:W + 1, :P]
    return jnp.transpose(out, (0, 3, 1, 2)).astype(jnp.float32)


# -------------------------- deterministic parameters ------------------------ #

def init_params(key, in_planes, planes):
    ks = jax.random.split(key, 16)

    def nrm(k, shape, scale=0.1):
        return (scale * jax.random.normal(k, shape)).astype(jnp.float32)

    def uni(k, shape):
        return jax.random.uniform(k, shape, jnp.float32, 0.5, 1.5)

    return dict(
        w1=nrm(ks[0], (planes, in_planes, 3, 3)),
        bn1_gamma=uni(ks[1], (planes,)),
        bn1_beta=nrm(ks[2], (planes,)),
        bn1_mean=nrm(ks[3], (planes,)),
        bn1_var=uni(ks[4], (planes,)),
        w2=nrm(ks[5], (planes, planes, 3, 3)),
        bn2_gamma=uni(ks[6], (planes,)),
        bn2_beta=nrm(ks[7], (planes,)),
        bn2_mean=nrm(ks[8], (planes,)),
        bn2_var=uni(ks[9], (planes,)),
        ws=nrm(ks[10], (planes, in_planes, 1, 1)),
        bns_gamma=uni(ks[11], (planes,)),
        bns_beta=nrm(ks[12], (planes,)),
        bns_mean=nrm(ks[13], (planes,)),
        bns_var=uni(ks[14], (planes,)),
    )


# ------------------------------ pure-JAX reference -------------------------- #

def reference_forward(x_nchw, params, eps=1e-5):
    def conv(x, w, pad):
        return jax.lax.conv_general_dilated(
            x, w, (1, 1), [(pad, pad), (pad, pad)],
            dimension_numbers=("NCHW", "OIHW", "NCHW"))

    def bn(x, g, b, m, v):
        g, b, m, v = (t.reshape(1, -1, 1, 1) for t in (g, b, m, v))
        return g * (x - m) / jnp.sqrt(v + eps) + b

    out = jax.nn.relu(bn(conv(x_nchw, params["w1"], 1),
                         params["bn1_gamma"], params["bn1_beta"],
                         params["bn1_mean"], params["bn1_var"]))
    out = bn(conv(out, params["w2"], 1),
             params["bn2_gamma"], params["bn2_beta"],
             params["bn2_mean"], params["bn2_var"])
    sc = bn(conv(x_nchw, params["ws"], 0),
            params["bns_gamma"], params["bns_beta"],
            params["bns_mean"], params["bns_var"])
    return jax.nn.relu(out + sc)


# ------------------------------------ main ---------------------------------- #

if __name__ == "__main__":
    B, Cin, H, W, PLANES = 2, 4, 16, 16, 8   # stride=1, in_planes != planes -> conv shortcut

    key = jax.random.PRNGKey(0)
    kx, kp = jax.random.split(key)
    x = jax.random.normal(kx, (B, Cin, H, W), jnp.float32)
    params = init_params(kp, Cin, PLANES)

    ref = reference_forward(x, params)

    # Default tiling (VMEM-budgeted row tile).
    fwd = jax.jit(basic_block_forward)
    out = jax.block_until_ready(fwd(x, params))
    # bf16 MXU operands / bf16 intermediates & output -> loose tolerance vs pure-f32 ref.
    np.testing.assert_allclose(np.asarray(out), np.asarray(ref), atol=4e-2, rtol=4e-2)

    # Also exercise the multi-row-tile path (n_rt > 1) with the double-buffered
    # window-prefetch chain.
    fwd_tiled = jax.jit(lambda xx, pp: basic_block_forward(xx, pp, max_tile_rows=4))
    out_t = jax.block_until_ready(fwd_tiled(x, params))
    np.testing.assert_allclose(np.asarray(out_t), np.asarray(ref), atol=4e-2, rtol=4e-2)

    print("KERNEL_OK")
</pallas_src>

<mosaic_0001>
module attributes {stable_mosaic.version = 11 : i64} {
  func.func @kernel(%arg0: i32, %arg1: i32, %arg2: memref<1x432x1xf32, #tpu.memory_space<vmem>>, %arg3: memref<9x128x128xbf16, #tpu.memory_space<vmem>>, %arg4: memref<1x128xf32, #tpu.memory_space<vmem>>, %arg5: memref<9x128x128xbf16, #tpu.memory_space<vmem>>, %arg6: memref<1x128xf32, #tpu.memory_space<vmem>>, %arg7: memref<128x128xbf16, #tpu.memory_space<vmem>>, %arg8: memref<1x128xf32, #tpu.memory_space<vmem>>, %arg9: memref<2x520x128xbf16, #tpu.memory_space<any>>, %arg10: memref<1x384x128xbf16, #tpu.memory_space<vmem>>, %arg11: memref<2x504x128xbf16, #tpu.memory_space<vmem>>, %arg12: memref<2x!tpu.dma_semaphore, #tpu.memory_space<semaphore_mem>>, %arg13: memref<464x128xbf16, #tpu.memory_space<vmem>>) attributes {dimension_semantics = [#tpu.dimension_semantics<parallel>, #tpu.dimension_semantics<arbitrary>], iteration_bounds = array<i64: 2, 1>, scalar_prefetch = 0 : i64, scratch_operands = 3 : i64, tpu.core_type = #tpu.core_type<tc>, window_params = [{transform_indices = @transform_0, window_bounds = array<i64: 1, 432, 1>}, {pipeline_mode = #tpu.pipeline_mode<synchronous>, transform_indices = @transform_1, window_bounds = array<i64: 9, 128, 128>}, {pipeline_mode = #tpu.pipeline_mode<synchronous>, transform_indices = @transform_2, window_bounds = array<i64: 1, 128>}, {pipeline_mode = #tpu.pipeline_mode<synchronous>, transform_indices = @transform_3, window_bounds = array<i64: 9, 128, 128>}, {pipeline_mode = #tpu.pipeline_mode<synchronous>, transform_indices = @transform_4, window_bounds = array<i64: 1, 128>}, {pipeline_mode = #tpu.pipeline_mode<synchronous>, transform_indices = @transform_5, window_bounds = array<i64: 128, 128>}, {pipeline_mode = #tpu.pipeline_mode<synchronous>, transform_indices = @transform_6, window_bounds = array<i64: 1, 128>}, {}, {transform_indices = @transform_8, window_bounds = array<i64: 1, 384, 128>}]} {
    %c0_i32 = arith.constant 0 : i32
    %0 = arith.cmpi eq, %arg1, %c0_i32 : i32
    %1 = arith.extui %0 : i1 to i32
    %c0_i32_0 = arith.constant 0 : i32
    %2 = arith.cmpi ne, %1, %c0_i32_0 : i32
    scf.if %2 {
      %c0_i32_110 = arith.constant 0 : i32
      %151 = tpu.assume_multiple %c0_i32_110, 8 : i32
      %c0_i32_111 = arith.constant 0 : i32
      %c0_i32_112 = arith.constant 0 : i32
      %c0_i32_113 = arith.constant 0 : i32
      %152 = tpu.memref_slice %arg9[%arg0, %151, %c0_i32_113] : memref<2x520x128xbf16, #tpu.memory_space<any>> -> memref<1x504x128xbf16, #tpu.memory_space<any>>
      %153 = tpu.memref_squeeze %152 : memref<1x504x128xbf16, #tpu.memory_space<any>> -> memref<504x128xbf16, #tpu.memory_space<any>>
      %c0_i32_114 = arith.constant 0 : i32
      %c0_i32_115 = arith.constant 0 : i32
      %154 = tpu.memref_slice %arg11[%c0_i32_111, %c0_i32_114, %c0_i32_115] : memref<2x504x128xbf16, #tpu.memory_space<vmem>> -> memref<1x504x128xbf16, #tpu.memory_space<vmem>>
      %155 = tpu.memref_squeeze %154 : memref<1x504x128xbf16, #tpu.memory_space<vmem>> -> memref<504x128xbf16, #tpu.memory_space<vmem>>
      %156 = tpu.memref_slice %arg12[%c0_i32_112] : memref<2x!tpu.dma_semaphore, #tpu.memory_space<semaphore_mem>> -> memref<1x!tpu.dma_semaphore, #tpu.memory_space<semaphore_mem>>
      %157 = tpu.memref_squeeze %156 : memref<1x!tpu.dma_semaphore, #tpu.memory_space<semaphore_mem>> -> memref<!tpu.dma_semaphore, #tpu.memory_space<semaphore_mem>>
      tpu.enqueue_dma source(%153 : memref<504x128xbf16, #tpu.memory_space<any>>) target(%155 : memref<504x128xbf16, #tpu.memory_space<vmem>>) target_semaphore(%157 : memref<!tpu.dma_semaphore, #tpu.memory_space<semaphore_mem>>)
    } else {
    }
    %c1_i32 = arith.constant 1 : i32
    %3 = arith.addi %arg1, %c1_i32 : i32
    %c1_i32_1 = arith.constant 1 : i32
    %4 = arith.cmpi slt, %3, %c1_i32_1 : i32
    %5 = arith.extui %4 : i1 to i32
    %c0_i32_2 = arith.constant 0 : i32
    %6 = arith.cmpi ne, %5, %c0_i32_2 : i32
    scf.if %6 {
      %c1_i32_110 = arith.constant 1 : i32
      %151 = arith.addi %arg1, %c1_i32_110 : i32
      %c1_i32_111 = arith.constant 1 : i32
      %152 = arith.addi %arg1, %c1_i32_111 : i32
      %c2_i32_112 = arith.constant 2 : i32
      %c0_i32_113 = arith.constant 0 : i32
      %153 = arith.cmpi eq, %c2_i32_112, %c0_i32_113 : i32
      %c1_i32_114 = arith.constant 1 : i32
      %154 = arith.select %153, %c1_i32_114, %c2_i32_112 : i32
      %155 = arith.remsi %152, %154 : i32
      %c0_i32_115 = arith.constant 0 : i32
      %156 = arith.cmpi ne, %155, %c0_i32_115 : i32
      %c0_i32_116 = arith.constant 0 : i32
      %157 = arith.cmpi slt, %155, %c0_i32_116 : i32
      %c0_i32_117 = arith.constant 0 : i32
      %158 = arith.cmpi slt, %154, %c0_i32_117 : i32
      %159 = arith.xori %157, %158 : i1
      %160 = arith.andi %159, %156 : i1
      %161 = arith.addi %155, %154 : i32
      %162 = arith.select %160, %161, %155 : i32
      %c384_i32_118 = arith.constant 384 : i32
      %163 = arith.muli %151, %c384_i32_118 : i32
      %164 = tpu.assume_multiple %163, 8 : i32
      %c0_i32_119 = arith.constant 0 : i32
      %165 = tpu.memref_slice %arg9[%arg0, %164, %c0_i32_119] : memref<2x520x128xbf16, #tpu.memory_space<any>> -> memref<1x504x128xbf16, #tpu.memory_space<any>>
      %166 = tpu.memref_squeeze %165 : memref<1x504x128xbf16, #tpu.memory_space<any>> -> memref<504x128xbf16, #tpu.memory_space<any>>
      %c0_i32_120 = arith.constant 0 : i32
      %c0_i32_121 = arith.constant 0 : i32
      %167 = tpu.memref_slice %arg11[%162, %c0_i32_120, %c0_i32_121] : memref<2x504x128xbf16, #tpu.memory_space<vmem>> -> memref<1x504x128xbf16, #tpu.memory_space<vmem>>
      %168 = tpu.memref_squeeze %167 : memref<1x504x128xbf16, #tpu.memory_space<vmem>> -> memref<504x128xbf16, #tpu.memory_space<vmem>>
      %169 = tpu.memref_slice %arg12[%162] : memref<2x!tpu.dma_semaphore, #tpu.memory_space<semaphore_mem>> -> memref<1x!tpu.dma_semaphore, #tpu.memory_space<semaphore_mem>>
      %170 = tpu.memref_squeeze %169 : memref<1x!tpu.dma_semaphore, #tpu.memory_space<semaphore_mem>> -> memref<!tpu.dma_semaphore, #tpu.memory_space<semaphore_mem>>
      tpu.enqueue_dma source(%166 : memref<504x128xbf16, #tpu.memory_space<any>>) target(%168 : memref<504x128xbf16, #tpu.memory_space<vmem>>) target_semaphore(%170 : memref<!tpu.dma_semaphore, #tpu.memory_space<semaphore_mem>>)
    } else {
    }
    %c2_i32 = arith.constant 2 : i32
    %c0_i32_3 = arith.constant 0 : i32
    %7 = arith.cmpi eq, %c2_i32, %c0_i32_3 : i32
    %c1_i32_4 = arith.constant 1 : i32
    %8 = arith.select %7, %c1_i32_4, %c2_i32 : i32
    %9 = arith.remsi %arg1, %8 : i32
    %c0_i32_5 = arith.constant 0 : i32
    %10 = arith.cmpi ne, %9, %c0_i32_5 : i32
    %c0_i32_6 = arith.constant 0 : i32
    %11 = arith.cmpi slt, %9, %c0_i32_6 : i32
    %c0_i32_7 = arith.constant 0 : i32
    %12 = arith.cmpi slt, %8, %c0_i32_7 : i32
    %13 = arith.xori %11, %12 : i1
    %14 = arith.andi %13, %10 : i1
    %15 = arith.addi %9, %8 : i32
    %16 = arith.select %14, %15, %9 : i32
    %c384_i32 = arith.constant 384 : i32
    %17 = arith.muli %arg1, %c384_i32 : i32
    %18 = tpu.assume_multiple %17, 8 : i32
    %c0_i32_8 = arith.constant 0 : i32
    %19 = tpu.memref_slice %arg9[%arg0, %18, %c0_i32_8] : memref<2x520x128xbf16, #tpu.memory_space<any>> -> memref<1x504x128xbf16, #tpu.memory_space<any>>
    %20 = tpu.memref_squeeze %19 : memref<1x504x128xbf16, #tpu.memory_space<any>> -> memref<504x128xbf16, #tpu.memory_space<any>>
    %c0_i32_9 = arith.constant 0 : i32
    %c0_i32_10 = arith.constant 0 : i32
    %21 = tpu.memref_slice %arg11[%16, %c0_i32_9, %c0_i32_10] : memref<2x504x128xbf16, #tpu.memory_space<vmem>> -> memref<1x504x128xbf16, #tpu.memory_space<vmem>>
    %22 = tpu.memref_squeeze %21 : memref<1x504x128xbf16, #tpu.memory_space<vmem>> -> memref<504x128xbf16, #tpu.memory_space<vmem>>
    %23 = tpu.memref_slice %arg12[%16] : memref<2x!tpu.dma_semaphore, #tpu.memory_space<semaphore_mem>> -> memref<1x!tpu.dma_semaphore, #tpu.memory_space<semaphore_mem>>
    %24 = tpu.memref_squeeze %23 : memref<1x!tpu.dma_semaphore, #tpu.memory_space<semaphore_mem>> -> memref<!tpu.dma_semaphore, #tpu.memory_space<semaphore_mem>>
    tpu.wait_dma2 semaphore(%24 : memref<!tpu.dma_semaphore, #tpu.memory_space<semaphore_mem>>) src(%20 : memref<504x128xbf16, #tpu.memory_space<any>>) dst(%22 : memref<504x128xbf16, #tpu.memory_space<vmem>>)
    %25 = arith.index_cast %16 : i32 to index
    %c0 = arith.constant 0 : index
    %c0_11 = arith.constant 0 : index
    %26 = vector.load %arg11[%25, %c0, %c0_11] : memref<2x504x128xbf16, #tpu.memory_space<vmem>>, vector<1x504x128xbf16>
    %27 = vector.shape_cast %26 : vector<1x504x128xbf16> to vector<504x128xbf16>
    %cst = arith.constant 0.000000e+00 : f32
    %28 = vector.broadcast %cst : f32 to vector<432x128xf32>
    %29 = vector.extract_strided_slice %27 {offsets = [15, 0], sizes = [432, 128], strides = [1, 1]} : vector<504x128xbf16> to vector<432x128xbf16>
    %c0_12 = arith.constant 0 : index
    %c0_13 = arith.constant 0 : index
    %c0_14 = arith.constant 0 : index
    %30 = vector.load %arg3[%c0_12, %c0_13, %c0_14] : memref<9x128x128xbf16, #tpu.memory_space<vmem>>, vector<1x128x128xbf16>
    %31 = vector.shape_cast %30 : vector<1x128x128xbf16> to vector<128x128xbf16>
    %cst_15 = arith.constant dense<0.000000e+00> : vector<432x128xf32>
    %32 = tpu.matmul %29, %31, %cst_15 {dimension_numbers = #tpu.dot_dimension_numbers<[1], [0], [0], [1], [0, 0, 1, 1], [], []>} : vector<432x128xbf16>, vector<128x128xbf16>, vector<432x128xf32> -> vector<432x128xf32>
    %33 = arith.addf %28, %32 : vector<432x128xf32>
    %34 = vector.extract_strided_slice %27 {offsets = [16, 0], sizes = [432, 128], strides = [1, 1]} : vector<504x128xbf16> to vector<432x128xbf16>
    %c1 = arith.constant 1 : index
    %c0_16 = arith.constant 0 : index
    %c0_17 = arith.constant 0 : index
    %35 = vector.load %arg3[%c1, %c0_16, %c0_17] : memref<9x128x128xbf16, #tpu.memory_space<vmem>>, vector<1x128x128xbf16>
    %36 = vector.shape_cast %35 : vector<1x128x128xbf16> to vector<128x128xbf16>
    %cst_18 = arith.constant dense<0.000000e+00> : vector<432x128xf32>
    %37 = tpu.matmul %34, %36, %cst_18 {dimension_numbers = #tpu.dot_dimension_numbers<[1], [0], [0], [1], [0, 0, 1, 1], [], []>} : vector<432x128xbf16>, vector<128x128xbf16>, vector<432x128xf32> -> vector<432x128xf32>
    %38 = arith.addf %33, %37 : vector<432x128xf32>
    %39 = vector.extract_strided_slice %27 {offsets = [17, 0], sizes = [432, 128], strides = [1, 1]} : vector<504x128xbf16> to vector<432x128xbf16>
    %c2 = arith.constant 2 : index
    %c0_19 = arith.constant 0 : index
    %c0_20 = arith.constant 0 : index
    %40 = vector.load %arg3[%c2, %c0_19, %c0_20] : memref<9x128x128xbf16, #tpu.memory_space<vmem>>, vector<1x128x128xbf16>
    %41 = vector.shape_cast %40 : vector<1x128x128xbf16> to vector<128x128xbf16>
    %cst_21 = arith.constant dense<0.000000e+00> : vector<432x128xf32>
    %42 = tpu.matmul %39, %41, %cst_21 {dimension_numbers = #tpu.dot_dimension_numbers<[1], [0], [0], [1], [0, 0, 1, 1], [], []>} : vector<432x128xbf16>, vector<128x128xbf16>, vector<432x128xf32> -> vector<432x128xf32>
    %43 = arith.addf %38, %42 : vector<432x128xf32>
    %44 = vector.extract_strided_slice %27 {offsets = [39, 0], sizes = [432, 128], strides = [1, 1]} : vector<504x128xbf16> to vector<432x128xbf16>
    %c3 = arith.constant 3 : index
    %c0_22 = arith.constant 0 : index
    %c0_23 = arith.constant 0 : index
    %45 = vector.load %arg3[%c3, %c0_22, %c0_23] : memref<9x128x128xbf16, #tpu.memory_space<vmem>>, vector<1x128x128xbf16>
    %46 = vector.shape_cast %45 : vector<1x128x128xbf16> to vector<128x128xbf16>
    %cst_24 = arith.constant dense<0.000000e+00> : vector<432x128xf32>
    %47 = tpu.matmul %44, %46, %cst_24 {dimension_numbers = #tpu.dot_dimension_numbers<[1], [0], [0], [1], [0, 0, 1, 1], [], []>} : vector<432x128xbf16>, vector<128x128xbf16>, vector<432x128xf32> -> vector<432x128xf32>
    %48 = arith.addf %43, %47 : vector<432x128xf32>
    %49 = vector.extract_strided_slice %27 {offsets = [40, 0], sizes = [432, 128], strides = [1, 1]} : vector<504x128xbf16> to vector<432x128xbf16>
    %c4 = arith.constant 4 : index
    %c0_25 = arith.constant 0 : index
    %c0_26 = arith.constant 0 : index
    %50 = vector.load %arg3[%c4, %c0_25, %c0_26] : memref<9x128x128xbf16, #tpu.memory_space<vmem>>, vector<1x128x128xbf16>
    %51 = vector.shape_cast %50 : vector<1x128x128xbf16> to vector<128x128xbf16>
    %cst_27 = arith.constant dense<0.000000e+00> : vector<432x128xf32>
    %52 = tpu.matmul %49, %51, %cst_27 {dimension_numbers = #tpu.dot_dimension_numbers<[1], [0], [0], [1], [0, 0, 1, 1], [], []>} : vector<432x128xbf16>, vector<128x128xbf16>, vector<432x128xf32> -> vector<432x128xf32>
    %53 = arith.addf %48, %52 : vector<432x128xf32>
    %54 = vector.extract_strided_slice %27 {offsets = [41, 0], sizes = [432, 128], strides = [1, 1]} : vector<504x128xbf16> to vector<432x128xbf16>
    %c5 = arith.constant 5 : index
    %c0_28 = arith.constant 0 : index
    %c0_29 = arith.constant 0 : index
    %55 = vector.load %arg3[%c5, %c0_28, %c0_29] : memref<9x128x128xbf16, #tpu.memory_space<vmem>>, vector<1x128x128xbf16>
    %56 = vector.shape_cast %55 : vector<1x128x128xbf16> to vector<128x128xbf16>
    %cst_30 = arith.constant dense<0.000000e+00> : vector<432x128xf32>
    %57 = tpu.matmul %54, %56, %cst_30 {dimension_numbers = #tpu.dot_dimension_numbers<[1], [0], [0], [1], [0, 0, 1, 1], [], []>} : vector<432x128xbf16>, vector<128x128xbf16>, vector<432x128xf32> -> vector<432x128xf32>
    %58 = arith.addf %53, %57 : vector<432x128xf32>
    %59 = vector.extract_strided_slice %27 {offsets = [63, 0], sizes = [432, 128], strides = [1, 1]} : vector<504x128xbf16> to vector<432x128xbf16>
    %c6 = arith.constant 6 : index
    %c0_31 = arith.constant 0 : index
    %c0_32 = arith.constant 0 : index
    %60 = vector.load %arg3[%c6, %c0_31, %c0_32] : memref<9x128x128xbf16, #tpu.memory_space<vmem>>, vector<1x128x128xbf16>
    %61 = vector.shape_cast %60 : vector<1x128x128xbf16> to vector<128x128xbf16>
    %cst_33 = arith.constant dense<0.000000e+00> : vector<432x128xf32>
    %62 = tpu.matmul %59, %61, %cst_33 {dimension_numbers = #tpu.dot_dimension_numbers<[1], [0], [0], [1], [0, 0, 1, 1], [], []>} : vector<432x128xbf16>, vector<128x128xbf16>, vector<432x128xf32> -> vector<432x128xf32>
    %63 = arith.addf %58, %62 : vector<432x128xf32>
    %64 = vector.extract_strided_slice %27 {offsets = [64, 0], sizes = [432, 128], strides = [1, 1]} : vector<504x128xbf16> to vector<432x128xbf16>
    %c7 = arith.constant 7 : index
    %c0_34 = arith.constant 0 : index
    %c0_35 = arith.constant 0 : index
    %65 = vector.load %arg3[%c7, %c0_34, %c0_35] : memref<9x128x128xbf16, #tpu.memory_space<vmem>>, vector<1x128x128xbf16>
    %66 = vector.shape_cast %65 : vector<1x128x128xbf16> to vector<128x128xbf16>
    %cst_36 = arith.constant dense<0.000000e+00> : vector<432x128xf32>
    %67 = tpu.matmul %64, %66, %cst_36 {dimension_numbers = #tpu.dot_dimension_numbers<[1], [0], [0], [1], [0, 0, 1, 1], [], []>} : vector<432x128xbf16>, vector<128x128xbf16>, vector<432x128xf32> -> vector<432x128xf32>
    %68 = arith.addf %63, %67 : vector<432x128xf32>
    %69 = vector.extract_strided_slice %27 {offsets = [65, 0], sizes = [432, 128], strides = [1, 1]} : vector<504x128xbf16> to vector<432x128xbf16>
    %c8 = arith.constant 8 : index
    %c0_37 = arith.constant 0 : index
    %c0_38 = arith.constant 0 : index
    %70 = vector.load %arg3[%c8, %c0_37, %c0_38] : memref<9x128x128xbf16, #tpu.memory_space<vmem>>, vector<1x128x128xbf16>
    %71 = vector.shape_cast %70 : vector<1x128x128xbf16> to vector<128x128xbf16>
    %cst_39 = arith.constant dense<0.000000e+00> : vector<432x128xf32>
    %72 = tpu.matmul %69, %71, %cst_39 {dimension_numbers = #tpu.dot_dimension_numbers<[1], [0], [0], [1], [0, 0, 1, 1], [], []>} : vector<432x128xbf16>, vector<128x128xbf16>, vector<432x128xf32> -> vector<432x128xf32>
    %73 = arith.addf %68, %72 : vector<432x128xf32>
    %c0_40 = arith.constant 0 : index
    %c0_41 = arith.constant 0 : index
    %74 = vector.load %arg4[%c0_40, %c0_41] : memref<1x128xf32, #tpu.memory_space<vmem>>, vector<1x128xf32>
    %75 = vector.broadcast %74 : vector<1x128xf32> to vector<432x128xf32>
    %76 = arith.addf %73, %75 : vector<432x128xf32>
    %cst_42 = arith.constant 0.000000e+00 : f32
    %77 = vector.broadcast %cst_42 : f32 to vector<432x128xf32>
    %78 = arith.maximumf %76, %77 : vector<432x128xf32>
    %c0_43 = arith.constant 0 : index
    %c0_44 = arith.constant 0 : index
    %c0_45 = arith.constant 0 : index
    %79 = vector.load %arg2[%c0_43, %c0_44, %c0_45] : memref<1x432x1xf32, #tpu.memory_space<vmem>>, vector<1x432x1xf32>
    %80 = vector.shape_cast %79 : vector<1x432x1xf32> to vector<432x1xf32>
    %81 = vector.broadcast %80 : vector<432x1xf32> to vector<432x128xf32>
    %82 = arith.mulf %78, %81 : vector<432x128xf32>
    %cst_46 = arith.constant 0.000000e+00 : bf16
    %83 = vector.broadcast %cst_46 : bf16 to vector<16x128xbf16>
    %c0_47 = arith.constant 0 : index
    %c0_48 = arith.constant 0 : index
    %84 = vector.load %arg13[%c0_47, %c0_48] : memref<464x128xbf16, #tpu.memory_space<vmem>>, vector<16x128xbf16>
    tpu.vector_store %arg13[%c0_47, %c0_48], %83 {strides = array<i32>} : memref<464x128xbf16, #tpu.memory_space<vmem>>, vector<16x128xbf16>,
    %85 = arith.truncf %82 : vector<432x128xf32> to vector<432x128xbf16>
    %c16 = arith.constant 16 : index
    %c0_49 = arith.constant 0 : index
    %86 = vector.load %arg13[%c16, %c0_49] : memref<464x128xbf16, #tpu.memory_space<vmem>>, vector<432x128xbf16>
    tpu.vector_store %arg13[%c16, %c0_49], %85 {strides = array<i32>} : memref<464x128xbf16, #tpu.memory_space<vmem>>, vector<432x128xbf16>,
    %cst_50 = arith.constant 0.000000e+00 : bf16
    %87 = vector.broadcast %cst_50 : bf16 to vector<16x128xbf16>
    %c448 = arith.constant 448 : index
    %c0_51 = arith.constant 0 : index
    %88 = vector.load %arg13[%c448, %c0_51] : memref<464x128xbf16, #tpu.memory_space<vmem>>, vector<16x128xbf16>
    tpu.vector_store %arg13[%c448, %c0_51], %87 {strides = array<i32>} : memref<464x128xbf16, #tpu.memory_space<vmem>>, vector<16x128xbf16>,
    %cst_52 = arith.constant 0.000000e+00 : f32
    %89 = vector.broadcast %cst_52 : f32 to vector<384x128xf32>
    %c15 = arith.constant 15 : index
    %c0_53 = arith.constant 0 : index
    %90 = vector.load %arg13[%c15, %c0_53] : memref<464x128xbf16, #tpu.memory_space<vmem>>, vector<384x128xbf16>
    %c0_54 = arith.constant 0 : index
    %c0_55 = arith.constant 0 : index
    %c0_56 = arith.constant 0 : index
    %91 = vector.load %arg5[%c0_54, %c0_55, %c0_56] : memref<9x128x128xbf16, #tpu.memory_space<vmem>>, vector<1x128x128xbf16>
    %92 = vector.shape_cast %91 : vector<1x128x128xbf16> to vector<128x128xbf16>
    %cst_57 = arith.constant dense<0.000000e+00> : vector<384x128xf32>
    %93 = tpu.matmul %90, %92, %cst_57 {dimension_numbers = #tpu.dot_dimension_numbers<[1], [0], [0], [1], [0, 0, 1, 1], [], []>} : vector<384x128xbf16>, vector<128x128xbf16>, vector<384x128xf32> -> vector<384x128xf32>
    %94 = arith.addf %89, %93 : vector<384x128xf32>
    %c16_58 = arith.constant 16 : index
    %c0_59 = arith.constant 0 : index
    %95 = vector.load %arg13[%c16_58, %c0_59] : memref<464x128xbf16, #tpu.memory_space<vmem>>, vector<384x128xbf16>
    %c1_60 = arith.constant 1 : index
    %c0_61 = arith.constant 0 : index
    %c0_62 = arith.constant 0 : index
    %96 = vector.load %arg5[%c1_60, %c0_61, %c0_62] : memref<9x128x128xbf16, #tpu.memory_space<vmem>>, vector<1x128x128xbf16>
    %97 = vector.shape_cast %96 : vector<1x128x128xbf16> to vector<128x128xbf16>
    %cst_63 = arith.constant dense<0.000000e+00> : vector<384x128xf32>
    %98 = tpu.matmul %95, %97, %cst_63 {dimension_numbers = #tpu.dot_dimension_numbers<[1], [0], [0], [1], [0, 0, 1, 1], [], []>} : vector<384x128xbf16>, vector<128x128xbf16>, vector<384x128xf32> -> vector<384x128xf32>
    %99 = arith.addf %94, %98 : vector<384x128xf32>
    %c17 = arith.constant 17 : index
    %c0_64 = arith.constant 0 : index
    %100 = vector.load %arg13[%c17, %c0_64] : memref<464x128xbf16, #tpu.memory_space<vmem>>, vector<384x128xbf16>
    %c2_65 = arith.constant 2 : index
    %c0_66 = arith.constant 0 : index
    %c0_67 = arith.constant 0 : index
    %101 = vector.load %arg5[%c2_65, %c0_66, %c0_67] : memref<9x128x128xbf16, #tpu.memory_space<vmem>>, vector<1x128x128xbf16>
    %102 = vector.shape_cast %101 : vector<1x128x128xbf16> to vector<128x128xbf16>
    %cst_68 = arith.constant dense<0.000000e+00> : vector<384x128xf32>
    %103 = tpu.matmul %100, %102, %cst_68 {dimension_numbers = #tpu.dot_dimension_numbers<[1], [0], [0], [1], [0, 0, 1, 1], [], []>} : vector<384x128xbf16>, vector<128x128xbf16>, vector<384x128xf32> -> vector<384x128xf32>
    %104 = arith.addf %99, %103 : vector<384x128xf32>
    %c39 = arith.constant 39 : index
    %c0_69 = arith.constant 0 : index
    %105 = vector.load %arg13[%c39, %c0_69] : memref<464x128xbf16, #tpu.memory_space<vmem>>, vector<384x128xbf16>
    %c3_70 = arith.constant 3 : index
    %c0_71 = arith.constant 0 : index
    %c0_72 = arith.constant 0 : index
    %106 = vector.load %arg5[%c3_70, %c0_71, %c0_72] : memref<9x128x128xbf16, #tpu.memory_space<vmem>>, vector<1x128x128xbf16>
    %107 = vector.shape_cast %106 : vector<1x128x128xbf16> to vector<128x128xbf16>
    %cst_73 = arith.constant dense<0.000000e+00> : vector<384x128xf32>
    %108 = tpu.matmul %105, %107, %cst_73 {dimension_numbers = #tpu.dot_dimension_numbers<[1], [0], [0], [1], [0, 0, 1, 1], [], []>} : vector<384x128xbf16>, vector<128x128xbf16>, vector<384x128xf32> -> vector<384x128xf32>
    %109 = arith.addf %104, %108 : vector<384x128xf32>
    %c40 = arith.constant 40 : index
    %c0_74 = arith.constant 0 : index
    %110 = vector.load %arg13[%c40, %c0_74] : memref<464x128xbf16, #tpu.memory_space<vmem>>, vector<384x128xbf16>
    %c4_75 = arith.constant 4 : index
    %c0_76 = arith.constant 0 : index
    %c0_77 = arith.constant 0 : index
    %111 = vector.load %arg5[%c4_75, %c0_76, %c0_77] : memref<9x128x128xbf16, #tpu.memory_space<vmem>>, vector<1x128x128xbf16>
    %112 = vector.shape_cast %111 : vector<1x128x128xbf16> to vector<128x128xbf16>
    %cst_78 = arith.constant dense<0.000000e+00> : vector<384x128xf32>
    %113 = tpu.matmul %110, %112, %cst_78 {dimension_numbers = #tpu.dot_dimension_numbers<[1], [0], [0], [1], [0, 0, 1, 1], [], []>} : vector<384x128xbf16>, vector<128x128xbf16>, vector<384x128xf32> -> vector<384x128xf32>
    %114 = arith.addf %109, %113 : vector<384x128xf32>
    %c41 = arith.constant 41 : index
    %c0_79 = arith.constant 0 : index
    %115 = vector.load %arg13[%c41, %c0_79] : memref<464x128xbf16, #tpu.memory_space<vmem>>, vector<384x128xbf16>
    %c5_80 = arith.constant 5 : index
    %c0_81 = arith.constant 0 : index
    %c0_82 = arith.constant 0 : index
    %116 = vector.load %arg5[%c5_80, %c0_81, %c0_82] : memref<9x128x128xbf16, #tpu.memory_space<vmem>>, vector<1x128x128xbf16>
    %117 = vector.shape_cast %116 : vector<1x128x128xbf16> to vector<128x128xbf16>
    %cst_83 = arith.constant dense<0.000000e+00> : vector<384x128xf32>
    %118 = tpu.matmul %115, %117, %cst_83 {dimension_numbers = #tpu.dot_dimension_numbers<[1], [0], [0], [1], [0, 0, 1, 1], [], []>} : vector<384x128xbf16>, vector<128x128xbf16>, vector<384x128xf32> -> vector<384x128xf32>
    %119 = arith.addf %114, %118 : vector<384x128xf32>
    %c63 = arith.constant 63 : index
    %c0_84 = arith.constant 0 : index
    %120 = vector.load %arg13[%c63, %c0_84] : memref<464x128xbf16, #tpu.memory_space<vmem>>, vector<384x128xbf16>
    %c6_85 = arith.constant 6 : index
    %c0_86 = arith.constant 0 : index
    %c0_87 = arith.constant 0 : index
    %121 = vector.load %arg5[%c6_85, %c0_86, %c0_87] : memref<9x128x128xbf16, #tpu.memory_space<vmem>>, vector<1x128x128xbf16>
    %122 = vector.shape_cast %121 : vector<1x128x128xbf16> to vector<128x128xbf16>
    %cst_88 = arith.constant dense<0.000000e+00> : vector<384x128xf32>
    %123 = tpu.matmul %120, %122, %cst_88 {dimension_numbers = #tpu.dot_dimension_numbers<[1], [0], [0], [1], [0, 0, 1, 1], [], []>} : vector<384x128xbf16>, vector<128x128xbf16>, vector<384x128xf32> -> vector<384x128xf32>
    %124 = arith.addf %119, %123 : vector<384x128xf32>
    %c64 = arith.constant 64 : index
    %c0_89 = arith.constant 0 : index
    %125 = vector.load %arg13[%c64, %c0_89] : memref<464x128xbf16, #tpu.memory_space<vmem>>, vector<384x128xbf16>
    %c7_90 = arith.constant 7 : index
    %c0_91 = arith.constant 0 : index
    %c0_92 = arith.constant 0 : index
    %126 = vector.load %arg5[%c7_90, %c0_91, %c0_92] : memref<9x128x128xbf16, #tpu.memory_space<vmem>>, vector<1x128x128xbf16>
    %127 = vector.shape_cast %126 : vector<1x128x128xbf16> to vector<128x128xbf16>
    %cst_93 = arith.constant dense<0.000000e+00> : vector<384x128xf32>
    %128 = tpu.matmul %125, %127, %cst_93 {dimension_numbers = #tpu.dot_dimension_numbers<[1], [0], [0], [1], [0, 0, 1, 1], [], []>} : vector<384x128xbf16>, vector<128x128xbf16>, vector<384x128xf32> -> vector<384x128xf32>
    %129 = arith.addf %124, %128 : vector<384x128xf32>
    %c65 = arith.constant 65 : index
    %c0_94 = arith.constant 0 : index
    %130 = vector.load %arg13[%c65, %c0_94] : memref<464x128xbf16, #tpu.memory_space<vmem>>, vector<384x128xbf16>
    %c8_95 = arith.constant 8 : index
    %c0_96 = arith.constant 0 : index
    %c0_97 = arith.constant 0 : index
    %131 = vector.load %arg5[%c8_95, %c0_96, %c0_97] : memref<9x128x128xbf16, #tpu.memory_space<vmem>>, vector<1x128x128xbf16>
    %132 = vector.shape_cast %131 : vector<1x128x128xbf16> to vector<128x128xbf16>
    %cst_98 = arith.constant dense<0.000000e+00> : vector<384x128xf32>
    %133 = tpu.matmul %130, %132, %cst_98 {dimension_numbers = #tpu.dot_dimension_numbers<[1], [0], [0], [1], [0, 0, 1, 1], [], []>} : vector<384x128xbf16>, vector<128x128xbf16>, vector<384x128xf32> -> vector<384x128xf32>
    %134 = arith.addf %129, %133 : vector<384x128xf32>
    %135 = vector.extract_strided_slice %27 {offsets = [64, 0], sizes = [384, 128], strides = [1, 1]} : vector<504x128xbf16> to vector<384x128xbf16>
    %c0_99 = arith.constant 0 : index
    %c0_100 = arith.constant 0 : index
    %136 = vector.load %arg7[%c0_99, %c0_100] : memref<128x128xbf16, #tpu.memory_space<vmem>>, vector<128x128xbf16>
    %cst_101 = arith.constant dense<0.000000e+00> : vector<384x128xf32>
    %137 = tpu.matmul %135, %136, %cst_101 {dimension_numbers = #tpu.dot_dimension_numbers<[1], [0], [0], [1], [0, 0, 1, 1], [], []>} : vector<384x128xbf16>, vector<128x128xbf16>, vector<384x128xf32> -> vector<384x128xf32>
    %c0_102 = arith.constant 0 : index
    %c0_103 = arith.constant 0 : index
    %138 = vector.load %arg6[%c0_102, %c0_103] : memref<1x128xf32, #tpu.memory_space<vmem>>, vector<1x128xf32>
    %139 = vector.broadcast %138 : vector<1x128xf32> to vector<384x128xf32>
    %140 = arith.addf %134, %139 : vector<384x128xf32>
    %141 = arith.addf %140, %137 : vector<384x128xf32>
    %c0_104 = arith.constant 0 : index
    %c0_105 = arith.constant 0 : index
    %142 = vector.load %arg8[%c0_104, %c0_105] : memref<1x128xf32, #tpu.memory_space<vmem>>, vector<1x128xf32>
    %143 = vector.broadcast %142 : vector<1x128xf32> to vector<384x128xf32>
    %144 = arith.addf %141, %143 : vector<384x128xf32>
    %cst_106 = arith.constant 0.000000e+00 : f32
    %145 = vector.broadcast %cst_106 : f32 to vector<384x128xf32>
    %146 = arith.maximumf %144, %145 : vector<384x128xf32>
    %147 = arith.truncf %146 : vector<384x128xf32> to vector<384x128xbf16>
    %c0_107 = arith.constant 0 : index
    %c0_108 = arith.constant 0 : index
    %c0_109 = arith.constant 0 : index
    %148 = vector.load %arg10[%c0_107, %c0_108, %c0_109] : memref<1x384x128xbf16, #tpu.memory_space<vmem>>, vector<1x384x128xbf16>
    %149 = vector.shape_cast %148 : vector<1x384x128xbf16> to vector<384x128xbf16>
    %150 = vector.shape_cast %147 : vector<384x128xbf16> to vector<1x384x128xbf16>
    tpu.vector_store %arg10[%c0_107, %c0_108, %c0_109], %150 {strides = array<i32>} : memref<1x384x128xbf16, #tpu.memory_space<vmem>>, vector<1x384x128xbf16>,
    return
  }
  func.func @transform_0(%arg0: i32, %arg1: i32) -> (i32, i32, i32) {
    %c0_i32 = arith.constant 0 : i32
    %c0_i32_0 = arith.constant 0 : i32
    %c0_i32_1 = arith.constant 0 : i32
    return %arg1, %c0_i32, %c0_i32_0 : i32, i32, i32
  }
  func.func @transform_1(%arg0: i32, %arg1: i32) -> (i32, i32, i32) {
    %c0_i32 = arith.constant 0 : i32
    %c0_i32_0 = arith.constant 0 : i32
    %c0_i32_1 = arith.constant 0 : i32
    %c0_i32_2 = arith.constant 0 : i32
    return %c0_i32, %c0_i32_0, %c0_i32_1 : i32, i32, i32
  }
  func.func @transform_2(%arg0: i32, %arg1: i32) -> (i32, i32) {
    %c0_i32 = arith.constant 0 : i32
    %c0_i32_0 = arith.constant 0 : i32
    %c0_i32_1 = arith.constant 0 : i32
    return %c0_i32, %c0_i32_0 : i32, i32
  }
  func.func @transform_3(%arg0: i32, %arg1: i32) -> (i32, i32, i32) {
    %c0_i32 = arith.constant 0 : i32
    %c0_i32_0 = arith.constant 0 : i32
    %c0_i32_1 = arith.constant 0 : i32
    %c0_i32_2 = arith.constant 0 : i32
    return %c0_i32, %c0_i32_0, %c0_i32_1 : i32, i32, i32
  }
  func.func @transform_4(%arg0: i32, %arg1: i32) -> (i32, i32) {
    %c0_i32 = arith.constant 0 : i32
    %c0_i32_0 = arith.constant 0 : i32
    %c0_i32_1 = arith.constant 0 : i32
    return %c0_i32, %c0_i32_0 : i32, i32
  }
  func.func @transform_5(%arg0: i32, %arg1: i32) -> (i32, i32) {
    %c0_i32 = arith.constant 0 : i32
    %c0_i32_0 = arith.constant 0 : i32
    %c0_i32_1 = arith.constant 0 : i32
    return %c0_i32, %c0_i32_0 : i32, i32
  }
  func.func @transform_6(%arg0: i32, %arg1: i32) -> (i32, i32) {
    %c0_i32 = arith.constant 0 : i32
    %c0_i32_0 = arith.constant 0 : i32
    %c0_i32_1 = arith.constant 0 : i32
    return %c0_i32, %c0_i32_0 : i32, i32
  }
  func.func @transform_8(%arg0: i32, %arg1: i32) -> (i32, i32, i32) {
    %c0_i32 = arith.constant 0 : i32
    %c0_i32_0 = arith.constant 0 : i32
    return %arg0, %arg1, %c0_i32 : i32, i32, i32
  }
}

</mosaic_0001>

<llo_original>
// kernel: basic_block_forward.1
$region0: #{basic_block_forward.1}
  #allocation0 [shape = 'u32[]', space=smem, size = 0x4, offset = 0x4, fixed_abs, tag = 'smem constant byte address 0x4 - core index']
  #allocation1 [shape = 'u32[72,128]{1,0:T(1,128)}', space=vmem, size = 0x9000, scoped, tag = 'internal scratch']
  #allocation2 [shape = 'bf16[2,504,128]{2,1,0:T(8,128)(2,1)}', space=vmem, size = 0x3f000, scoped, tag = 'scratch operand']
  #allocation3 [shape = 's32[2]{0}', space=sflag, size = 0x8, scoped, tag = 'scratch operand']
  #allocation4 [shape = 'bf16[464,128]{1,0:T(8,128)(2,1)}', space=vmem, size = 0x1d000, scoped, tag = 'scratch operand']
  #allocation5 [shape = 's32[]', space=sflag, size = 0x4, offset = 0, fixed_abs, tag = 'sflag constant byte address 0x0 - dummy sync flag']
  #allocation6 [shape = 's32[]', space=sflag, size = 0x4, offset = 0, fixed_abs, tag = 'sflag constant byte address 0x0 - dummy sync flag']
  %s0 = inlined_call_operand.vmem [shape: f32[1,432,1], index: 0, kind: input, shape index: {}]
  %s1 = inlined_call_operand.vmem [shape: bf16[9,128,128], index: 1, kind: input, shape index: {}]
  %s2 = inlined_call_operand.vmem [shape: f32[1,128], index: 2, kind: input, shape index: {}]
  %s3 = inlined_call_operand.vmem [shape: bf16[9,128,128], index: 3, kind: input, shape index: {}]
  %s4 = inlined_call_operand.vmem [shape: f32[1,128], index: 4, kind: input, shape index: {}]
  %s5 = inlined_call_operand.vmem [shape: bf16[128,128], index: 5, kind: input, shape index: {}]
  %s6 = inlined_call_operand.vmem [shape: f32[1,128], index: 6, kind: input, shape index: {}]
  %s7 = inlined_call_operand.vmem [shape: bf16[2,520,128], index: 7, kind: input, shape index: {}]
  %s8 = inlined_call_operand.vmem [shape: bf16[2,384,128], index: 8, kind: output, shape index: {}]
  %s9 = sld [smem:[#allocation0]]
  $region113: #{basic_block_forward.1} parent=0
    _
  %s11 = ssub.s32 1, %s9
  %s12 = scalar_select 0, %s11, %s9
  loop: start=0, step=1, limit=4
  $region2: #{basic_block_forward.1} parent=0 // loop_pre_header
    _
  $region3: #{basic_block_forward.1} parent=0 // loop_header
    %s14 = sphi 0, %s18
    %p15 = scmp.ge.s32.totalorder %s14, 4
    %s21 = sphi 0, %s33
    %s22 = sphi 0, %s29
    %s23 = sphi 0, %s21
    %s24 = sphi 0, %s22
    %s25 = sphi 0, %s23
    %s26 = sphi 0, %s24
    %s36 = sphi 0, %s38
    %s39 = sphi 0, %s36
    %s40 = sphi 0, %s39
    %s56 = sphi 0, %s40
    %s60 = sphi 0, %s60
    %s62 = sphi 0, %s60
    %s63 = sphi 0, %s62
    %s77 = sphi 0, %s63
    %s81 = sphi 0, %s81
    %s83 = sphi 0, %s81
    %s84 = sphi 0, %s83
    %s98 = sphi 0, %s84
    %s102 = sphi 0, %s102
    %s104 = sphi 0, %s102
    %s105 = sphi 0, %s104
    %s119 = sphi 0, %s105
    %s123 = sphi 0, %s123
    %s125 = sphi 0, %s123
    %s126 = sphi 0, %s125
    %s140 = sphi 0, %s126
    %s144 = sphi 0, %s144
    %s146 = sphi 0, %s144
    %s147 = sphi 0, %s146
    %s161 = sphi 0, %s147
    %s165 = sphi 0, %s165
    %s167 = sphi 0, %s165
    %s168 = sphi 0, %s167
    %s182 = sphi 0, %s168
    %s190 = sphi 0, %s192
    %s193 = sphi 0, %s190
    %s194 = sphi 0, %s193
    %s210 = sphi 0, %s194
  $region4: #{basic_block_forward.1} parent=0 // loop_header_branch
    %17 = sbr.rel (%p15) target = $region8
  $region5: #{basic_block_forward.1} parent=0 // loop_body
    %s19 = ssub.s32 %s14, 1
    %s20 = ssub.s32 %s14, 2
    %s27 = sadd.s32 1, %s22
    %p28 = scmp.ge.s32.totalorder %s27, 1
    %s29 = scalar_select %p28, 0, %s27
    %s30 = sadd.s32 1, %s21
    %s31 = scalar_select %p28, %s30, %s21
    %p32 = scmp.ge.s32.totalorder %s31, 2
    %s33 = scalar_select %p32, 0, %s31
    %s34 = ssub.s32 %s22, %s29
    %p35 = scmp.eq.s32.totalorder %s34, 0
    %s37 = sadd.s32 %s36, 1
    %s38 = scalar_select %p35, %s36, %s37
    %p41 = pneg %p35
    %p42 = scmp.eq.s32.totalorder %s14, 1
    %p43 = por %p41, %p42
    %p44 = scmp.ne.s32.totalorder %s36, %s39
    %p45 = scmp.eq.s32.totalorder %s14, 0
    %p46 = por %p44, %p45
    %p47 = scmp.ne.s32.totalorder %s36, %s39
    %p48 = scmp.eq.s32.totalorder %s19, 1
    %p49 = por %p47, %p48
    %p50 = scmp.ne.s32.totalorder %s39, %s40
    %p51 = scmp.eq.s32.totalorder %s19, 0
    %p52 = por %p50, %p51
    %p53 = scmp.ne.s32.totalorder %s39, %s40
    %p54 = scmp.eq.s32.totalorder %s20, 1
    %p55 = por %p53, %p54
    %p57 = scmp.ne.s32.totalorder %s40, %s56
    %p58 = scmp.eq.s32.totalorder %s20, 0
    %p59 = por %p57, %p58
    %s61 = sadd.s32 %s60, 1
    %p64 = scmp.eq.s32.totalorder %s14, 1
    %p65 = scmp.ne.s32.totalorder %s60, %s62
    %p66 = scmp.eq.s32.totalorder %s14, 0
    %p67 = por %p65, %p66
    %p68 = scmp.ne.s32.totalorder %s60, %s62
    %p69 = scmp.eq.s32.totalorder %s19, 1
    %p70 = por %p68, %p69
    %p71 = scmp.ne.s32.totalorder %s62, %s63
    %p72 = scmp.eq.s32.totalorder %s19, 0
    %p73 = por %p71, %p72
    %p74 = scmp.ne.s32.totalorder %s62, %s63
    %p75 = scmp.eq.s32.totalorder %s20, 1
    %p76 = por %p74, %p75
    %p78 = scmp.ne.s32.totalorder %s63, %s77
    %p79 = scmp.eq.s32.totalorder %s20, 0
    %p80 = por %p78, %p79
    %s82 = sadd.s32 %s81, 1
    %p85 = scmp.eq.s32.totalorder %s14, 1
    %p86 = scmp.ne.s32.totalorder %s81, %s83
    %p87 = scmp.eq.s32.totalorder %s14, 0
    %p88 = por %p86, %p87
    %p89 = scmp.ne.s32.totalorder %s81, %s83
    %p90 = scmp.eq.s32.totalorder %s19, 1
    %p91 = por %p89, %p90
    %p92 = scmp.ne.s32.totalorder %s83, %s84
    %p93 = scmp.eq.s32.totalorder %s19, 0
    %p94 = por %p92, %p93
    %p95 = scmp.ne.s32.totalorder %s83, %s84
    %p96 = scmp.eq.s32.totalorder %s20, 1
    %p97 = por %p95, %p96
    %p99 = scmp.ne.s32.totalorder %s84, %s98
    %p100 = scmp.eq.s32.totalorder %s20, 0
    %p101 = por %p99, %p100
    %s103 = sadd.s32 %s102, 1
    %p106 = scmp.eq.s32.totalorder %s14, 1
    %p107 = scmp.ne.s32.totalorder %s102, %s104
    %p108 = scmp.eq.s32.totalorder %s14, 0
    %p109 = por %p107, %p108
    %p110 = scmp.ne.s32.totalorder %s102, %s104
    %p111 = scmp.eq.s32.totalorder %s19, 1
    %p112 = por %p110, %p111
    %p113 = scmp.ne.s32.totalorder %s104, %s105
    %p114 = scmp.eq.s32.totalorder %s19, 0
    %p115 = por %p113, %p114
    %p116 = scmp.ne.s32.totalorder %s104, %s105
    %p117 = scmp.eq.s32.totalorder %s20, 1
    %p118 = por %p116, %p117
    %p120 = scmp.ne.s32.totalorder %s105, %s119
    %p121 = scmp.eq.s32.totalorder %s20, 0
    %p122 = por %p120, %p121
    %s124 = sadd.s32 %s123, 1
    %p127 = scmp.eq.s32.totalorder %s14, 1
    %p128 = scmp.ne.s32.totalorder %s123, %s125
    %p129 = scmp.eq.s32.totalorder %s14, 0
    %p130 = por %p128, %p129
    %p131 = scmp.ne.s32.totalorder %s123, %s125
    %p132 = scmp.eq.s32.totalorder %s19, 1
    %p133 = por %p131, %p132
    %p134 = scmp.ne.s32.totalorder %s125, %s126
    %p135 = scmp.eq.s32.totalorder %s19, 0
    %p136 = por %p134, %p135
    %p137 = scmp.ne.s32.totalorder %s125, %s126
    %p138 = scmp.eq.s32.totalorder %s20, 1
    %p139 = por %p137, %p138
    %p141 = scmp.ne.s32.totalorder %s126, %s140
    %p142 = scmp.eq.s32.totalorder %s20, 0
    %p143 = por %p141, %p142
    %s145 = sadd.s32 %s144, 1
    %p148 = scmp.eq.s32.totalorder %s14, 1
    %p149 = scmp.ne.s32.totalorder %s144, %s146
    %p150 = scmp.eq.s32.totalorder %s14, 0
    %p151 = por %p149, %p150
    %p152 = scmp.ne.s32.totalorder %s144, %s146
    %p153 = scmp.eq.s32.totalorder %s19, 1
    %p154 = por %p152, %p153
    %p155 = scmp.ne.s32.totalorder %s146, %s147
    %p156 = scmp.eq.s32.totalorder %s19, 0
    %p157 = por %p155, %p156
    %p158 = scmp.ne.s32.totalorder %s146, %s147
    %p159 = scmp.eq.s32.totalorder %s20, 1
    %p160 = por %p158, %p159
    %p162 = scmp.ne.s32.totalorder %s147, %s161
    %p163 = scmp.eq.s32.totalorder %s20, 0
    %p164 = por %p162, %p163
    %s166 = sadd.s32 %s165, 1
    %p169 = scmp.eq.s32.totalorder %s14, 1
    %p170 = scmp.ne.s32.totalorder %s165, %s167
    %p171 = scmp.eq.s32.totalorder %s14, 0
    %p172 = por %p170, %p171
    %p173 = scmp.ne.s32.totalorder %s165, %s167
    %p174 = scmp.eq.s32.totalorder %s19, 1
    %p175 = por %p173, %p174
    %p176 = scmp.ne.s32.totalorder %s167, %s168
    %p177 = scmp.eq.s32.totalorder %s19, 0
    %p178 = por %p176, %p177
    %p179 = scmp.ne.s32.totalorder %s167, %s168
    %p180 = scmp.eq.s32.totalorder %s20, 1
    %p181 = por %p179, %p180
    %p183 = scmp.ne.s32.totalorder %s168, %s182
    %p184 = scmp.eq.s32.totalorder %s20, 0
    %p185 = por %p183, %p184
    %s186 = ssub.s32 %s21, %s33
    %s187 = ssub.s32 %s22, %s29
    %s188 = sor.u32 %s186, %s187
    %p189 = scmp.eq.s32.totalorder %s188, 0
    %s191 = sadd.s32 %s190, 1
    %s192 = scalar_select %p189, %s190, %s191
    %p195 = pneg %p189
    %p196 = scmp.eq.s32.totalorder %s14, 1
    %p197 = por %p195, %p196
    %p198 = scmp.ne.s32.totalorder %s190, %s193
    %p199 = scmp.eq.s32.totalorder %s14, 0
    %p200 = por %p198, %p199
    %p201 = scmp.ne.s32.totalorder %s190, %s193
    %p202 = scmp.eq.s32.totalorder %s19, 1
    %p203 = por %p201, %p202
    %p204 = scmp.ne.s32.totalorder %s193, %s194
    %p205 = scmp.eq.s32.totalorder %s19, 0
    %p206 = por %p204, %p205
    %p207 = scmp.ne.s32.totalorder %s193, %s194
    %p208 = scmp.eq.s32.totalorder %s20, 1
    %p209 = por %p207, %p208
    %p211 = scmp.ne.s32.totalorder %s194, %s210
    %p212 = scmp.eq.s32.totalorder %s20, 0
    %p213 = por %p211, %p212
    %p214 = scmp.le.s32.totalorder 1, %s14
    %p215 = scmp.lt.s32.totalorder %s14, 3
    %p216 = pnand %p214, %p215
    %p217 = pneg %p216
    // Predicated region
    $region9: #{basic_block_forward.1} parent=5 // pred_check
      _
    $region10: #{basic_block_forward.1} parent=5 // pred_check_branch
      %219 = sbr.rel (%p216) target = $region12
    $region11: #{basic_block_forward.1} parent=5 // pred_region
      %s220 = ssub.s32 %s14, 1
      // Predicated region
      $region13: #{basic_block_forward.1} parent=11 // pred_check
        %p221 = pneg %p52
      $region14: #{basic_block_forward.1} parent=11 // pred_check_branch
        %223 = sbr.rel (%p221) target = $region16
      $region15: #{basic_block_forward.1} parent=11 // pred_region
        %p224 = scmp.lt.s32.totalorder %s24, 0
        %s225 = scalar_select %p224, %s24, 0
        %s226 = smul.addr %s225, 54
        %s227 = smul.addr %s226, 8
        %s228 = scalar_lea.vmem %s0, %s227
      $region16: #{basic_block_forward.1} parent=11 // pred_fallthru
        _
      // Predicated region
      $region17: #{basic_block_forward.1} parent=11 // pred_check
        %p229 = pneg %p73
      $region18: #{basic_block_forward.1} parent=11 // pred_check_branch
        %231 = sbr.rel (%p229) target = $region20
      $region19: #{basic_block_forward.1} parent=11 // pred_region
        _
      $region20: #{basic_block_forward.1} parent=11 // pred_fallthru
        _
      // Predicated region
      $region21: #{basic_block_forward.1} parent=11 // pred_check
        %p232 = pneg %p94
      $region22: #{basic_block_forward.1} parent=11 // pred_check_branch
        %234 = sbr.rel (%p232) target = $region24
      $region23: #{basic_block_forward.1} parent=11 // pred_region
        _
      $region24: #{basic_block_forward.1} parent=11 // pred_fallthru
        _
      // Predicated region
      $region25: #{basic_block_forward.1} parent=11 // pred_check
        %p235 = pneg %p115
      $region26: #{basic_block_forward.1} parent=11 // pred_check_branch
        %237 = sbr.rel (%p235) target = $region28
      $region27: #{basic_block_forward.1} parent=11 // pred_region
        _
      $region28: #{basic_block_forward.1} parent=11 // pred_fallthru
        _
      // Predicated region
      $region29: #{basic_block_forward.1} parent=11 // pred_check
        %p238 = pneg %p136
      $region30: #{basic_block_forward.1} parent=11 // pred_check_branch
        %240 = sbr.rel (%p238) target = $region32
      $region31: #{basic_block_forward.1} parent=11 // pred_region
        _
      $region32: #{basic_block_forward.1} parent=11 // pred_fallthru
        _
      // Predicated region
      $region33: #{basic_block_forward.1} parent=11 // pred_check
        %p241 = pneg %p157
      $region34: #{basic_block_forward.1} parent=11 // pred_check_branch
        %243 = sbr.rel (%p241) target = $region36
      $region35: #{basic_block_forward.1} parent=11 // pred_region
        _
      $region36: #{basic_block_forward.1} parent=11 // pred_fallthru
        _
      // Predicated region
      $region37: #{basic_block_forward.1} parent=11 // pred_check
        %p244 = pneg %p178
      $region38: #{basic_block_forward.1} parent=11 // pred_check_branch
        %246 = sbr.rel (%p244) target = $region40
      $region39: #{basic_block_forward.1} parent=11 // pred_region
        _
      $region40: #{basic_block_forward.1} parent=11 // pred_fallthru
        _
    $region12: #{basic_block_forward.1} parent=5 // pred_fallthru
      _
    %p247 = scmp.lt.s32.totalorder %s14, 2
    // Predicated region
    $region41: #{basic_block_forward.1} parent=5 // pred_check
      %p248 = pneg %p247
    $region42: #{basic_block_forward.1} parent=5 // pred_check_branch
      %250 = sbr.rel (%p248) target = $region44
    $region43: #{basic_block_forward.1} parent=5 // pred_region
      _
    $region44: #{basic_block_forward.1} parent=5 // pred_fallthru
      _
    %p251 = scmp.le.s32.totalorder 1, %s14
    %p252 = scmp.lt.s32.totalorder %s14, 3
    %p253 = pnand %p251, %p252
    %p254 = pneg %p253
    // Predicated region
    $region45: #{basic_block_forward.1} parent=5 // pred_check
      _
    $region46: #{basic_block_forward.1} parent=5 // pred_check_branch
      %256 = sbr.rel (%p253) target = $region48
    $region47: #{basic_block_forward.1} parent=5 // pred_region
      %s257 = ssub.s32 %s14, 1
      %p258 = scmp.lt.s32.totalorder %s24, 0
      %s259 = scalar_select %p258, %s24, 0
      %s260 = smul.addr %s259, 54
      %s261 = smul.addr %s260, 8
      %s262 = scalar_lea.vmem %s0, %s261
      %p263 = pneg %p52
      %p264 = pneg %p49
      %p265 = pneg %p73
      %p266 = pneg %p70
      %p267 = pneg %p94
      %p268 = pneg %p91
      %p269 = pneg %p115
      %p270 = pneg %p112
      %p271 = pneg %p136
      %p272 = pneg %p133
      %p273 = pneg %p157
      %p274 = pneg %p154
      %p275 = pneg %p178
      %p276 = pneg %p175
      %p277 = pneg %p206
      %p278 = pneg %p203
      %s279 = smul.u32 48, %s24
      %p280 = scmp.lt.s32.totalorder %s23, 1
      %s281 = scalar_select %p280, %s23, 1
      %p282 = scmp.lt.s32.totalorder %s279, 47
      %s283 = scalar_select %p282, %s279, 47
      %s284 = smul.addr %s281, 48
      %s285 = sadd.s32 %s283, %s284
      %s286 = smul.addr %s285, 4
      %s287 = scalar_lea.vmem %s8, %s286
      %p288 = scmp.lt.s32.totalorder %s24, 0
      %s289 = scalar_select %p288, %s24, 0
      %s290 = smul.addr %s289, 54
      %s291 = smul.addr %s290, 8
      %s292 = scalar_lea.vmem %s0, %s291
      %s293 = smul.u32 48, %s24
      %p294 = scmp.lt.s32.totalorder %s23, 1
      %s295 = scalar_select %p294, %s23, 1
      %p296 = scmp.lt.s32.totalorder %s293, 47
      %s297 = scalar_select %p296, %s293, 47
      %s298 = smul.addr %s295, 48
      %s299 = sadd.s32 %s297, %s298
      %s300 = smul.addr %s299, 4
      %s301 = scalar_lea.vmem %s8, %s300
      %s302 = smul.u32 48, %s24
      %p304 = scmp.eq.s32.totalorder %s24, 0
      // Predicated region
      $region49: #{basic_block_forward.1} parent=47 // pred_check
        %p305 = pneg %p304
      $region50: #{basic_block_forward.1} parent=47 // pred_check_branch
        %307 = sbr.rel (%p305) target = $region52
      $region51: #{basic_block_forward.1} parent=47 // pred_region
        %s308 = smul.u32 %s23, 65
        %s309 = sadd.s32 0, %s308
        %s310 = smul.addr %s309, 4
        %s311 = scalar_lea.vmem %s7, %s310
        // Predicated region
        $region53: #{basic_block_forward.1} parent=51 // pred_check
          _
        $region54: #{basic_block_forward.1} parent=51 // pred_check_branch
          %313 = sbr.rel (0) target = $region56
        $region55: #{basic_block_forward.1} parent=51 // pred_region
          %s314 = scalar_lea.vmem %s311, 248
          %s315 = scalar_lea.vmem [#allocation2], 248
          loop: start=0, step=1, limit=1
          $region57: #{basic_block_forward.1} parent=55 // loop_pre_header
            _
          $region58: #{basic_block_forward.1} parent=55 // loop_header
            %s317 = sphi 0, %s321
            %p318 = scmp.ge.s32.totalorder %s317, 1
            %s322 = sphi %s311, %s311
            %s323 = sphi [#allocation2], [#allocation2]
          $region59: #{basic_block_forward.1} parent=55 // loop_header_branch
            %320 = sbr.rel (%p318) target = $region63
          $region60: #{basic_block_forward.1} parent=55 // loop_body
            %v324 = vld [vmem:[%s322] sm:$0xff]
            %325 = vst [vmem:[%s323] sm:$0xff] %v324
            %v326 = vld [vmem:[%s322 + $0x8] sm:$0xff]
            %327 = vst [vmem:[%s323 + $0x8] sm:$0xff] %v326
            %v328 = vld [vmem:[%s322 + $0x10] sm:$0xff]
            %329 = vst [vmem:[%s323 + $0x10] sm:$0xff] %v328
            %v330 = vld [vmem:[%s322 + $0x18] sm:$0xff]
            %331 = vst [vmem:[%s323 + $0x18] sm:$0xff] %v330
            %v332 = vld [vmem:[%s322 + $0x20] sm:$0xff]
            %333 = vst [vmem:[%s323 + $0x20] sm:$0xff] %v332
            %v334 = vld [vmem:[%s322 + $0x28] sm:$0xff]
            %335 = vst [vmem:[%s323 + $0x28] sm:$0xff] %v334
            %v336 = vld [vmem:[%s322 + $0x30] sm:$0xff]
            %337 = vst [vmem:[%s323 + $0x30] sm:$0xff] %v336
            %v338 = vld [vmem:[%s322 + $0x38] sm:$0xff]
            %339 = vst [vmem:[%s323 + $0x38] sm:$0xff] %v338
            %v340 = vld [vmem:[%s322 + $0x40] sm:$0xff]
            %341 = vst [vmem:[%s323 + $0x40] sm:$0xff] %v340
            %v342 = vld [vmem:[%s322 + $0x48] sm:$0xff]
            %343 = vst [vmem:[%s323 + $0x48] sm:$0xff] %v342
            %v344 = vld [vmem:[%s322 + $0x50] sm:$0xff]
            %345 = vst [vmem:[%s323 + $0x50] sm:$0xff] %v344
            %v346 = vld [vmem:[%s322 + $0x58] sm:$0xff]
            %347 = vst [vmem:[%s323 + $0x58] sm:$0xff] %v346
            %v348 = vld [vmem:[%s322 + $0x60] sm:$0xff]
            %349 = vst [vmem:[%s323 + $0x60] sm:$0xff] %v348
            %v350 = vld [vmem:[%s322 + $0x68] sm:$0xff]
            %351 = vst [vmem:[%s323 + $0x68] sm:$0xff] %v350
            %v352 = vld [vmem:[%s322 + $0x70] sm:$0xff]
            %353 = vst [vmem:[%s323 + $0x70] sm:$0xff] %v352
            %v354 = vld [vmem:[%s322 + $0x78] sm:$0xff]
            %355 = vst [vmem:[%s323 + $0x78] sm:$0xff] %v354
            %v356 = vld [vmem:[%s322 + $0x80] sm:$0xff]
            %357 = vst [vmem:[%s323 + $0x80] sm:$0xff] %v356
            %v358 = vld [vmem:[%s322 + $0x88] sm:$0xff]
            %359 = vst [vmem:[%s323 + $0x88] sm:$0xff] %v358
            %v360 = vld [vmem:[%s322 + $0x90] sm:$0xff]
            %361 = vst [vmem:[%s323 + $0x90] sm:$0xff] %v360
            %v362 = vld [vmem:[%s322 + $0x98] sm:$0xff]
            %363 = vst [vmem:[%s323 + $0x98] sm:$0xff] %v362
            %v364 = vld [vmem:[%s322 + $0xa0] sm:$0xff]
            %365 = vst [vmem:[%s323 + $0xa0] sm:$0xff] %v364
            %v366 = vld [vmem:[%s322 + $0xa8] sm:$0xff]
            %367 = vst [vmem:[%s323 + $0xa8] sm:$0xff] %v366
            %v368 = vld [vmem:[%s322 + $0xb0] sm:$0xff]
            %369 = vst [vmem:[%s323 + $0xb0] sm:$0xff] %v368
            %v370 = vld [vmem:[%s322 + $0xb8] sm:$0xff]
            %371 = vst [vmem:[%s323 + $0xb8] sm:$0xff] %v370
            %v372 = vld [vmem:[%s322 + $0xc0] sm:$0xff]
            %373 = vst [vmem:[%s323 + $0xc0] sm:$0xff] %v372
            %v374 = vld [vmem:[%s322 + $0xc8] sm:$0xff]
            %375 = vst [vmem:[%s323 + $0xc8] sm:$0xff] %v374
            %v376 = vld [vmem:[%s322 + $0xd0] sm:$0xff]
            %377 = vst [vmem:[%s323 + $0xd0] sm:$0xff] %v376
            %v378 = vld [vmem:[%s322 + $0xd8] sm:$0xff]
            %379 = vst [vmem:[%s323 + $0xd8] sm:$0xff] %v378
            %v380 = vld [vmem:[%s322 + $0xe0] sm:$0xff]
            %381 = vst [vmem:[%s323 + $0xe0] sm:$0xff] %v380
            %v382 = vld [vmem:[%s322 + $0xe8] sm:$0xff]
            %383 = vst [vmem:[%s323 + $0xe8] sm:$0xff] %v382
            %v384 = vld [vmem:[%s322 + $0xf0] sm:$0xff]
            %385 = vst [vmem:[%s323 + $0xf0] sm:$0xff] %v384
          $region61: #{basic_block_forward.1} parent=55 // loop_footer
            %s321 = sadd.s32 1, %s317
          $region62: #{basic_block_forward.1} parent=55 // loop_footer_branch
            %316 = sbr.rel target = $region58
          $region63: #{basic_block_forward.1} parent=55 // loop_exit
            _
          %s387 = ssub.s32 16, 1
          loop: start=0, step=1, limit=1
          $region64: #{basic_block_forward.1} parent=55 // loop_pre_header
            _
          $region65: #{basic_block_forward.1} parent=55 // loop_header
            %s389 = sphi 0, %s393
            %p390 = scmp.ge.s32.totalorder %s389, 1
            %s394 = sphi %s314, %s314
            %s395 = sphi %s315, %s315
          $region66: #{basic_block_forward.1} parent=55 // loop_header_branch
            %392 = sbr.rel (%p390) target = $region70
          $region67: #{basic_block_forward.1} parent=55 // loop_body
            %v396 = vld [vmem:[%s394] sm:%s387]
            %397 = vst [vmem:[%s395] sm:%s387] %v396
          $region68: #{basic_block_forward.1} parent=55 // loop_footer
            %s393 = sadd.s32 1, %s389
          $region69: #{basic_block_forward.1} parent=55 // loop_footer_branch
            %388 = sbr.rel target = $region65
          $region70: #{basic_block_forward.1} parent=55 // loop_exit
            _
        $region56: #{basic_block_forward.1} parent=51 // pred_fallthru
          _
        // Predicated region
        $region71: #{basic_block_forward.1} parent=51 // pred_check
          _
        $region72: #{basic_block_forward.1} parent=51 // pred_check_branch
          %400 = sbr.rel (0) target = $region74
        $region73: #{basic_block_forward.1} parent=51 // pred_region
          %401 = vsyncadd [#allocation3], 4032
        $region74: #{basic_block_forward.1} parent=51 // pred_fallthru
          _
      $region52: #{basic_block_forward.1} parent=47 // pred_fallthru
        _
      %s402 = sadd.s32 %s24, 1
      %p403 = scmp.lt.s32.totalorder %s402, 1
      // Predicated region
      $region75: #{basic_block_forward.1} parent=47 // pred_check
        %p404 = pneg %p403
      $region76: #{basic_block_forward.1} parent=47 // pred_check_branch
        %406 = sbr.rel (%p404) target = $region78
      $region77: #{basic_block_forward.1} parent=47 // pred_region
        %p407 = scmp.lt.s32.totalorder %s402, 0
        %s408 = ssub.s32 0, %s402
        %s409 = scalar_select %p407, %s408, %s402
        %s410 = sand.u32 %s409, 1
        %s411 = ssub.s32 0, %s410
        %s412 = scalar_select %p407, %s411, %s410
        %p413 = scmp.ne.s32.totalorder %s412, 0
        %p414 = scmp.lt.s32.totalorder %s412, 0
        %p415 = pnand %p414, %p413
        %p416 = pneg %p415
        %s417 = sadd.s32 %s412, 2
        %s418 = scalar_select %p416, %s417, %s412
        %s419 = smul.u32 %s402, 384
        %s420 = sshra.s32 %s419, 3
        %s421 = sand.u32 %s419, 7
        %s422 = smul.u32 %s23, 65
        %s423 = sadd.s32 %s420, %s422
        %s424 = smul.addr %s423, 4
        %s425 = scalar_lea.vmem %s7, %s424
        %s426 = smul.u32 %s418, 63
        %s427 = smul.addr %s426, 4
        %s428 = scalar_lea.vmem [#allocation2], %s427
        %s429 = scalar_lea.sflag [#allocation3], %s418
        // Predicated region
        $region79: #{basic_block_forward.1} parent=77 // pred_check
          _
        $region80: #{basic_block_forward.1} parent=77 // pred_check_branch
          %431 = sbr.rel (0) target = $region82
        $region81: #{basic_block_forward.1} parent=77 // pred_region
          %s432 = scalar_lea.vmem %s425, 248
          %s433 = scalar_lea.vmem %s428, 248 [#allocation2]
          loop: start=0, step=1, limit=1
          $region83: #{basic_block_forward.1} parent=81 // loop_pre_header
            _
          $region84: #{basic_block_forward.1} parent=81 // loop_header
            %s435 = sphi 0, %s439
            %p436 = scmp.ge.s32.totalorder %s435, 1
            %s440 = sphi %s425, %s425
            %s441 = sphi %s428, %s428
          $region85: #{basic_block_forward.1} parent=81 // loop_header_branch
            %438 = sbr.rel (%p436) target = $region89
          $region86: #{basic_block_forward.1} parent=81 // loop_body
            %v442 = vld [vmem:[%s440] sm:$0xff]
            %443 = vst [vmem:[%s441] sm:$0xff] %v442
            %v444 = vld [vmem:[%s440 + $0x8] sm:$0xff]
            %445 = vst [vmem:[%s441 + $0x8] sm:$0xff] %v444
            %v446 = vld [vmem:[%s440 + $0x10] sm:$0xff]
            %447 = vst [vmem:[%s441 + $0x10] sm:$0xff] %v446
            %v448 = vld [vmem:[%s440 + $0x18] sm:$0xff]
            %449 = vst [vmem:[%s441 + $0x18] sm:$0xff] %v448
            %v450 = vld [vmem:[%s440 + $0x20] sm:$0xff]
            %451 = vst [vmem:[%s441 + $0x20] sm:$0xff] %v450
            %v452 = vld [vmem:[%s440 + $0x28] sm:$0xff]
            %453 = vst [vmem:[%s441 + $0x28] sm:$0xff] %v452
            %v454 = vld [vmem:[%s440 + $0x30] sm:$0xff]
            %455 = vst [vmem:[%s441 + $0x30] sm:$0xff] %v454
            %v456 = vld [vmem:[%s440 + $0x38] sm:$0xff]
            %457 = vst [vmem:[%s441 + $0x38] sm:$0xff] %v456
            %v458 = vld [vmem:[%s440 + $0x40] sm:$0xff]
            %459 = vst [vmem:[%s441 + $0x40] sm:$0xff] %v458
            %v460 = vld [vmem:[%s440 + $0x48] sm:$0xff]
            %461 = vst [vmem:[%s441 + $0x48] sm:$0xff] %v460
            %v462 = vld [vmem:[%s440 + $0x50] sm:$0xff]
            %463 = vst [vmem:[%s441 + $0x50] sm:$0xff] %v462
            %v464 = vld [vmem:[%s440 + $0x58] sm:$0xff]
            %465 = vst [vmem:[%s441 + $0x58] sm:$0xff] %v464
            %v466 = vld [vmem:[%s440 + $0x60] sm:$0xff]
            %467 = vst [vmem:[%s441 + $0x60] sm:$0xff] %v466
            %v468 = vld [vmem:[%s440 + $0x68] sm:$0xff]
            %469 = vst [vmem:[%s441 + $0x68] sm:$0xff] %v468
            %v470 = vld [vmem:[%s440 + $0x70] sm:$0xff]
            %471 = vst [vmem:[%s441 + $0x70] sm:$0xff] %v470
            %v472 = vld [vmem:[%s440 + $0x78] sm:$0xff]
            %473 = vst [vmem:[%s441 + $0x78] sm:$0xff] %v472
            %v474 = vld [vmem:[%s440 + $0x80] sm:$0xff]
            %475 = vst [vmem:[%s441 + $0x80] sm:$0xff] %v474
            %v476 = vld [vmem:[%s440 + $0x88] sm:$0xff]
            %477 = vst [vmem:[%s441 + $0x88] sm:$0xff] %v476
            %v478 = vld [vmem:[%s440 + $0x90] sm:$0xff]
            %479 = vst [vmem:[%s441 + $0x90] sm:$0xff] %v478
            %v480 = vld [vmem:[%s440 + $0x98] sm:$0xff]
            %481 = vst [vmem:[%s441 + $0x98] sm:$0xff] %v480
            %v482 = vld [vmem:[%s440 + $0xa0] sm:$0xff]
            %483 = vst [vmem:[%s441 + $0xa0] sm:$0xff] %v482
            %v484 = vld [vmem:[%s440 + $0xa8] sm:$0xff]
            %485 = vst [vmem:[%s441 + $0xa8] sm:$0xff] %v484
            %v486 = vld [vmem:[%s440 + $0xb0] sm:$0xff]
            %487 = vst [vmem:[%s441 + $0xb0] sm:$0xff] %v486
            %v488 = vld [vmem:[%s440 + $0xb8] sm:$0xff]
            %489 = vst [vmem:[%s441 + $0xb8] sm:$0xff] %v488
            %v490 = vld [vmem:[%s440 + $0xc0] sm:$0xff]
            %491 = vst [vmem:[%s441 + $0xc0] sm:$0xff] %v490
            %v492 = vld [vmem:[%s440 + $0xc8] sm:$0xff]
            %493 = vst [vmem:[%s441 + $0xc8] sm:$0xff] %v492
            %v494 = vld [vmem:[%s440 + $0xd0] sm:$0xff]
            %495 = vst [vmem:[%s441 + $0xd0] sm:$0xff] %v494
            %v496 = vld [vmem:[%s440 + $0xd8] sm:$0xff]
            %497 = vst [vmem:[%s441 + $0xd8] sm:$0xff] %v496
            %v498 = vld [vmem:[%s440 + $0xe0] sm:$0xff]
            %499 = vst [vmem:[%s441 + $0xe0] sm:$0xff] %v498
            %v500 = vld [vmem:[%s440 + $0xe8] sm:$0xff]
            %501 = vst [vmem:[%s441 + $0xe8] sm:$0xff] %v500
            %v502 = vld [vmem:[%s440 + $0xf0] sm:$0xff]
            %503 = vst [vmem:[%s441 + $0xf0] sm:$0xff] %v502
          $region87: #{basic_block_forward.1} parent=81 // loop_footer
            %s439 = sadd.s32 1, %s435
          $region88: #{basic_block_forward.1} parent=81 // loop_footer_branch
            %434 = sbr.rel target = $region84
          $region89: #{basic_block_forward.1} parent=81 // loop_exit
            _
          %s505 = ssub.s32 16, 1
          loop: start=0, step=1, limit=1
          $region90: #{basic_block_forward.1} parent=81 // loop_pre_header
            _
          $region91: #{basic_block_forward.1} parent=81 // loop_header
            %s507 = sphi 0, %s511
            %p508 = scmp.ge.s32.totalorder %s507, 1
            %s512 = sphi %s432, %s432
            %s513 = sphi %s433, %s433
          $region92: #{basic_block_forward.1} parent=81 // loop_header_branch
            %510 = sbr.rel (%p508) target = $region96
          $region93: #{basic_block_forward.1} parent=81 // loop_body
            %v514 = vld [vmem:[%s512] sm:%s505]
            %515 = vst [vmem:[%s513] sm:%s505] %v514
          $region94: #{basic_block_forward.1} parent=81 // loop_footer
            %s511 = sadd.s32 1, %s507
          $region95: #{basic_block_forward.1} parent=81 // loop_footer_branch
            %506 = sbr.rel target = $region91
          $region96: #{basic_block_forward.1} parent=81 // loop_exit
            _
        $region82: #{basic_block_forward.1} parent=77 // pred_fallthru
          _
        // Predicated region
        $region97: #{basic_block_forward.1} parent=77 // pred_check
          _
        $region98: #{basic_block_forward.1} parent=77 // pred_check_branch
          %518 = sbr.rel (0) target = $region100
        $region99: #{basic_block_forward.1} parent=77 // pred_region
          %519 = vsyncadd %s429, 4032
        $region100: #{basic_block_forward.1} parent=77 // pred_fallthru
          _
      $region78: #{basic_block_forward.1} parent=47 // pred_fallthru
        _
      %p520 = scmp.lt.s32.totalorder %s24, 0
      %s521 = ssub.s32 0, %s24
      %s522 = scalar_select %p520, %s521, %s24
      %s523 = sand.u32 %s522, 1
      %s524 = ssub.s32 0, %s523
      %s525 = scalar_select %p520, %s524, %s523
      %p526 = scmp.ne.s32.totalorder %s525, 0
      %p527 = scmp.lt.s32.totalorder %s525, 0
      %p528 = pnand %p527, %p526
      %p529 = pneg %p528
      %s530 = sadd.s32 %s525, 2
      %s531 = scalar_select %p529, %s530, %s525
      %s532 = smul.u32 %s24, 384
      %s533 = smul.u32 %s531, 63
      %s534 = smul.addr %s533, 4
      %s535 = scalar_lea.vmem [#allocation2], %s534
      %s536 = scalar_lea.sflag [#allocation3], %s531
      %s537 = smul.u32 4, 63
      %s538 = smul.u32 %s537, 1
      %s539 = sshll.u32 %s538, 4
      %540 = dma.done %s536, %s539
      %v541 = vld [vmem:[%s535 + $0x4] sm:$0xf]
      %v542 = vld [vmem:[%s535 + $0x8] sm:$0xf]
      %v543 = vld [vmem:[%s535 + $0xc] sm:$0xf]
      %v544 = vld [vmem:[%s535 + $0x10] sm:$0xf]
      %v545 = vld [vmem:[%s535 + $0x14] sm:$0xf]
      %v546 = vld [vmem:[%s535 + $0x18] sm:$0xf]
      %v547 = vld [vmem:[%s535 + $0x1c] sm:$0xf]
      %v548 = vld [vmem:[%s535 + $0x20] sm:$0xf]
      %v549 = vld [vmem:[%s535 + $0x24] sm:$0xf]
      %v550 = vld [vmem:[%s535 + $0x28] sm:$0xf]
      %v551 = vld [vmem:[%s535 + $0x2c] sm:$0xf]
      %v552 = vld [vmem:[%s535 + $0x30] sm:$0xf]
      %v553 = vld [vmem:[%s535 + $0x34] sm:$0xf]
      %v554 = vld [vmem:[%s535 + $0x38] sm:$0xf]
      %v555 = vld [vmem:[%s535 + $0x3c] sm:$0xf]
      %v556 = vld [vmem:[%s535 + $0x40] sm:$0xf]
      %v557 = vld [vmem:[%s535 + $0x44] sm:$0xf]
      %v558 = vld [vmem:[%s535 + $0x48] sm:$0xf]
      %v559 = vld [vmem:[%s535 + $0x4c] sm:$0xf]
      %v560 = vld [vmem:[%s535 + $0x50] sm:$0xf]
      %v561 = vld [vmem:[%s535 + $0x54] sm:$0xf]
      %v562 = vld [vmem:[%s535 + $0x58] sm:$0xf]
      %v563 = vld [vmem:[%s535 + $0x5c] sm:$0xf]
      %v564 = vld [vmem:[%s535 + $0x60] sm:$0xf]
      %v565 = vld [vmem:[%s535 + $0x64] sm:$0xf]
      %v566 = vld [vmem:[%s535 + $0x68] sm:$0xf]
      %v567 = vld [vmem:[%s535 + $0x6c] sm:$0xf]
      %v568 = vld [vmem:[%s535 + $0x70] sm:$0xf]
      %v569 = vld [vmem:[%s535 + $0x74] sm:$0xf]
      %v570 = vld [vmem:[%s535 + $0x78] sm:$0xf]
      %v571 = vld [vmem:[%s535 + $0x7c] sm:$0xf]
      %v572 = vld [vmem:[%s535 + $0x80] sm:$0xf]
      %v573 = vld [vmem:[%s535 + $0x84] sm:$0xf]
      %v574 = vld [vmem:[%s535 + $0x88] sm:$0xf]
      %v575 = vld [vmem:[%s535 + $0x8c] sm:$0xf]
      %v576 = vld [vmem:[%s535 + $0x90] sm:$0xf]
      %v577 = vld [vmem:[%s535 + $0x94] sm:$0xf]
      %v578 = vld [vmem:[%s535 + $0x98] sm:$0xf]
      %v579 = vld [vmem:[%s535 + $0x9c] sm:$0xf]
      %v580 = vld [vmem:[%s535 + $0xa0] sm:$0xf]
      %v581 = vld [vmem:[%s535 + $0xa4] sm:$0xf]
      %v582 = vld [vmem:[%s535 + $0xa8] sm:$0xf]
      %v583 = vld [vmem:[%s535 + $0xac] sm:$0xf]
      %v584 = vld [vmem:[%s535 + $0xb0] sm:$0xf]
      %v585 = vld [vmem:[%s535 + $0xb4] sm:$0xf]
      %v586 = vld [vmem:[%s535 + $0xb8] sm:$0xf]
      %v587 = vld [vmem:[%s535 + $0xbc] sm:$0xf]
      %v588 = vld [vmem:[%s535 + $0xc0] sm:$0xf]
      %v589 = vld [vmem:[%s535 + $0xc4] sm:$0xf]
      %v590 = vld [vmem:[%s535 + $0xc8] sm:$0xf]
      %v591 = vld [vmem:[%s535 + $0xcc] sm:$0xf]
      %v592 = vld [vmem:[%s535 + $0xd0] sm:$0xf]
      %v593 = vld [vmem:[%s535 + $0xd4] sm:$0xf]
      %v594 = vld [vmem:[%s535 + $0xd8] sm:$0xf]
      %v595 = vld [vmem:[%s535 + $0xdc] sm:$0xf]
      %v596 = vld [vmem:[%s535 + $0xe0] sm:$0xf]
      %v597 = vld [vmem:[%s535 + $0xe4] sm:$0xf]
      %v598 = vld [vmem:[%s535 + $0xe8] sm:$0xf]
      %v599 = vld [vmem:[%s535 + $0xec] sm:$0xf]
      %v600 = vld [vmem:[%s535 + $0xf0] sm:$0xf]
      %v601 = vld [vmem:[%s535 + $0xf4] sm:$0xf]
      %v602 = vld [vmem:[%s535 + $0xf8] sm:$0xf]
      %v603 = vld [vmem:[%s1] sm:$0xf]
      %v604 = vld [vmem:[%s1 + $0x4] sm:$0xf]
      %v605 = vld [vmem:[%s1 + $0x8] sm:$0xf]
      %v606 = vld [vmem:[%s1 + $0xc] sm:$0xf]
      %v607 = vld [vmem:[%s1 + $0x10] sm:$0xf]
      %v608 = vld [vmem:[%s1 + $0x14] sm:$0xf]
      %v609 = vld [vmem:[%s1 + $0x18] sm:$0xf]
      %v610 = vld [vmem:[%s1 + $0x1c] sm:$0xf]
      %v611 = vld [vmem:[%s1 + $0x20] sm:$0xf]
      %v612 = vld [vmem:[%s1 + $0x24] sm:$0xf]
      %v613 = vld [vmem:[%s1 + $0x28] sm:$0xf]
      %v614 = vld [vmem:[%s1 + $0x2c] sm:$0xf]
      %v615 = vld [vmem:[%s1 + $0x30] sm:$0xf]
      %v616 = vld [vmem:[%s1 + $0x34] sm:$0xf]
      %v617 = vld [vmem:[%s1 + $0x38] sm:$0xf]
      %v618 = vld [vmem:[%s1 + $0x3c] sm:$0xf]
      %s619 = scalar_lea.vmem %s1, 64
      %v620 = vld [vmem:[%s619] sm:$0xf]
      %v621 = vld [vmem:[%s619 + $0x4] sm:$0xf]
      %v622 = vld [vmem:[%s619 + $0x8] sm:$0xf]
      %v623 = vld [vmem:[%s619 + $0xc] sm:$0xf]
      %v624 = vld [vmem:[%s619 + $0x10] sm:$0xf]
      %v625 = vld [vmem:[%s619 + $0x14] sm:$0xf]
      %v626 = vld [vmem:[%s619 + $0x18] sm:$0xf]
      %v627 = vld [vmem:[%s619 + $0x1c] sm:$0xf]
      %v628 = vld [vmem:[%s619 + $0x20] sm:$0xf]
      %v629 = vld [vmem:[%s619 + $0x24] sm:$0xf]
      %v630 = vld [vmem:[%s619 + $0x28] sm:$0xf]
      %v631 = vld [vmem:[%s619 + $0x2c] sm:$0xf]
      %v632 = vld [vmem:[%s619 + $0x30] sm:$0xf]
      %v633 = vld [vmem:[%s619 + $0x34] sm:$0xf]
      %v634 = vld [vmem:[%s619 + $0x38] sm:$0xf]
      %v635 = vld [vmem:[%s619 + $0x3c] sm:$0xf]
      %v690 = vunpack.c.l.b16 %v542
      %v691 = vunpack.c.l.b16 %v543
      %v692 = vunpack.c.l.b16 %v544
      %v693 = vunpack.c.l.b16 %v545
      %v694 = vunpack.c.l.b16 %v546
      %v695 = vunpack.c.l.b16 %v547
      %v696 = vunpack.c.l.b16 %v548
      %v697 = vunpack.c.l.b16 %v549
      %v698 = vunpack.c.l.b16 %v550
      %v699 = vunpack.c.l.b16 %v551
      %v700 = vunpack.c.l.b16 %v552
      %v701 = vunpack.c.l.b16 %v553
      %v702 = vunpack.c.l.b16 %v554
      %v703 = vunpack.c.l.b16 %v555
      %v704 = vunpack.c.l.b16 %v556
      %v705 = vunpack.c.l.b16 %v557
      %v706 = vunpack.c.l.b16 %v558
      %v707 = vunpack.c.l.b16 %v559
      %v708 = vunpack.c.l.b16 %v560
      %v709 = vunpack.c.l.b16 %v561
      %v710 = vunpack.c.l.b16 %v562
      %v711 = vunpack.c.l.b16 %v563
      %v712 = vunpack.c.l.b16 %v564
      %v713 = vunpack.c.l.b16 %v565
      %v714 = vunpack.c.l.b16 %v566
      %v715 = vunpack.c.l.b16 %v567
      %v716 = vunpack.c.l.b16 %v568
      %v717 = vunpack.c.l.b16 %v569
      %v718 = vunpack.c.l.b16 %v570
      %v719 = vunpack.c.l.b16 %v571
      %v720 = vunpack.c.l.b16 %v572
      %v721 = vunpack.c.l.b16 %v573
      %v722 = vunpack.c.l.b16 %v574
      %v723 = vunpack.c.l.b16 %v575
      %v724 = vunpack.c.l.b16 %v576
      %v725 = vunpack.c.l.b16 %v577
      %v726 = vunpack.c.l.b16 %v578
      %v727 = vunpack.c.l.b16 %v579
      %v728 = vunpack.c.l.b16 %v580
      %v729 = vunpack.c.l.b16 %v581
      %v730 = vunpack.c.l.b16 %v582
      %v731 = vunpack.c.l.b16 %v583
      %v732 = vunpack.c.l.b16 %v584
      %v733 = vunpack.c.l.b16 %v585
      %v734 = vunpack.c.l.b16 %v586
      %v735 = vunpack.c.l.b16 %v587
      %v736 = vunpack.c.l.b16 %v588
      %v737 = vunpack.c.l.b16 %v589
      %v738 = vunpack.c.l.b16 %v590
      %v739 = vunpack.c.l.b16 %v591
      %v740 = vunpack.c.l.b16 %v592
      %v741 = vunpack.c.l.b16 %v593
      %v742 = vunpack.c.l.b16 %v594
      %v743 = vunpack.c.l.b16 %v595
      %v744 = vpack.c.b16 %v691, %v690
      %v745 = vpack.c.b16 %v693, %v692
      %v746 = vpack.c.b16 %v695, %v694
      %v747 = vpack.c.b16 %v697, %v696
      %v748 = vpack.c.b16 %v699, %v698
      %v749 = vpack.c.b16 %v701, %v700
      %v750 = vpack.c.b16 %v703, %v702
      %v751 = vpack.c.b16 %v705, %v704
      %v752 = vpack.c.b16 %v707, %v706
      %v753 = vpack.c.b16 %v709, %v708
      %v754 = vpack.c.b16 %v711, %v710
      %v755 = vpack.c.b16 %v713, %v712
      %v756 = vpack.c.b16 %v715, %v714
      %v757 = vpack.c.b16 %v717, %v716
      %v758 = vpack.c.b16 %v719, %v718
      %v759 = vpack.c.b16 %v721, %v720
      %v760 = vpack.c.b16 %v723, %v722
      %v761 = vpack.c.b16 %v725, %v724
      %v762 = vpack.c.b16 %v727, %v726
      %v763 = vpack.c.b16 %v729, %v728
      %v764 = vpack.c.b16 %v731, %v730
      %v765 = vpack.c.b16 %v733, %v732
      %v766 = vpack.c.b16 %v735, %v734
      %v767 = vpack.c.b16 %v737, %v736
      %v768 = vpack.c.b16 %v739, %v738
      %v769 = vpack.c.b16 %v741, %v740
      %v770 = vpack.c.b16 %v743, %v742
      %v814 = vunpack.c.l.b16 %v620
      %v815 = vunpack.c.l.b16 %v621
      %v816 = vunpack.c.l.b16 %v622
      %v817 = vunpack.c.l.b16 %v623
      %v818 = vunpack.c.l.b16 %v624
      %v819 = vunpack.c.l.b16 %v625
      %v820 = vunpack.c.l.b16 %v626
      %v821 = vunpack.c.l.b16 %v627
      %v822 = vunpack.c.l.b16 %v628
      %v823 = vunpack.c.l.b16 %v629
      %v824 = vunpack.c.l.b16 %v630
      %v825 = vunpack.c.l.b16 %v631
      %v826 = vunpack.c.l.b16 %v632
      %v827 = vunpack.c.l.b16 %v633
      %v828 = vunpack.c.l.b16 %v634
      %v829 = vunpack.c.l.b16 %v635
      %v830 = vpack.c.b16 %v815, %v814
      %v831 = vpack.c.b16 %v817, %v816
      %v832 = vpack.c.b16 %v819, %v818
      %v833 = vpack.c.b16 %v821, %v820
      %v834 = vpack.c.b16 %v823, %v822
      %v835 = vpack.c.b16 %v825, %v824
      %v836 = vpack.c.b16 %v827, %v826
      %v837 = vpack.c.b16 %v829, %v828
      %846 = vmatpush.bf16.msra.mxu0 %v837
      %847 = vmatpush.bf16.msra.mxu0 %v836
      %848 = vmatpush.bf16.msra.mxu0 %v835
      %849 = vmatpush.bf16.msra.mxu0 %v834
      %850 = vmatpush.bf16.msra.mxu0 %v833
      %851 = vmatpush.bf16.msra.mxu0 %v832
      %852 = vmatpush.bf16.msra.mxu0 %v831
      %853 = vmatpush.bf16.msra.mxu0 %v830
      %854 = vmatmul.bf16.gmra.mxu0 %v744
      %v855 = vpop.f32.mrf.mxu0
      %v856 = vadd.f32 0.0, %v855
      %v857 = vpop.f32.mrf.mxu0
      %v858 = vadd.f32 0.0, %v857
      %859 = vmatmul.bf16.gmra.mxu0 %v745
      %v860 = vpop.f32.mrf.mxu0
      %v861 = vadd.f32 0.0, %v860
      %v862 = vpop.f32.mrf.mxu0
      %v863 = vadd.f32 0.0, %v862
      %864 = vmatmul.bf16.gmra.mxu0 %v746
      %v865 = vpop.f32.mrf.mxu0
      %v866 = vadd.f32 0.0, %v865
      %v867 = vpop.f32.mrf.mxu0
      %v868 = vadd.f32 0.0, %v867
      %869 = vmatmul.bf16.gmra.mxu0 %v747
      %v870 = vpop.f32.mrf.mxu0
      %v871 = vadd.f32 0.0, %v870
      %v872 = vpop.f32.mrf.mxu0
      %v873 = vadd.f32 0.0, %v872
      %874 = vmatmul.bf16.gmra.mxu0 %v748
      %v875 = vpop.f32.mrf.mxu0
      %v876 = vadd.f32 0.0, %v875
      %v877 = vpop.f32.mrf.mxu0
      %v878 = vadd.f32 0.0, %v877
      %879 = vmatmul.bf16.gmra.mxu0 %v749
      %v880 = vpop.f32.mrf.mxu0
      %v881 = vadd.f32 0.0, %v880
      %v882 = vpop.f32.mrf.mxu0
      %v883 = vadd.f32 0.0, %v882
      %884 = vmatmul.bf16.gmra.mxu0 %v750
      %v885 = vpop.f32.mrf.mxu0
      %v886 = vadd.f32 0.0, %v885
      %v887 = vpop.f32.mrf.mxu0
      %v888 = vadd.f32 0.0, %v887
      %889 = vmatmul.bf16.gmra.mxu0 %v751
      %v890 = vpop.f32.mrf.mxu0
      %v891 = vadd.f32 0.0, %v890
      %v892 = vpop.f32.mrf.mxu0
      %v893 = vadd.f32 0.0, %v892
      %894 = vmatmul.bf16.gmra.mxu0 %v752
      %v895 = vpop.f32.mrf.mxu0
      %v896 = vadd.f32 0.0, %v895
      %v897 = vpop.f32.mrf.mxu0
      %v898 = vadd.f32 0.0, %v897
      %899 = vmatmul.bf16.gmra.mxu0 %v753
      %v900 = vpop.f32.mrf.mxu0
      %v901 = vadd.f32 0.0, %v900
      %v902 = vpop.f32.mrf.mxu0
      %v903 = vadd.f32 0.0, %v902
      %904 = vmatmul.bf16.gmra.mxu0 %v754
      %v905 = vpop.f32.mrf.mxu0
      %v906 = vadd.f32 0.0, %v905
      %v907 = vpop.f32.mrf.mxu0
      %v908 = vadd.f32 0.0, %v907
      %909 = vmatmul.bf16.gmra.mxu0 %v755
      %v910 = vpop.f32.mrf.mxu0
      %v911 = vadd.f32 0.0, %v910
      %v912 = vpop.f32.mrf.mxu0
      %v913 = vadd.f32 0.0, %v912
      %914 = vmatmul.bf16.gmra.mxu0 %v756
      %v915 = vpop.f32.mrf.mxu0
      %v916 = vadd.f32 0.0, %v915
      %v917 = vpop.f32.mrf.mxu0
      %v918 = vadd.f32 0.0, %v917
      %919 = vmatmul.bf16.gmra.mxu0 %v757
      %v920 = vpop.f32.mrf.mxu0
      %v921 = vadd.f32 0.0, %v920
      %v922 = vpop.f32.mrf.mxu0
      %v923 = vadd.f32 0.0, %v922
      %924 = vmatmul.bf16.gmra.mxu0 %v758
      %v925 = vpop.f32.mrf.mxu0
      %v926 = vadd.f32 0.0, %v925
      %v927 = vpop.f32.mrf.mxu0
      %v928 = vadd.f32 0.0, %v927
      %929 = vmatmul.bf16.gmra.mxu0 %v759
      %v930 = vpop.f32.mrf.mxu0
      %v931 = vadd.f32 0.0, %v930
      %v932 = vpop.f32.mrf.mxu0
      %v933 = vadd.f32 0.0, %v932
      %934 = vmatmul.bf16.gmra.mxu0 %v760
      %v935 = vpop.f32.mrf.mxu0
      %v936 = vadd.f32 0.0, %v935
      %v937 = vpop.f32.mrf.mxu0
      %v938 = vadd.f32 0.0, %v937
      %939 = vmatmul.bf16.gmra.mxu0 %v761
      %v940 = vpop.f32.mrf.mxu0
      %v941 = vadd.f32 0.0, %v940
      %v942 = vpop.f32.mrf.mxu0
      %v943 = vadd.f32 0.0, %v942
      %944 = vmatmul.bf16.gmra.mxu0 %v762
      %v945 = vpop.f32.mrf.mxu0
      %v946 = vadd.f32 0.0, %v945
      %v947 = vpop.f32.mrf.mxu0
      %v948 = vadd.f32 0.0, %v947
      %949 = vmatmul.bf16.gmra.mxu0 %v763
      %v950 = vpop.f32.mrf.mxu0
      %v951 = vadd.f32 0.0, %v950
      %v952 = vpop.f32.mrf.mxu0
      %v953 = vadd.f32 0.0, %v952
      %954 = vmatmul.bf16.gmra.mxu0 %v764
      %v955 = vpop.f32.mrf.mxu0
      %v956 = vadd.f32 0.0, %v955
      %v957 = vpop.f32.mrf.mxu0
      %v958 = vadd.f32 0.0, %v957
      %959 = vmatmul.bf16.gmra.mxu0 %v765
      %v960 = vpop.f32.mrf.mxu0
      %v961 = vadd.f32 0.0, %v960
      %v962 = vpop.f32.mrf.mxu0
      %v963 = vadd.f32 0.0, %v962
      %964 = vmatmul.bf16.gmra.mxu0 %v766
      %v965 = vpop.f32.mrf.mxu0
      %v966 = vadd.f32 0.0, %v965
      %v967 = vpop.f32.mrf.mxu0
      %v968 = vadd.f32 0.0, %v967
      %969 = vmatmul.bf16.gmra.mxu0 %v767
      %v970 = vpop.f32.mrf.mxu0
      %v971 = vadd.f32 0.0, %v970
      %v972 = vpop.f32.mrf.mxu0
      %v973 = vadd.f32 0.0, %v972
      %974 = vmatmul.bf16.gmra.mxu0 %v768
      %v975 = vpop.f32.mrf.mxu0
      %v976 = vadd.f32 0.0, %v975
      %v977 = vpop.f32.mrf.mxu0
      %v978 = vadd.f32 0.0, %v977
      %979 = vmatmul.bf16.gmra.mxu0 %v769
      %v980 = vpop.f32.mrf.mxu0
      %v981 = vadd.f32 0.0, %v980
      %v982 = vpop.f32.mrf.mxu0
      %v983 = vadd.f32 0.0, %v982
      %984 = vmatmul.bf16.gmra.mxu0 %v770
      %v985 = vpop.f32.mrf.mxu0
      %v986 = vadd.f32 0.0, %v985
      %v987 = vpop.f32.mrf.mxu0
      %v988 = vadd.f32 0.0, %v987
      %989 = vdwg.mxu0
      %v991 = vunpack.c.l.b16 %v541
      %v992 = vpack.c.b16 %v690, %v991
      %v993 = vpack.c.b16 %v692, %v691
      %v994 = vpack.c.b16 %v694, %v693
      %v995 = vpack.c.b16 %v696, %v695
      %v996 = vpack.c.b16 %v698, %v697
      %v997 = vpack.c.b16 %v700, %v699
      %v998 = vpack.c.b16 %v702, %v701
      %v999 = vpack.c.b16 %v704, %v703
      %v1000 = vpack.c.b16 %v706, %v705
      %v1001 = vpack.c.b16 %v708, %v707
      %v1002 = vpack.c.b16 %v710, %v709
      %v1003 = vpack.c.b16 %v712, %v711
      %v1004 = vpack.c.b16 %v714, %v713
      %v1005 = vpack.c.b16 %v716, %v715
      %v1006 = vpack.c.b16 %v718, %v717
      %v1007 = vpack.c.b16 %v720, %v719
      %v1008 = vpack.c.b16 %v722, %v721
      %v1009 = vpack.c.b16 %v724, %v723
      %v1010 = vpack.c.b16 %v726, %v725
      %v1011 = vpack.c.b16 %v728, %v727
      %v1012 = vpack.c.b16 %v730, %v729
      %v1013 = vpack.c.b16 %v732, %v731
      %v1014 = vpack.c.b16 %v734, %v733
      %v1015 = vpack.c.b16 %v736, %v735
      %v1016 = vpack.c.b16 %v738, %v737
      %v1017 = vpack.c.b16 %v740, %v739
      %v1018 = vpack.c.b16 %v742, %v741
      %v1019 = vpack.c.b16 %v743, %v743
      %vm1020 = vsmask.f32 4352
      %v1022 = vshrl.u32 %v992, 16
      %v1024 = vrot.slane %v1022, 3
      %v1025 = vshll.u32 %v992, 16
      %v1027 = vrot.slane %v1025, 4
      %v1028 = vor.u32 %v1024, %v1027
      %v1030 = vshrl.u32 %v993, 16
      %v1032 = vrot.slane %v1030, 3
      %v1033 = vshll.u32 %v993, 16
      %v1035 = vrot.slane %v1033, 4
      %v1036 = vor.u32 %v1032, %v1035
      %v1037 = vsel %vm1020, %v1028, %v1036
      %v1039 = vshrl.u32 %v994, 16
      %v1041 = vrot.slane %v1039, 3
      %v1042 = vshll.u32 %v994, 16
      %v1044 = vrot.slane %v1042, 4
      %v1045 = vor.u32 %v1041, %v1044
      %v1046 = vsel %vm1020, %v1036, %v1045
      %v1048 = vshrl.u32 %v995, 16
      %v1050 = vrot.slane %v1048, 3
      %v1051 = vshll.u32 %v995, 16
      %v1053 = vrot.slane %v1051, 4
      %v1054 = vor.u32 %v1050, %v1053
      %v1055 = vsel %vm1020, %v1045, %v1054
      %v1057 = vshrl.u32 %v996, 16
      %v1059 = vrot.slane %v1057, 3
      %v1060 = vshll.u32 %v996, 16
      %v1062 = vrot.slane %v1060, 4
      %v1063 = vor.u32 %v1059, %v1062
      %v1064 = vsel %vm1020, %v1054, %v1063
      %v1066 = vshrl.u32 %v997, 16
      %v1068 = vrot.slane %v1066, 3
      %v1069 = vshll.u32 %v997, 16
      %v1071 = vrot.slane %v1069, 4
      %v1072 = vor.u32 %v1068, %v1071
      %v1073 = vsel %vm1020, %v1063, %v1072
      %v1075 = vshrl.u32 %v998, 16
      %v1077 = vrot.slane %v1075, 3
      %v1078 = vshll.u32 %v998, 16
      %v1080 = vrot.slane %v1078, 4
      %v1081 = vor.u32 %v1077, %v1080
      %v1082 = vsel %vm1020, %v1072, %v1081
      %v1084 = vshrl.u32 %v999, 16
      %v1086 = vrot.slane %v1084, 3
      %v1087 = vshll.u32 %v999, 16
      %v1089 = vrot.slane %v1087, 4
      %v1090 = vor.u32 %v1086, %v1089
      %v1091 = vsel %vm1020, %v1081, %v1090
      %v1093 = vshrl.u32 %v1000, 16
      %v1095 = vrot.slane %v1093, 3
      %v1096 = vshll.u32 %v1000, 16
      %v1098 = vrot.slane %v1096, 4
      %v1099 = vor.u32 %v1095, %v1098
      %v1100 = vsel %vm1020, %v1090, %v1099
      %v1102 = vshrl.u32 %v1001, 16
      %v1104 = vrot.slane %v1102, 3
      %v1105 = vshll.u32 %v1001, 16
      %v1107 = vrot.slane %v1105, 4
      %v1108 = vor.u32 %v1104, %v1107
      %v1109 = vsel %vm1020, %v1099, %v1108
      %v1111 = vshrl.u32 %v1002, 16
      %v1113 = vrot.slane %v1111, 3
      %v1114 = vshll.u32 %v1002, 16
      %v1116 = vrot.slane %v1114, 4
      %v1117 = vor.u32 %v1113, %v1116
      %v1118 = vsel %vm1020, %v1108, %v1117
      %v1120 = vshrl.u32 %v1003, 16
      %v1122 = vrot.slane %v1120, 3
      %v1123 = vshll.u32 %v1003, 16
      %v1125 = vrot.slane %v1123, 4
      %v1126 = vor.u32 %v1122, %v1125
      %v1127 = vsel %vm1020, %v1117, %v1126
      %v1129 = vshrl.u32 %v1004, 16
      %v1131 = vrot.slane %v1129, 3
      %v1132 = vshll.u32 %v1004, 16
      %v1134 = vrot.slane %v1132, 4
      %v1135 = vor.u32 %v1131, %v1134
      %v1136 = vsel %vm1020, %v1126, %v1135
      %v1138 = vshrl.u32 %v1005, 16
      %v1140 = vrot.slane %v1138, 3
      %v1141 = vshll.u32 %v1005, 16
      %v1143 = vrot.slane %v1141, 4
      %v1144 = vor.u32 %v1140, %v1143
      %v1145 = vsel %vm1020, %v1135, %v1144
      %v1147 = vshrl.u32 %v1006, 16
      %v1149 = vrot.slane %v1147, 3
      %v1150 = vshll.u32 %v1006, 16
      %v1152 = vrot.slane %v1150, 4
      %v1153 = vor.u32 %v1149, %v1152
      %v1154 = vsel %vm1020, %v1144, %v1153
      %v1156 = vshrl.u32 %v1007, 16
      %v1158 = vrot.slane %v1156, 3
      %v1159 = vshll.u32 %v1007, 16
      %v1161 = vrot.slane %v1159, 4
      %v1162 = vor.u32 %v1158, %v1161
      %v1163 = vsel %vm1020, %v1153, %v1162
      %v1165 = vshrl.u32 %v1008, 16
      %v1167 = vrot.slane %v1165, 3
      %v1168 = vshll.u32 %v1008, 16
      %v1170 = vrot.slane %v1168, 4
      %v1171 = vor.u32 %v1167, %v1170
      %v1172 = vsel %vm1020, %v1162, %v1171
      %v1174 = vshrl.u32 %v1009, 16
      %v1176 = vrot.slane %v1174, 3
      %v1177 = vshll.u32 %v1009, 16
      %v1179 = vrot.slane %v1177, 4
      %v1180 = vor.u32 %v1176, %v1179
      %v1181 = vsel %vm1020, %v1171, %v1180
      %v1183 = vshrl.u32 %v1010, 16
      %v1185 = vrot.slane %v1183, 3
      %v1186 = vshll.u32 %v1010, 16
      %v1188 = vrot.slane %v1186, 4
      %v1189 = vor.u32 %v1185, %v1188
      %v1190 = vsel %vm1020, %v1180, %v1189
      %v1192 = vshrl.u32 %v1011, 16
      %v1194 = vrot.slane %v1192, 3
      %v1195 = vshll.u32 %v1011, 16
      %v1197 = vrot.slane %v1195, 4
      %v1198 = vor.u32 %v1194, %v1197
      %v1199 = vsel %vm1020, %v1189, %v1198
      %v1201 = vshrl.u32 %v1012, 16
      %v1203 = vrot.slane %v1201, 3
      %v1204 = vshll.u32 %v1012, 16
      %v1206 = vrot.slane %v1204, 4
      %v1207 = vor.u32 %v1203, %v1206
      %v1208 = vsel %vm1020, %v1198, %v1207
      %v1210 = vshrl.u32 %v1013, 16
      %v1212 = vrot.slane %v1210, 3
      %v1213 = vshll.u32 %v1013, 16
      %v1215 = vrot.slane %v1213, 4
      %v1216 = vor.u32 %v1212, %v1215
      %v1217 = vsel %vm1020, %v1207, %v1216
      %v1219 = vshrl.u32 %v1014, 16
      %v1221 = vrot.slane %v1219, 3
      %v1222 = vshll.u32 %v1014, 16
      %v1224 = vrot.slane %v1222, 4
      %v1225 = vor.u32 %v1221, %v1224
      %v1226 = vsel %vm1020, %v1216, %v1225
      %v1228 = vshrl.u32 %v1015, 16
      %v1230 = vrot.slane %v1228, 3
      %v1231 = vshll.u32 %v1015, 16
      %v1233 = vrot.slane %v1231, 4
      %v1234 = vor.u32 %v1230, %v1233
      %v1235 = vsel %vm1020, %v1225, %v1234
      %v1237 = vshrl.u32 %v1016, 16
      %v1239 = vrot.slane %v1237, 3
      %v1240 = vshll.u32 %v1016, 16
      %v1242 = vrot.slane %v1240, 4
      %v1243 = vor.u32 %v1239, %v1242
      %v1244 = vsel %vm1020, %v1234, %v1243
      %v1246 = vshrl.u32 %v1017, 16
      %v1248 = vrot.slane %v1246, 3
      %v1249 = vshll.u32 %v1017, 16
      %v1251 = vrot.slane %v1249, 4
      %v1252 = vor.u32 %v1248, %v1251
      %v1253 = vsel %vm1020, %v1243, %v1252
      %v1255 = vshrl.u32 %v1018, 16
      %v1257 = vrot.slane %v1255, 3
      %v1258 = vshll.u32 %v1018, 16
      %v1260 = vrot.slane %v1258, 4
      %v1261 = vor.u32 %v1257, %v1260
      %v1262 = vsel %vm1020, %v1252, %v1261
      %v1264 = vshrl.u32 %v1019, 16
      %v1266 = vrot.slane %v1264, 3
      %v1267 = vshll.u32 %v1019, 16
      %v1269 = vrot.slane %v1267, 4
      %v1270 = vor.u32 %v1266, %v1269
      %v1271 = vsel %vm1020, %v1261, %v1270
      %v1315 = vunpack.c.l.b16 %v603
      %v1316 = vunpack.c.l.b16 %v604
      %v1317 = vunpack.c.l.b16 %v605
      %v1318 = vunpack.c.l.b16 %v606
      %v1319 = vunpack.c.l.b16 %v607
      %v1320 = vunpack.c.l.b16 %v608
      %v1321 = vunpack.c.l.b16 %v609
      %v1322 = vunpack.c.l.b16 %v610
      %v1323 = vunpack.c.l.b16 %v611
      %v1324 = vunpack.c.l.b16 %v612
      %v1325 = vunpack.c.l.b16 %v613
      %v1326 = vunpack.c.l.b16 %v614
      %v1327 = vunpack.c.l.b16 %v615
      %v1328 = vunpack.c.l.b16 %v616
      %v1329 = vunpack.c.l.b16 %v617
      %v1330 = vunpack.c.l.b16 %v618
      %v1331 = vpack.c.b16 %v1316, %v1315
      %v1332 = vpack.c.b16 %v1318, %v1317
      %v1333 = vpack.c.b16 %v1320, %v1319
      %v1334 = vpack.c.b16 %v1322, %v1321
      %v1335 = vpack.c.b16 %v1324, %v1323
      %v1336 = vpack.c.b16 %v1326, %v1325
      %v1337 = vpack.c.b16 %v1328, %v1327
      %v1338 = vpack.c.b16 %v1330, %v1329
      %1347 = vmatpush.bf16.msra.mxu0 %v1338
      %1348 = vmatpush.bf16.msra.mxu0 %v1337
      %1349 = vmatpush.bf16.msra.mxu0 %v1336
      %1350 = vmatpush.bf16.msra.mxu0 %v1335
      %1351 = vmatpush.bf16.msra.mxu0 %v1334
      %1352 = vmatpush.bf16.msra.mxu0 %v1333
      %1353 = vmatpush.bf16.msra.mxu0 %v1332
      %1354 = vmatpush.bf16.msra.mxu0 %v1331
      %1355 = vmatmul.bf16.gmra.mxu0 %v1037
      %v1356 = vpop.f32.mrf.mxu0
      %v1357 = vadd.f32 %v856, %v1356
      %v1358 = vpop.f32.mrf.mxu0
      %v1359 = vadd.f32 %v858, %v1358
      %1360 = vmatmul.bf16.gmra.mxu0 %v1046
      %v1361 = vpop.f32.mrf.mxu0
      %v1362 = vadd.f32 %v861, %v1361
      %v1363 = vpop.f32.mrf.mxu0
      %v1364 = vadd.f32 %v863, %v1363
      %1365 = vmatmul.bf16.gmra.mxu0 %v1055
      %v1366 = vpop.f32.mrf.mxu0
      %v1367 = vadd.f32 %v866, %v1366
      %v1368 = vpop.f32.mrf.mxu0
      %v1369 = vadd.f32 %v868, %v1368
      %1370 = vmatmul.bf16.gmra.mxu0 %v1064
      %v1371 = vpop.f32.mrf.mxu0
      %v1372 = vadd.f32 %v871, %v1371
      %v1373 = vpop.f32.mrf.mxu0
      %v1374 = vadd.f32 %v873, %v1373
      %1375 = vmatmul.bf16.gmra.mxu0 %v1073
      %v1376 = vpop.f32.mrf.mxu0
      %v1377 = vadd.f32 %v876, %v1376
      %v1378 = vpop.f32.mrf.mxu0
      %v1379 = vadd.f32 %v878, %v1378
      %1380 = vmatmul.bf16.gmra.mxu0 %v1082
      %v1381 = vpop.f32.mrf.mxu0
      %v1382 = vadd.f32 %v881, %v1381
      %v1383 = vpop.f32.mrf.mxu0
      %v1384 = vadd.f32 %v883, %v1383
      %1385 = vmatmul.bf16.gmra.mxu0 %v1091
      %v1386 = vpop.f32.mrf.mxu0
      %v1387 = vadd.f32 %v886, %v1386
      %v1388 = vpop.f32.mrf.mxu0
      %v1389 = vadd.f32 %v888, %v1388
      %1390 = vmatmul.bf16.gmra.mxu0 %v1100
      %v1391 = vpop.f32.mrf.mxu0
      %v1392 = vadd.f32 %v891, %v1391
      %v1393 = vpop.f32.mrf.mxu0
      %v1394 = vadd.f32 %v893, %v1393
      %1395 = vmatmul.bf16.gmra.mxu0 %v1109
      %v1396 = vpop.f32.mrf.mxu0
      %v1397 = vadd.f32 %v896, %v1396
      %v1398 = vpop.f32.mrf.mxu0
      %v1399 = vadd.f32 %v898, %v1398
      %1400 = vmatmul.bf16.gmra.mxu0 %v1118
      %v1401 = vpop.f32.mrf.mxu0
      %v1402 = vadd.f32 %v901, %v1401
      %v1403 = vpop.f32.mrf.mxu0
      %v1404 = vadd.f32 %v903, %v1403
      %1405 = vmatmul.bf16.gmra.mxu0 %v1127
      %v1406 = vpop.f32.mrf.mxu0
      %v1407 = vadd.f32 %v906, %v1406
      %v1408 = vpop.f32.mrf.mxu0
      %v1409 = vadd.f32 %v908, %v1408
      %1410 = vmatmul.bf16.gmra.mxu0 %v1136
      %v1411 = vpop.f32.mrf.mxu0
      %v1412 = vadd.f32 %v911, %v1411
      %v1413 = vpop.f32.mrf.mxu0
      %v1414 = vadd.f32 %v913, %v1413
      %1415 = vmatmul.bf16.gmra.mxu0 %v1145
      %v1416 = vpop.f32.mrf.mxu0
      %v1417 = vadd.f32 %v916, %v1416
      %v1418 = vpop.f32.mrf.mxu0
      %v1419 = vadd.f32 %v918, %v1418
      %1420 = vmatmul.bf16.gmra.mxu0 %v1154
      %v1421 = vpop.f32.mrf.mxu0
      %v1422 = vadd.f32 %v921, %v1421
      %v1423 = vpop.f32.mrf.mxu0
      %v1424 = vadd.f32 %v923, %v1423
      %1425 = vmatmul.bf16.gmra.mxu0 %v1163
      %v1426 = vpop.f32.mrf.mxu0
      %v1427 = vadd.f32 %v926, %v1426
      %v1428 = vpop.f32.mrf.mxu0
      %v1429 = vadd.f32 %v928, %v1428
      %1430 = vmatmul.bf16.gmra.mxu0 %v1172
      %v1431 = vpop.f32.mrf.mxu0
      %v1432 = vadd.f32 %v931, %v1431
      %v1433 = vpop.f32.mrf.mxu0
      %v1434 = vadd.f32 %v933, %v1433
      %1435 = vmatmul.bf16.gmra.mxu0 %v1181
      %v1436 = vpop.f32.mrf.mxu0
      %v1437 = vadd.f32 %v936, %v1436
      %v1438 = vpop.f32.mrf.mxu0
      %v1439 = vadd.f32 %v938, %v1438
      %1440 = vmatmul.bf16.gmra.mxu0 %v1190
      %v1441 = vpop.f32.mrf.mxu0
      %v1442 = vadd.f32 %v941, %v1441
      %v1443 = vpop.f32.mrf.mxu0
      %v1444 = vadd.f32 %v943, %v1443
      %1445 = vmatmul.bf16.gmra.mxu0 %v1199
      %v1446 = vpop.f32.mrf.mxu0
      %v1447 = vadd.f32 %v946, %v1446
      %v1448 = vpop.f32.mrf.mxu0
      %v1449 = vadd.f32 %v948, %v1448
      %1450 = vmatmul.bf16.gmra.mxu0 %v1208
      %v1451 = vpop.f32.mrf.mxu0
      %v1452 = vadd.f32 %v951, %v1451
      %v1453 = vpop.f32.mrf.mxu0
      %v1454 = vadd.f32 %v953, %v1453
      %1455 = vmatmul.bf16.gmra.mxu0 %v1217
      %v1456 = vpop.f32.mrf.mxu0
      %v1457 = vadd.f32 %v956, %v1456
      %v1458 = vpop.f32.mrf.mxu0
      %v1459 = vadd.f32 %v958, %v1458
      %1460 = vmatmul.bf16.gmra.mxu0 %v1226
      %v1461 = vpop.f32.mrf.mxu0
      %v1462 = vadd.f32 %v961, %v1461
      %v1463 = vpop.f32.mrf.mxu0
      %v1464 = vadd.f32 %v963, %v1463
      %1465 = vmatmul.bf16.gmra.mxu0 %v1235
      %v1466 = vpop.f32.mrf.mxu0
      %v1467 = vadd.f32 %v966, %v1466
      %v1468 = vpop.f32.mrf.mxu0
      %v1469 = vadd.f32 %v968, %v1468
      %1470 = vmatmul.bf16.gmra.mxu0 %v1244
      %v1471 = vpop.f32.mrf.mxu0
      %v1472 = vadd.f32 %v971, %v1471
      %v1473 = vpop.f32.mrf.mxu0
      %v1474 = vadd.f32 %v973, %v1473
      %1475 = vmatmul.bf16.gmra.mxu0 %v1253
      %v1476 = vpop.f32.mrf.mxu0
      %v1477 = vadd.f32 %v976, %v1476
      %v1478 = vpop.f32.mrf.mxu0
      %v1479 = vadd.f32 %v978, %v1478
      %1480 = vmatmul.bf16.gmra.mxu0 %v1262
      %v1481 = vpop.f32.mrf.mxu0
      %v1482 = vadd.f32 %v981, %v1481
      %v1483 = vpop.f32.mrf.mxu0
      %v1484 = vadd.f32 %v983, %v1483
      %1485 = vmatmul.bf16.gmra.mxu0 %v1271
      %v1486 = vpop.f32.mrf.mxu0
      %v1487 = vadd.f32 %v986, %v1486
      %v1488 = vpop.f32.mrf.mxu0
      %v1489 = vadd.f32 %v988, %v1488
      %1490 = vdwg.mxu0
      %s1491 = scalar_lea.vmem %s1, 128
      %v1492 = vld [vmem:[%s1491] sm:$0xf]
      %v1493 = vld [vmem:[%s1491 + $0x4] sm:$0xf]
      %v1494 = vld [vmem:[%s1491 + $0x8] sm:$0xf]
      %v1495 = vld [vmem:[%s1491 + $0xc] sm:$0xf]
      %v1496 = vld [vmem:[%s1491 + $0x10] sm:$0xf]
      %v1497 = vld [vmem:[%s1491 + $0x14] sm:$0xf]
      %v1498 = vld [vmem:[%s1491 + $0x18] sm:$0xf]
      %v1499 = vld [vmem:[%s1491 + $0x1c] sm:$0xf]
      %v1500 = vld [vmem:[%s1491 + $0x20] sm:$0xf]
      %v1501 = vld [vmem:[%s1491 + $0x24] sm:$0xf]
      %v1502 = vld [vmem:[%s1491 + $0x28] sm:$0xf]
      %v1503 = vld [vmem:[%s1491 + $0x2c] sm:$0xf]
      %v1504 = vld [vmem:[%s1491 + $0x30] sm:$0xf]
      %v1505 = vld [vmem:[%s1491 + $0x34] sm:$0xf]
      %v1506 = vld [vmem:[%s1491 + $0x38] sm:$0xf]
      %v1507 = vld [vmem:[%s1491 + $0x3c] sm:$0xf]
      %v1509 = vunpack.c.l.b16 %v596
      %v1510 = vpack.c.b16 %v1509, %v1509
      %vm1511 = vsmask.f32 7424
      %v1513 = vshrl.u32 %v744, 16
      %v1515 = vshll.u32 %v744, 16
      %v1517 = vrot.slane %v1515, 1
      %v1518 = vor.u32 %v1513, %v1517
      %v1520 = vshll.u32 %v745, 16
      %v1522 = vrot.slane %v1520, 1
      %v1523 = vsel %vm1511, %v1518, %v1522
      %v1524 = vshrl.u32 %v745, 16
      %v1526 = vor.u32 %v1524, %v1522
      %v1528 = vshll.u32 %v746, 16
      %v1530 = vrot.slane %v1528, 1
      %v1531 = vsel %vm1511, %v1526, %v1530
      %v1532 = vshrl.u32 %v746, 16
      %v1534 = vor.u32 %v1532, %v1530
      %v1536 = vshll.u32 %v747, 16
      %v1538 = vrot.slane %v1536, 1
      %v1539 = vsel %vm1511, %v1534, %v1538
      %v1540 = vshrl.u32 %v747, 16
      %v1542 = vor.u32 %v1540, %v1538
      %v1544 = vshll.u32 %v748, 16
      %v1546 = vrot.slane %v1544, 1
      %v1547 = vsel %vm1511, %v1542, %v1546
      %v1548 = vshrl.u32 %v748, 16
      %v1550 = vor.u32 %v1548, %v1546
      %v1552 = vshll.u32 %v749, 16
      %v1554 = vrot.slane %v1552, 1
      %v1555 = vsel %vm1511, %v1550, %v1554
      %v1556 = vshrl.u32 %v749, 16
      %v1558 = vor.u32 %v1556, %v1554
      %v1560 = vshll.u32 %v750, 16
      %v1562 = vrot.slane %v1560, 1
      %v1563 = vsel %vm1511, %v1558, %v1562
      %v1564 = vshrl.u32 %v750, 16
      %v1566 = vor.u32 %v1564, %v1562
      %v1568 = vshll.u32 %v751, 16
      %v1570 = vrot.slane %v1568, 1
      %v1571 = vsel %vm1511, %v1566, %v1570
      %v1572 = vshrl.u32 %v751, 16
      %v1574 = vor.u32 %v1572, %v1570
      %v1576 = vshll.u32 %v752, 16
      %v1578 = vrot.slane %v1576, 1
      %v1579 = vsel %vm1511, %v1574, %v1578
      %v1580 = vshrl.u32 %v752, 16
      %v1582 = vor.u32 %v1580, %v1578
      %v1584 = vshll.u32 %v753, 16
      %v1586 = vrot.slane %v1584, 1
      %v1587 = vsel %vm1511, %v1582, %v1586
      %v1588 = vshrl.u32 %v753, 16
      %v1590 = vor.u32 %v1588, %v1586
      %v1592 = vshll.u32 %v754, 16
      %v1594 = vrot.slane %v1592, 1
      %v1595 = vsel %vm1511, %v1590, %v1594
      %v1596 = vshrl.u32 %v754, 16
      %v1598 = vor.u32 %v1596, %v1594
      %v1600 = vshll.u32 %v755, 16
      %v1602 = vrot.slane %v1600, 1
      %v1603 = vsel %vm1511, %v1598, %v1602
      %v1604 = vshrl.u32 %v755, 16
      %v1606 = vor.u32 %v1604, %v1602
      %v1608 = vshll.u32 %v756, 16
      %v1610 = vrot.slane %v1608, 1
      %v1611 = vsel %vm1511, %v1606, %v1610
      %v1612 = vshrl.u32 %v756, 16
      %v1614 = vor.u32 %v1612, %v1610
      %v1616 = vshll.u32 %v757, 16
      %v1618 = vrot.slane %v1616, 1
      %v1619 = vsel %vm1511, %v1614, %v1618
      %v1620 = vshrl.u32 %v757, 16
      %v1622 = vor.u32 %v1620, %v1618
      %v1624 = vshll.u32 %v758, 16
      %v1626 = vrot.slane %v1624, 1
      %v1627 = vsel %vm1511, %v1622, %v1626
      %v1628 = vshrl.u32 %v758, 16
      %v1630 = vor.u32 %v1628, %v1626
      %v1632 = vshll.u32 %v759, 16
      %v1634 = vrot.slane %v1632, 1
      %v1635 = vsel %vm1511, %v1630, %v1634
      %v1636 = vshrl.u32 %v759, 16
      %v1638 = vor.u32 %v1636, %v1634
      %v1640 = vshll.u32 %v760, 16
      %v1642 = vrot.slane %v1640, 1
      %v1643 = vsel %vm1511, %v1638, %v1642
      %v1644 = vshrl.u32 %v760, 16
      %v1646 = vor.u32 %v1644, %v1642
      %v1648 = vshll.u32 %v761, 16
      %v1650 = vrot.slane %v1648, 1
      %v1651 = vsel %vm1511, %v1646, %v1650
      %v1652 = vshrl.u32 %v761, 16
      %v1654 = vor.u32 %v1652, %v1650
      %v1656 = vshll.u32 %v762, 16
      %v1658 = vrot.slane %v1656, 1
      %v1659 = vsel %vm1511, %v1654, %v1658
      %v1660 = vshrl.u32 %v762, 16
      %v1662 = vor.u32 %v1660, %v1658
      %v1664 = vshll.u32 %v763, 16
      %v1666 = vrot.slane %v1664, 1
      %v1667 = vsel %vm1511, %v1662, %v1666
      %v1668 = vshrl.u32 %v763, 16
      %v1670 = vor.u32 %v1668, %v1666
      %v1672 = vshll.u32 %v764, 16
      %v1674 = vrot.slane %v1672, 1
      %v1675 = vsel %vm1511, %v1670, %v1674
      %v1676 = vshrl.u32 %v764, 16
      %v1678 = vor.u32 %v1676, %v1674
      %v1680 = vshll.u32 %v765, 16
      %v1682 = vrot.slane %v1680, 1
      %v1683 = vsel %vm1511, %v1678, %v1682
      %v1684 = vshrl.u32 %v765, 16
      %v1686 = vor.u32 %v1684, %v1682
      %v1688 = vshll.u32 %v766, 16
      %v1690 = vrot.slane %v1688, 1
      %v1691 = vsel %vm1511, %v1686, %v1690
      %v1692 = vshrl.u32 %v766, 16
      %v1694 = vor.u32 %v1692, %v1690
      %v1696 = vshll.u32 %v767, 16
      %v1698 = vrot.slane %v1696, 1
      %v1699 = vsel %vm1511, %v1694, %v1698
      %v1700 = vshrl.u32 %v767, 16
      %v1702 = vor.u32 %v1700, %v1698
      %v1704 = vshll.u32 %v768, 16
      %v1706 = vrot.slane %v1704, 1
      %v1707 = vsel %vm1511, %v1702, %v1706
      %v1708 = vshrl.u32 %v768, 16
      %v1710 = vor.u32 %v1708, %v1706
      %v1712 = vshll.u32 %v769, 16
      %v1714 = vrot.slane %v1712, 1
      %v1715 = vsel %vm1511, %v1710, %v1714
      %v1716 = vshrl.u32 %v769, 16
      %v1718 = vor.u32 %v1716, %v1714
      %v1720 = vshll.u32 %v770, 16
      %v1722 = vrot.slane %v1720, 1
      %v1723 = vsel %vm1511, %v1718, %v1722
      %v1724 = vshrl.u32 %v770, 16
      %v1726 = vor.u32 %v1724, %v1722
      %v1728 = vshll.u32 %v1510, 16
      %v1730 = vrot.slane %v1728, 1
      %v1731 = vsel %vm1511, %v1726, %v1730
      %v1775 = vunpack.c.l.b16 %v1492
      %v1776 = vunpack.c.l.b16 %v1493
      %v1777 = vunpack.c.l.b16 %v1494
      %v1778 = vunpack.c.l.b16 %v1495
      %v1779 = vunpack.c.l.b16 %v1496
      %v1780 = vunpack.c.l.b16 %v1497
      %v1781 = vunpack.c.l.b16 %v1498
      %v1782 = vunpack.c.l.b16 %v1499
      %v1783 = vunpack.c.l.b16 %v1500
      %v1784 = vunpack.c.l.b16 %v1501
      %v1785 = vunpack.c.l.b16 %v1502
      %v1786 = vunpack.c.l.b16 %v1503
      %v1787 = vunpack.c.l.b16 %v1504
      %v1788 = vunpack.c.l.b16 %v1505
      %v1789 = vunpack.c.l.b16 %v1506
      %v1790 = vunpack.c.l.b16 %v1507
      %v1791 = vpack.c.b16 %v1776, %v1775
      %v1792 = vpack.c.b16 %v1778, %v1777
      %v1793 = vpack.c.b16 %v1780, %v1779
      %v1794 = vpack.c.b16 %v1782, %v1781
      %v1795 = vpack.c.b16 %v1784, %v1783
      %v1796 = vpack.c.b16 %v1786, %v1785
      %v1797 = vpack.c.b16 %v1788, %v1787
      %v1798 = vpack.c.b16 %v1790, %v1789
      %1807 = vmatpush.bf16.msra.mxu0 %v1798
      %1808 = vmatpush.bf16.msra.mxu0 %v1797
      %1809 = vmatpush.bf16.msra.mxu0 %v1796
      %1810 = vmatpush.bf16.msra.mxu0 %v1795
      %1811 = vmatpush.bf16.msra.mxu0 %v1794
      %1812 = vmatpush.bf16.msra.mxu0 %v1793
      %1813 = vmatpush.bf16.msra.mxu0 %v1792
      %1814 = vmatpush.bf16.msra.mxu0 %v1791
      %1815 = vmatmul.bf16.gmra.mxu0 %v1523
      %v1816 = vpop.f32.mrf.mxu0
      %v1817 = vadd.f32 0.0, %v1816
      %v1818 = vpop.f32.mrf.mxu0
      %v1819 = vadd.f32 0.0, %v1818
      %1820 = vmatmul.bf16.gmra.mxu0 %v1531
      %v1821 = vpop.f32.mrf.mxu0
      %v1822 = vadd.f32 0.0, %v1821
      %v1823 = vpop.f32.mrf.mxu0
      %v1824 = vadd.f32 0.0, %v1823
      %1825 = vmatmul.bf16.gmra.mxu0 %v1539
      %v1826 = vpop.f32.mrf.mxu0
      %v1827 = vadd.f32 0.0, %v1826
      %v1828 = vpop.f32.mrf.mxu0
      %v1829 = vadd.f32 0.0, %v1828
      %1830 = vmatmul.bf16.gmra.mxu0 %v1547
      %v1831 = vpop.f32.mrf.mxu0
      %v1832 = vadd.f32 0.0, %v1831
      %v1833 = vpop.f32.mrf.mxu0
      %v1834 = vadd.f32 0.0, %v1833
      %1835 = vmatmul.bf16.gmra.mxu0 %v1555
      %v1836 = vpop.f32.mrf.mxu0
      %v1837 = vadd.f32 0.0, %v1836
      %v1838 = vpop.f32.mrf.mxu0
      %v1839 = vadd.f32 0.0, %v1838
      %1840 = vmatmul.bf16.gmra.mxu0 %v1563
      %v1841 = vpop.f32.mrf.mxu0
      %v1842 = vadd.f32 0.0, %v1841
      %v1843 = vpop.f32.mrf.mxu0
      %v1844 = vadd.f32 0.0, %v1843
      %1845 = vmatmul.bf16.gmra.mxu0 %v1571
      %v1846 = vpop.f32.mrf.mxu0
      %v1847 = vadd.f32 0.0, %v1846
      %v1848 = vpop.f32.mrf.mxu0
      %v1849 = vadd.f32 0.0, %v1848
      %1850 = vmatmul.bf16.gmra.mxu0 %v1579
      %v1851 = vpop.f32.mrf.mxu0
      %v1852 = vadd.f32 0.0, %v1851
      %v1853 = vpop.f32.mrf.mxu0
      %v1854 = vadd.f32 0.0, %v1853
      %1855 = vmatmul.bf16.gmra.mxu0 %v1587
      %v1856 = vpop.f32.mrf.mxu0
      %v1857 = vadd.f32 0.0, %v1856
      %v1858 = vpop.f32.mrf.mxu0
      %v1859 = vadd.f32 0.0, %v1858
      %1860 = vmatmul.bf16.gmra.mxu0 %v1595
      %v1861 = vpop.f32.mrf.mxu0
      %v1862 = vadd.f32 0.0, %v1861
      %v1863 = vpop.f32.mrf.mxu0
      %v1864 = vadd.f32 0.0, %v1863
      %1865 = vmatmul.bf16.gmra.mxu0 %v1603
      %v1866 = vpop.f32.mrf.mxu0
      %v1867 = vadd.f32 0.0, %v1866
      %v1868 = vpop.f32.mrf.mxu0
      %v1869 = vadd.f32 0.0, %v1868
      %1870 = vmatmul.bf16.gmra.mxu0 %v1611
      %v1871 = vpop.f32.mrf.mxu0
      %v1872 = vadd.f32 0.0, %v1871
      %v1873 = vpop.f32.mrf.mxu0
      %v1874 = vadd.f32 0.0, %v1873
      %1875 = vmatmul.bf16.gmra.mxu0 %v1619
      %v1876 = vpop.f32.mrf.mxu0
      %v1877 = vadd.f32 0.0, %v1876
      %v1878 = vpop.f32.mrf.mxu0
      %v1879 = vadd.f32 0.0, %v1878
      %1880 = vmatmul.bf16.gmra.mxu0 %v1627
      %v1881 = vpop.f32.mrf.mxu0
      %v1882 = vadd.f32 0.0, %v1881
      %v1883 = vpop.f32.mrf.mxu0
      %v1884 = vadd.f32 0.0, %v1883
      %1885 = vmatmul.bf16.gmra.mxu0 %v1635
      %v1886 = vpop.f32.mrf.mxu0
      %v1887 = vadd.f32 0.0, %v1886
      %v1888 = vpop.f32.mrf.mxu0
      %v1889 = vadd.f32 0.0, %v1888
      %1890 = vmatmul.bf16.gmra.mxu0 %v1643
      %v1891 = vpop.f32.mrf.mxu0
      %v1892 = vadd.f32 0.0, %v1891
      %v1893 = vpop.f32.mrf.mxu0
      %v1894 = vadd.f32 0.0, %v1893
      %1895 = vmatmul.bf16.gmra.mxu0 %v1651
      %v1896 = vpop.f32.mrf.mxu0
      %v1897 = vadd.f32 0.0, %v1896
      %v1898 = vpop.f32.mrf.mxu0
      %v1899 = vadd.f32 0.0, %v1898
      %1900 = vmatmul.bf16.gmra.mxu0 %v1659
      %v1901 = vpop.f32.mrf.mxu0
      %v1902 = vadd.f32 0.0, %v1901
      %v1903 = vpop.f32.mrf.mxu0
      %v1904 = vadd.f32 0.0, %v1903
      %1905 = vmatmul.bf16.gmra.mxu0 %v1667
      %v1906 = vpop.f32.mrf.mxu0
      %v1907 = vadd.f32 0.0, %v1906
      %v1908 = vpop.f32.mrf.mxu0
      %v1909 = vadd.f32 0.0, %v1908
      %1910 = vmatmul.bf16.gmra.mxu0 %v1675
      %v1911 = vpop.f32.mrf.mxu0
      %v1912 = vadd.f32 0.0, %v1911
      %v1913 = vpop.f32.mrf.mxu0
      %v1914 = vadd.f32 0.0, %v1913
      %1915 = vmatmul.bf16.gmra.mxu0 %v1683
      %v1916 = vpop.f32.mrf.mxu0
      %v1917 = vadd.f32 0.0, %v1916
      %v1918 = vpop.f32.mrf.mxu0
      %v1919 = vadd.f32 0.0, %v1918
      %1920 = vmatmul.bf16.gmra.mxu0 %v1691
      %v1921 = vpop.f32.mrf.mxu0
      %v1922 = vadd.f32 0.0, %v1921
      %v1923 = vpop.f32.mrf.mxu0
      %v1924 = vadd.f32 0.0, %v1923
      %1925 = vmatmul.bf16.gmra.mxu0 %v1699
      %v1926 = vpop.f32.mrf.mxu0
      %v1927 = vadd.f32 0.0, %v1926
      %v1928 = vpop.f32.mrf.mxu0
      %v1929 = vadd.f32 0.0, %v1928
      %1930 = vmatmul.bf16.gmra.mxu0 %v1707
      %v1931 = vpop.f32.mrf.mxu0
      %v1932 = vadd.f32 0.0, %v1931
      %v1933 = vpop.f32.mrf.mxu0
      %v1934 = vadd.f32 0.0, %v1933
      %1935 = vmatmul.bf16.gmra.mxu0 %v1715
      %v1936 = vpop.f32.mrf.mxu0
      %v1937 = vadd.f32 0.0, %v1936
      %v1938 = vpop.f32.mrf.mxu0
      %v1939 = vadd.f32 0.0, %v1938
      %1940 = vmatmul.bf16.gmra.mxu0 %v1723
      %v1941 = vpop.f32.mrf.mxu0
      %v1942 = vadd.f32 0.0, %v1941
      %v1943 = vpop.f32.mrf.mxu0
      %v1944 = vadd.f32 0.0, %v1943
      %1945 = vmatmul.bf16.gmra.mxu0 %v1731
      %v1946 = vpop.f32.mrf.mxu0
      %v1947 = vadd.f32 0.0, %v1946
      %v1948 = vpop.f32.mrf.mxu0
      %v1949 = vadd.f32 0.0, %v1948
      %1950 = vdwg.mxu0
      %v1951 = vadd.f32 %v1357, %v1817
      %v1952 = vadd.f32 %v1359, %v1819
      %v1953 = vadd.f32 %v1362, %v1822
      %v1954 = vadd.f32 %v1364, %v1824
      %v1955 = vadd.f32 %v1367, %v1827
      %v1956 = vadd.f32 %v1369, %v1829
      %v1957 = vadd.f32 %v1372, %v1832
      %v1958 = vadd.f32 %v1374, %v1834
      %v1959 = vadd.f32 %v1377, %v1837
      %v1960 = vadd.f32 %v1379, %v1839
      %v1961 = vadd.f32 %v1382, %v1842
      %v1962 = vadd.f32 %v1384, %v1844
      %v1963 = vadd.f32 %v1387, %v1847
      %v1964 = vadd.f32 %v1389, %v1849
      %v1965 = vadd.f32 %v1392, %v1852
      %v1966 = vadd.f32 %v1394, %v1854
      %v1967 = vadd.f32 %v1397, %v1857
      %v1968 = vadd.f32 %v1399, %v1859
      %v1969 = vadd.f32 %v1402, %v1862
      %v1970 = vadd.f32 %v1404, %v1864
      %v1971 = vadd.f32 %v1407, %v1867
      %v1972 = vadd.f32 %v1409, %v1869
      %v1973 = vadd.f32 %v1412, %v1872
      %v1974 = vadd.f32 %v1414, %v1874
      %v1975 = vadd.f32 %v1417, %v1877
      %v1976 = vadd.f32 %v1419, %v1879
      %v1977 = vadd.f32 %v1422, %v1882
      %v1978 = vadd.f32 %v1424, %v1884
      %v1979 = vadd.f32 %v1427, %v1887
      %v1980 = vadd.f32 %v1429, %v1889
      %v1981 = vadd.f32 %v1432, %v1892
      %v1982 = vadd.f32 %v1434, %v1894
      %v1983 = vadd.f32 %v1437, %v1897
      %v1984 = vadd.f32 %v1439, %v1899
      %v1985 = vadd.f32 %v1442, %v1902
      %v1986 = vadd.f32 %v1444, %v1904
      %v1987 = vadd.f32 %v1447, %v1907
      %v1988 = vadd.f32 %v1449, %v1909
      %v1989 = vadd.f32 %v1452, %v1912
      %v1990 = vadd.f32 %v1454, %v1914
      %v1991 = vadd.f32 %v1457, %v1917
      %v1992 = vadd.f32 %v1459, %v1919
      %v1993 = vadd.f32 %v1462, %v1922
      %v1994 = vadd.f32 %v1464, %v1924
      %v1995 = vadd.f32 %v1467, %v1927
      %v1996 = vadd.f32 %v1469, %v1929
      %v1997 = vadd.f32 %v1472, %v1932
      %v1998 = vadd.f32 %v1474, %v1934
      %v1999 = vadd.f32 %v1477, %v1937
      %v2000 = vadd.f32 %v1479, %v1939
      %v2001 = vadd.f32 %v1482, %v1942
      %v2002 = vadd.f32 %v1484, %v1944
      %v2003 = vadd.f32 %v1487, %v1947
      %v2004 = vadd.f32 %v1489, %v1949
      %s2005 = scalar_lea.vmem %s1, 192
      %v2006 = vld [vmem:[%s2005] sm:$0xf]
      %v2007 = vld [vmem:[%s2005 + $0x4] sm:$0xf]
      %v2008 = vld [vmem:[%s2005 + $0x8] sm:$0xf]
      %v2009 = vld [vmem:[%s2005 + $0xc] sm:$0xf]
      %v2010 = vld [vmem:[%s2005 + $0x10] sm:$0xf]
      %v2011 = vld [vmem:[%s2005 + $0x14] sm:$0xf]
      %v2012 = vld [vmem:[%s2005 + $0x18] sm:$0xf]
      %v2013 = vld [vmem:[%s2005 + $0x1c] sm:$0xf]
      %v2014 = vld [vmem:[%s2005 + $0x20] sm:$0xf]
      %v2015 = vld [vmem:[%s2005 + $0x24] sm:$0xf]
      %v2016 = vld [vmem:[%s2005 + $0x28] sm:$0xf]
      %v2017 = vld [vmem:[%s2005 + $0x2c] sm:$0xf]
      %v2018 = vld [vmem:[%s2005 + $0x30] sm:$0xf]
      %v2019 = vld [vmem:[%s2005 + $0x34] sm:$0xf]
      %v2020 = vld [vmem:[%s2005 + $0x38] sm:$0xf]
      %v2021 = vld [vmem:[%s2005 + $0x3c] sm:$0xf]
      %v2024 = vunpack.c.l.b16 %v597
      %v2025 = vunpack.c.l.b16 %v598
      %v2026 = vpack.c.b16 %v2024, %v1509
      %v2027 = vpack.c.b16 %v2025, %v2025
      %v2028 = vrot.slane %v1524, 3
      %v2029 = vrot.slane %v1520, 4
      %v2030 = vor.u32 %v2028, %v2029
      %v2031 = vrot.slane %v1532, 3
      %v2032 = vrot.slane %v1528, 4
      %v2033 = vor.u32 %v2031, %v2032
      %v2034 = vsel %vm1020, %v2030, %v2033
      %v2035 = vrot.slane %v1540, 3
      %v2036 = vrot.slane %v1536, 4
      %v2037 = vor.u32 %v2035, %v2036
      %v2038 = vsel %vm1020, %v2033, %v2037
      %v2039 = vrot.slane %v1548, 3
      %v2040 = vrot.slane %v1544, 4
      %v2041 = vor.u32 %v2039, %v2040
      %v2042 = vsel %vm1020, %v2037, %v2041
      %v2043 = vrot.slane %v1556, 3
      %v2044 = vrot.slane %v1552, 4
      %v2045 = vor.u32 %v2043, %v2044
      %v2046 = vsel %vm1020, %v2041, %v2045
      %v2047 = vrot.slane %v1564, 3
      %v2048 = vrot.slane %v1560, 4
      %v2049 = vor.u32 %v2047, %v2048
      %v2050 = vsel %vm1020, %v2045, %v2049
      %v2051 = vrot.slane %v1572, 3
      %v2052 = vrot.slane %v1568, 4
      %v2053 = vor.u32 %v2051, %v2052
      %v2054 = vsel %vm1020, %v2049, %v2053
      %v2055 = vrot.slane %v1580, 3
      %v2056 = vrot.slane %v1576, 4
      %v2057 = vor.u32 %v2055, %v2056
      %v2058 = vsel %vm1020, %v2053, %v2057
      %v2059 = vrot.slane %v1588, 3
      %v2060 = vrot.slane %v1584, 4
      %v2061 = vor.u32 %v2059, %v2060
      %v2062 = vsel %vm1020, %v2057, %v2061
      %v2063 = vrot.slane %v1596, 3
      %v2064 = vrot.slane %v1592, 4
      %v2065 = vor.u32 %v2063, %v2064
      %v2066 = vsel %vm1020, %v2061, %v2065
      %v2067 = vrot.slane %v1604, 3
      %v2068 = vrot.slane %v1600, 4
      %v2069 = vor.u32 %v2067, %v2068
      %v2070 = vsel %vm1020, %v2065, %v2069
      %v2071 = vrot.slane %v1612, 3
      %v2072 = vrot.slane %v1608, 4
      %v2073 = vor.u32 %v2071, %v2072
      %v2074 = vsel %vm1020, %v2069, %v2073
      %v2075 = vrot.slane %v1620, 3
      %v2076 = vrot.slane %v1616, 4
      %v2077 = vor.u32 %v2075, %v2076
      %v2078 = vsel %vm1020, %v2073, %v2077
      %v2079 = vrot.slane %v1628, 3
      %v2080 = vrot.slane %v1624, 4
      %v2081 = vor.u32 %v2079, %v2080
      %v2082 = vsel %vm1020, %v2077, %v2081
      %v2083 = vrot.slane %v1636, 3
      %v2084 = vrot.slane %v1632, 4
      %v2085 = vor.u32 %v2083, %v2084
      %v2086 = vsel %vm1020, %v2081, %v2085
      %v2087 = vrot.slane %v1644, 3
      %v2088 = vrot.slane %v1640, 4
      %v2089 = vor.u32 %v2087, %v2088
      %v2090 = vsel %vm1020, %v2085, %v2089
      %v2091 = vrot.slane %v1652, 3
      %v2092 = vrot.slane %v1648, 4
      %v2093 = vor.u32 %v2091, %v2092
      %v2094 = vsel %vm1020, %v2089, %v2093
      %v2095 = vrot.slane %v1660, 3
      %v2096 = vrot.slane %v1656, 4
      %v2097 = vor.u32 %v2095, %v2096
      %v2098 = vsel %vm1020, %v2093, %v2097
      %v2099 = vrot.slane %v1668, 3
      %v2100 = vrot.slane %v1664, 4
      %v2101 = vor.u32 %v2099, %v2100
      %v2102 = vsel %vm1020, %v2097, %v2101
      %v2103 = vrot.slane %v1676, 3
      %v2104 = vrot.slane %v1672, 4
      %v2105 = vor.u32 %v2103, %v2104
      %v2106 = vsel %vm1020, %v2101, %v2105
      %v2107 = vrot.slane %v1684, 3
      %v2108 = vrot.slane %v1680, 4
      %v2109 = vor.u32 %v2107, %v2108
      %v2110 = vsel %vm1020, %v2105, %v2109
      %v2111 = vrot.slane %v1692, 3
      %v2112 = vrot.slane %v1688, 4
      %v2113 = vor.u32 %v2111, %v2112
      %v2114 = vsel %vm1020, %v2109, %v2113
      %v2115 = vrot.slane %v1700, 3
      %v2116 = vrot.slane %v1696, 4
      %v2117 = vor.u32 %v2115, %v2116
      %v2118 = vsel %vm1020, %v2113, %v2117
      %v2119 = vrot.slane %v1708, 3
      %v2120 = vrot.slane %v1704, 4
      %v2121 = vor.u32 %v2119, %v2120
      %v2122 = vsel %vm1020, %v2117, %v2121
      %v2123 = vrot.slane %v1716, 3
      %v2124 = vrot.slane %v1712, 4
      %v2125 = vor.u32 %v2123, %v2124
      %v2126 = vsel %vm1020, %v2121, %v2125
      %v2127 = vrot.slane %v1724, 3
      %v2128 = vrot.slane %v1720, 4
      %v2129 = vor.u32 %v2127, %v2128
      %v2130 = vsel %vm1020, %v2125, %v2129
      %v2132 = vshrl.u32 %v2026, 16
      %v2134 = vrot.slane %v2132, 3
      %v2135 = vshll.u32 %v2026, 16
      %v2137 = vrot.slane %v2135, 4
      %v2138 = vor.u32 %v2134, %v2137
      %v2139 = vsel %vm1020, %v2129, %v2138
      %v2141 = vshrl.u32 %v2027, 16
      %v2143 = vrot.slane %v2141, 3
      %v2144 = vshll.u32 %v2027, 16
      %v2146 = vrot.slane %v2144, 4
      %v2147 = vor.u32 %v2143, %v2146
      %v2148 = vsel %vm1020, %v2138, %v2147
      %v2192 = vunpack.c.l.b16 %v2006
      %v2193 = vunpack.c.l.b16 %v2007
      %v2194 = vunpack.c.l.b16 %v2008
      %v2195 = vunpack.c.l.b16 %v2009
      %v2196 = vunpack.c.l.b16 %v2010
      %v2197 = vunpack.c.l.b16 %v2011
      %v2198 = vunpack.c.l.b16 %v2012
      %v2199 = vunpack.c.l.b16 %v2013
      %v2200 = vunpack.c.l.b16 %v2014
      %v2201 = vunpack.c.l.b16 %v2015
      %v2202 = vunpack.c.l.b16 %v2016
      %v2203 = vunpack.c.l.b16 %v2017
      %v2204 = vunpack.c.l.b16 %v2018
      %v2205 = vunpack.c.l.b16 %v2019
      %v2206 = vunpack.c.l.b16 %v2020
      %v2207 = vunpack.c.l.b16 %v2021
      %v2208 = vpack.c.b16 %v2193, %v2192
      %v2209 = vpack.c.b16 %v2195, %v2194
      %v2210 = vpack.c.b16 %v2197, %v2196
      %v2211 = vpack.c.b16 %v2199, %v2198
      %v2212 = vpack.c.b16 %v2201, %v2200
      %v2213 = vpack.c.b16 %v2203, %v2202
      %v2214 = vpack.c.b16 %v2205, %v2204
      %v2215 = vpack.c.b16 %v2207, %v2206
      %2224 = vmatpush.bf16.msra.mxu0 %v2215
      %2225 = vmatpush.bf16.msra.mxu0 %v2214
      %2226 = vmatpush.bf16.msra.mxu0 %v2213
      %2227 = vmatpush.bf16.msra.mxu0 %v2212
      %2228 = vmatpush.bf16.msra.mxu0 %v2211
      %2229 = vmatpush.bf16.msra.mxu0 %v2210
      %2230 = vmatpush.bf16.msra.mxu0 %v2209
      %2231 = vmatpush.bf16.msra.mxu0 %v2208
      %2232 = vmatmul.bf16.gmra.mxu0 %v2034
      %v2233 = vpop.f32.mrf.mxu0
      %v2234 = vadd.f32 0.0, %v2233
      %v2235 = vpop.f32.mrf.mxu0
      %v2236 = vadd.f32 0.0, %v2235
      %2237 = vmatmul.bf16.gmra.mxu0 %v2038
      %v2238 = vpop.f32.mrf.mxu0
      %v2239 = vadd.f32 0.0, %v2238
      %v2240 = vpop.f32.mrf.mxu0
      %v2241 = vadd.f32 0.0, %v2240
      %2242 = vmatmul.bf16.gmra.mxu0 %v2042
      %v2243 = vpop.f32.mrf.mxu0
      %v2244 = vadd.f32 0.0, %v2243
      %v2245 = vpop.f32.mrf.mxu0
      %v2246 = vadd.f32 0.0, %v2245
      %2247 = vmatmul.bf16.gmra.mxu0 %v2046
      %v2248 = vpop.f32.mrf.mxu0
      %v2249 = vadd.f32 0.0, %v2248
      %v2250 = vpop.f32.mrf.mxu0
      %v2251 = vadd.f32 0.0, %v2250
      %2252 = vmatmul.bf16.gmra.mxu0 %v2050
      %v2253 = vpop.f32.mrf.mxu0
      %v2254 = vadd.f32 0.0, %v2253
      %v2255 = vpop.f32.mrf.mxu0
      %v2256 = vadd.f32 0.0, %v2255
      %2257 = vmatmul.bf16.gmra.mxu0 %v2054
      %v2258 = vpop.f32.mrf.mxu0
      %v2259 = vadd.f32 0.0, %v2258
      %v2260 = vpop.f32.mrf.mxu0
      %v2261 = vadd.f32 0.0, %v2260
      %2262 = vmatmul.bf16.gmra.mxu0 %v2058
      %v2263 = vpop.f32.mrf.mxu0
      %v2264 = vadd.f32 0.0, %v2263
      %v2265 = vpop.f32.mrf.mxu0
      %v2266 = vadd.f32 0.0, %v2265
      %2267 = vmatmul.bf16.gmra.mxu0 %v2062
      %v2268 = vpop.f32.mrf.mxu0
      %v2269 = vadd.f32 0.0, %v2268
      %v2270 = vpop.f32.mrf.mxu0
      %v2271 = vadd.f32 0.0, %v2270
      %2272 = vmatmul.bf16.gmra.mxu0 %v2066
      %v2273 = vpop.f32.mrf.mxu0
      %v2274 = vadd.f32 0.0, %v2273
      %v2275 = vpop.f32.mrf.mxu0
      %v2276 = vadd.f32 0.0, %v2275
      %2277 = vmatmul.bf16.gmra.mxu0 %v2070
      %v2278 = vpop.f32.mrf.mxu0
      %v2279 = vadd.f32 0.0, %v2278
      %v2280 = vpop.f32.mrf.mxu0
      %v2281 = vadd.f32 0.0, %v2280
      %2282 = vmatmul.bf16.gmra.mxu0 %v2074
      %v2283 = vpop.f32.mrf.mxu0
      %v2284 = vadd.f32 0.0, %v2283
      %v2285 = vpop.f32.mrf.mxu0
      %v2286 = vadd.f32 0.0, %v2285
      %2287 = vmatmul.bf16.gmra.mxu0 %v2078
      %v2288 = vpop.f32.mrf.mxu0
      %v2289 = vadd.f32 0.0, %v2288
      %v2290 = vpop.f32.mrf.mxu0
      %v2291 = vadd.f32 0.0, %v2290
      %2292 = vmatmul.bf16.gmra.mxu0 %v2082
      %v2293 = vpop.f32.mrf.mxu0
      %v2294 = vadd.f32 0.0, %v2293
      %v2295 = vpop.f32.mrf.mxu0
      %v2296 = vadd.f32 0.0, %v2295
      %2297 = vmatmul.bf16.gmra.mxu0 %v2086
      %v2298 = vpop.f32.mrf.mxu0
      %v2299 = vadd.f32 0.0, %v2298
      %v2300 = vpop.f32.mrf.mxu0
      %v2301 = vadd.f32 0.0, %v2300
      %2302 = vmatmul.bf16.gmra.mxu0 %v2090
      %v2303 = vpop.f32.mrf.mxu0
      %v2304 = vadd.f32 0.0, %v2303
      %v2305 = vpop.f32.mrf.mxu0
      %v2306 = vadd.f32 0.0, %v2305
      %2307 = vmatmul.bf16.gmra.mxu0 %v2094
      %v2308 = vpop.f32.mrf.mxu0
      %v2309 = vadd.f32 0.0, %v2308
      %v2310 = vpop.f32.mrf.mxu0
      %v2311 = vadd.f32 0.0, %v2310
      %2312 = vmatmul.bf16.gmra.mxu0 %v2098
      %v2313 = vpop.f32.mrf.mxu0
      %v2314 = vadd.f32 0.0, %v2313
      %v2315 = vpop.f32.mrf.mxu0
      %v2316 = vadd.f32 0.0, %v2315
      %2317 = vmatmul.bf16.gmra.mxu0 %v2102
      %v2318 = vpop.f32.mrf.mxu0
      %v2319 = vadd.f32 0.0, %v2318
      %v2320 = vpop.f32.mrf.mxu0
      %v2321 = vadd.f32 0.0, %v2320
      %2322 = vmatmul.bf16.gmra.mxu0 %v2106
      %v2323 = vpop.f32.mrf.mxu0
      %v2324 = vadd.f32 0.0, %v2323
      %v2325 = vpop.f32.mrf.mxu0
      %v2326 = vadd.f32 0.0, %v2325
      %2327 = vmatmul.bf16.gmra.mxu0 %v2110
      %v2328 = vpop.f32.mrf.mxu0
      %v2329 = vadd.f32 0.0, %v2328
      %v2330 = vpop.f32.mrf.mxu0
      %v2331 = vadd.f32 0.0, %v2330
      %2332 = vmatmul.bf16.gmra.mxu0 %v2114
      %v2333 = vpop.f32.mrf.mxu0
      %v2334 = vadd.f32 0.0, %v2333
      %v2335 = vpop.f32.mrf.mxu0
      %v2336 = vadd.f32 0.0, %v2335
      %2337 = vmatmul.bf16.gmra.mxu0 %v2118
      %v2338 = vpop.f32.mrf.mxu0
      %v2339 = vadd.f32 0.0, %v2338
      %v2340 = vpop.f32.mrf.mxu0
      %v2341 = vadd.f32 0.0, %v2340
      %2342 = vmatmul.bf16.gmra.mxu0 %v2122
      %v2343 = vpop.f32.mrf.mxu0
      %v2344 = vadd.f32 0.0, %v2343
      %v2345 = vpop.f32.mrf.mxu0
      %v2346 = vadd.f32 0.0, %v2345
      %2347 = vmatmul.bf16.gmra.mxu0 %v2126
      %v2348 = vpop.f32.mrf.mxu0
      %v2349 = vadd.f32 0.0, %v2348
      %v2350 = vpop.f32.mrf.mxu0
      %v2351 = vadd.f32 0.0, %v2350
      %2352 = vmatmul.bf16.gmra.mxu0 %v2130
      %v2353 = vpop.f32.mrf.mxu0
      %v2354 = vadd.f32 0.0, %v2353
      %v2355 = vpop.f32.mrf.mxu0
      %v2356 = vadd.f32 0.0, %v2355
      %2357 = vmatmul.bf16.gmra.mxu0 %v2139
      %v2358 = vpop.f32.mrf.mxu0
      %v2359 = vadd.f32 0.0, %v2358
      %v2360 = vpop.f32.mrf.mxu0
      %v2361 = vadd.f32 0.0, %v2360
      %2362 = vmatmul.bf16.gmra.mxu0 %v2148
      %v2363 = vpop.f32.mrf.mxu0
      %v2364 = vadd.f32 0.0, %v2363
      %v2365 = vpop.f32.mrf.mxu0
      %v2366 = vadd.f32 0.0, %v2365
      %2367 = vdwg.mxu0
      %v2368 = vadd.f32 %v1951, %v2234
      %v2369 = vadd.f32 %v1952, %v2236
      %v2370 = vadd.f32 %v1953, %v2239
      %v2371 = vadd.f32 %v1954, %v2241
      %v2372 = vadd.f32 %v1955, %v2244
      %v2373 = vadd.f32 %v1956, %v2246
      %v2374 = vadd.f32 %v1957, %v2249
      %v2375 = vadd.f32 %v1958, %v2251
      %v2376 = vadd.f32 %v1959, %v2254
      %v2377 = vadd.f32 %v1960, %v2256
      %v2378 = vadd.f32 %v1961, %v2259
      %v2379 = vadd.f32 %v1962, %v2261
      %v2380 = vadd.f32 %v1963, %v2264
      %v2381 = vadd.f32 %v1964, %v2266
      %v2382 = vadd.f32 %v1965, %v2269
      %v2383 = vadd.f32 %v1966, %v2271
      %v2384 = vadd.f32 %v1967, %v2274
      %v2385 = vadd.f32 %v1968, %v2276
      %v2386 = vadd.f32 %v1969, %v2279
      %v2387 = vadd.f32 %v1970, %v2281
      %v2388 = vadd.f32 %v1971, %v2284
      %v2389 = vadd.f32 %v1972, %v2286
      %v2390 = vadd.f32 %v1973, %v2289
      %v2391 = vadd.f32 %v1974, %v2291
      %v2392 = vadd.f32 %v1975, %v2294
      %v2393 = vadd.f32 %v1976, %v2296
      %v2394 = vadd.f32 %v1977, %v2299
      %v2395 = vadd.f32 %v1978, %v2301
      %v2396 = vadd.f32 %v1979, %v2304
      %v2397 = vadd.f32 %v1980, %v2306
      %v2398 = vadd.f32 %v1981, %v2309
      %v2399 = vadd.f32 %v1982, %v2311
      %v2400 = vadd.f32 %v1983, %v2314
      %v2401 = vadd.f32 %v1984, %v2316
      %v2402 = vadd.f32 %v1985, %v2319
      %v2403 = vadd.f32 %v1986, %v2321
      %v2404 = vadd.f32 %v1987, %v2324
      %v2405 = vadd.f32 %v1988, %v2326
      %v2406 = vadd.f32 %v1989, %v2329
      %v2407 = vadd.f32 %v1990, %v2331
      %v2408 = vadd.f32 %v1991, %v2334
      %v2409 = vadd.f32 %v1992, %v2336
      %v2410 = vadd.f32 %v1993, %v2339
      %v2411 = vadd.f32 %v1994, %v2341
      %v2412 = vadd.f32 %v1995, %v2344
      %v2413 = vadd.f32 %v1996, %v2346
      %v2414 = vadd.f32 %v1997, %v2349
      %v2415 = vadd.f32 %v1998, %v2351
      %v2416 = vadd.f32 %v1999, %v2354
      %v2417 = vadd.f32 %v2000, %v2356
      %v2418 = vadd.f32 %v2001, %v2359
      %v2419 = vadd.f32 %v2002, %v2361
      %v2420 = vadd.f32 %v2003, %v2364
      %v2421 = vadd.f32 %v2004, %v2366
      %s2422 = scalar_lea.vmem %s1, 256
      %v2423 = vld [vmem:[%s2422] sm:$0xf]
      %v2424 = vld [vmem:[%s2422 + $0x4] sm:$0xf]
      %v2425 = vld [vmem:[%s2422 + $0x8] sm:$0xf]
      %v2426 = vld [vmem:[%s2422 + $0xc] sm:$0xf]
      %v2427 = vld [vmem:[%s2422 + $0x10] sm:$0xf]
      %v2428 = vld [vmem:[%s2422 + $0x14] sm:$0xf]
      %v2429 = vld [vmem:[%s2422 + $0x18] sm:$0xf]
      %v2430 = vld [vmem:[%s2422 + $0x1c] sm:$0xf]
      %v2431 = vld [vmem:[%s2422 + $0x20] sm:$0xf]
      %v2432 = vld [vmem:[%s2422 + $0x24] sm:$0xf]
      %v2433 = vld [vmem:[%s2422 + $0x28] sm:$0xf]
      %v2434 = vld [vmem:[%s2422 + $0x2c] sm:$0xf]
      %v2435 = vld [vmem:[%s2422 + $0x30] sm:$0xf]
      %v2436 = vld [vmem:[%s2422 + $0x34] sm:$0xf]
      %v2437 = vld [vmem:[%s2422 + $0x38] sm:$0xf]
      %v2438 = vld [vmem:[%s2422 + $0x3c] sm:$0xf]
      %v2439 = vpack.c.b16 %v1509, %v743
      %v2440 = vpack.c.b16 %v2025, %v2024
      %v2484 = vunpack.c.l.b16 %v2423
      %v2485 = vunpack.c.l.b16 %v2424
      %v2486 = vunpack.c.l.b16 %v2425
      %v2487 = vunpack.c.l.b16 %v2426
      %v2488 = vunpack.c.l.b16 %v2427
      %v2489 = vunpack.c.l.b16 %v2428
      %v2490 = vunpack.c.l.b16 %v2429
      %v2491 = vunpack.c.l.b16 %v2430
      %v2492 = vunpack.c.l.b16 %v2431
      %v2493 = vunpack.c.l.b16 %v2432
      %v2494 = vunpack.c.l.b16 %v2433
      %v2495 = vunpack.c.l.b16 %v2434
      %v2496 = vunpack.c.l.b16 %v2435
      %v2497 = vunpack.c.l.b16 %v2436
      %v2498 = vunpack.c.l.b16 %v2437
      %v2499 = vunpack.c.l.b16 %v2438
      %v2500 = vpack.c.b16 %v2485, %v2484
      %v2501 = vpack.c.b16 %v2487, %v2486
      %v2502 = vpack.c.b16 %v2489, %v2488
      %v2503 = vpack.c.b16 %v2491, %v2490
      %v2504 = vpack.c.b16 %v2493, %v2492
      %v2505 = vpack.c.b16 %v2495, %v2494
      %v2506 = vpack.c.b16 %v2497, %v2496
      %v2507 = vpack.c.b16 %v2499, %v2498
      %2516 = vmatpush.bf16.msra.mxu0 %v2507
      %2517 = vmatpush.bf16.msra.mxu0 %v2506
      %2518 = vmatpush.bf16.msra.mxu0 %v2505
      %2519 = vmatpush.bf16.msra.mxu0 %v2504
      %2520 = vmatpush.bf16.msra.mxu0 %v2503
      %2521 = vmatpush.bf16.msra.mxu0 %v2502
      %2522 = vmatpush.bf16.msra.mxu0 %v2501
      %2523 = vmatpush.bf16.msra.mxu0 %v2500
      %2524 = vmatmul.bf16.gmra.mxu0 %v994
      %v2525 = vpop.f32.mrf.mxu0
      %v2526 = vadd.f32 0.0, %v2525
      %v2527 = vpop.f32.mrf.mxu0
      %v2528 = vadd.f32 0.0, %v2527
      %2529 = vmatmul.bf16.gmra.mxu0 %v995
      %v2530 = vpop.f32.mrf.mxu0
      %v2531 = vadd.f32 0.0, %v2530
      %v2532 = vpop.f32.mrf.mxu0
      %v2533 = vadd.f32 0.0, %v2532
      %2534 = vmatmul.bf16.gmra.mxu0 %v996
      %v2535 = vpop.f32.mrf.mxu0
      %v2536 = vadd.f32 0.0, %v2535
      %v2537 = vpop.f32.mrf.mxu0
      %v2538 = vadd.f32 0.0, %v2537
      %2539 = vmatmul.bf16.gmra.mxu0 %v997
      %v2540 = vpop.f32.mrf.mxu0
      %v2541 = vadd.f32 0.0, %v2540
      %v2542 = vpop.f32.mrf.mxu0
      %v2543 = vadd.f32 0.0, %v2542
      %2544 = vmatmul.bf16.gmra.mxu0 %v998
      %v2545 = vpop.f32.mrf.mxu0
      %v2546 = vadd.f32 0.0, %v2545
      %v2547 = vpop.f32.mrf.mxu0
      %v2548 = vadd.f32 0.0, %v2547
      %2549 = vmatmul.bf16.gmra.mxu0 %v999
      %v2550 = vpop.f32.mrf.mxu0
      %v2551 = vadd.f32 0.0, %v2550
      %v2552 = vpop.f32.mrf.mxu0
      %v2553 = vadd.f32 0.0, %v2552
      %2554 = vmatmul.bf16.gmra.mxu0 %v1000
      %v2555 = vpop.f32.mrf.mxu0
      %v2556 = vadd.f32 0.0, %v2555
      %v2557 = vpop.f32.mrf.mxu0
      %v2558 = vadd.f32 0.0, %v2557
      %2559 = vmatmul.bf16.gmra.mxu0 %v1001
      %v2560 = vpop.f32.mrf.mxu0
      %v2561 = vadd.f32 0.0, %v2560
      %v2562 = vpop.f32.mrf.mxu0
      %v2563 = vadd.f32 0.0, %v2562
      %2564 = vmatmul.bf16.gmra.mxu0 %v1002
      %v2565 = vpop.f32.mrf.mxu0
      %v2566 = vadd.f32 0.0, %v2565
      %v2567 = vpop.f32.mrf.mxu0
      %v2568 = vadd.f32 0.0, %v2567
      %2569 = vmatmul.bf16.gmra.mxu0 %v1003
      %v2570 = vpop.f32.mrf.mxu0
      %v2571 = vadd.f32 0.0, %v2570
      %v2572 = vpop.f32.mrf.mxu0
      %v2573 = vadd.f32 0.0, %v2572
      %2574 = vmatmul.bf16.gmra.mxu0 %v1004
      %v2575 = vpop.f32.mrf.mxu0
      %v2576 = vadd.f32 0.0, %v2575
      %v2577 = vpop.f32.mrf.mxu0
      %v2578 = vadd.f32 0.0, %v2577
      %2579 = vmatmul.bf16.gmra.mxu0 %v1005
      %v2580 = vpop.f32.mrf.mxu0
      %v2581 = vadd.f32 0.0, %v2580
      %v2582 = vpop.f32.mrf.mxu0
      %v2583 = vadd.f32 0.0, %v2582
      %2584 = vmatmul.bf16.gmra.mxu0 %v1006
      %v2585 = vpop.f32.mrf.mxu0
      %v2586 = vadd.f32 0.0, %v2585
      %v2587 = vpop.f32.mrf.mxu0
      %v2588 = vadd.f32 0.0, %v2587
      %2589 = vmatmul.bf16.gmra.mxu0 %v1007
      %v2590 = vpop.f32.mrf.mxu0
      %v2591 = vadd.f32 0.0, %v2590
      %v2592 = vpop.f32.mrf.mxu0
      %v2593 = vadd.f32 0.0, %v2592
      %2594 = vmatmul.bf16.gmra.mxu0 %v1008
      %v2595 = vpop.f32.mrf.mxu0
      %v2596 = vadd.f32 0.0, %v2595
      %v2597 = vpop.f32.mrf.mxu0
      %v2598 = vadd.f32 0.0, %v2597
      %2599 = vmatmul.bf16.gmra.mxu0 %v1009
      %v2600 = vpop.f32.mrf.mxu0
      %v2601 = vadd.f32 0.0, %v2600
      %v2602 = vpop.f32.mrf.mxu0
      %v2603 = vadd.f32 0.0, %v2602
      %2604 = vmatmul.bf16.gmra.mxu0 %v1010
      %v2605 = vpop.f32.mrf.mxu0
      %v2606 = vadd.f32 0.0, %v2605
      %v2607 = vpop.f32.mrf.mxu0
      %v2608 = vadd.f32 0.0, %v2607
      %2609 = vmatmul.bf16.gmra.mxu0 %v1011
      %v2610 = vpop.f32.mrf.mxu0
      %v2611 = vadd.f32 0.0, %v2610
      %v2612 = vpop.f32.mrf.mxu0
      %v2613 = vadd.f32 0.0, %v2612
      %2614 = vmatmul.bf16.gmra.mxu0 %v1012
      %v2615 = vpop.f32.mrf.mxu0
      %v2616 = vadd.f32 0.0, %v2615
      %v2617 = vpop.f32.mrf.mxu0
      %v2618 = vadd.f32 0.0, %v2617
      %2619 = vmatmul.bf16.gmra.mxu0 %v1013
      %v2620 = vpop.f32.mrf.mxu0
      %v2621 = vadd.f32 0.0, %v2620
      %v2622 = vpop.f32.mrf.mxu0
      %v2623 = vadd.f32 0.0, %v2622
      %2624 = vmatmul.bf16.gmra.mxu0 %v1014
      %v2625 = vpop.f32.mrf.mxu0
      %v2626 = vadd.f32 0.0, %v2625
      %v2627 = vpop.f32.mrf.mxu0
      %v2628 = vadd.f32 0.0, %v2627
      %2629 = vmatmul.bf16.gmra.mxu0 %v1015
      %v2630 = vpop.f32.mrf.mxu0
      %v2631 = vadd.f32 0.0, %v2630
      %v2632 = vpop.f32.mrf.mxu0
      %v2633 = vadd.f32 0.0, %v2632
      %2634 = vmatmul.bf16.gmra.mxu0 %v1016
      %v2635 = vpop.f32.mrf.mxu0
      %v2636 = vadd.f32 0.0, %v2635
      %v2637 = vpop.f32.mrf.mxu0
      %v2638 = vadd.f32 0.0, %v2637
      %2639 = vmatmul.bf16.gmra.mxu0 %v1017
      %v2640 = vpop.f32.mrf.mxu0
      %v2641 = vadd.f32 0.0, %v2640
      %v2642 = vpop.f32.mrf.mxu0
      %v2643 = vadd.f32 0.0, %v2642
      %2644 = vmatmul.bf16.gmra.mxu0 %v1018
      %v2645 = vpop.f32.mrf.mxu0
      %v2646 = vadd.f32 0.0, %v2645
      %v2647 = vpop.f32.mrf.mxu0
      %v2648 = vadd.f32 0.0, %v2647
      %2649 = vmatmul.bf16.gmra.mxu0 %v2439
      %v2650 = vpop.f32.mrf.mxu0
      %v2651 = vadd.f32 0.0, %v2650
      %v2652 = vpop.f32.mrf.mxu0
      %v2653 = vadd.f32 0.0, %v2652
      %2654 = vmatmul.bf16.gmra.mxu0 %v2440
      %v2655 = vpop.f32.mrf.mxu0
      %v2656 = vadd.f32 0.0, %v2655
      %v2657 = vpop.f32.mrf.mxu0
      %v2658 = vadd.f32 0.0, %v2657
      %2659 = vdwg.mxu0
      %v2660 = vadd.f32 %v2368, %v2526
      %v2661 = vadd.f32 %v2369, %v2528
      %v2662 = vadd.f32 %v2370, %v2531
      %v2663 = vadd.f32 %v2371, %v2533
      %v2664 = vadd.f32 %v2372, %v2536
      %v2665 = vadd.f32 %v2373, %v2538
      %v2666 = vadd.f32 %v2374, %v2541
      %v2667 = vadd.f32 %v2375, %v2543
      %v2668 = vadd.f32 %v2376, %v2546
      %v2669 = vadd.f32 %v2377, %v2548
      %v2670 = vadd.f32 %v2378, %v2551
      %v2671 = vadd.f32 %v2379, %v2553
      %v2672 = vadd.f32 %v2380, %v2556
      %v2673 = vadd.f32 %v2381, %v2558
      %v2674 = vadd.f32 %v2382, %v2561
      %v2675 = vadd.f32 %v2383, %v2563
      %v2676 = vadd.f32 %v2384, %v2566
      %v2677 = vadd.f32 %v2385, %v2568
      %v2678 = vadd.f32 %v2386, %v2571
      %v2679 = vadd.f32 %v2387, %v2573
      %v2680 = vadd.f32 %v2388, %v2576
      %v2681 = vadd.f32 %v2389, %v2578
      %v2682 = vadd.f32 %v2390, %v2581
      %v2683 = vadd.f32 %v2391, %v2583
      %v2684 = vadd.f32 %v2392, %v2586
      %v2685 = vadd.f32 %v2393, %v2588
      %v2686 = vadd.f32 %v2394, %v2591
      %v2687 = vadd.f32 %v2395, %v2593
      %v2688 = vadd.f32 %v2396, %v2596
      %v2689 = vadd.f32 %v2397, %v2598
      %v2690 = vadd.f32 %v2398, %v2601
      %v2691 = vadd.f32 %v2399, %v2603
      %v2692 = vadd.f32 %v2400, %v2606
      %v2693 = vadd.f32 %v2401, %v2608
      %v2694 = vadd.f32 %v2402, %v2611
      %v2695 = vadd.f32 %v2403, %v2613
      %v2696 = vadd.f32 %v2404, %v2616
      %v2697 = vadd.f32 %v2405, %v2618
      %v2698 = vadd.f32 %v2406, %v2621
      %v2699 = vadd.f32 %v2407, %v2623
      %v2700 = vadd.f32 %v2408, %v2626
      %v2701 = vadd.f32 %v2409, %v2628
      %v2702 = vadd.f32 %v2410, %v2631
      %v2703 = vadd.f32 %v2411, %v2633
      %v2704 = vadd.f32 %v2412, %v2636
      %v2705 = vadd.f32 %v2413, %v2638
      %v2706 = vadd.f32 %v2414, %v2641
      %v2707 = vadd.f32 %v2415, %v2643
      %v2708 = vadd.f32 %v2416, %v2646
      %v2709 = vadd.f32 %v2417, %v2648
      %v2710 = vadd.f32 %v2418, %v2651
      %v2711 = vadd.f32 %v2419, %v2653
      %v2712 = vadd.f32 %v2420, %v2656
      %v2713 = vadd.f32 %v2421, %v2658
      %s2714 = scalar_lea.vmem %s1, 320
      %v2715 = vld [vmem:[%s2714] sm:$0xf]
      %v2716 = vld [vmem:[%s2714 + $0x4] sm:$0xf]
      %v2717 = vld [vmem:[%s2714 + $0x8] sm:$0xf]
      %v2718 = vld [vmem:[%s2714 + $0xc] sm:$0xf]
      %v2719 = vld [vmem:[%s2714 + $0x10] sm:$0xf]
      %v2720 = vld [vmem:[%s2714 + $0x14] sm:$0xf]
      %v2721 = vld [vmem:[%s2714 + $0x18] sm:$0xf]
      %v2722 = vld [vmem:[%s2714 + $0x1c] sm:$0xf]
      %v2723 = vld [vmem:[%s2714 + $0x20] sm:$0xf]
      %v2724 = vld [vmem:[%s2714 + $0x24] sm:$0xf]
      %v2725 = vld [vmem:[%s2714 + $0x28] sm:$0xf]
      %v2726 = vld [vmem:[%s2714 + $0x2c] sm:$0xf]
      %v2727 = vld [vmem:[%s2714 + $0x30] sm:$0xf]
      %v2728 = vld [vmem:[%s2714 + $0x34] sm:$0xf]
      %v2729 = vld [vmem:[%s2714 + $0x38] sm:$0xf]
      %v2730 = vld [vmem:[%s2714 + $0x3c] sm:$0xf]
      %v2732 = vunpack.c.l.b16 %v599
      %v2733 = vpack.c.b16 %v2732, %v2732
      %v2734 = vrot.slane %v1042, 1
      %v2735 = vor.u32 %v1039, %v2734
      %v2736 = vrot.slane %v1051, 1
      %v2737 = vsel %vm1511, %v2735, %v2736
      %v2738 = vor.u32 %v1048, %v2736
      %v2739 = vrot.slane %v1060, 1
      %v2740 = vsel %vm1511, %v2738, %v2739
      %v2741 = vor.u32 %v1057, %v2739
      %v2742 = vrot.slane %v1069, 1
      %v2743 = vsel %vm1511, %v2741, %v2742
      %v2744 = vor.u32 %v1066, %v2742
      %v2745 = vrot.slane %v1078, 1
      %v2746 = vsel %vm1511, %v2744, %v2745
      %v2747 = vor.u32 %v1075, %v2745
      %v2748 = vrot.slane %v1087, 1
      %v2749 = vsel %vm1511, %v2747, %v2748
      %v2750 = vor.u32 %v1084, %v2748
      %v2751 = vrot.slane %v1096, 1
      %v2752 = vsel %vm1511, %v2750, %v2751
      %v2753 = vor.u32 %v1093, %v2751
      %v2754 = vrot.slane %v1105, 1
      %v2755 = vsel %vm1511, %v2753, %v2754
      %v2756 = vor.u32 %v1102, %v2754
      %v2757 = vrot.slane %v1114, 1
      %v2758 = vsel %vm1511, %v2756, %v2757
      %v2759 = vor.u32 %v1111, %v2757
      %v2760 = vrot.slane %v1123, 1
      %v2761 = vsel %vm1511, %v2759, %v2760
      %v2762 = vor.u32 %v1120, %v2760
      %v2763 = vrot.slane %v1132, 1
      %v2764 = vsel %vm1511, %v2762, %v2763
      %v2765 = vor.u32 %v1129, %v2763
      %v2766 = vrot.slane %v1141, 1
      %v2767 = vsel %vm1511, %v2765, %v2766
      %v2768 = vor.u32 %v1138, %v2766
      %v2769 = vrot.slane %v1150, 1
      %v2770 = vsel %vm1511, %v2768, %v2769
      %v2771 = vor.u32 %v1147, %v2769
      %v2772 = vrot.slane %v1159, 1
      %v2773 = vsel %vm1511, %v2771, %v2772
      %v2774 = vor.u32 %v1156, %v2772
      %v2775 = vrot.slane %v1168, 1
      %v2776 = vsel %vm1511, %v2774, %v2775
      %v2777 = vor.u32 %v1165, %v2775
      %v2778 = vrot.slane %v1177, 1
      %v2779 = vsel %vm1511, %v2777, %v2778
      %v2780 = vor.u32 %v1174, %v2778
      %v2781 = vrot.slane %v1186, 1
      %v2782 = vsel %vm1511, %v2780, %v2781
      %v2783 = vor.u32 %v1183, %v2781
      %v2784 = vrot.slane %v1195, 1
      %v2785 = vsel %vm1511, %v2783, %v2784
      %v2786 = vor.u32 %v1192, %v2784
      %v2787 = vrot.slane %v1204, 1
      %v2788 = vsel %vm1511, %v2786, %v2787
      %v2789 = vor.u32 %v1201, %v2787
      %v2790 = vrot.slane %v1213, 1
      %v2791 = vsel %vm1511, %v2789, %v2790
      %v2792 = vor.u32 %v1210, %v2790
      %v2793 = vrot.slane %v1222, 1
      %v2794 = vsel %vm1511, %v2792, %v2793
      %v2795 = vor.u32 %v1219, %v2793
      %v2796 = vrot.slane %v1231, 1
      %v2797 = vsel %vm1511, %v2795, %v2796
      %v2798 = vor.u32 %v1228, %v2796
      %v2799 = vrot.slane %v1240, 1
      %v2800 = vsel %vm1511, %v2798, %v2799
      %v2801 = vor.u32 %v1237, %v2799
      %v2802 = vrot.slane %v1249, 1
      %v2803 = vsel %vm1511, %v2801, %v2802
      %v2804 = vor.u32 %v1246, %v2802
      %v2805 = vrot.slane %v1258, 1
      %v2806 = vsel %vm1511, %v2804, %v2805
      %v2807 = vor.u32 %v1255, %v2805
      %v2809 = vshll.u32 %v2439, 16
      %v2811 = vrot.slane %v2809, 1
      %v2812 = vsel %vm1511, %v2807, %v2811
      %v2813 = vshrl.u32 %v2439, 16
      %v2815 = vor.u32 %v2813, %v2811
      %v2817 = vshll.u32 %v2440, 16
      %v2819 = vrot.slane %v2817, 1
      %v2820 = vsel %vm1511, %v2815, %v2819
      %v2821 = vshrl.u32 %v2440, 16
      %v2823 = vor.u32 %v2821, %v2819
      %v2825 = vshll.u32 %v2733, 16
      %v2827 = vrot.slane %v2825, 1
      %v2828 = vsel %vm1511, %v2823, %v2827
      %v2872 = vunpack.c.l.b16 %v2715
      %v2873 = vunpack.c.l.b16 %v2716
      %v2874 = vunpack.c.l.b16 %v2717
      %v2875 = vunpack.c.l.b16 %v2718
      %v2876 = vunpack.c.l.b16 %v2719
      %v2877 = vunpack.c.l.b16 %v2720
      %v2878 = vunpack.c.l.b16 %v2721
      %v2879 = vunpack.c.l.b16 %v2722
      %v2880 = vunpack.c.l.b16 %v2723
      %v2881 = vunpack.c.l.b16 %v2724
      %v2882 = vunpack.c.l.b16 %v2725
      %v2883 = vunpack.c.l.b16 %v2726
      %v2884 = vunpack.c.l.b16 %v2727
      %v2885 = vunpack.c.l.b16 %v2728
      %v2886 = vunpack.c.l.b16 %v2729
      %v2887 = vunpack.c.l.b16 %v2730
      %v2888 = vpack.c.b16 %v2873, %v2872
      %v2889 = vpack.c.b16 %v2875, %v2874
      %v2890 = vpack.c.b16 %v2877, %v2876
      %v2891 = vpack.c.b16 %v2879, %v2878
      %v2892 = vpack.c.b16 %v2881, %v2880
      %v2893 = vpack.c.b16 %v2883, %v2882
      %v2894 = vpack.c.b16 %v2885, %v2884
      %v2895 = vpack.c.b16 %v2887, %v2886
      %2904 = vmatpush.bf16.msra.mxu0 %v2895
      %2905 = vmatpush.bf16.msra.mxu0 %v2894
      %2906 = vmatpush.bf16.msra.mxu0 %v2893
      %2907 = vmatpush.bf16.msra.mxu0 %v2892
      %2908 = vmatpush.bf16.msra.mxu0 %v2891
      %2909 = vmatpush.bf16.msra.mxu0 %v2890
      %2910 = vmatpush.bf16.msra.mxu0 %v2889
      %2911 = vmatpush.bf16.msra.mxu0 %v2888
      %2912 = vmatmul.bf16.gmra.mxu0 %v2737
      %v2913 = vpop.f32.mrf.mxu0
      %v2914 = vadd.f32 0.0, %v2913
      %v2915 = vpop.f32.mrf.mxu0
      %v2916 = vadd.f32 0.0, %v2915
      %2917 = vmatmul.bf16.gmra.mxu0 %v2740
      %v2918 = vpop.f32.mrf.mxu0
      %v2919 = vadd.f32 0.0, %v2918
      %v2920 = vpop.f32.mrf.mxu0
      %v2921 = vadd.f32 0.0, %v2920
      %2922 = vmatmul.bf16.gmra.mxu0 %v2743
      %v2923 = vpop.f32.mrf.mxu0
      %v2924 = vadd.f32 0.0, %v2923
      %v2925 = vpop.f32.mrf.mxu0
      %v2926 = vadd.f32 0.0, %v2925
      %2927 = vmatmul.bf16.gmra.mxu0 %v2746
      %v2928 = vpop.f32.mrf.mxu0
      %v2929 = vadd.f32 0.0, %v2928
      %v2930 = vpop.f32.mrf.mxu0
      %v2931 = vadd.f32 0.0, %v2930
      %2932 = vmatmul.bf16.gmra.mxu0 %v2749
      %v2933 = vpop.f32.mrf.mxu0
      %v2934 = vadd.f32 0.0, %v2933
      %v2935 = vpop.f32.mrf.mxu0
      %v2936 = vadd.f32 0.0, %v2935
      %2937 = vmatmul.bf16.gmra.mxu0 %v2752
      %v2938 = vpop.f32.mrf.mxu0
      %v2939 = vadd.f32 0.0, %v2938
      %v2940 = vpop.f32.mrf.mxu0
      %v2941 = vadd.f32 0.0, %v2940
      %2942 = vmatmul.bf16.gmra.mxu0 %v2755
      %v2943 = vpop.f32.mrf.mxu0
      %v2944 = vadd.f32 0.0, %v2943
      %v2945 = vpop.f32.mrf.mxu0
      %v2946 = vadd.f32 0.0, %v2945
      %2947 = vmatmul.bf16.gmra.mxu0 %v2758
      %v2948 = vpop.f32.mrf.mxu0
      %v2949 = vadd.f32 0.0, %v2948
      %v2950 = vpop.f32.mrf.mxu0
      %v2951 = vadd.f32 0.0, %v2950
      %2952 = vmatmul.bf16.gmra.mxu0 %v2761
      %v2953 = vpop.f32.mrf.mxu0
      %v2954 = vadd.f32 0.0, %v2953
      %v2955 = vpop.f32.mrf.mxu0
      %v2956 = vadd.f32 0.0, %v2955
      %2957 = vmatmul.bf16.gmra.mxu0 %v2764
      %v2958 = vpop.f32.mrf.mxu0
      %v2959 = vadd.f32 0.0, %v2958
      %v2960 = vpop.f32.mrf.mxu0
      %v2961 = vadd.f32 0.0, %v2960
      %2962 = vmatmul.bf16.gmra.mxu0 %v2767
      %v2963 = vpop.f32.mrf.mxu0
      %v2964 = vadd.f32 0.0, %v2963
      %v2965 = vpop.f32.mrf.mxu0
      %v2966 = vadd.f32 0.0, %v2965
      %2967 = vmatmul.bf16.gmra.mxu0 %v2770
      %v2968 = vpop.f32.mrf.mxu0
      %v2969 = vadd.f32 0.0, %v2968
      %v2970 = vpop.f32.mrf.mxu0
      %v2971 = vadd.f32 0.0, %v2970
      %2972 = vmatmul.bf16.gmra.mxu0 %v2773
      %v2973 = vpop.f32.mrf.mxu0
      %v2974 = vadd.f32 0.0, %v2973
      %v2975 = vpop.f32.mrf.mxu0
      %v2976 = vadd.f32 0.0, %v2975
      %2977 = vmatmul.bf16.gmra.mxu0 %v2776
      %v2978 = vpop.f32.mrf.mxu0
      %v2979 = vadd.f32 0.0, %v2978
      %v2980 = vpop.f32.mrf.mxu0
      %v2981 = vadd.f32 0.0, %v2980
      %2982 = vmatmul.bf16.gmra.mxu0 %v2779
      %v2983 = vpop.f32.mrf.mxu0
      %v2984 = vadd.f32 0.0, %v2983
      %v2985 = vpop.f32.mrf.mxu0
      %v2986 = vadd.f32 0.0, %v2985
      %2987 = vmatmul.bf16.gmra.mxu0 %v2782
      %v2988 = vpop.f32.mrf.mxu0
      %v2989 = vadd.f32 0.0, %v2988
      %v2990 = vpop.f32.mrf.mxu0
      %v2991 = vadd.f32 0.0, %v2990
      %2992 = vmatmul.bf16.gmra.mxu0 %v2785
      %v2993 = vpop.f32.mrf.mxu0
      %v2994 = vadd.f32 0.0, %v2993
      %v2995 = vpop.f32.mrf.mxu0
      %v2996 = vadd.f32 0.0, %v2995
      %2997 = vmatmul.bf16.gmra.mxu0 %v2788
      %v2998 = vpop.f32.mrf.mxu0
      %v2999 = vadd.f32 0.0, %v2998
      %v3000 = vpop.f32.mrf.mxu0
      %v3001 = vadd.f32 0.0, %v3000
      %3002 = vmatmul.bf16.gmra.mxu0 %v2791
      %v3003 = vpop.f32.mrf.mxu0
      %v3004 = vadd.f32 0.0, %v3003
      %v3005 = vpop.f32.mrf.mxu0
      %v3006 = vadd.f32 0.0, %v3005
      %3007 = vmatmul.bf16.gmra.mxu0 %v2794
      %v3008 = vpop.f32.mrf.mxu0
      %v3009 = vadd.f32 0.0, %v3008
      %v3010 = vpop.f32.mrf.mxu0
      %v3011 = vadd.f32 0.0, %v3010
      %3012 = vmatmul.bf16.gmra.mxu0 %v2797
      %v3013 = vpop.f32.mrf.mxu0
      %v3014 = vadd.f32 0.0, %v3013
      %v3015 = vpop.f32.mrf.mxu0
      %v3016 = vadd.f32 0.0, %v3015
      %3017 = vmatmul.bf16.gmra.mxu0 %v2800
      %v3018 = vpop.f32.mrf.mxu0
      %v3019 = vadd.f32 0.0, %v3018
      %v3020 = vpop.f32.mrf.mxu0
      %v3021 = vadd.f32 0.0, %v3020
      %3022 = vmatmul.bf16.gmra.mxu0 %v2803
      %v3023 = vpop.f32.mrf.mxu0
      %v3024 = vadd.f32 0.0, %v3023
      %v3025 = vpop.f32.mrf.mxu0
      %v3026 = vadd.f32 0.0, %v3025
      %3027 = vmatmul.bf16.gmra.mxu0 %v2806
      %v3028 = vpop.f32.mrf.mxu0
      %v3029 = vadd.f32 0.0, %v3028
      %v3030 = vpop.f32.mrf.mxu0
      %v3031 = vadd.f32 0.0, %v3030
      %3032 = vmatmul.bf16.gmra.mxu0 %v2812
      %v3033 = vpop.f32.mrf.mxu0
      %v3034 = vadd.f32 0.0, %v3033
      %v3035 = vpop.f32.mrf.mxu0
      %v3036 = vadd.f32 0.0, %v3035
      %3037 = vmatmul.bf16.gmra.mxu0 %v2820
      %v3038 = vpop.f32.mrf.mxu0
      %v3039 = vadd.f32 0.0, %v3038
      %v3040 = vpop.f32.mrf.mxu0
      %v3041 = vadd.f32 0.0, %v3040
      %3042 = vmatmul.bf16.gmra.mxu0 %v2828
      %v3043 = vpop.f32.mrf.mxu0
      %v3044 = vadd.f32 0.0, %v3043
      %v3045 = vpop.f32.mrf.mxu0
      %v3046 = vadd.f32 0.0, %v3045
      %3047 = vdwg.mxu0
      %v3048 = vadd.f32 %v2660, %v2914
      %v3049 = vadd.f32 %v2661, %v2916
      %v3050 = vadd.f32 %v2662, %v2919
      %v3051 = vadd.f32 %v2663, %v2921
      %v3052 = vadd.f32 %v2664, %v2924
      %v3053 = vadd.f32 %v2665, %v2926
      %v3054 = vadd.f32 %v2666, %v2929
      %v3055 = vadd.f32 %v2667, %v2931
      %v3056 = vadd.f32 %v2668, %v2934
      %v3057 = vadd.f32 %v2669, %v2936
      %v3058 = vadd.f32 %v2670, %v2939
      %v3059 = vadd.f32 %v2671, %v2941
      %v3060 = vadd.f32 %v2672, %v2944
      %v3061 = vadd.f32 %v2673, %v2946
      %v3062 = vadd.f32 %v2674, %v2949
      %v3063 = vadd.f32 %v2675, %v2951
      %v3064 = vadd.f32 %v2676, %v2954
      %v3065 = vadd.f32 %v2677, %v2956
      %v3066 = vadd.f32 %v2678, %v2959
      %v3067 = vadd.f32 %v2679, %v2961
      %v3068 = vadd.f32 %v2680, %v2964
      %v3069 = vadd.f32 %v2681, %v2966
      %v3070 = vadd.f32 %v2682, %v2969
      %v3071 = vadd.f32 %v2683, %v2971
      %v3072 = vadd.f32 %v2684, %v2974
      %v3073 = vadd.f32 %v2685, %v2976
      %v3074 = vadd.f32 %v2686, %v2979
      %v3075 = vadd.f32 %v2687, %v2981
      %v3076 = vadd.f32 %v2688, %v2984
      %v3077 = vadd.f32 %v2689, %v2986
      %v3078 = vadd.f32 %v2690, %v2989
      %v3079 = vadd.f32 %v2691, %v2991
      %v3080 = vadd.f32 %v2692, %v2994
      %v3081 = vadd.f32 %v2693, %v2996
      %v3082 = vadd.f32 %v2694, %v2999
      %v3083 = vadd.f32 %v2695, %v3001
      %v3084 = vadd.f32 %v2696, %v3004
      %v3085 = vadd.f32 %v2697, %v3006
      %v3086 = vadd.f32 %v2698, %v3009
      %v3087 = vadd.f32 %v2699, %v3011
      %v3088 = vadd.f32 %v2700, %v3014
      %v3089 = vadd.f32 %v2701, %v3016
      %v3090 = vadd.f32 %v2702, %v3019
      %v3091 = vadd.f32 %v2703, %v3021
      %v3092 = vadd.f32 %v2704, %v3024
      %v3093 = vadd.f32 %v2705, %v3026
      %v3094 = vadd.f32 %v2706, %v3029
      %v3095 = vadd.f32 %v2707, %v3031
      %v3096 = vadd.f32 %v2708, %v3034
      %v3097 = vadd.f32 %v2709, %v3036
      %v3098 = vadd.f32 %v2710, %v3039
      %v3099 = vadd.f32 %v2711, %v3041
      %v3100 = vadd.f32 %v2712, %v3044
      %v3101 = vadd.f32 %v2713, %v3046
      %s3102 = scalar_lea.vmem %s1, 384
      %v3103 = vld [vmem:[%s3102] sm:$0xf]
      %v3104 = vld [vmem:[%s3102 + $0x4] sm:$0xf]
      %v3105 = vld [vmem:[%s3102 + $0x8] sm:$0xf]
      %v3106 = vld [vmem:[%s3102 + $0xc] sm:$0xf]
      %v3107 = vld [vmem:[%s3102 + $0x10] sm:$0xf]
      %v3108 = vld [vmem:[%s3102 + $0x14] sm:$0xf]
      %v3109 = vld [vmem:[%s3102 + $0x18] sm:$0xf]
      %v3110 = vld [vmem:[%s3102 + $0x1c] sm:$0xf]
      %v3111 = vld [vmem:[%s3102 + $0x20] sm:$0xf]
      %v3112 = vld [vmem:[%s3102 + $0x24] sm:$0xf]
      %v3113 = vld [vmem:[%s3102 + $0x28] sm:$0xf]
      %v3114 = vld [vmem:[%s3102 + $0x2c] sm:$0xf]
      %v3115 = vld [vmem:[%s3102 + $0x30] sm:$0xf]
      %v3116 = vld [vmem:[%s3102 + $0x34] sm:$0xf]
      %v3117 = vld [vmem:[%s3102 + $0x38] sm:$0xf]
      %v3118 = vld [vmem:[%s3102 + $0x3c] sm:$0xf]
      %v3121 = vunpack.c.l.b16 %v600
      %v3122 = vunpack.c.l.b16 %v601
      %v3123 = vpack.c.b16 %v3121, %v2732
      %v3124 = vpack.c.b16 %v3122, %v3122
      %v3125 = vrot.slane %v2813, 3
      %v3126 = vrot.slane %v2809, 4
      %v3127 = vor.u32 %v3125, %v3126
      %v3128 = vsel %vm1020, %v1261, %v3127
      %v3129 = vrot.slane %v2821, 3
      %v3130 = vrot.slane %v2817, 4
      %v3131 = vor.u32 %v3129, %v3130
      %v3132 = vsel %vm1020, %v3127, %v3131
      %v3134 = vshrl.u32 %v3123, 16
      %v3136 = vrot.slane %v3134, 3
      %v3137 = vshll.u32 %v3123, 16
      %v3139 = vrot.slane %v3137, 4
      %v3140 = vor.u32 %v3136, %v3139
      %v3141 = vsel %vm1020, %v3131, %v3140
      %v3143 = vshrl.u32 %v3124, 16
      %v3145 = vrot.slane %v3143, 3
      %v3146 = vshll.u32 %v3124, 16
      %v3148 = vrot.slane %v3146, 4
      %v3149 = vor.u32 %v3145, %v3148
      %v3150 = vsel %vm1020, %v3140, %v3149
      %v3171 = vunpack.c.l.b16 %v3103
      %v3172 = vunpack.c.l.b16 %v3104
      %v3173 = vunpack.c.l.b16 %v3105
      %v3174 = vunpack.c.l.b16 %v3106
      %v3175 = vunpack.c.l.b16 %v3107
      %v3176 = vunpack.c.l.b16 %v3108
      %v3177 = vunpack.c.l.b16 %v3109
      %v3178 = vunpack.c.l.b16 %v3110
      %v3179 = vunpack.c.l.b16 %v3111
      %v3180 = vunpack.c.l.b16 %v3112
      %v3181 = vunpack.c.l.b16 %v3113
      %v3182 = vunpack.c.l.b16 %v3114
      %v3183 = vunpack.c.l.b16 %v3115
      %v3184 = vunpack.c.l.b16 %v3116
      %v3185 = vunpack.c.l.b16 %v3117
      %v3186 = vunpack.c.l.b16 %v3118
      %v3187 = vpack.c.b16 %v3172, %v3171
      %v3188 = vpack.c.b16 %v3174, %v3173
      %v3189 = vpack.c.b16 %v3176, %v3175
      %v3190 = vpack.c.b16 %v3178, %v3177
      %v3191 = vpack.c.b16 %v3180, %v3179
      %v3192 = vpack.c.b16 %v3182, %v3181
      %v3193 = vpack.c.b16 %v3184, %v3183
      %v3194 = vpack.c.b16 %v3186, %v3185
      %3203 = vmatpush.bf16.msra.mxu0 %v3194
      %3204 = vmatpush.bf16.msra.mxu0 %v3193
      %3205 = vmatpush.bf16.msra.mxu0 %v3192
      %3206 = vmatpush.bf16.msra.mxu0 %v3191
      %3207 = vmatpush.bf16.msra.mxu0 %v3190
      %3208 = vmatpush.bf16.msra.mxu0 %v3189
      %3209 = vmatpush.bf16.msra.mxu0 %v3188
      %3210 = vmatpush.bf16.msra.mxu0 %v3187
      %3211 = vmatmul.bf16.gmra.mxu0 %v1064
      %v3212 = vpop.f32.mrf.mxu0
      %v3213 = vadd.f32 0.0, %v3212
      %v3214 = vpop.f32.mrf.mxu0
      %v3215 = vadd.f32 0.0, %v3214
      %3216 = vmatmul.bf16.gmra.mxu0 %v1073
      %v3217 = vpop.f32.mrf.mxu0
      %v3218 = vadd.f32 0.0, %v3217
      %v3219 = vpop.f32.mrf.mxu0
      %v3220 = vadd.f32 0.0, %v3219
      %3221 = vmatmul.bf16.gmra.mxu0 %v1082
      %v3222 = vpop.f32.mrf.mxu0
      %v3223 = vadd.f32 0.0, %v3222
      %v3224 = vpop.f32.mrf.mxu0
      %v3225 = vadd.f32 0.0, %v3224
      %3226 = vmatmul.bf16.gmra.mxu0 %v1091
      %v3227 = vpop.f32.mrf.mxu0
      %v3228 = vadd.f32 0.0, %v3227
      %v3229 = vpop.f32.mrf.mxu0
      %v3230 = vadd.f32 0.0, %v3229
      %3231 = vmatmul.bf16.gmra.mxu0 %v1100
      %v3232 = vpop.f32.mrf.mxu0
      %v3233 = vadd.f32 0.0, %v3232
      %v3234 = vpop.f32.mrf.mxu0
      %v3235 = vadd.f32 0.0, %v3234
      %3236 = vmatmul.bf16.gmra.mxu0 %v1109
      %v3237 = vpop.f32.mrf.mxu0
      %v3238 = vadd.f32 0.0, %v3237
      %v3239 = vpop.f32.mrf.mxu0
      %v3240 = vadd.f32 0.0, %v3239
      %3241 = vmatmul.bf16.gmra.mxu0 %v1118
      %v3242 = vpop.f32.mrf.mxu0
      %v3243 = vadd.f32 0.0, %v3242
      %v3244 = vpop.f32.mrf.mxu0
      %v3245 = vadd.f32 0.0, %v3244
      %3246 = vmatmul.bf16.gmra.mxu0 %v1127
      %v3247 = vpop.f32.mrf.mxu0
      %v3248 = vadd.f32 0.0, %v3247
      %v3249 = vpop.f32.mrf.mxu0
      %v3250 = vadd.f32 0.0, %v3249
      %3251 = vmatmul.bf16.gmra.mxu0 %v1136
      %v3252 = vpop.f32.mrf.mxu0
      %v3253 = vadd.f32 0.0, %v3252
      %v3254 = vpop.f32.mrf.mxu0
      %v3255 = vadd.f32 0.0, %v3254
      %3256 = vmatmul.bf16.gmra.mxu0 %v1145
      %v3257 = vpop.f32.mrf.mxu0
      %v3258 = vadd.f32 0.0, %v3257
      %v3259 = vpop.f32.mrf.mxu0
      %v3260 = vadd.f32 0.0, %v3259
      %3261 = vmatmul.bf16.gmra.mxu0 %v1154
      %v3262 = vpop.f32.mrf.mxu0
      %v3263 = vadd.f32 0.0, %v3262
      %v3264 = vpop.f32.mrf.mxu0
      %v3265 = vadd.f32 0.0, %v3264
      %3266 = vmatmul.bf16.gmra.mxu0 %v1163
      %v3267 = vpop.f32.mrf.mxu0
      %v3268 = vadd.f32 0.0, %v3267
      %v3269 = vpop.f32.mrf.mxu0
      %v3270 = vadd.f32 0.0, %v3269
      %3271 = vmatmul.bf16.gmra.mxu0 %v1172
      %v3272 = vpop.f32.mrf.mxu0
      %v3273 = vadd.f32 0.0, %v3272
      %v3274 = vpop.f32.mrf.mxu0
      %v3275 = vadd.f32 0.0, %v3274
      %3276 = vmatmul.bf16.gmra.mxu0 %v1181
      %v3277 = vpop.f32.mrf.mxu0
      %v3278 = vadd.f32 0.0, %v3277
      %v3279 = vpop.f32.mrf.mxu0
      %v3280 = vadd.f32 0.0, %v3279
      %3281 = vmatmul.bf16.gmra.mxu0 %v1190
      %v3282 = vpop.f32.mrf.mxu0
      %v3283 = vadd.f32 0.0, %v3282
      %v3284 = vpop.f32.mrf.mxu0
      %v3285 = vadd.f32 0.0, %v3284
      %3286 = vmatmul.bf16.gmra.mxu0 %v1199
      %v3287 = vpop.f32.mrf.mxu0
      %v3288 = vadd.f32 0.0, %v3287
      %v3289 = vpop.f32.mrf.mxu0
      %v3290 = vadd.f32 0.0, %v3289
      %3291 = vmatmul.bf16.gmra.mxu0 %v1208
      %v3292 = vpop.f32.mrf.mxu0
      %v3293 = vadd.f32 0.0, %v3292
      %v3294 = vpop.f32.mrf.mxu0
      %v3295 = vadd.f32 0.0, %v3294
      %3296 = vmatmul.bf16.gmra.mxu0 %v1217
      %v3297 = vpop.f32.mrf.mxu0
      %v3298 = vadd.f32 0.0, %v3297
      %v3299 = vpop.f32.mrf.mxu0
      %v3300 = vadd.f32 0.0, %v3299
      %3301 = vmatmul.bf16.gmra.mxu0 %v1226
      %v3302 = vpop.f32.mrf.mxu0
      %v3303 = vadd.f32 0.0, %v3302
      %v3304 = vpop.f32.mrf.mxu0
      %v3305 = vadd.f32 0.0, %v3304
      %3306 = vmatmul.bf16.gmra.mxu0 %v1235
      %v3307 = vpop.f32.mrf.mxu0
      %v3308 = vadd.f32 0.0, %v3307
      %v3309 = vpop.f32.mrf.mxu0
      %v3310 = vadd.f32 0.0, %v3309
      %3311 = vmatmul.bf16.gmra.mxu0 %v1244
      %v3312 = vpop.f32.mrf.mxu0
      %v3313 = vadd.f32 0.0, %v3312
      %v3314 = vpop.f32.mrf.mxu0
      %v3315 = vadd.f32 0.0, %v3314
      %3316 = vmatmul.bf16.gmra.mxu0 %v1253
      %v3317 = vpop.f32.mrf.mxu0
      %v3318 = vadd.f32 0.0, %v3317
      %v3319 = vpop.f32.mrf.mxu0
      %v3320 = vadd.f32 0.0, %v3319
      %3321 = vmatmul.bf16.gmra.mxu0 %v1262
      %v3322 = vpop.f32.mrf.mxu0
      %v3323 = vadd.f32 0.0, %v3322
      %v3324 = vpop.f32.mrf.mxu0
      %v3325 = vadd.f32 0.0, %v3324
      %3326 = vmatmul.bf16.gmra.mxu0 %v3128
      %v3327 = vpop.f32.mrf.mxu0
      %v3328 = vadd.f32 0.0, %v3327
      %v3329 = vpop.f32.mrf.mxu0
      %v3330 = vadd.f32 0.0, %v3329
      %3331 = vmatmul.bf16.gmra.mxu0 %v3132
      %v3332 = vpop.f32.mrf.mxu0
      %v3333 = vadd.f32 0.0, %v3332
      %v3334 = vpop.f32.mrf.mxu0
      %v3335 = vadd.f32 0.0, %v3334
      %3336 = vmatmul.bf16.gmra.mxu0 %v3141
      %v3337 = vpop.f32.mrf.mxu0
      %v3338 = vadd.f32 0.0, %v3337
      %v3339 = vpop.f32.mrf.mxu0
      %v3340 = vadd.f32 0.0, %v3339
      %3341 = vmatmul.bf16.gmra.mxu0 %v3150
      %v3342 = vpop.f32.mrf.mxu0
      %v3343 = vadd.f32 0.0, %v3342
      %v3344 = vpop.f32.mrf.mxu0
      %v3345 = vadd.f32 0.0, %v3344
      %3346 = vdwg.mxu0
      %v3347 = vadd.f32 %v3048, %v3213
      %v3348 = vadd.f32 %v3049, %v3215
      %v3349 = vadd.f32 %v3050, %v3218
      %v3350 = vadd.f32 %v3051, %v3220
      %v3351 = vadd.f32 %v3052, %v3223
      %v3352 = vadd.f32 %v3053, %v3225
      %v3353 = vadd.f32 %v3054, %v3228
      %v3354 = vadd.f32 %v3055, %v3230
      %v3355 = vadd.f32 %v3056, %v3233
      %v3356 = vadd.f32 %v3057, %v3235
      %v3357 = vadd.f32 %v3058, %v3238
      %v3358 = vadd.f32 %v3059, %v3240
      %v3359 = vadd.f32 %v3060, %v3243
      %v3360 = vadd.f32 %v3061, %v3245
      %v3361 = vadd.f32 %v3062, %v3248
      %v3362 = vadd.f32 %v3063, %v3250
      %v3363 = vadd.f32 %v3064, %v3253
      %v3364 = vadd.f32 %v3065, %v3255
      %v3365 = vadd.f32 %v3066, %v3258
      %v3366 = vadd.f32 %v3067, %v3260
      %v3367 = vadd.f32 %v3068, %v3263
      %v3368 = vadd.f32 %v3069, %v3265
      %v3369 = vadd.f32 %v3070, %v3268
      %v3370 = vadd.f32 %v3071, %v3270
      %v3371 = vadd.f32 %v3072, %v3273
      %v3372 = vadd.f32 %v3073, %v3275
      %v3373 = vadd.f32 %v3074, %v3278
      %v3374 = vadd.f32 %v3075, %v3280
      %v3375 = vadd.f32 %v3076, %v3283
      %v3376 = vadd.f32 %v3077, %v3285
      %v3377 = vadd.f32 %v3078, %v3288
      %v3378 = vadd.f32 %v3079, %v3290
      %v3379 = vadd.f32 %v3080, %v3293
      %v3380 = vadd.f32 %v3081, %v3295
      %v3381 = vadd.f32 %v3082, %v3298
      %v3382 = vadd.f32 %v3083, %v3300
      %v3383 = vadd.f32 %v3084, %v3303
      %v3384 = vadd.f32 %v3085, %v3305
      %v3385 = vadd.f32 %v3086, %v3308
      %v3386 = vadd.f32 %v3087, %v3310
      %v3387 = vadd.f32 %v3088, %v3313
      %v3388 = vadd.f32 %v3089, %v3315
      %v3389 = vadd.f32 %v3090, %v3318
      %v3390 = vadd.f32 %v3091, %v3320
      %v3391 = vadd.f32 %v3092, %v3323
      %v3392 = vadd.f32 %v3093, %v3325
      %v3393 = vadd.f32 %v3094, %v3328
      %v3394 = vadd.f32 %v3095, %v3330
      %v3395 = vadd.f32 %v3096, %v3333
      %v3396 = vadd.f32 %v3097, %v3335
      %v3397 = vadd.f32 %v3098, %v3338
      %v3398 = vadd.f32 %v3099, %v3340
      %v3399 = vadd.f32 %v3100, %v3343
      %v3400 = vadd.f32 %v3101, %v3345
      %s3401 = scalar_lea.vmem %s1, 448
      %v3402 = vld [vmem:[%s3401] sm:$0xf]
      %v3403 = vld [vmem:[%s3401 + $0x4] sm:$0xf]
      %v3404 = vld [vmem:[%s3401 + $0x8] sm:$0xf]
      %v3405 = vld [vmem:[%s3401 + $0xc] sm:$0xf]
      %v3406 = vld [vmem:[%s3401 + $0x10] sm:$0xf]
      %v3407 = vld [vmem:[%s3401 + $0x14] sm:$0xf]
      %v3408 = vld [vmem:[%s3401 + $0x18] sm:$0xf]
      %v3409 = vld [vmem:[%s3401 + $0x1c] sm:$0xf]
      %v3410 = vld [vmem:[%s3401 + $0x20] sm:$0xf]
      %v3411 = vld [vmem:[%s3401 + $0x24] sm:$0xf]
      %v3412 = vld [vmem:[%s3401 + $0x28] sm:$0xf]
      %v3413 = vld [vmem:[%s3401 + $0x2c] sm:$0xf]
      %v3414 = vld [vmem:[%s3401 + $0x30] sm:$0xf]
      %v3415 = vld [vmem:[%s3401 + $0x34] sm:$0xf]
      %v3416 = vld [vmem:[%s3401 + $0x38] sm:$0xf]
      %v3417 = vld [vmem:[%s3401 + $0x3c] sm:$0xf]
      %v3418 = vpack.c.b16 %v2732, %v2025
      %v3419 = vpack.c.b16 %v3122, %v3121
      %v3439 = vunpack.c.l.b16 %v3402
      %v3440 = vunpack.c.l.b16 %v3403
      %v3441 = vunpack.c.l.b16 %v3404
      %v3442 = vunpack.c.l.b16 %v3405
      %v3443 = vunpack.c.l.b16 %v3406
      %v3444 = vunpack.c.l.b16 %v3407
      %v3445 = vunpack.c.l.b16 %v3408
      %v3446 = vunpack.c.l.b16 %v3409
      %v3447 = vunpack.c.l.b16 %v3410
      %v3448 = vunpack.c.l.b16 %v3411
      %v3449 = vunpack.c.l.b16 %v3412
      %v3450 = vunpack.c.l.b16 %v3413
      %v3451 = vunpack.c.l.b16 %v3414
      %v3452 = vunpack.c.l.b16 %v3415
      %v3453 = vunpack.c.l.b16 %v3416
      %v3454 = vunpack.c.l.b16 %v3417
      %v3455 = vpack.c.b16 %v3440, %v3439
      %v3456 = vpack.c.b16 %v3442, %v3441
      %v3457 = vpack.c.b16 %v3444, %v3443
      %v3458 = vpack.c.b16 %v3446, %v3445
      %v3459 = vpack.c.b16 %v3448, %v3447
      %v3460 = vpack.c.b16 %v3450, %v3449
      %v3461 = vpack.c.b16 %v3452, %v3451
      %v3462 = vpack.c.b16 %v3454, %v3453
      %3471 = vmatpush.bf16.msra.mxu0 %v3462
      %3472 = vmatpush.bf16.msra.mxu0 %v3461
      %3473 = vmatpush.bf16.msra.mxu0 %v3460
      %3474 = vmatpush.bf16.msra.mxu0 %v3459
      %3475 = vmatpush.bf16.msra.mxu0 %v3458
      %3476 = vmatpush.bf16.msra.mxu0 %v3457
      %3477 = vmatpush.bf16.msra.mxu0 %v3456
      %3478 = vmatpush.bf16.msra.mxu0 %v3455
      %3479 = vmatmul.bf16.gmra.mxu0 %v747
      %v3480 = vpop.f32.mrf.mxu0
      %v3481 = vadd.f32 0.0, %v3480
      %v3482 = vpop.f32.mrf.mxu0
      %v3483 = vadd.f32 0.0, %v3482
      %3484 = vmatmul.bf16.gmra.mxu0 %v748
      %v3485 = vpop.f32.mrf.mxu0
      %v3486 = vadd.f32 0.0, %v3485
      %v3487 = vpop.f32.mrf.mxu0
      %v3488 = vadd.f32 0.0, %v3487
      %3489 = vmatmul.bf16.gmra.mxu0 %v749
      %v3490 = vpop.f32.mrf.mxu0
      %v3491 = vadd.f32 0.0, %v3490
      %v3492 = vpop.f32.mrf.mxu0
      %v3493 = vadd.f32 0.0, %v3492
      %3494 = vmatmul.bf16.gmra.mxu0 %v750
      %v3495 = vpop.f32.mrf.mxu0
      %v3496 = vadd.f32 0.0, %v3495
      %v3497 = vpop.f32.mrf.mxu0
      %v3498 = vadd.f32 0.0, %v3497
      %3499 = vmatmul.bf16.gmra.mxu0 %v751
      %v3500 = vpop.f32.mrf.mxu0
      %v3501 = vadd.f32 0.0, %v3500
      %v3502 = vpop.f32.mrf.mxu0
      %v3503 = vadd.f32 0.0, %v3502
      %3504 = vmatmul.bf16.gmra.mxu0 %v752
      %v3505 = vpop.f32.mrf.mxu0
      %v3506 = vadd.f32 0.0, %v3505
      %v3507 = vpop.f32.mrf.mxu0
      %v3508 = vadd.f32 0.0, %v3507
      %3509 = vmatmul.bf16.gmra.mxu0 %v753
      %v3510 = vpop.f32.mrf.mxu0
      %v3511 = vadd.f32 0.0, %v3510
      %v3512 = vpop.f32.mrf.mxu0
      %v3513 = vadd.f32 0.0, %v3512
      %3514 = vmatmul.bf16.gmra.mxu0 %v754
      %v3515 = vpop.f32.mrf.mxu0
      %v3516 = vadd.f32 0.0, %v3515
      %v3517 = vpop.f32.mrf.mxu0
      %v3518 = vadd.f32 0.0, %v3517
      %3519 = vmatmul.bf16.gmra.mxu0 %v755
      %v3520 = vpop.f32.mrf.mxu0
      %v3521 = vadd.f32 0.0, %v3520
      %v3522 = vpop.f32.mrf.mxu0
      %v3523 = vadd.f32 0.0, %v3522
      %3524 = vmatmul.bf16.gmra.mxu0 %v756
      %v3525 = vpop.f32.mrf.mxu0
      %v3526 = vadd.f32 0.0, %v3525
      %v3527 = vpop.f32.mrf.mxu0
      %v3528 = vadd.f32 0.0, %v3527
      %3529 = vmatmul.bf16.gmra.mxu0 %v757
      %v3530 = vpop.f32.mrf.mxu0
      %v3531 = vadd.f32 0.0, %v3530
      %v3532 = vpop.f32.mrf.mxu0
      %v3533 = vadd.f32 0.0, %v3532
      %3534 = vmatmul.bf16.gmra.mxu0 %v758
      %v3535 = vpop.f32.mrf.mxu0
      %v3536 = vadd.f32 0.0, %v3535
      %v3537 = vpop.f32.mrf.mxu0
      %v3538 = vadd.f32 0.0, %v3537
      %3539 = vmatmul.bf16.gmra.mxu0 %v759
      %v3540 = vpop.f32.mrf.mxu0
      %v3541 = vadd.f32 0.0, %v3540
      %v3542 = vpop.f32.mrf.mxu0
      %v3543 = vadd.f32 0.0, %v3542
      %3544 = vmatmul.bf16.gmra.mxu0 %v760
      %v3545 = vpop.f32.mrf.mxu0
      %v3546 = vadd.f32 0.0, %v3545
      %v3547 = vpop.f32.mrf.mxu0
      %v3548 = vadd.f32 0.0, %v3547
      %3549 = vmatmul.bf16.gmra.mxu0 %v761
      %v3550 = vpop.f32.mrf.mxu0
      %v3551 = vadd.f32 0.0, %v3550
      %v3552 = vpop.f32.mrf.mxu0
      %v3553 = vadd.f32 0.0, %v3552
      %3554 = vmatmul.bf16.gmra.mxu0 %v762
      %v3555 = vpop.f32.mrf.mxu0
      %v3556 = vadd.f32 0.0, %v3555
      %v3557 = vpop.f32.mrf.mxu0
      %v3558 = vadd.f32 0.0, %v3557
      %3559 = vmatmul.bf16.gmra.mxu0 %v763
      %v3560 = vpop.f32.mrf.mxu0
      %v3561 = vadd.f32 0.0, %v3560
      %v3562 = vpop.f32.mrf.mxu0
      %v3563 = vadd.f32 0.0, %v3562
      %3564 = vmatmul.bf16.gmra.mxu0 %v764
      %v3565 = vpop.f32.mrf.mxu0
      %v3566 = vadd.f32 0.0, %v3565
      %v3567 = vpop.f32.mrf.mxu0
      %v3568 = vadd.f32 0.0, %v3567
      %3569 = vmatmul.bf16.gmra.mxu0 %v765
      %v3570 = vpop.f32.mrf.mxu0
      %v3571 = vadd.f32 0.0, %v3570
      %v3572 = vpop.f32.mrf.mxu0
      %v3573 = vadd.f32 0.0, %v3572
      %3574 = vmatmul.bf16.gmra.mxu0 %v766
      %v3575 = vpop.f32.mrf.mxu0
      %v3576 = vadd.f32 0.0, %v3575
      %v3577 = vpop.f32.mrf.mxu0
      %v3578 = vadd.f32 0.0, %v3577
      %3579 = vmatmul.bf16.gmra.mxu0 %v767
      %v3580 = vpop.f32.mrf.mxu0
      %v3581 = vadd.f32 0.0, %v3580
      %v3582 = vpop.f32.mrf.mxu0
      %v3583 = vadd.f32 0.0, %v3582
      %3584 = vmatmul.bf16.gmra.mxu0 %v768
      %v3585 = vpop.f32.mrf.mxu0
      %v3586 = vadd.f32 0.0, %v3585
      %v3587 = vpop.f32.mrf.mxu0
      %v3588 = vadd.f32 0.0, %v3587
      %3589 = vmatmul.bf16.gmra.mxu0 %v769
      %v3590 = vpop.f32.mrf.mxu0
      %v3591 = vadd.f32 0.0, %v3590
      %v3592 = vpop.f32.mrf.mxu0
      %v3593 = vadd.f32 0.0, %v3592
      %3594 = vmatmul.bf16.gmra.mxu0 %v770
      %v3595 = vpop.f32.mrf.mxu0
      %v3596 = vadd.f32 0.0, %v3595
      %v3597 = vpop.f32.mrf.mxu0
      %v3598 = vadd.f32 0.0, %v3597
      %3599 = vmatmul.bf16.gmra.mxu0 %v2026
      %v3600 = vpop.f32.mrf.mxu0
      %v3601 = vadd.f32 0.0, %v3600
      %v3602 = vpop.f32.mrf.mxu0
      %v3603 = vadd.f32 0.0, %v3602
      %3604 = vmatmul.bf16.gmra.mxu0 %v3418
      %v3605 = vpop.f32.mrf.mxu0
      %v3606 = vadd.f32 0.0, %v3605
      %v3607 = vpop.f32.mrf.mxu0
      %v3608 = vadd.f32 0.0, %v3607
      %3609 = vmatmul.bf16.gmra.mxu0 %v3419
      %v3610 = vpop.f32.mrf.mxu0
      %v3611 = vadd.f32 0.0, %v3610
      %v3612 = vpop.f32.mrf.mxu0
      %v3613 = vadd.f32 0.0, %v3612
      %3614 = vdwg.mxu0
      %v3615 = vadd.f32 %v3347, %v3481
      %v3616 = vadd.f32 %v3348, %v3483
      %v3617 = vadd.f32 %v3349, %v3486
      %v3618 = vadd.f32 %v3350, %v3488
      %v3619 = vadd.f32 %v3351, %v3491
      %v3620 = vadd.f32 %v3352, %v3493
      %v3621 = vadd.f32 %v3353, %v3496
      %v3622 = vadd.f32 %v3354, %v3498
      %v3623 = vadd.f32 %v3355, %v3501
      %v3624 = vadd.f32 %v3356, %v3503
      %v3625 = vadd.f32 %v3357, %v3506
      %v3626 = vadd.f32 %v3358, %v3508
      %v3627 = vadd.f32 %v3359, %v3511
      %v3628 = vadd.f32 %v3360, %v3513
      %v3629 = vadd.f32 %v3361, %v3516
      %v3630 = vadd.f32 %v3362, %v3518
      %v3631 = vadd.f32 %v3363, %v3521
      %v3632 = vadd.f32 %v3364, %v3523
      %v3633 = vadd.f32 %v3365, %v3526
      %v3634 = vadd.f32 %v3366, %v3528
      %v3635 = vadd.f32 %v3367, %v3531
      %v3636 = vadd.f32 %v3368, %v3533
      %v3637 = vadd.f32 %v3369, %v3536
      %v3638 = vadd.f32 %v3370, %v3538
      %v3639 = vadd.f32 %v3371, %v3541
      %v3640 = vadd.f32 %v3372, %v3543
      %v3641 = vadd.f32 %v3373, %v3546
      %v3642 = vadd.f32 %v3374, %v3548
      %v3643 = vadd.f32 %v3375, %v3551
      %v3644 = vadd.f32 %v3376, %v3553
      %v3645 = vadd.f32 %v3377, %v3556
      %v3646 = vadd.f32 %v3378, %v3558
      %v3647 = vadd.f32 %v3379, %v3561
      %v3648 = vadd.f32 %v3380, %v3563
      %v3649 = vadd.f32 %v3381, %v3566
      %v3650 = vadd.f32 %v3382, %v3568
      %v3651 = vadd.f32 %v3383, %v3571
      %v3652 = vadd.f32 %v3384, %v3573
      %v3653 = vadd.f32 %v3385, %v3576
      %v3654 = vadd.f32 %v3386, %v3578
      %v3655 = vadd.f32 %v3387, %v3581
      %v3656 = vadd.f32 %v3388, %v3583
      %v3657 = vadd.f32 %v3389, %v3586
      %v3658 = vadd.f32 %v3390, %v3588
      %v3659 = vadd.f32 %v3391, %v3591
      %v3660 = vadd.f32 %v3392, %v3593
      %v3661 = vadd.f32 %v3393, %v3596
      %v3662 = vadd.f32 %v3394, %v3598
      %v3663 = vadd.f32 %v3395, %v3601
      %v3664 = vadd.f32 %v3396, %v3603
      %v3665 = vadd.f32 %v3397, %v3606
      %v3666 = vadd.f32 %v3398, %v3608
      %v3667 = vadd.f32 %v3399, %v3611
      %v3668 = vadd.f32 %v3400, %v3613
      %s3669 = scalar_lea.vmem %s1, 512
      %v3670 = vld [vmem:[%s3669] sm:$0xf]
      %v3671 = vld [vmem:[%s3669 + $0x4] sm:$0xf]
      %v3672 = vld [vmem:[%s3669 + $0x8] sm:$0xf]
      %v3673 = vld [vmem:[%s3669 + $0xc] sm:$0xf]
      %v3674 = vld [vmem:[%s3669 + $0x10] sm:$0xf]
      %v3675 = vld [vmem:[%s3669 + $0x14] sm:$0xf]
      %v3676 = vld [vmem:[%s3669 + $0x18] sm:$0xf]
      %v3677 = vld [vmem:[%s3669 + $0x1c] sm:$0xf]
      %v3678 = vld [vmem:[%s3669 + $0x20] sm:$0xf]
      %v3679 = vld [vmem:[%s3669 + $0x24] sm:$0xf]
      %v3680 = vld [vmem:[%s3669 + $0x28] sm:$0xf]
      %v3681 = vld [vmem:[%s3669 + $0x2c] sm:$0xf]
      %v3682 = vld [vmem:[%s3669 + $0x30] sm:$0xf]
      %v3683 = vld [vmem:[%s3669 + $0x34] sm:$0xf]
      %v3684 = vld [vmem:[%s3669 + $0x38] sm:$0xf]
      %v3685 = vld [vmem:[%s3669 + $0x3c] sm:$0xf]
      %v3687 = vunpack.c.l.b16 %v602
      %v3688 = vpack.c.b16 %v3687, %v3687
      %v3689 = vrot.slane %v2135, 1
      %v3690 = vsel %vm1511, %v1726, %v3689
      %v3691 = vor.u32 %v2132, %v3689
      %v3693 = vshll.u32 %v3418, 16
      %v3695 = vrot.slane %v3693, 1
      %v3696 = vsel %vm1511, %v3691, %v3695
      %v3697 = vshrl.u32 %v3418, 16
      %v3699 = vor.u32 %v3697, %v3695
      %v3701 = vshll.u32 %v3419, 16
      %v3703 = vrot.slane %v3701, 1
      %v3704 = vsel %vm1511, %v3699, %v3703
      %v3705 = vshrl.u32 %v3419, 16
      %v3707 = vor.u32 %v3705, %v3703
      %v3709 = vshll.u32 %v3688, 16
      %v3711 = vrot.slane %v3709, 1
      %v3712 = vsel %vm1511, %v3707, %v3711
      %v3733 = vunpack.c.l.b16 %v3670
      %v3734 = vunpack.c.l.b16 %v3671
      %v3735 = vunpack.c.l.b16 %v3672
      %v3736 = vunpack.c.l.b16 %v3673
      %v3737 = vunpack.c.l.b16 %v3674
      %v3738 = vunpack.c.l.b16 %v3675
      %v3739 = vunpack.c.l.b16 %v3676
      %v3740 = vunpack.c.l.b16 %v3677
      %v3741 = vunpack.c.l.b16 %v3678
      %v3742 = vunpack.c.l.b16 %v3679
      %v3743 = vunpack.c.l.b16 %v3680
      %v3744 = vunpack.c.l.b16 %v3681
      %v3745 = vunpack.c.l.b16 %v3682
      %v3746 = vunpack.c.l.b16 %v3683
      %v3747 = vunpack.c.l.b16 %v3684
      %v3748 = vunpack.c.l.b16 %v3685
      %v3749 = vpack.c.b16 %v3734, %v3733
      %v3750 = vpack.c.b16 %v3736, %v3735
      %v3751 = vpack.c.b16 %v3738, %v3737
      %v3752 = vpack.c.b16 %v3740, %v3739
      %v3753 = vpack.c.b16 %v3742, %v3741
      %v3754 = vpack.c.b16 %v3744, %v3743
      %v3755 = vpack.c.b16 %v3746, %v3745
      %v3756 = vpack.c.b16 %v3748, %v3747
      %3765 = vmatpush.bf16.msra.mxu0 %v3756
      %3766 = vmatpush.bf16.msra.mxu0 %v3755
      %3767 = vmatpush.bf16.msra.mxu0 %v3754
      %3768 = vmatpush.bf16.msra.mxu0 %v3753
      %3769 = vmatpush.bf16.msra.mxu0 %v3752
      %3770 = vmatpush.bf16.msra.mxu0 %v3751
      %3771 = vmatpush.bf16.msra.mxu0 %v3750
      %3772 = vmatpush.bf16.msra.mxu0 %v3749
      %3773 = vmatmul.bf16.gmra.mxu0 %v1547
      %v3774 = vpop.f32.mrf.mxu0
      %v3775 = vadd.f32 0.0, %v3774
      %v3776 = vpop.f32.mrf.mxu0
      %v3777 = vadd.f32 0.0, %v3776
      %3778 = vmatmul.bf16.gmra.mxu0 %v1555
      %v3779 = vpop.f32.mrf.mxu0
      %v3780 = vadd.f32 0.0, %v3779
      %v3781 = vpop.f32.mrf.mxu0
      %v3782 = vadd.f32 0.0, %v3781
      %3783 = vmatmul.bf16.gmra.mxu0 %v1563
      %v3784 = vpop.f32.mrf.mxu0
      %v3785 = vadd.f32 0.0, %v3784
      %v3786 = vpop.f32.mrf.mxu0
      %v3787 = vadd.f32 0.0, %v3786
      %3788 = vmatmul.bf16.gmra.mxu0 %v1571
      %v3789 = vpop.f32.mrf.mxu0
      %v3790 = vadd.f32 0.0, %v3789
      %v3791 = vpop.f32.mrf.mxu0
      %v3792 = vadd.f32 0.0, %v3791
      %3793 = vmatmul.bf16.gmra.mxu0 %v1579
      %v3794 = vpop.f32.mrf.mxu0
      %v3795 = vadd.f32 0.0, %v3794
      %v3796 = vpop.f32.mrf.mxu0
      %v3797 = vadd.f32 0.0, %v3796
      %3798 = vmatmul.bf16.gmra.mxu0 %v1587
      %v3799 = vpop.f32.mrf.mxu0
      %v3800 = vadd.f32 0.0, %v3799
      %v3801 = vpop.f32.mrf.mxu0
      %v3802 = vadd.f32 0.0, %v3801
      %3803 = vmatmul.bf16.gmra.mxu0 %v1595
      %v3804 = vpop.f32.mrf.mxu0
      %v3805 = vadd.f32 0.0, %v3804
      %v3806 = vpop.f32.mrf.mxu0
      %v3807 = vadd.f32 0.0, %v3806
      %3808 = vmatmul.bf16.gmra.mxu0 %v1603
      %v3809 = vpop.f32.mrf.mxu0
      %v3810 = vadd.f32 0.0, %v3809
      %v3811 = vpop.f32.mrf.mxu0
      %v3812 = vadd.f32 0.0, %v3811
      %3813 = vmatmul.bf16.gmra.mxu0 %v1611
      %v3814 = vpop.f32.mrf.mxu0
      %v3815 = vadd.f32 0.0, %v3814
      %v3816 = vpop.f32.mrf.mxu0
      %v3817 = vadd.f32 0.0, %v3816
      %3818 = vmatmul.bf16.gmra.mxu0 %v1619
      %v3819 = vpop.f32.mrf.mxu0
      %v3820 = vadd.f32 0.0, %v3819
      %v3821 = vpop.f32.mrf.mxu0
      %v3822 = vadd.f32 0.0, %v3821
      %3823 = vmatmul.bf16.gmra.mxu0 %v1627
      %v3824 = vpop.f32.mrf.mxu0
      %v3825 = vadd.f32 0.0, %v3824
      %v3826 = vpop.f32.mrf.mxu0
      %v3827 = vadd.f32 0.0, %v3826
      %3828 = vmatmul.bf16.gmra.mxu0 %v1635
      %v3829 = vpop.f32.mrf.mxu0
      %v3830 = vadd.f32 0.0, %v3829
      %v3831 = vpop.f32.mrf.mxu0
      %v3832 = vadd.f32 0.0, %v3831
      %3833 = vmatmul.bf16.gmra.mxu0 %v1643
      %v3834 = vpop.f32.mrf.mxu0
      %v3835 = vadd.f32 0.0, %v3834
      %v3836 = vpop.f32.mrf.mxu0
      %v3837 = vadd.f32 0.0, %v3836
      %3838 = vmatmul.bf16.gmra.mxu0 %v1651
      %v3839 = vpop.f32.mrf.mxu0
      %v3840 = vadd.f32 0.0, %v3839
      %v3841 = vpop.f32.mrf.mxu0
      %v3842 = vadd.f32 0.0, %v3841
      %3843 = vmatmul.bf16.gmra.mxu0 %v1659
      %v3844 = vpop.f32.mrf.mxu0
      %v3845 = vadd.f32 0.0, %v3844
      %v3846 = vpop.f32.mrf.mxu0
      %v3847 = vadd.f32 0.0, %v3846
      %3848 = vmatmul.bf16.gmra.mxu0 %v1667
      %v3849 = vpop.f32.mrf.mxu0
      %v3850 = vadd.f32 0.0, %v3849
      %v3851 = vpop.f32.mrf.mxu0
      %v3852 = vadd.f32 0.0, %v3851
      %3853 = vmatmul.bf16.gmra.mxu0 %v1675
      %v3854 = vpop.f32.mrf.mxu0
      %v3855 = vadd.f32 0.0, %v3854
      %v3856 = vpop.f32.mrf.mxu0
      %v3857 = vadd.f32 0.0, %v3856
      %3858 = vmatmul.bf16.gmra.mxu0 %v1683
      %v3859 = vpop.f32.mrf.mxu0
      %v3860 = vadd.f32 0.0, %v3859
      %v3861 = vpop.f32.mrf.mxu0
      %v3862 = vadd.f32 0.0, %v3861
      %3863 = vmatmul.bf16.gmra.mxu0 %v1691
      %v3864 = vpop.f32.mrf.mxu0
      %v3865 = vadd.f32 0.0, %v3864
      %v3866 = vpop.f32.mrf.mxu0
      %v3867 = vadd.f32 0.0, %v3866
      %3868 = vmatmul.bf16.gmra.mxu0 %v1699
      %v3869 = vpop.f32.mrf.mxu0
      %v3870 = vadd.f32 0.0, %v3869
      %v3871 = vpop.f32.mrf.mxu0
      %v3872 = vadd.f32 0.0, %v3871
      %3873 = vmatmul.bf16.gmra.mxu0 %v1707
      %v3874 = vpop.f32.mrf.mxu0
      %v3875 = vadd.f32 0.0, %v3874
      %v3876 = vpop.f32.mrf.mxu0
      %v3877 = vadd.f32 0.0, %v3876
      %3878 = vmatmul.bf16.gmra.mxu0 %v1715
      %v3879 = vpop.f32.mrf.mxu0
      %v3880 = vadd.f32 0.0, %v3879
      %v3881 = vpop.f32.mrf.mxu0
      %v3882 = vadd.f32 0.0, %v3881
      %3883 = vmatmul.bf16.gmra.mxu0 %v1723
      %v3884 = vpop.f32.mrf.mxu0
      %v3885 = vadd.f32 0.0, %v3884
      %v3886 = vpop.f32.mrf.mxu0
      %v3887 = vadd.f32 0.0, %v3886
      %3888 = vmatmul.bf16.gmra.mxu0 %v3690
      %v3889 = vpop.f32.mrf.mxu0
      %v3890 = vadd.f32 0.0, %v3889
      %v3891 = vpop.f32.mrf.mxu0
      %v3892 = vadd.f32 0.0, %v3891
      %3893 = vmatmul.bf16.gmra.mxu0 %v3696
      %v3894 = vpop.f32.mrf.mxu0
      %v3895 = vadd.f32 0.0, %v3894
      %v3896 = vpop.f32.mrf.mxu0
      %v3897 = vadd.f32 0.0, %v3896
      %3898 = vmatmul.bf16.gmra.mxu0 %v3704
      %v3899 = vpop.f32.mrf.mxu0
      %v3900 = vadd.f32 0.0, %v3899
      %v3901 = vpop.f32.mrf.mxu0
      %v3902 = vadd.f32 0.0, %v3901
      %3903 = vmatmul.bf16.gmra.mxu0 %v3712
      %v3904 = vpop.f32.mrf.mxu0
      %v3905 = vadd.f32 0.0, %v3904
      %v3906 = vpop.f32.mrf.mxu0
      %v3907 = vadd.f32 0.0, %v3906
      %3908 = vdwg.mxu0
      %v3909 = vadd.f32 %v3615, %v3775
      %v3910 = vadd.f32 %v3616, %v3777
      %v3911 = vadd.f32 %v3617, %v3780
      %v3912 = vadd.f32 %v3618, %v3782
      %v3913 = vadd.f32 %v3619, %v3785
      %v3914 = vadd.f32 %v3620, %v3787
      %v3915 = vadd.f32 %v3621, %v3790
      %v3916 = vadd.f32 %v3622, %v3792
      %v3917 = vadd.f32 %v3623, %v3795
      %v3918 = vadd.f32 %v3624, %v3797
      %v3919 = vadd.f32 %v3625, %v3800
      %v3920 = vadd.f32 %v3626, %v3802
      %v3921 = vadd.f32 %v3627, %v3805
      %v3922 = vadd.f32 %v3628, %v3807
      %v3923 = vadd.f32 %v3629, %v3810
      %v3924 = vadd.f32 %v3630, %v3812
      %v3925 = vadd.f32 %v3631, %v3815
      %v3926 = vadd.f32 %v3632, %v3817
      %v3927 = vadd.f32 %v3633, %v3820
      %v3928 = vadd.f32 %v3634, %v3822
      %v3929 = vadd.f32 %v3635, %v3825
      %v3930 = vadd.f32 %v3636, %v3827
      %v3931 = vadd.f32 %v3637, %v3830
      %v3932 = vadd.f32 %v3638, %v3832
      %v3933 = vadd.f32 %v3639, %v3835
      %v3934 = vadd.f32 %v3640, %v3837
      %v3935 = vadd.f32 %v3641, %v3840
      %v3936 = vadd.f32 %v3642, %v3842
      %v3937 = vadd.f32 %v3643, %v3845
      %v3938 = vadd.f32 %v3644, %v3847
      %v3939 = vadd.f32 %v3645, %v3850
      %v3940 = vadd.f32 %v3646, %v3852
      %v3941 = vadd.f32 %v3647, %v3855
      %v3942 = vadd.f32 %v3648, %v3857
      %v3943 = vadd.f32 %v3649, %v3860
      %v3944 = vadd.f32 %v3650, %v3862
      %v3945 = vadd.f32 %v3651, %v3865
      %v3946 = vadd.f32 %v3652, %v3867
      %v3947 = vadd.f32 %v3653, %v3870
      %v3948 = vadd.f32 %v3654, %v3872
      %v3949 = vadd.f32 %v3655, %v3875
      %v3950 = vadd.f32 %v3656, %v3877
      %v3951 = vadd.f32 %v3657, %v3880
      %v3952 = vadd.f32 %v3658, %v3882
      %v3953 = vadd.f32 %v3659, %v3885
      %v3954 = vadd.f32 %v3660, %v3887
      %v3955 = vadd.f32 %v3661, %v3890
      %v3956 = vadd.f32 %v3662, %v3892
      %v3957 = vadd.f32 %v3663, %v3895
      %v3958 = vadd.f32 %v3664, %v3897
      %v3959 = vadd.f32 %v3665, %v3900
      %v3960 = vadd.f32 %v3666, %v3902
      %v3961 = vadd.f32 %v3667, %v3905
      %v3962 = vadd.f32 %v3668, %v3907
      %v3963 = vld [vmem:[%s2] sm:$0x1]
      %v3965 = vperm.slane %v3963, 0
      %v3967 = vadd.f32 %v3909, %v3965
      %v3968 = vadd.f32 %v3910, %v3965
      %v3969 = vadd.f32 %v3911, %v3965
      %v3970 = vadd.f32 %v3912, %v3965
      %v3971 = vadd.f32 %v3913, %v3965
      %v3972 = vadd.f32 %v3914, %v3965
      %v3973 = vadd.f32 %v3915, %v3965
      %v3974 = vadd.f32 %v3916, %v3965
      %v3975 = vadd.f32 %v3917, %v3965
      %v3976 = vadd.f32 %v3918, %v3965
      %v3977 = vadd.f32 %v3919, %v3965
      %v3978 = vadd.f32 %v3920, %v3965
      %v3979 = vadd.f32 %v3921, %v3965
      %v3980 = vadd.f32 %v3922, %v3965
      %v3981 = vadd.f32 %v3923, %v3965
      %v3982 = vadd.f32 %v3924, %v3965
      %v3983 = vadd.f32 %v3925, %v3965
      %v3984 = vadd.f32 %v3926, %v3965
      %v3985 = vadd.f32 %v3927, %v3965
      %v3986 = vadd.f32 %v3928, %v3965
      %v3987 = vadd.f32 %v3929, %v3965
      %v3988 = vadd.f32 %v3930, %v3965
      %v3989 = vadd.f32 %v3931, %v3965
      %v3990 = vadd.f32 %v3932, %v3965
      %v3991 = vadd.f32 %v3933, %v3965
      %v3992 = vadd.f32 %v3934, %v3965
      %v3993 = vadd.f32 %v3935, %v3965
      %v3994 = vadd.f32 %v3936, %v3965
      %v3995 = vadd.f32 %v3937, %v3965
      %v3996 = vadd.f32 %v3938, %v3965
      %v3997 = vadd.f32 %v3939, %v3965
      %v3998 = vadd.f32 %v3940, %v3965
      %v3999 = vadd.f32 %v3941, %v3965
      %v4000 = vadd.f32 %v3942, %v3965
      %v4001 = vadd.f32 %v3943, %v3965
      %v4002 = vadd.f32 %v3944, %v3965
      %v4003 = vadd.f32 %v3945, %v3965
      %v4004 = vadd.f32 %v3946, %v3965
      %v4005 = vadd.f32 %v3947, %v3965
      %v4006 = vadd.f32 %v3948, %v3965
      %v4007 = vadd.f32 %v3949, %v3965
      %v4008 = vadd.f32 %v3950, %v3965
      %v4009 = vadd.f32 %v3951, %v3965
      %v4010 = vadd.f32 %v3952, %v3965
      %v4011 = vadd.f32 %v3953, %v3965
      %v4012 = vadd.f32 %v3954, %v3965
      %v4013 = vadd.f32 %v3955, %v3965
      %v4014 = vadd.f32 %v3956, %v3965
      %v4015 = vadd.f32 %v3957, %v3965
      %v4016 = vadd.f32 %v3958, %v3965
      %v4017 = vadd.f32 %v3959, %v3965
      %v4018 = vadd.f32 %v3960, %v3965
      %v4019 = vadd.f32 %v3961, %v3965
      %v4020 = vadd.f32 %v3962, %v3965
      %v4021 = vmax.f32 %v3967, 0.0
      %v4022 = vmax.f32 %v3968, 0.0
      %v4023 = vmax.f32 %v3969, 0.0
      %v4024 = vmax.f32 %v3970, 0.0
      %v4025 = vmax.f32 %v3971, 0.0
      %v4026 = vmax.f32 %v3972, 0.0
      %v4027 = vmax.f32 %v3973, 0.0
      %v4028 = vmax.f32 %v3974, 0.0
      %v4029 = vmax.f32 %v3975, 0.0
      %v4030 = vmax.f32 %v3976, 0.0
      %v4031 = vmax.f32 %v3977, 0.0
      %v4032 = vmax.f32 %v3978, 0.0
      %v4033 = vmax.f32 %v3979, 0.0
      %v4034 = vmax.f32 %v3980, 0.0
      %v4035 = vmax.f32 %v3981, 0.0
      %v4036 = vmax.f32 %v3982, 0.0
      %v4037 = vmax.f32 %v3983, 0.0
      %v4038 = vmax.f32 %v3984, 0.0
      %v4039 = vmax.f32 %v3985, 0.0
      %v4040 = vmax.f32 %v3986, 0.0
      %v4041 = vmax.f32 %v3987, 0.0
      %v4042 = vmax.f32 %v3988, 0.0
      %v4043 = vmax.f32 %v3989, 0.0
      %v4044 = vmax.f32 %v3990, 0.0
      %v4045 = vmax.f32 %v3991, 0.0
      %v4046 = vmax.f32 %v3992, 0.0
      %v4047 = vmax.f32 %v3993, 0.0
      %v4048 = vmax.f32 %v3994, 0.0
      %v4049 = vmax.f32 %v3995, 0.0
      %v4050 = vmax.f32 %v3996, 0.0
      %v4051 = vmax.f32 %v3997, 0.0
      %v4052 = vmax.f32 %v3998, 0.0
      %v4053 = vmax.f32 %v3999, 0.0
      %v4054 = vmax.f32 %v4000, 0.0
      %v4055 = vmax.f32 %v4001, 0.0
      %v4056 = vmax.f32 %v4002, 0.0
      %v4057 = vmax.f32 %v4003, 0.0
      %v4058 = vmax.f32 %v4004, 0.0
      %v4059 = vmax.f32 %v4005, 0.0
      %v4060 = vmax.f32 %v4006, 0.0
      %v4061 = vmax.f32 %v4007, 0.0
      %v4062 = vmax.f32 %v4008, 0.0
      %v4063 = vmax.f32 %v4009, 0.0
      %v4064 = vmax.f32 %v4010, 0.0
      %v4065 = vmax.f32 %v4011, 0.0
      %v4066 = vmax.f32 %v4012, 0.0
      %v4067 = vmax.f32 %v4013, 0.0
      %v4068 = vmax.f32 %v4014, 0.0
      %v4069 = vmax.f32 %v4015, 0.0
      %v4070 = vmax.f32 %v4016, 0.0
      %v4071 = vmax.f32 %v4017, 0.0
      %v4072 = vmax.f32 %v4018, 0.0
      %v4073 = vmax.f32 %v4019, 0.0
      %v4074 = vmax.f32 %v4020, 0.0
      %v4075 = vld [vmem:[%s292] sm:$0xff]
      %v4076 = vld [vmem:[%s292 + $0x8] sm:$0xff]
      %v4077 = vld [vmem:[%s292 + $0x10] sm:$0xff]
      %v4078 = vld [vmem:[%s292 + $0x18] sm:$0xff]
      %v4079 = vld [vmem:[%s292 + $0x20] sm:$0xff]
      %v4080 = vld [vmem:[%s292 + $0x28] sm:$0xff]
      %v4081 = vld [vmem:[%s292 + $0x30] sm:$0xff]
      %v4082 = vld [vmem:[%s292 + $0x38] sm:$0xff]
      %v4083 = vld [vmem:[%s292 + $0x40] sm:$0xff]
      %v4084 = vld [vmem:[%s292 + $0x48] sm:$0xff]
      %v4085 = vld [vmem:[%s292 + $0x50] sm:$0xff]
      %v4086 = vld [vmem:[%s292 + $0x58] sm:$0xff]
      %v4087 = vld [vmem:[%s292 + $0x60] sm:$0xff]
      %v4088 = vld [vmem:[%s292 + $0x68] sm:$0xff]
      %v4089 = vld [vmem:[%s292 + $0x70] sm:$0xff]
      %v4090 = vld [vmem:[%s292 + $0x78] sm:$0xff]
      %v4091 = vld [vmem:[%s292 + $0x80] sm:$0xff]
      %v4092 = vld [vmem:[%s292 + $0x88] sm:$0xff]
      %v4093 = vld [vmem:[%s292 + $0x90] sm:$0xff]
      %v4094 = vld [vmem:[%s292 + $0x98] sm:$0xff]
      %v4095 = vld [vmem:[%s292 + $0xa0] sm:$0xff]
      %v4096 = vld [vmem:[%s292 + $0xa8] sm:$0xff]
      %v4097 = vld [vmem:[%s292 + $0xb0] sm:$0xff]
      %v4098 = vld [vmem:[%s292 + $0xb8] sm:$0xff]
      %v4099 = vld [vmem:[%s292 + $0xc0] sm:$0xff]
      %v4100 = vld [vmem:[%s292 + $0xc8] sm:$0xff]
      %v4101 = vld [vmem:[%s292 + $0xd0] sm:$0xff]
      %v4102 = vld [vmem:[%s292 + $0xd8] sm:$0xff]
      %v4103 = vld [vmem:[%s292 + $0xe0] sm:$0xff]
      %v4104 = vld [vmem:[%s292 + $0xe8] sm:$0xff]
      %v4105 = vld [vmem:[%s292 + $0xf0] sm:$0xff]
      %v4106 = vld [vmem:[%s292 + $0xf8] sm:$0xff]
      %v4107 = vld [vmem:[%s292 + $0x100] sm:$0xff]
      %v4108 = vld [vmem:[%s292 + $0x108] sm:$0xff]
      %v4109 = vld [vmem:[%s292 + $0x110] sm:$0xff]
      %v4110 = vld [vmem:[%s292 + $0x118] sm:$0xff]
      %v4111 = vld [vmem:[%s292 + $0x120] sm:$0xff]
      %v4112 = vld [vmem:[%s292 + $0x128] sm:$0xff]
      %v4113 = vld [vmem:[%s292 + $0x130] sm:$0xff]
      %v4114 = vld [vmem:[%s292 + $0x138] sm:$0xff]
      %v4115 = vld [vmem:[%s292 + $0x140] sm:$0xff]
      %v4116 = vld [vmem:[%s292 + $0x148] sm:$0xff]
      %v4117 = vld [vmem:[%s292 + $0x150] sm:$0xff]
      %v4118 = vld [vmem:[%s292 + $0x158] sm:$0xff]
      %v4119 = vld [vmem:[%s292 + $0x160] sm:$0xff]
      %v4120 = vld [vmem:[%s292 + $0x168] sm:$0xff]
      %v4121 = vld [vmem:[%s292 + $0x170] sm:$0xff]
      %v4122 = vld [vmem:[%s292 + $0x178] sm:$0xff]
      %v4123 = vld [vmem:[%s292 + $0x180] sm:$0xff]
      %v4124 = vld [vmem:[%s292 + $0x188] sm:$0xff]
      %v4125 = vld [vmem:[%s292 + $0x190] sm:$0xff]
      %v4126 = vld [vmem:[%s292 + $0x198] sm:$0xff]
      %v4127 = vld [vmem:[%s292 + $0x1a0] sm:$0xff]
      %v4128 = vld [vmem:[%s292 + $0x1a8] sm:$0xff]
      %4130 = vset.pattern.permute.xlu0 0
      %4131 = vperm.xlu0 %4130, %v4075
      %v4132 = vpop.permute.xlu0 %4131
      %4135 = vset.pattern.permute.xlu0 0
      %4136 = vperm.xlu0 %4135, %v4076
      %v4137 = vpop.permute.xlu0 %4136
      %4140 = vset.pattern.permute.xlu0 0
      %4141 = vperm.xlu0 %4140, %v4077
      %v4142 = vpop.permute.xlu0 %4141
      %4145 = vset.pattern.permute.xlu0 0
      %4146 = vperm.xlu0 %4145, %v4078
      %v4147 = vpop.permute.xlu0 %4146
      %4150 = vset.pattern.permute.xlu0 0
      %4151 = vperm.xlu0 %4150, %v4079
      %v4152 = vpop.permute.xlu0 %4151
      %4155 = vset.pattern.permute.xlu0 0
      %4156 = vperm.xlu0 %4155, %v4080
      %v4157 = vpop.permute.xlu0 %4156
      %4160 = vset.pattern.permute.xlu0 0
      %4161 = vperm.xlu0 %4160, %v4081
      %v4162 = vpop.permute.xlu0 %4161
      %4165 = vset.pattern.permute.xlu0 0
      %4166 = vperm.xlu0 %4165, %v4082
      %v4167 = vpop.permute.xlu0 %4166
      %4170 = vset.pattern.permute.xlu0 0
      %4171 = vperm.xlu0 %4170, %v4083
      %v4172 = vpop.permute.xlu0 %4171
      %4175 = vset.pattern.permute.xlu0 0
      %4176 = vperm.xlu0 %4175, %v4084
      %v4177 = vpop.permute.xlu0 %4176
      %4180 = vset.pattern.permute.xlu0 0
      %4181 = vperm.xlu0 %4180, %v4085
      %v4182 = vpop.permute.xlu0 %4181
      %4185 = vset.pattern.permute.xlu0 0
      %4186 = vperm.xlu0 %4185, %v4086
      %v4187 = vpop.permute.xlu0 %4186
      %4190 = vset.pattern.permute.xlu0 0
      %4191 = vperm.xlu0 %4190, %v4087
      %v4192 = vpop.permute.xlu0 %4191
      %4195 = vset.pattern.permute.xlu0 0
      %4196 = vperm.xlu0 %4195, %v4088
      %v4197 = vpop.permute.xlu0 %4196
      %4200 = vset.pattern.permute.xlu0 0
      %4201 = vperm.xlu0 %4200, %v4089
      %v4202 = vpop.permute.xlu0 %4201
      %4205 = vset.pattern.permute.xlu0 0
      %4206 = vperm.xlu0 %4205, %v4090
      %v4207 = vpop.permute.xlu0 %4206
      %4210 = vset.pattern.permute.xlu0 0
      %4211 = vperm.xlu0 %4210, %v4091
      %v4212 = vpop.permute.xlu0 %4211
      %4215 = vset.pattern.permute.xlu0 0
      %4216 = vperm.xlu0 %4215, %v4092
      %v4217 = vpop.permute.xlu0 %4216
      %4220 = vset.pattern.permute.xlu0 0
      %4221 = vperm.xlu0 %4220, %v4093
      %v4222 = vpop.permute.xlu0 %4221
      %4225 = vset.pattern.permute.xlu0 0
      %4226 = vperm.xlu0 %4225, %v4094
      %v4227 = vpop.permute.xlu0 %4226
      %4230 = vset.pattern.permute.xlu0 0
      %4231 = vperm.xlu0 %4230, %v4095
      %v4232 = vpop.permute.xlu0 %4231
      %4235 = vset.pattern.permute.xlu0 0
      %4236 = vperm.xlu0 %4235, %v4096
      %v4237 = vpop.permute.xlu0 %4236
      %4240 = vset.pattern.permute.xlu0 0
      %4241 = vperm.xlu0 %4240, %v4097
      %v4242 = vpop.permute.xlu0 %4241
      %4245 = vset.pattern.permute.xlu0 0
      %4246 = vperm.xlu0 %4245, %v4098
      %v4247 = vpop.permute.xlu0 %4246
      %4250 = vset.pattern.permute.xlu0 0
      %4251 = vperm.xlu0 %4250, %v4099
      %v4252 = vpop.permute.xlu0 %4251
      %4255 = vset.pattern.permute.xlu0 0
      %4256 = vperm.xlu0 %4255, %v4100
      %v4257 = vpop.permute.xlu0 %4256
      %4260 = vset.pattern.permute.xlu0 0
      %4261 = vperm.xlu0 %4260, %v4101
      %v4262 = vpop.permute.xlu0 %4261
      %4265 = vset.pattern.permute.xlu0 0
      %4266 = vperm.xlu0 %4265, %v4102
      %v4267 = vpop.permute.xlu0 %4266
      %4270 = vset.pattern.permute.xlu0 0
      %4271 = vperm.xlu0 %4270, %v4103
      %v4272 = vpop.permute.xlu0 %4271
      %4275 = vset.pattern.permute.xlu0 0
      %4276 = vperm.xlu0 %4275, %v4104
      %v4277 = vpop.permute.xlu0 %4276
      %4280 = vset.pattern.permute.xlu0 0
      %4281 = vperm.xlu0 %4280, %v4105
      %v4282 = vpop.permute.xlu0 %4281
      %4285 = vset.pattern.permute.xlu0 0
      %4286 = vperm.xlu0 %4285, %v4106
      %v4287 = vpop.permute.xlu0 %4286
      %4290 = vset.pattern.permute.xlu0 0
      %4291 = vperm.xlu0 %4290, %v4107
      %v4292 = vpop.permute.xlu0 %4291
      %4295 = vset.pattern.permute.xlu0 0
      %4296 = vperm.xlu0 %4295, %v4108
      %v4297 = vpop.permute.xlu0 %4296
      %4300 = vset.pattern.permute.xlu0 0
      %4301 = vperm.xlu0 %4300, %v4109
      %v4302 = vpop.permute.xlu0 %4301
      %4305 = vset.pattern.permute.xlu0 0
      %4306 = vperm.xlu0 %4305, %v4110
      %v4307 = vpop.permute.xlu0 %4306
      %4310 = vset.pattern.permute.xlu0 0
      %4311 = vperm.xlu0 %4310, %v4111
      %v4312 = vpop.permute.xlu0 %4311
      %4315 = vset.pattern.permute.xlu0 0
      %4316 = vperm.xlu0 %4315, %v4112
      %v4317 = vpop.permute.xlu0 %4316
      %4320 = vset.pattern.permute.xlu0 0
      %4321 = vperm.xlu0 %4320, %v4113
      %v4322 = vpop.permute.xlu0 %4321
      %4325 = vset.pattern.permute.xlu0 0
      %4326 = vperm.xlu0 %4325, %v4114
      %v4327 = vpop.permute.xlu0 %4326
      %4330 = vset.pattern.permute.xlu0 0
      %4331 = vperm.xlu0 %4330, %v4115
      %v4332 = vpop.permute.xlu0 %4331
      %4335 = vset.pattern.permute.xlu0 0
      %4336 = vperm.xlu0 %4335, %v4116
      %v4337 = vpop.permute.xlu0 %4336
      %4340 = vset.pattern.permute.xlu0 0
      %4341 = vperm.xlu0 %4340, %v4117
      %v4342 = vpop.permute.xlu0 %4341
      %4345 = vset.pattern.permute.xlu0 0
      %4346 = vperm.xlu0 %4345, %v4118
      %v4347 = vpop.permute.xlu0 %4346
      %4350 = vset.pattern.permute.xlu0 0
      %4351 = vperm.xlu0 %4350, %v4119
      %v4352 = vpop.permute.xlu0 %4351
      %4355 = vset.pattern.permute.xlu0 0
      %4356 = vperm.xlu0 %4355, %v4120
      %v4357 = vpop.permute.xlu0 %4356
      %4360 = vset.pattern.permute.xlu0 0
      %4361 = vperm.xlu0 %4360, %v4121
      %v4362 = vpop.permute.xlu0 %4361
      %4365 = vset.pattern.permute.xlu0 0
      %4366 = vperm.xlu0 %4365, %v4122
      %v4367 = vpop.permute.xlu0 %4366
      %4370 = vset.pattern.permute.xlu0 0
      %4371 = vperm.xlu0 %4370, %v4123
      %v4372 = vpop.permute.xlu0 %4371
      %4375 = vset.pattern.permute.xlu0 0
      %4376 = vperm.xlu0 %4375, %v4124
      %v4377 = vpop.permute.xlu0 %4376
      %4380 = vset.pattern.permute.xlu0 0
      %4381 = vperm.xlu0 %4380, %v4125
      %v4382 = vpop.permute.xlu0 %4381
      %4385 = vset.pattern.permute.xlu0 0
      %4386 = vperm.xlu0 %4385, %v4126
      %v4387 = vpop.permute.xlu0 %4386
      %4390 = vset.pattern.permute.xlu0 0
      %4391 = vperm.xlu0 %4390, %v4127
      %v4392 = vpop.permute.xlu0 %4391
      %4395 = vset.pattern.permute.xlu0 0
      %4396 = vperm.xlu0 %4395, %v4128
      %v4397 = vpop.permute.xlu0 %4396
      %v4399 = vmul.f32 %v4021, %v4132
      %v4400 = vmul.f32 %v4022, %v4137
      %v4401 = vmul.f32 %v4023, %v4142
      %v4402 = vmul.f32 %v4024, %v4147
      %v4403 = vmul.f32 %v4025, %v4152
      %v4404 = vmul.f32 %v4026, %v4157
      %v4405 = vmul.f32 %v4027, %v4162
      %v4406 = vmul.f32 %v4028, %v4167
      %v4407 = vmul.f32 %v4029, %v4172
      %v4408 = vmul.f32 %v4030, %v4177
      %v4409 = vmul.f32 %v4031, %v4182
      %v4410 = vmul.f32 %v4032, %v4187
      %v4411 = vmul.f32 %v4033, %v4192
      %v4412 = vmul.f32 %v4034, %v4197
      %v4413 = vmul.f32 %v4035, %v4202
      %v4414 = vmul.f32 %v4036, %v4207
      %v4415 = vmul.f32 %v4037, %v4212
      %v4416 = vmul.f32 %v4038, %v4217
      %v4417 = vmul.f32 %v4039, %v4222
      %v4418 = vmul.f32 %v4040, %v4227
      %v4419 = vmul.f32 %v4041, %v4232
      %v4420 = vmul.f32 %v4042, %v4237
      %v4421 = vmul.f32 %v4043, %v4242
      %v4422 = vmul.f32 %v4044, %v4247
      %v4423 = vmul.f32 %v4045, %v4252
      %v4424 = vmul.f32 %v4046, %v4257
      %v4425 = vmul.f32 %v4047, %v4262
      %v4426 = vmul.f32 %v4048, %v4267
      %v4427 = vmul.f32 %v4049, %v4272
      %v4428 = vmul.f32 %v4050, %v4277
      %v4429 = vmul.f32 %v4051, %v4282
      %v4430 = vmul.f32 %v4052, %v4287
      %v4431 = vmul.f32 %v4053, %v4292
      %v4432 = vmul.f32 %v4054, %v4297
      %v4433 = vmul.f32 %v4055, %v4302
      %v4434 = vmul.f32 %v4056, %v4307
      %v4435 = vmul.f32 %v4057, %v4312
      %v4436 = vmul.f32 %v4058, %v4317
      %v4437 = vmul.f32 %v4059, %v4322
      %v4438 = vmul.f32 %v4060, %v4327
      %v4439 = vmul.f32 %v4061, %v4332
      %v4440 = vmul.f32 %v4062, %v4337
      %v4441 = vmul.f32 %v4063, %v4342
      %v4442 = vmul.f32 %v4064, %v4347
      %v4443 = vmul.f32 %v4065, %v4352
      %v4444 = vmul.f32 %v4066, %v4357
      %v4445 = vmul.f32 %v4067, %v4362
      %v4446 = vmul.f32 %v4068, %v4367
      %v4447 = vmul.f32 %v4069, %v4372
      %v4448 = vmul.f32 %v4070, %v4377
      %v4449 = vmul.f32 %v4071, %v4382
      %v4450 = vmul.f32 %v4072, %v4387
      %v4451 = vmul.f32 %v4073, %v4392
      %v4452 = vmul.f32 %v4074, %v4397
      %4453 = vst [vmem:[#allocation4] sm:$0xf] 0
      %4454 = vst [vmem:[#allocation4 + $0x4] sm:$0xf] 0
      %v4455 = vpack.c.bf16 %v4399, %v4399
      %v4456 = vpack.c.bf16 %v4400, %v4400
      %v4457 = vpack.c.bf16 %v4401, %v4401
      %v4458 = vpack.c.bf16 %v4402, %v4402
      %v4459 = vpack.c.bf16 %v4403, %v4403
      %v4460 = vpack.c.bf16 %v4404, %v4404
      %v4461 = vpack.c.bf16 %v4405, %v4405
      %v4462 = vpack.c.bf16 %v4406, %v4406
      %v4463 = vpack.c.bf16 %v4407, %v4407
      %v4464 = vpack.c.bf16 %v4408, %v4408
      %v4465 = vpack.c.bf16 %v4409, %v4409
      %v4466 = vpack.c.bf16 %v4410, %v4410
      %v4467 = vpack.c.bf16 %v4411, %v4411
      %v4468 = vpack.c.bf16 %v4412, %v4412
      %v4469 = vpack.c.bf16 %v4413, %v4413
      %v4470 = vpack.c.bf16 %v4414, %v4414
      %v4471 = vpack.c.bf16 %v4415, %v4415
      %v4472 = vpack.c.bf16 %v4416, %v4416
      %v4473 = vpack.c.bf16 %v4417, %v4417
      %v4474 = vpack.c.bf16 %v4418, %v4418
      %v4475 = vpack.c.bf16 %v4419, %v4419
      %v4476 = vpack.c.bf16 %v4420, %v4420
      %v4477 = vpack.c.bf16 %v4421, %v4421
      %v4478 = vpack.c.bf16 %v4422, %v4422
      %v4479 = vpack.c.bf16 %v4423, %v4423
      %v4480 = vpack.c.bf16 %v4424, %v4424
      %v4481 = vpack.c.bf16 %v4425, %v4425
      %v4482 = vpack.c.bf16 %v4426, %v4426
      %v4483 = vpack.c.bf16 %v4427, %v4427
      %v4484 = vpack.c.bf16 %v4428, %v4428
      %v4485 = vpack.c.bf16 %v4429, %v4429
      %v4486 = vpack.c.bf16 %v4430, %v4430
      %v4487 = vpack.c.bf16 %v4431, %v4431
      %v4488 = vpack.c.bf16 %v4432, %v4432
      %v4489 = vpack.c.bf16 %v4433, %v4433
      %v4490 = vpack.c.bf16 %v4434, %v4434
      %v4491 = vpack.c.bf16 %v4435, %v4435
      %v4492 = vpack.c.bf16 %v4436, %v4436
      %v4493 = vpack.c.bf16 %v4437, %v4437
      %v4494 = vpack.c.bf16 %v4438, %v4438
      %v4495 = vpack.c.bf16 %v4439, %v4439
      %v4496 = vpack.c.bf16 %v4440, %v4440
      %v4497 = vpack.c.bf16 %v4441, %v4441
      %v4498 = vpack.c.bf16 %v4442, %v4442
      %v4499 = vpack.c.bf16 %v4443, %v4443
      %v4500 = vpack.c.bf16 %v4444, %v4444
      %v4501 = vpack.c.bf16 %v4445, %v4445
      %v4502 = vpack.c.bf16 %v4446, %v4446
      %v4503 = vpack.c.bf16 %v4447, %v4447
      %v4504 = vpack.c.bf16 %v4448, %v4448
      %v4505 = vpack.c.bf16 %v4449, %v4449
      %v4506 = vpack.c.bf16 %v4450, %v4450
      %v4507 = vpack.c.bf16 %v4451, %v4451
      %v4508 = vpack.c.bf16 %v4452, %v4452
      %4509 = vst [vmem:[#allocation4 + $0x8] sm:$0xf] %v4455
      %4510 = vst [vmem:[#allocation4 + $0xc] sm:$0xf] %v4456
      %4511 = vst [vmem:[#allocation4 + $0x10] sm:$0xf] %v4457
      %4512 = vst [vmem:[#allocation4 + $0x14] sm:$0xf] %v4458
      %4513 = vst [vmem:[#allocation4 + $0x18] sm:$0xf] %v4459
      %4514 = vst [vmem:[#allocation4 + $0x1c] sm:$0xf] %v4460
      %4515 = vst [vmem:[#allocation4 + $0x20] sm:$0xf] %v4461
      %4516 = vst [vmem:[#allocation4 + $0x24] sm:$0xf] %v4462
      %4517 = vst [vmem:[#allocation4 + $0x28] sm:$0xf] %v4463
      %4518 = vst [vmem:[#allocation4 + $0x2c] sm:$0xf] %v4464
      %4519 = vst [vmem:[#allocation4 + $0x30] sm:$0xf] %v4465
      %4520 = vst [vmem:[#allocation4 + $0x34] sm:$0xf] %v4466
      %4521 = vst [vmem:[#allocation4 + $0x38] sm:$0xf] %v4467
      %4522 = vst [vmem:[#allocation4 + $0x3c] sm:$0xf] %v4468
      %4523 = vst [vmem:[#allocation4 + $0x40] sm:$0xf] %v4469
      %4524 = vst [vmem:[#allocation4 + $0x44] sm:$0xf] %v4470
      %4525 = vst [vmem:[#allocation4 + $0x48] sm:$0xf] %v4471
      %4526 = vst [vmem:[#allocation4 + $0x4c] sm:$0xf] %v4472
      %4527 = vst [vmem:[#allocation4 + $0x50] sm:$0xf] %v4473
      %4528 = vst [vmem:[#allocation4 + $0x54] sm:$0xf] %v4474
      %4529 = vst [vmem:[#allocation4 + $0x58] sm:$0xf] %v4475
      %4530 = vst [vmem:[#allocation4 + $0x5c] sm:$0xf] %v4476
      %4531 = vst [vmem:[#allocation4 + $0x60] sm:$0xf] %v4477
      %4532 = vst [vmem:[#allocation4 + $0x64] sm:$0xf] %v4478
      %4533 = vst [vmem:[#allocation4 + $0x68] sm:$0xf] %v4479
      %4534 = vst [vmem:[#allocation4 + $0x6c] sm:$0xf] %v4480
      %4535 = vst [vmem:[#allocation4 + $0x70] sm:$0xf] %v4481
      %4536 = vst [vmem:[#allocation4 + $0x74] sm:$0xf] %v4482
      %4537 = vst [vmem:[#allocation4 + $0x78] sm:$0xf] %v4483
      %4538 = vst [vmem:[#allocation4 + $0x7c] sm:$0xf] %v4484
      %4539 = vst [vmem:[#allocation4 + $0x80] sm:$0xf] %v4485
      %4540 = vst [vmem:[#allocation4 + $0x84] sm:$0xf] %v4486
      %4541 = vst [vmem:[#allocation4 + $0x88] sm:$0xf] %v4487
      %4542 = vst [vmem:[#allocation4 + $0x8c] sm:$0xf] %v4488
      %4543 = vst [vmem:[#allocation4 + $0x90] sm:$0xf] %v4489
      %4544 = vst [vmem:[#allocation4 + $0x94] sm:$0xf] %v4490
      %4545 = vst [vmem:[#allocation4 + $0x98] sm:$0xf] %v4491
      %4546 = vst [vmem:[#allocation4 + $0x9c] sm:$0xf] %v4492
      %4547 = vst [vmem:[#allocation4 + $0xa0] sm:$0xf] %v4493
      %4548 = vst [vmem:[#allocation4 + $0xa4] sm:$0xf] %v4494
      %4549 = vst [vmem:[#allocation4 + $0xa8] sm:$0xf] %v4495
      %4550 = vst [vmem:[#allocation4 + $0xac] sm:$0xf] %v4496
      %4551 = vst [vmem:[#allocation4 + $0xb0] sm:$0xf] %v4497
      %4552 = vst [vmem:[#allocation4 + $0xb4] sm:$0xf] %v4498
      %4553 = vst [vmem:[#allocation4 + $0xb8] sm:$0xf] %v4499
      %4554 = vst [vmem:[#allocation4 + $0xbc] sm:$0xf] %v4500
      %4555 = vst [vmem:[#allocation4 + $0xc0] sm:$0xf] %v4501
      %4556 = vst [vmem:[#allocation4 + $0xc4] sm:$0xf] %v4502
      %4557 = vst [vmem:[#allocation4 + $0xc8] sm:$0xf] %v4503
      %4558 = vst [vmem:[#allocation4 + $0xcc] sm:$0xf] %v4504
      %4559 = vst [vmem:[#allocation4 + $0xd0] sm:$0xf] %v4505
      %4560 = vst [vmem:[#allocation4 + $0xd4] sm:$0xf] %v4506
      %4561 = vst [vmem:[#allocation4 + $0xd8] sm:$0xf] %v4507
      %4562 = vst [vmem:[#allocation4 + $0xdc] sm:$0xf] %v4508
      %4563 = vst [vmem:[#allocation4 + $0xe0] sm:$0xf] 0
      %4564 = vst [vmem:[#allocation4 + $0xe4] sm:$0xf] 0
      %v4565 = vld [vmem:[#allocation4 + $0x4] sm:$0x8]
      %v4566 = vld [vmem:[#allocation4 + $0x8] sm:$0xf]
      %v4567 = vld [vmem:[#allocation4 + $0xc] sm:$0xf]
      %v4568 = vld [vmem:[#allocation4 + $0x10] sm:$0xf]
      %v4569 = vld [vmem:[#allocation4 + $0x14] sm:$0xf]
      %v4570 = vld [vmem:[#allocation4 + $0x18] sm:$0xf]
      %v4571 = vld [vmem:[#allocation4 + $0x1c] sm:$0xf]
      %v4572 = vld [vmem:[#allocation4 + $0x20] sm:$0xf]
      %v4573 = vld [vmem:[#allocation4 + $0x24] sm:$0xf]
      %v4574 = vld [vmem:[#allocation4 + $0x28] sm:$0xf]
      %v4575 = vld [vmem:[#allocation4 + $0x2c] sm:$0xf]
      %v4576 = vld [vmem:[#allocation4 + $0x30] sm:$0xf]
      %v4577 = vld [vmem:[#allocation4 + $0x34] sm:$0xf]
      %v4578 = vld [vmem:[#allocation4 + $0x38] sm:$0xf]
      %v4579 = vld [vmem:[#allocation4 + $0x3c] sm:$0xf]
      %v4580 = vld [vmem:[#allocation4 + $0x40] sm:$0xf]
      %v4581 = vld [vmem:[#allocation4 + $0x44] sm:$0xf]
      %v4582 = vld [vmem:[#allocation4 + $0x48] sm:$0xf]
      %v4583 = vld [vmem:[#allocation4 + $0x4c] sm:$0xf]
      %v4584 = vld [vmem:[#allocation4 + $0x50] sm:$0xf]
      %v4585 = vld [vmem:[#allocation4 + $0x54] sm:$0xf]
      %v4586 = vld [vmem:[#allocation4 + $0x58] sm:$0xf]
      %v4587 = vld [vmem:[#allocation4 + $0x5c] sm:$0xf]
      %v4588 = vld [vmem:[#allocation4 + $0x60] sm:$0xf]
      %v4589 = vld [vmem:[#allocation4 + $0x64] sm:$0xf]
      %v4590 = vld [vmem:[#allocation4 + $0x68] sm:$0xf]
      %v4591 = vld [vmem:[#allocation4 + $0x6c] sm:$0xf]
      %v4592 = vld [vmem:[#allocation4 + $0x70] sm:$0xf]
      %v4593 = vld [vmem:[#allocation4 + $0x74] sm:$0xf]
      %v4594 = vld [vmem:[#allocation4 + $0x78] sm:$0xf]
      %v4595 = vld [vmem:[#allocation4 + $0x7c] sm:$0xf]
      %v4596 = vld [vmem:[#allocation4 + $0x80] sm:$0xf]
      %v4597 = vld [vmem:[#allocation4 + $0x84] sm:$0xf]
      %v4598 = vld [vmem:[#allocation4 + $0x88] sm:$0xf]
      %v4599 = vld [vmem:[#allocation4 + $0x8c] sm:$0xf]
      %v4600 = vld [vmem:[#allocation4 + $0x90] sm:$0xf]
      %v4601 = vld [vmem:[#allocation4 + $0x94] sm:$0xf]
      %v4602 = vld [vmem:[#allocation4 + $0x98] sm:$0xf]
      %v4603 = vld [vmem:[#allocation4 + $0x9c] sm:$0xf]
      %v4604 = vld [vmem:[#allocation4 + $0xa0] sm:$0xf]
      %v4605 = vld [vmem:[#allocation4 + $0xa4] sm:$0xf]
      %v4606 = vld [vmem:[#allocation4 + $0xa8] sm:$0xf]
      %v4607 = vld [vmem:[#allocation4 + $0xac] sm:$0xf]
      %v4608 = vld [vmem:[#allocation4 + $0xb0] sm:$0xf]
      %v4609 = vld [vmem:[#allocation4 + $0xb4] sm:$0xf]
      %v4610 = vld [vmem:[#allocation4 + $0xb8] sm:$0xf]
      %v4611 = vld [vmem:[#allocation4 + $0xbc] sm:$0xf]
      %v4612 = vld [vmem:[#allocation4 + $0xc0] sm:$0xf]
      %v4613 = vld [vmem:[#allocation4 + $0xc4] sm:$0xf]
      %v4614 = vld [vmem:[%s3] sm:$0xf]
      %v4615 = vld [vmem:[%s3 + $0x4] sm:$0xf]
      %v4616 = vld [vmem:[%s3 + $0x8] sm:$0xf]
      %v4617 = vld [vmem:[%s3 + $0xc] sm:$0xf]
      %v4618 = vld [vmem:[%s3 + $0x10] sm:$0xf]
      %v4619 = vld [vmem:[%s3 + $0x14] sm:$0xf]
      %v4620 = vld [vmem:[%s3 + $0x18] sm:$0xf]
      %v4621 = vld [vmem:[%s3 + $0x1c] sm:$0xf]
      %v4622 = vld [vmem:[%s3 + $0x20] sm:$0xf]
      %v4623 = vld [vmem:[%s3 + $0x24] sm:$0xf]
      %v4624 = vld [vmem:[%s3 + $0x28] sm:$0xf]
      %v4625 = vld [vmem:[%s3 + $0x2c] sm:$0xf]
      %v4626 = vld [vmem:[%s3 + $0x30] sm:$0xf]
      %v4627 = vld [vmem:[%s3 + $0x34] sm:$0xf]
      %v4628 = vld [vmem:[%s3 + $0x38] sm:$0xf]
      %v4629 = vld [vmem:[%s3 + $0x3c] sm:$0xf]
      %s4630 = scalar_lea.vmem %s3, 64
      %v4631 = vld [vmem:[%s4630] sm:$0xf]
      %v4632 = vld [vmem:[%s4630 + $0x4] sm:$0xf]
      %v4633 = vld [vmem:[%s4630 + $0x8] sm:$0xf]
      %v4634 = vld [vmem:[%s4630 + $0xc] sm:$0xf]
      %v4635 = vld [vmem:[%s4630 + $0x10] sm:$0xf]
      %v4636 = vld [vmem:[%s4630 + $0x14] sm:$0xf]
      %v4637 = vld [vmem:[%s4630 + $0x18] sm:$0xf]
      %v4638 = vld [vmem:[%s4630 + $0x1c] sm:$0xf]
      %v4639 = vld [vmem:[%s4630 + $0x20] sm:$0xf]
      %v4640 = vld [vmem:[%s4630 + $0x24] sm:$0xf]
      %v4641 = vld [vmem:[%s4630 + $0x28] sm:$0xf]
      %v4642 = vld [vmem:[%s4630 + $0x2c] sm:$0xf]
      %v4643 = vld [vmem:[%s4630 + $0x30] sm:$0xf]
      %v4644 = vld [vmem:[%s4630 + $0x34] sm:$0xf]
      %v4645 = vld [vmem:[%s4630 + $0x38] sm:$0xf]
      %v4646 = vld [vmem:[%s4630 + $0x3c] sm:$0xf]
      %v4695 = vunpack.c.l.b16 %v4566
      %v4696 = vunpack.c.l.b16 %v4567
      %v4697 = vunpack.c.l.b16 %v4568
      %v4698 = vunpack.c.l.b16 %v4569
      %v4699 = vunpack.c.l.b16 %v4570
      %v4700 = vunpack.c.l.b16 %v4571
      %v4701 = vunpack.c.l.b16 %v4572
      %v4702 = vunpack.c.l.b16 %v4573
      %v4703 = vunpack.c.l.b16 %v4574
      %v4704 = vunpack.c.l.b16 %v4575
      %v4705 = vunpack.c.l.b16 %v4576
      %v4706 = vunpack.c.l.b16 %v4577
      %v4707 = vunpack.c.l.b16 %v4578
      %v4708 = vunpack.c.l.b16 %v4579
      %v4709 = vunpack.c.l.b16 %v4580
      %v4710 = vunpack.c.l.b16 %v4581
      %v4711 = vunpack.c.l.b16 %v4582
      %v4712 = vunpack.c.l.b16 %v4583
      %v4713 = vunpack.c.l.b16 %v4584
      %v4714 = vunpack.c.l.b16 %v4585
      %v4715 = vunpack.c.l.b16 %v4586
      %v4716 = vunpack.c.l.b16 %v4587
      %v4717 = vunpack.c.l.b16 %v4588
      %v4718 = vunpack.c.l.b16 %v4589
      %v4719 = vunpack.c.l.b16 %v4590
      %v4720 = vunpack.c.l.b16 %v4591
      %v4721 = vunpack.c.l.b16 %v4592
      %v4722 = vunpack.c.l.b16 %v4593
      %v4723 = vunpack.c.l.b16 %v4594
      %v4724 = vunpack.c.l.b16 %v4595
      %v4725 = vunpack.c.l.b16 %v4596
      %v4726 = vunpack.c.l.b16 %v4597
      %v4727 = vunpack.c.l.b16 %v4598
      %v4728 = vunpack.c.l.b16 %v4599
      %v4729 = vunpack.c.l.b16 %v4600
      %v4730 = vunpack.c.l.b16 %v4601
      %v4731 = vunpack.c.l.b16 %v4602
      %v4732 = vunpack.c.l.b16 %v4603
      %v4733 = vunpack.c.l.b16 %v4604
      %v4734 = vunpack.c.l.b16 %v4605
      %v4735 = vunpack.c.l.b16 %v4606
      %v4736 = vunpack.c.l.b16 %v4607
      %v4737 = vunpack.c.l.b16 %v4608
      %v4738 = vunpack.c.l.b16 %v4609
      %v4739 = vunpack.c.l.b16 %v4610
      %v4740 = vunpack.c.l.b16 %v4611
      %v4741 = vunpack.c.l.b16 %v4612
      %v4742 = vunpack.c.l.b16 %v4613
      %v4743 = vpack.c.b16 %v4696, %v4695
      %v4744 = vpack.c.b16 %v4698, %v4697
      %v4745 = vpack.c.b16 %v4700, %v4699
      %v4746 = vpack.c.b16 %v4702, %v4701
      %v4747 = vpack.c.b16 %v4704, %v4703
      %v4748 = vpack.c.b16 %v4706, %v4705
      %v4749 = vpack.c.b16 %v4708, %v4707
      %v4750 = vpack.c.b16 %v4710, %v4709
      %v4751 = vpack.c.b16 %v4712, %v4711
      %v4752 = vpack.c.b16 %v4714, %v4713
      %v4753 = vpack.c.b16 %v4716, %v4715
      %v4754 = vpack.c.b16 %v4718, %v4717
      %v4755 = vpack.c.b16 %v4720, %v4719
      %v4756 = vpack.c.b16 %v4722, %v4721
      %v4757 = vpack.c.b16 %v4724, %v4723
      %v4758 = vpack.c.b16 %v4726, %v4725
      %v4759 = vpack.c.b16 %v4728, %v4727
      %v4760 = vpack.c.b16 %v4730, %v4729
      %v4761 = vpack.c.b16 %v4732, %v4731
      %v4762 = vpack.c.b16 %v4734, %v4733
      %v4763 = vpack.c.b16 %v4736, %v4735
      %v4764 = vpack.c.b16 %v4738, %v4737
      %v4765 = vpack.c.b16 %v4740, %v4739
      %v4766 = vpack.c.b16 %v4742, %v4741
      %v4807 = vunpack.c.l.b16 %v4631
      %v4808 = vunpack.c.l.b16 %v4632
      %v4809 = vunpack.c.l.b16 %v4633
      %v4810 = vunpack.c.l.b16 %v4634
      %v4811 = vunpack.c.l.b16 %v4635
      %v4812 = vunpack.c.l.b16 %v4636
      %v4813 = vunpack.c.l.b16 %v4637
      %v4814 = vunpack.c.l.b16 %v4638
      %v4815 = vunpack.c.l.b16 %v4639
      %v4816 = vunpack.c.l.b16 %v4640
      %v4817 = vunpack.c.l.b16 %v4641
      %v4818 = vunpack.c.l.b16 %v4642
      %v4819 = vunpack.c.l.b16 %v4643
      %v4820 = vunpack.c.l.b16 %v4644
      %v4821 = vunpack.c.l.b16 %v4645
      %v4822 = vunpack.c.l.b16 %v4646
      %v4823 = vpack.c.b16 %v4808, %v4807
      %v4824 = vpack.c.b16 %v4810, %v4809
      %v4825 = vpack.c.b16 %v4812, %v4811
      %v4826 = vpack.c.b16 %v4814, %v4813
      %v4827 = vpack.c.b16 %v4816, %v4815
      %v4828 = vpack.c.b16 %v4818, %v4817
      %v4829 = vpack.c.b16 %v4820, %v4819
      %v4830 = vpack.c.b16 %v4822, %v4821
      %4839 = vmatpush.bf16.msra.mxu0 %v4830
      %4840 = vmatpush.bf16.msra.mxu0 %v4829
      %4841 = vmatpush.bf16.msra.mxu0 %v4828
      %4842 = vmatpush.bf16.msra.mxu0 %v4827
      %4843 = vmatpush.bf16.msra.mxu0 %v4826
      %4844 = vmatpush.bf16.msra.mxu0 %v4825
      %4845 = vmatpush.bf16.msra.mxu0 %v4824
      %4846 = vmatpush.bf16.msra.mxu0 %v4823
      %4847 = vmatmul.bf16.gmra.mxu0 %v4743
      %v4848 = vpop.f32.mrf.mxu0
      %v4849 = vadd.f32 0.0, %v4848
      %v4850 = vpop.f32.mrf.mxu0
      %v4851 = vadd.f32 0.0, %v4850
      %4852 = vmatmul.bf16.gmra.mxu0 %v4744
      %v4853 = vpop.f32.mrf.mxu0
      %v4854 = vadd.f32 0.0, %v4853
      %v4855 = vpop.f32.mrf.mxu0
      %v4856 = vadd.f32 0.0, %v4855
      %4857 = vmatmul.bf16.gmra.mxu0 %v4745
      %v4858 = vpop.f32.mrf.mxu0
      %v4859 = vadd.f32 0.0, %v4858
      %v4860 = vpop.f32.mrf.mxu0
      %v4861 = vadd.f32 0.0, %v4860
      %4862 = vmatmul.bf16.gmra.mxu0 %v4746
      %v4863 = vpop.f32.mrf.mxu0
      %v4864 = vadd.f32 0.0, %v4863
      %v4865 = vpop.f32.mrf.mxu0
      %v4866 = vadd.f32 0.0, %v4865
      %4867 = vmatmul.bf16.gmra.mxu0 %v4747
      %v4868 = vpop.f32.mrf.mxu0
      %v4869 = vadd.f32 0.0, %v4868
      %v4870 = vpop.f32.mrf.mxu0
      %v4871 = vadd.f32 0.0, %v4870
      %4872 = vmatmul.bf16.gmra.mxu0 %v4748
      %v4873 = vpop.f32.mrf.mxu0
      %v4874 = vadd.f32 0.0, %v4873
      %v4875 = vpop.f32.mrf.mxu0
      %v4876 = vadd.f32 0.0, %v4875
      %4877 = vmatmul.bf16.gmra.mxu0 %v4749
      %v4878 = vpop.f32.mrf.mxu0
      %v4879 = vadd.f32 0.0, %v4878
      %v4880 = vpop.f32.mrf.mxu0
      %v4881 = vadd.f32 0.0, %v4880
      %4882 = vmatmul.bf16.gmra.mxu0 %v4750
      %v4883 = vpop.f32.mrf.mxu0
      %v4884 = vadd.f32 0.0, %v4883
      %v4885 = vpop.f32.mrf.mxu0
      %v4886 = vadd.f32 0.0, %v4885
      %4887 = vmatmul.bf16.gmra.mxu0 %v4751
      %v4888 = vpop.f32.mrf.mxu0
      %v4889 = vadd.f32 0.0, %v4888
      %v4890 = vpop.f32.mrf.mxu0
      %v4891 = vadd.f32 0.0, %v4890
      %4892 = vmatmul.bf16.gmra.mxu0 %v4752
      %v4893 = vpop.f32.mrf.mxu0
      %v4894 = vadd.f32 0.0, %v4893
      %v4895 = vpop.f32.mrf.mxu0
      %v4896 = vadd.f32 0.0, %v4895
      %4897 = vmatmul.bf16.gmra.mxu0 %v4753
      %v4898 = vpop.f32.mrf.mxu0
      %v4899 = vadd.f32 0.0, %v4898
      %v4900 = vpop.f32.mrf.mxu0
      %v4901 = vadd.f32 0.0, %v4900
      %4902 = vmatmul.bf16.gmra.mxu0 %v4754
      %v4903 = vpop.f32.mrf.mxu0
      %v4904 = vadd.f32 0.0, %v4903
      %v4905 = vpop.f32.mrf.mxu0
      %v4906 = vadd.f32 0.0, %v4905
      %4907 = vmatmul.bf16.gmra.mxu0 %v4755
      %v4908 = vpop.f32.mrf.mxu0
      %v4909 = vadd.f32 0.0, %v4908
      %v4910 = vpop.f32.mrf.mxu0
      %v4911 = vadd.f32 0.0, %v4910
      %4912 = vmatmul.bf16.gmra.mxu0 %v4756
      %v4913 = vpop.f32.mrf.mxu0
      %v4914 = vadd.f32 0.0, %v4913
      %v4915 = vpop.f32.mrf.mxu0
      %v4916 = vadd.f32 0.0, %v4915
      %4917 = vmatmul.bf16.gmra.mxu0 %v4757
      %v4918 = vpop.f32.mrf.mxu0
      %v4919 = vadd.f32 0.0, %v4918
      %v4920 = vpop.f32.mrf.mxu0
      %v4921 = vadd.f32 0.0, %v4920
      %4922 = vmatmul.bf16.gmra.mxu0 %v4758
      %v4923 = vpop.f32.mrf.mxu0
      %v4924 = vadd.f32 0.0, %v4923
      %v4925 = vpop.f32.mrf.mxu0
      %v4926 = vadd.f32 0.0, %v4925
      %4927 = vmatmul.bf16.gmra.mxu0 %v4759
      %v4928 = vpop.f32.mrf.mxu0
      %v4929 = vadd.f32 0.0, %v4928
      %v4930 = vpop.f32.mrf.mxu0
      %v4931 = vadd.f32 0.0, %v4930
      %4932 = vmatmul.bf16.gmra.mxu0 %v4760
      %v4933 = vpop.f32.mrf.mxu0
      %v4934 = vadd.f32 0.0, %v4933
      %v4935 = vpop.f32.mrf.mxu0
      %v4936 = vadd.f32 0.0, %v4935
      %4937 = vmatmul.bf16.gmra.mxu0 %v4761
      %v4938 = vpop.f32.mrf.mxu0
      %v4939 = vadd.f32 0.0, %v4938
      %v4940 = vpop.f32.mrf.mxu0
      %v4941 = vadd.f32 0.0, %v4940
      %4942 = vmatmul.bf16.gmra.mxu0 %v4762
      %v4943 = vpop.f32.mrf.mxu0
      %v4944 = vadd.f32 0.0, %v4943
      %v4945 = vpop.f32.mrf.mxu0
      %v4946 = vadd.f32 0.0, %v4945
      %4947 = vmatmul.bf16.gmra.mxu0 %v4763
      %v4948 = vpop.f32.mrf.mxu0
      %v4949 = vadd.f32 0.0, %v4948
      %v4950 = vpop.f32.mrf.mxu0
      %v4951 = vadd.f32 0.0, %v4950
      %4952 = vmatmul.bf16.gmra.mxu0 %v4764
      %v4953 = vpop.f32.mrf.mxu0
      %v4954 = vadd.f32 0.0, %v4953
      %v4955 = vpop.f32.mrf.mxu0
      %v4956 = vadd.f32 0.0, %v4955
      %4957 = vmatmul.bf16.gmra.mxu0 %v4765
      %v4958 = vpop.f32.mrf.mxu0
      %v4959 = vadd.f32 0.0, %v4958
      %v4960 = vpop.f32.mrf.mxu0
      %v4961 = vadd.f32 0.0, %v4960
      %4962 = vmatmul.bf16.gmra.mxu0 %v4766
      %v4963 = vpop.f32.mrf.mxu0
      %v4964 = vadd.f32 0.0, %v4963
      %v4965 = vpop.f32.mrf.mxu0
      %v4966 = vadd.f32 0.0, %v4965
      %4967 = vdwg.mxu0
      %v4969 = vunpack.c.l.b16 %v4565
      %v4970 = vpack.c.b16 %v4695, %v4969
      %v4971 = vpack.c.b16 %v4697, %v4696
      %v4972 = vpack.c.b16 %v4699, %v4698
      %v4973 = vpack.c.b16 %v4701, %v4700
      %v4974 = vpack.c.b16 %v4703, %v4702
      %v4975 = vpack.c.b16 %v4705, %v4704
      %v4976 = vpack.c.b16 %v4707, %v4706
      %v4977 = vpack.c.b16 %v4709, %v4708
      %v4978 = vpack.c.b16 %v4711, %v4710
      %v4979 = vpack.c.b16 %v4713, %v4712
      %v4980 = vpack.c.b16 %v4715, %v4714
      %v4981 = vpack.c.b16 %v4717, %v4716
      %v4982 = vpack.c.b16 %v4719, %v4718
      %v4983 = vpack.c.b16 %v4721, %v4720
      %v4984 = vpack.c.b16 %v4723, %v4722
      %v4985 = vpack.c.b16 %v4725, %v4724
      %v4986 = vpack.c.b16 %v4727, %v4726
      %v4987 = vpack.c.b16 %v4729, %v4728
      %v4988 = vpack.c.b16 %v4731, %v4730
      %v4989 = vpack.c.b16 %v4733, %v4732
      %v4990 = vpack.c.b16 %v4735, %v4734
      %v4991 = vpack.c.b16 %v4737, %v4736
      %v4992 = vpack.c.b16 %v4739, %v4738
      %v4993 = vpack.c.b16 %v4741, %v4740
      %v4994 = vpack.c.b16 %v4742, %v4742
      %v4996 = vshrl.u32 %v4970, 16
      %v4998 = vrot.slane %v4996, 3
      %v4999 = vshll.u32 %v4970, 16
      %v5001 = vrot.slane %v4999, 4
      %v5002 = vor.u32 %v4998, %v5001
      %v5004 = vshrl.u32 %v4971, 16
      %v5006 = vrot.slane %v5004, 3
      %v5007 = vshll.u32 %v4971, 16
      %v5009 = vrot.slane %v5007, 4
      %v5010 = vor.u32 %v5006, %v5009
      %v5011 = vsel %vm1020, %v5002, %v5010
      %v5013 = vshrl.u32 %v4972, 16
      %v5015 = vrot.slane %v5013, 3
      %v5016 = vshll.u32 %v4972, 16
      %v5018 = vrot.slane %v5016, 4
      %v5019 = vor.u32 %v5015, %v5018
      %v5020 = vsel %vm1020, %v5010, %v5019
      %v5022 = vshrl.u32 %v4973, 16
      %v5024 = vrot.slane %v5022, 3
      %v5025 = vshll.u32 %v4973, 16
      %v5027 = vrot.slane %v5025, 4
      %v5028 = vor.u32 %v5024, %v5027
      %v5029 = vsel %vm1020, %v5019, %v5028
      %v5031 = vshrl.u32 %v4974, 16
      %v5033 = vrot.slane %v5031, 3
      %v5034 = vshll.u32 %v4974, 16
      %v5036 = vrot.slane %v5034, 4
      %v5037 = vor.u32 %v5033, %v5036
      %v5038 = vsel %vm1020, %v5028, %v5037
      %v5040 = vshrl.u32 %v4975, 16
      %v5042 = vrot.slane %v5040, 3
      %v5043 = vshll.u32 %v4975, 16
      %v5045 = vrot.slane %v5043, 4
      %v5046 = vor.u32 %v5042, %v5045
      %v5047 = vsel %vm1020, %v5037, %v5046
      %v5049 = vshrl.u32 %v4976, 16
      %v5051 = vrot.slane %v5049, 3
      %v5052 = vshll.u32 %v4976, 16
      %v5054 = vrot.slane %v5052, 4
      %v5055 = vor.u32 %v5051, %v5054
      %v5056 = vsel %vm1020, %v5046, %v5055
      %v5058 = vshrl.u32 %v4977, 16
      %v5060 = vrot.slane %v5058, 3
      %v5061 = vshll.u32 %v4977, 16
      %v5063 = vrot.slane %v5061, 4
      %v5064 = vor.u32 %v5060, %v5063
      %v5065 = vsel %vm1020, %v5055, %v5064
      %v5067 = vshrl.u32 %v4978, 16
      %v5069 = vrot.slane %v5067, 3
      %v5070 = vshll.u32 %v4978, 16
      %v5072 = vrot.slane %v5070, 4
      %v5073 = vor.u32 %v5069, %v5072
      %v5074 = vsel %vm1020, %v5064, %v5073
      %v5076 = vshrl.u32 %v4979, 16
      %v5078 = vrot.slane %v5076, 3
      %v5079 = vshll.u32 %v4979, 16
      %v5081 = vrot.slane %v5079, 4
      %v5082 = vor.u32 %v5078, %v5081
      %v5083 = vsel %vm1020, %v5073, %v5082
      %v5085 = vshrl.u32 %v4980, 16
      %v5087 = vrot.slane %v5085, 3
      %v5088 = vshll.u32 %v4980, 16
      %v5090 = vrot.slane %v5088, 4
      %v5091 = vor.u32 %v5087, %v5090
      %v5092 = vsel %vm1020, %v5082, %v5091
      %v5094 = vshrl.u32 %v4981, 16
      %v5096 = vrot.slane %v5094, 3
      %v5097 = vshll.u32 %v4981, 16
      %v5099 = vrot.slane %v5097, 4
      %v5100 = vor.u32 %v5096, %v5099
      %v5101 = vsel %vm1020, %v5091, %v5100
      %v5103 = vshrl.u32 %v4982, 16
      %v5105 = vrot.slane %v5103, 3
      %v5106 = vshll.u32 %v4982, 16
      %v5108 = vrot.slane %v5106, 4
      %v5109 = vor.u32 %v5105, %v5108
      %v5110 = vsel %vm1020, %v5100, %v5109
      %v5112 = vshrl.u32 %v4983, 16
      %v5114 = vrot.slane %v5112, 3
      %v5115 = vshll.u32 %v4983, 16
      %v5117 = vrot.slane %v5115, 4
      %v5118 = vor.u32 %v5114, %v5117
      %v5119 = vsel %vm1020, %v5109, %v5118
      %v5121 = vshrl.u32 %v4984, 16
      %v5123 = vrot.slane %v5121, 3
      %v5124 = vshll.u32 %v4984, 16
      %v5126 = vrot.slane %v5124, 4
      %v5127 = vor.u32 %v5123, %v5126
      %v5128 = vsel %vm1020, %v5118, %v5127
      %v5130 = vshrl.u32 %v4985, 16
      %v5132 = vrot.slane %v5130, 3
      %v5133 = vshll.u32 %v4985, 16
      %v5135 = vrot.slane %v5133, 4
      %v5136 = vor.u32 %v5132, %v5135
      %v5137 = vsel %vm1020, %v5127, %v5136
      %v5139 = vshrl.u32 %v4986, 16
      %v5141 = vrot.slane %v5139, 3
      %v5142 = vshll.u32 %v4986, 16
      %v5144 = vrot.slane %v5142, 4
      %v5145 = vor.u32 %v5141, %v5144
      %v5146 = vsel %vm1020, %v5136, %v5145
      %v5148 = vshrl.u32 %v4987, 16
      %v5150 = vrot.slane %v5148, 3
      %v5151 = vshll.u32 %v4987, 16
      %v5153 = vrot.slane %v5151, 4
      %v5154 = vor.u32 %v5150, %v5153
      %v5155 = vsel %vm1020, %v5145, %v5154
      %v5157 = vshrl.u32 %v4988, 16
      %v5159 = vrot.slane %v5157, 3
      %v5160 = vshll.u32 %v4988, 16
      %v5162 = vrot.slane %v5160, 4
      %v5163 = vor.u32 %v5159, %v5162
      %v5164 = vsel %vm1020, %v5154, %v5163
      %v5166 = vshrl.u32 %v4989, 16
      %v5168 = vrot.slane %v5166, 3
      %v5169 = vshll.u32 %v4989, 16
      %v5171 = vrot.slane %v5169, 4
      %v5172 = vor.u32 %v5168, %v5171
      %v5173 = vsel %vm1020, %v5163, %v5172
      %v5175 = vshrl.u32 %v4990, 16
      %v5177 = vrot.slane %v5175, 3
      %v5178 = vshll.u32 %v4990, 16
      %v5180 = vrot.slane %v5178, 4
      %v5181 = vor.u32 %v5177, %v5180
      %v5182 = vsel %vm1020, %v5172, %v5181
      %v5184 = vshrl.u32 %v4991, 16
      %v5186 = vrot.slane %v5184, 3
      %v5187 = vshll.u32 %v4991, 16
      %v5189 = vrot.slane %v5187, 4
      %v5190 = vor.u32 %v5186, %v5189
      %v5191 = vsel %vm1020, %v5181, %v5190
      %v5193 = vshrl.u32 %v4992, 16
      %v5195 = vrot.slane %v5193, 3
      %v5196 = vshll.u32 %v4992, 16
      %v5198 = vrot.slane %v5196, 4
      %v5199 = vor.u32 %v5195, %v5198
      %v5200 = vsel %vm1020, %v5190, %v5199
      %v5202 = vshrl.u32 %v4993, 16
      %v5204 = vrot.slane %v5202, 3
      %v5205 = vshll.u32 %v4993, 16
      %v5207 = vrot.slane %v5205, 4
      %v5208 = vor.u32 %v5204, %v5207
      %v5209 = vsel %vm1020, %v5199, %v5208
      %v5211 = vshrl.u32 %v4994, 16
      %v5213 = vrot.slane %v5211, 3
      %v5214 = vshll.u32 %v4994, 16
      %v5216 = vrot.slane %v5214, 4
      %v5217 = vor.u32 %v5213, %v5216
      %v5218 = vsel %vm1020, %v5208, %v5217
      %v5259 = vunpack.c.l.b16 %v4614
      %v5260 = vunpack.c.l.b16 %v4615
      %v5261 = vunpack.c.l.b16 %v4616
      %v5262 = vunpack.c.l.b16 %v4617
      %v5263 = vunpack.c.l.b16 %v4618
      %v5264 = vunpack.c.l.b16 %v4619
      %v5265 = vunpack.c.l.b16 %v4620
      %v5266 = vunpack.c.l.b16 %v4621
      %v5267 = vunpack.c.l.b16 %v4622
      %v5268 = vunpack.c.l.b16 %v4623
      %v5269 = vunpack.c.l.b16 %v4624
      %v5270 = vunpack.c.l.b16 %v4625
      %v5271 = vunpack.c.l.b16 %v4626
      %v5272 = vunpack.c.l.b16 %v4627
      %v5273 = vunpack.c.l.b16 %v4628
      %v5274 = vunpack.c.l.b16 %v4629
      %v5275 = vpack.c.b16 %v5260, %v5259
      %v5276 = vpack.c.b16 %v5262, %v5261
      %v5277 = vpack.c.b16 %v5264, %v5263
      %v5278 = vpack.c.b16 %v5266, %v5265
      %v5279 = vpack.c.b16 %v5268, %v5267
      %v5280 = vpack.c.b16 %v5270, %v5269
      %v5281 = vpack.c.b16 %v5272, %v5271
      %v5282 = vpack.c.b16 %v5274, %v5273
      %5291 = vmatpush.bf16.msra.mxu0 %v5282
      %5292 = vmatpush.bf16.msra.mxu0 %v5281
      %5293 = vmatpush.bf16.msra.mxu0 %v5280
      %5294 = vmatpush.bf16.msra.mxu0 %v5279
      %5295 = vmatpush.bf16.msra.mxu0 %v5278
      %5296 = vmatpush.bf16.msra.mxu0 %v5277
      %5297 = vmatpush.bf16.msra.mxu0 %v5276
      %5298 = vmatpush.bf16.msra.mxu0 %v5275
      %5299 = vmatmul.bf16.gmra.mxu0 %v5011
      %v5300 = vpop.f32.mrf.mxu0
      %v5301 = vadd.f32 %v4849, %v5300
      %v5302 = vpop.f32.mrf.mxu0
      %v5303 = vadd.f32 %v4851, %v5302
      %5304 = vmatmul.bf16.gmra.mxu0 %v5020
      %v5305 = vpop.f32.mrf.mxu0
      %v5306 = vadd.f32 %v4854, %v5305
      %v5307 = vpop.f32.mrf.mxu0
      %v5308 = vadd.f32 %v4856, %v5307
      %5309 = vmatmul.bf16.gmra.mxu0 %v5029
      %v5310 = vpop.f32.mrf.mxu0
      %v5311 = vadd.f32 %v4859, %v5310
      %v5312 = vpop.f32.mrf.mxu0
      %v5313 = vadd.f32 %v4861, %v5312
      %5314 = vmatmul.bf16.gmra.mxu0 %v5038
      %v5315 = vpop.f32.mrf.mxu0
      %v5316 = vadd.f32 %v4864, %v5315
      %v5317 = vpop.f32.mrf.mxu0
      %v5318 = vadd.f32 %v4866, %v5317
      %5319 = vmatmul.bf16.gmra.mxu0 %v5047
      %v5320 = vpop.f32.mrf.mxu0
      %v5321 = vadd.f32 %v4869, %v5320
      %v5322 = vpop.f32.mrf.mxu0
      %v5323 = vadd.f32 %v4871, %v5322
      %5324 = vmatmul.bf16.gmra.mxu0 %v5056
      %v5325 = vpop.f32.mrf.mxu0
      %v5326 = vadd.f32 %v4874, %v5325
      %v5327 = vpop.f32.mrf.mxu0
      %v5328 = vadd.f32 %v4876, %v5327
      %5329 = vmatmul.bf16.gmra.mxu0 %v5065
      %v5330 = vpop.f32.mrf.mxu0
      %v5331 = vadd.f32 %v4879, %v5330
      %v5332 = vpop.f32.mrf.mxu0
      %v5333 = vadd.f32 %v4881, %v5332
      %5334 = vmatmul.bf16.gmra.mxu0 %v5074
      %v5335 = vpop.f32.mrf.mxu0
      %v5336 = vadd.f32 %v4884, %v5335
      %v5337 = vpop.f32.mrf.mxu0
      %v5338 = vadd.f32 %v4886, %v5337
      %5339 = vmatmul.bf16.gmra.mxu0 %v5083
      %v5340 = vpop.f32.mrf.mxu0
      %v5341 = vadd.f32 %v4889, %v5340
      %v5342 = vpop.f32.mrf.mxu0
      %v5343 = vadd.f32 %v4891, %v5342
      %5344 = vmatmul.bf16.gmra.mxu0 %v5092
      %v5345 = vpop.f32.mrf.mxu0
      %v5346 = vadd.f32 %v4894, %v5345
      %v5347 = vpop.f32.mrf.mxu0
      %v5348 = vadd.f32 %v4896, %v5347
      %5349 = vmatmul.bf16.gmra.mxu0 %v5101
      %v5350 = vpop.f32.mrf.mxu0
      %v5351 = vadd.f32 %v4899, %v5350
      %v5352 = vpop.f32.mrf.mxu0
      %v5353 = vadd.f32 %v4901, %v5352
      %5354 = vmatmul.bf16.gmra.mxu0 %v5110
      %v5355 = vpop.f32.mrf.mxu0
      %v5356 = vadd.f32 %v4904, %v5355
      %v5357 = vpop.f32.mrf.mxu0
      %v5358 = vadd.f32 %v4906, %v5357
      %5359 = vmatmul.bf16.gmra.mxu0 %v5119
      %v5360 = vpop.f32.mrf.mxu0
      %v5361 = vadd.f32 %v4909, %v5360
      %v5362 = vpop.f32.mrf.mxu0
      %v5363 = vadd.f32 %v4911, %v5362
      %5364 = vmatmul.bf16.gmra.mxu0 %v5128
      %v5365 = vpop.f32.mrf.mxu0
      %v5366 = vadd.f32 %v4914, %v5365
      %v5367 = vpop.f32.mrf.mxu0
      %v5368 = vadd.f32 %v4916, %v5367
      %5369 = vmatmul.bf16.gmra.mxu0 %v5137
      %v5370 = vpop.f32.mrf.mxu0
      %v5371 = vadd.f32 %v4919, %v5370
      %v5372 = vpop.f32.mrf.mxu0
      %v5373 = vadd.f32 %v4921, %v5372
      %5374 = vmatmul.bf16.gmra.mxu0 %v5146
      %v5375 = vpop.f32.mrf.mxu0
      %v5376 = vadd.f32 %v4924, %v5375
      %v5377 = vpop.f32.mrf.mxu0
      %v5378 = vadd.f32 %v4926, %v5377
      %5379 = vmatmul.bf16.gmra.mxu0 %v5155
      %v5380 = vpop.f32.mrf.mxu0
      %v5381 = vadd.f32 %v4929, %v5380
      %v5382 = vpop.f32.mrf.mxu0
      %v5383 = vadd.f32 %v4931, %v5382
      %5384 = vmatmul.bf16.gmra.mxu0 %v5164
      %v5385 = vpop.f32.mrf.mxu0
      %v5386 = vadd.f32 %v4934, %v5385
      %v5387 = vpop.f32.mrf.mxu0
      %v5388 = vadd.f32 %v4936, %v5387
      %5389 = vmatmul.bf16.gmra.mxu0 %v5173
      %v5390 = vpop.f32.mrf.mxu0
      %v5391 = vadd.f32 %v4939, %v5390
      %v5392 = vpop.f32.mrf.mxu0
      %v5393 = vadd.f32 %v4941, %v5392
      %5394 = vmatmul.bf16.gmra.mxu0 %v5182
      %v5395 = vpop.f32.mrf.mxu0
      %v5396 = vadd.f32 %v4944, %v5395
      %v5397 = vpop.f32.mrf.mxu0
      %v5398 = vadd.f32 %v4946, %v5397
      %5399 = vmatmul.bf16.gmra.mxu0 %v5191
      %v5400 = vpop.f32.mrf.mxu0
      %v5401 = vadd.f32 %v4949, %v5400
      %v5402 = vpop.f32.mrf.mxu0
      %v5403 = vadd.f32 %v4951, %v5402
      %5404 = vmatmul.bf16.gmra.mxu0 %v5200
      %v5405 = vpop.f32.mrf.mxu0
      %v5406 = vadd.f32 %v4954, %v5405
      %v5407 = vpop.f32.mrf.mxu0
      %v5408 = vadd.f32 %v4956, %v5407
      %5409 = vmatmul.bf16.gmra.mxu0 %v5209
      %v5410 = vpop.f32.mrf.mxu0
      %v5411 = vadd.f32 %v4959, %v5410
      %v5412 = vpop.f32.mrf.mxu0
      %v5413 = vadd.f32 %v4961, %v5412
      %5414 = vmatmul.bf16.gmra.mxu0 %v5218
      %v5415 = vpop.f32.mrf.mxu0
      %v5416 = vadd.f32 %v4964, %v5415
      %v5417 = vpop.f32.mrf.mxu0
      %v5418 = vadd.f32 %v4966, %v5417
      %5419 = vdwg.mxu0
      %v5420 = vld [vmem:[#allocation4 + $0x8] sm:$0xf]
      %v5421 = vld [vmem:[#allocation4 + $0xc] sm:$0xf]
      %v5422 = vld [vmem:[#allocation4 + $0x10] sm:$0xf]
      %v5423 = vld [vmem:[#allocation4 + $0x14] sm:$0xf]
      %v5424 = vld [vmem:[#allocation4 + $0x18] sm:$0xf]
      %v5425 = vld [vmem:[#allocation4 + $0x1c] sm:$0xf]
      %v5426 = vld [vmem:[#allocation4 + $0x20] sm:$0xf]
      %v5427 = vld [vmem:[#allocation4 + $0x24] sm:$0xf]
      %v5428 = vld [vmem:[#allocation4 + $0x28] sm:$0xf]
      %v5429 = vld [vmem:[#allocation4 + $0x2c] sm:$0xf]
      %v5430 = vld [vmem:[#allocation4 + $0x30] sm:$0xf]
      %v5431 = vld [vmem:[#allocation4 + $0x34] sm:$0xf]
      %v5432 = vld [vmem:[#allocation4 + $0x38] sm:$0xf]
      %v5433 = vld [vmem:[#allocation4 + $0x3c] sm:$0xf]
      %v5434 = vld [vmem:[#allocation4 + $0x40] sm:$0xf]
      %v5435 = vld [vmem:[#allocation4 + $0x44] sm:$0xf]
      %v5436 = vld [vmem:[#allocation4 + $0x48] sm:$0xf]
      %v5437 = vld [vmem:[#allocation4 + $0x4c] sm:$0xf]
      %v5438 = vld [vmem:[#allocation4 + $0x50] sm:$0xf]
      %v5439 = vld [vmem:[#allocation4 + $0x54] sm:$0xf]
      %v5440 = vld [vmem:[#allocation4 + $0x58] sm:$0xf]
      %v5441 = vld [vmem:[#allocation4 + $0x5c] sm:$0xf]
      %v5442 = vld [vmem:[#allocation4 + $0x60] sm:$0xf]
      %v5443 = vld [vmem:[#allocation4 + $0x64] sm:$0xf]
      %v5444 = vld [vmem:[#allocation4 + $0x68] sm:$0xf]
      %v5445 = vld [vmem:[#allocation4 + $0x6c] sm:$0xf]
      %v5446 = vld [vmem:[#allocation4 + $0x70] sm:$0xf]
      %v5447 = vld [vmem:[#allocation4 + $0x74] sm:$0xf]
      %v5448 = vld [vmem:[#allocation4 + $0x78] sm:$0xf]
      %v5449 = vld [vmem:[#allocation4 + $0x7c] sm:$0xf]
      %v5450 = vld [vmem:[#allocation4 + $0x80] sm:$0xf]
      %v5451 = vld [vmem:[#allocation4 + $0x84] sm:$0xf]
      %v5452 = vld [vmem:[#allocation4 + $0x88] sm:$0xf]
      %v5453 = vld [vmem:[#allocation4 + $0x8c] sm:$0xf]
      %v5454 = vld [vmem:[#allocation4 + $0x90] sm:$0xf]
      %v5455 = vld [vmem:[#allocation4 + $0x94] sm:$0xf]
      %v5456 = vld [vmem:[#allocation4 + $0x98] sm:$0xf]
      %v5457 = vld [vmem:[#allocation4 + $0x9c] sm:$0xf]
      %v5458 = vld [vmem:[#allocation4 + $0xa0] sm:$0xf]
      %v5459 = vld [vmem:[#allocation4 + $0xa4] sm:$0xf]
      %v5460 = vld [vmem:[#allocation4 + $0xa8] sm:$0xf]
      %v5461 = vld [vmem:[#allocation4 + $0xac] sm:$0xf]
      %v5462 = vld [vmem:[#allocation4 + $0xb0] sm:$0xf]
      %v5463 = vld [vmem:[#allocation4 + $0xb4] sm:$0xf]
      %v5464 = vld [vmem:[#allocation4 + $0xb8] sm:$0xf]
      %v5465 = vld [vmem:[#allocation4 + $0xbc] sm:$0xf]
      %v5466 = vld [vmem:[#allocation4 + $0xc0] sm:$0xf]
      %v5467 = vld [vmem:[#allocation4 + $0xc4] sm:$0xf]
      %v5468 = vld [vmem:[#allocation4 + $0xc8] sm:$0x1]
      %s5469 = scalar_lea.vmem %s3, 128
      %v5470 = vld [vmem:[%s5469] sm:$0xf]
      %v5471 = vld [vmem:[%s5469 + $0x4] sm:$0xf]
      %v5472 = vld [vmem:[%s5469 + $0x8] sm:$0xf]
      %v5473 = vld [vmem:[%s5469 + $0xc] sm:$0xf]
      %v5474 = vld [vmem:[%s5469 + $0x10] sm:$0xf]
      %v5475 = vld [vmem:[%s5469 + $0x14] sm:$0xf]
      %v5476 = vld [vmem:[%s5469 + $0x18] sm:$0xf]
      %v5477 = vld [vmem:[%s5469 + $0x1c] sm:$0xf]
      %v5478 = vld [vmem:[%s5469 + $0x20] sm:$0xf]
      %v5479 = vld [vmem:[%s5469 + $0x24] sm:$0xf]
      %v5480 = vld [vmem:[%s5469 + $0x28] sm:$0xf]
      %v5481 = vld [vmem:[%s5469 + $0x2c] sm:$0xf]
      %v5482 = vld [vmem:[%s5469 + $0x30] sm:$0xf]
      %v5483 = vld [vmem:[%s5469 + $0x34] sm:$0xf]
      %v5484 = vld [vmem:[%s5469 + $0x38] sm:$0xf]
      %v5485 = vld [vmem:[%s5469 + $0x3c] sm:$0xf]
      %v5535 = vunpack.c.l.b16 %v5420
      %v5536 = vunpack.c.l.b16 %v5421
      %v5537 = vunpack.c.l.b16 %v5422
      %v5538 = vunpack.c.l.b16 %v5423
      %v5539 = vunpack.c.l.b16 %v5424
      %v5540 = vunpack.c.l.b16 %v5425
      %v5541 = vunpack.c.l.b16 %v5426
      %v5542 = vunpack.c.l.b16 %v5427
      %v5543 = vunpack.c.l.b16 %v5428
      %v5544 = vunpack.c.l.b16 %v5429
      %v5545 = vunpack.c.l.b16 %v5430
      %v5546 = vunpack.c.l.b16 %v5431
      %v5547 = vunpack.c.l.b16 %v5432
      %v5548 = vunpack.c.l.b16 %v5433
      %v5549 = vunpack.c.l.b16 %v5434
      %v5550 = vunpack.c.l.b16 %v5435
      %v5551 = vunpack.c.l.b16 %v5436
      %v5552 = vunpack.c.l.b16 %v5437
      %v5553 = vunpack.c.l.b16 %v5438
      %v5554 = vunpack.c.l.b16 %v5439
      %v5555 = vunpack.c.l.b16 %v5440
      %v5556 = vunpack.c.l.b16 %v5441
      %v5557 = vunpack.c.l.b16 %v5442
      %v5558 = vunpack.c.l.b16 %v5443
      %v5559 = vunpack.c.l.b16 %v5444
      %v5560 = vunpack.c.l.b16 %v5445
      %v5561 = vunpack.c.l.b16 %v5446
      %v5562 = vunpack.c.l.b16 %v5447
      %v5563 = vunpack.c.l.b16 %v5448
      %v5564 = vunpack.c.l.b16 %v5449
      %v5565 = vunpack.c.l.b16 %v5450
      %v5566 = vunpack.c.l.b16 %v5451
      %v5567 = vunpack.c.l.b16 %v5452
      %v5568 = vunpack.c.l.b16 %v5453
      %v5569 = vunpack.c.l.b16 %v5454
      %v5570 = vunpack.c.l.b16 %v5455
      %v5571 = vunpack.c.l.b16 %v5456
      %v5572 = vunpack.c.l.b16 %v5457
      %v5573 = vunpack.c.l.b16 %v5458
      %v5574 = vunpack.c.l.b16 %v5459
      %v5575 = vunpack.c.l.b16 %v5460
      %v5576 = vunpack.c.l.b16 %v5461
      %v5577 = vunpack.c.l.b16 %v5462
      %v5578 = vunpack.c.l.b16 %v5463
      %v5579 = vunpack.c.l.b16 %v5464
      %v5580 = vunpack.c.l.b16 %v5465
      %v5581 = vunpack.c.l.b16 %v5466
      %v5582 = vunpack.c.l.b16 %v5467
      %v5583 = vunpack.c.l.b16 %v5468
      %v5584 = vpack.c.b16 %v5536, %v5535
      %v5585 = vpack.c.b16 %v5538, %v5537
      %v5586 = vpack.c.b16 %v5540, %v5539
      %v5587 = vpack.c.b16 %v5542, %v5541
      %v5588 = vpack.c.b16 %v5544, %v5543
      %v5589 = vpack.c.b16 %v5546, %v5545
      %v5590 = vpack.c.b16 %v5548, %v5547
      %v5591 = vpack.c.b16 %v5550, %v5549
      %v5592 = vpack.c.b16 %v5552, %v5551
      %v5593 = vpack.c.b16 %v5554, %v5553
      %v5594 = vpack.c.b16 %v5556, %v5555
      %v5595 = vpack.c.b16 %v5558, %v5557
      %v5596 = vpack.c.b16 %v5560, %v5559
      %v5597 = vpack.c.b16 %v5562, %v5561
      %v5598 = vpack.c.b16 %v5564, %v5563
      %v5599 = vpack.c.b16 %v5566, %v5565
      %v5600 = vpack.c.b16 %v5568, %v5567
      %v5601 = vpack.c.b16 %v5570, %v5569
      %v5602 = vpack.c.b16 %v5572, %v5571
      %v5603 = vpack.c.b16 %v5574, %v5573
      %v5604 = vpack.c.b16 %v5576, %v5575
      %v5605 = vpack.c.b16 %v5578, %v5577
      %v5606 = vpack.c.b16 %v5580, %v5579
      %v5607 = vpack.c.b16 %v5582, %v5581
      %v5608 = vpack.c.b16 %v5583, %v5583
      %v5610 = vshrl.u32 %v5584, 16
      %v5612 = vshll.u32 %v5584, 16
      %v5614 = vrot.slane %v5612, 1
      %v5615 = vor.u32 %v5610, %v5614
      %v5617 = vshll.u32 %v5585, 16
      %v5619 = vrot.slane %v5617, 1
      %v5620 = vsel %vm1511, %v5615, %v5619
      %v5621 = vshrl.u32 %v5585, 16
      %v5623 = vor.u32 %v5621, %v5619
      %v5625 = vshll.u32 %v5586, 16
      %v5627 = vrot.slane %v5625, 1
      %v5628 = vsel %vm1511, %v5623, %v5627
      %v5629 = vshrl.u32 %v5586, 16
      %v5631 = vor.u32 %v5629, %v5627
      %v5633 = vshll.u32 %v5587, 16
      %v5635 = vrot.slane %v5633, 1
      %v5636 = vsel %vm1511, %v5631, %v5635
      %v5637 = vshrl.u32 %v5587, 16
      %v5639 = vor.u32 %v5637, %v5635
      %v5641 = vshll.u32 %v5588, 16
      %v5643 = vrot.slane %v5641, 1
      %v5644 = vsel %vm1511, %v5639, %v5643
      %v5645 = vshrl.u32 %v5588, 16
      %v5647 = vor.u32 %v5645, %v5643
      %v5649 = vshll.u32 %v5589, 16
      %v5651 = vrot.slane %v5649, 1
      %v5652 = vsel %vm1511, %v5647, %v5651
      %v5653 = vshrl.u32 %v5589, 16
      %v5655 = vor.u32 %v5653, %v5651
      %v5657 = vshll.u32 %v5590, 16
      %v5659 = vrot.slane %v5657, 1
      %v5660 = vsel %vm1511, %v5655, %v5659
      %v5661 = vshrl.u32 %v5590, 16
      %v5663 = vor.u32 %v5661, %v5659
      %v5665 = vshll.u32 %v5591, 16
      %v5667 = vrot.slane %v5665, 1
      %v5668 = vsel %vm1511, %v5663, %v5667
      %v5669 = vshrl.u32 %v5591, 16
      %v5671 = vor.u32 %v5669, %v5667
      %v5673 = vshll.u32 %v5592, 16
      %v5675 = vrot.slane %v5673, 1
      %v5676 = vsel %vm1511, %v5671, %v5675
      %v5677 = vshrl.u32 %v5592, 16
      %v5679 = vor.u32 %v5677, %v5675
      %v5681 = vshll.u32 %v5593, 16
      %v5683 = vrot.slane %v5681, 1
      %v5684 = vsel %vm1511, %v5679, %v5683
      %v5685 = vshrl.u32 %v5593, 16
      %v5687 = vor.u32 %v5685, %v5683
      %v5689 = vshll.u32 %v5594, 16
      %v5691 = vrot.slane %v5689, 1
      %v5692 = vsel %vm1511, %v5687, %v5691
      %v5693 = vshrl.u32 %v5594, 16
      %v5695 = vor.u32 %v5693, %v5691
      %v5697 = vshll.u32 %v5595, 16
      %v5699 = vrot.slane %v5697, 1
      %v5700 = vsel %vm1511, %v5695, %v5699
      %v5701 = vshrl.u32 %v5595, 16
      %v5703 = vor.u32 %v5701, %v5699
      %v5705 = vshll.u32 %v5596, 16
      %v5707 = vrot.slane %v5705, 1
      %v5708 = vsel %vm1511, %v5703, %v5707
      %v5709 = vshrl.u32 %v5596, 16
      %v5711 = vor.u32 %v5709, %v5707
      %v5713 = vshll.u32 %v5597, 16
      %v5715 = vrot.slane %v5713, 1
      %v5716 = vsel %vm1511, %v5711, %v5715
      %v5717 = vshrl.u32 %v5597, 16
      %v5719 = vor.u32 %v5717, %v5715
      %v5721 = vshll.u32 %v5598, 16
      %v5723 = vrot.slane %v5721, 1
      %v5724 = vsel %vm1511, %v5719, %v5723
      %v5725 = vshrl.u32 %v5598, 16
      %v5727 = vor.u32 %v5725, %v5723
      %v5729 = vshll.u32 %v5599, 16
      %v5731 = vrot.slane %v5729, 1
      %v5732 = vsel %vm1511, %v5727, %v5731
      %v5733 = vshrl.u32 %v5599, 16
      %v5735 = vor.u32 %v5733, %v5731
      %v5737 = vshll.u32 %v5600, 16
      %v5739 = vrot.slane %v5737, 1
      %v5740 = vsel %vm1511, %v5735, %v5739
      %v5741 = vshrl.u32 %v5600, 16
      %v5743 = vor.u32 %v5741, %v5739
      %v5745 = vshll.u32 %v5601, 16
      %v5747 = vrot.slane %v5745, 1
      %v5748 = vsel %vm1511, %v5743, %v5747
      %v5749 = vshrl.u32 %v5601, 16
      %v5751 = vor.u32 %v5749, %v5747
      %v5753 = vshll.u32 %v5602, 16
      %v5755 = vrot.slane %v5753, 1
      %v5756 = vsel %vm1511, %v5751, %v5755
      %v5757 = vshrl.u32 %v5602, 16
      %v5759 = vor.u32 %v5757, %v5755
      %v5761 = vshll.u32 %v5603, 16
      %v5763 = vrot.slane %v5761, 1
      %v5764 = vsel %vm1511, %v5759, %v5763
      %v5765 = vshrl.u32 %v5603, 16
      %v5767 = vor.u32 %v5765, %v5763
      %v5769 = vshll.u32 %v5604, 16
      %v5771 = vrot.slane %v5769, 1
      %v5772 = vsel %vm1511, %v5767, %v5771
      %v5773 = vshrl.u32 %v5604, 16
      %v5775 = vor.u32 %v5773, %v5771
      %v5777 = vshll.u32 %v5605, 16
      %v5779 = vrot.slane %v5777, 1
      %v5780 = vsel %vm1511, %v5775, %v5779
      %v5781 = vshrl.u32 %v5605, 16
      %v5783 = vor.u32 %v5781, %v5779
      %v5785 = vshll.u32 %v5606, 16
      %v5787 = vrot.slane %v5785, 1
      %v5788 = vsel %vm1511, %v5783, %v5787
      %v5789 = vshrl.u32 %v5606, 16
      %v5791 = vor.u32 %v5789, %v5787
      %v5793 = vshll.u32 %v5607, 16
      %v5795 = vrot.slane %v5793, 1
      %v5796 = vsel %vm1511, %v5791, %v5795
      %v5797 = vshrl.u32 %v5607, 16
      %v5799 = vor.u32 %v5797, %v5795
      %v5801 = vshll.u32 %v5608, 16
      %v5803 = vrot.slane %v5801, 1
      %v5804 = vsel %vm1511, %v5799, %v5803
      %v5845 = vunpack.c.l.b16 %v5470
      %v5846 = vunpack.c.l.b16 %v5471
      %v5847 = vunpack.c.l.b16 %v5472
      %v5848 = vunpack.c.l.b16 %v5473
      %v5849 = vunpack.c.l.b16 %v5474
      %v5850 = vunpack.c.l.b16 %v5475
      %v5851 = vunpack.c.l.b16 %v5476
      %v5852 = vunpack.c.l.b16 %v5477
      %v5853 = vunpack.c.l.b16 %v5478
      %v5854 = vunpack.c.l.b16 %v5479
      %v5855 = vunpack.c.l.b16 %v5480
      %v5856 = vunpack.c.l.b16 %v5481
      %v5857 = vunpack.c.l.b16 %v5482
      %v5858 = vunpack.c.l.b16 %v5483
      %v5859 = vunpack.c.l.b16 %v5484
      %v5860 = vunpack.c.l.b16 %v5485
      %v5861 = vpack.c.b16 %v5846, %v5845
      %v5862 = vpack.c.b16 %v5848, %v5847
      %v5863 = vpack.c.b16 %v5850, %v5849
      %v5864 = vpack.c.b16 %v5852, %v5851
      %v5865 = vpack.c.b16 %v5854, %v5853
      %v5866 = vpack.c.b16 %v5856, %v5855
      %v5867 = vpack.c.b16 %v5858, %v5857
      %v5868 = vpack.c.b16 %v5860, %v5859
      %5877 = vmatpush.bf16.msra.mxu0 %v5868
      %5878 = vmatpush.bf16.msra.mxu0 %v5867
      %5879 = vmatpush.bf16.msra.mxu0 %v5866
      %5880 = vmatpush.bf16.msra.mxu0 %v5865
      %5881 = vmatpush.bf16.msra.mxu0 %v5864
      %5882 = vmatpush.bf16.msra.mxu0 %v5863
      %5883 = vmatpush.bf16.msra.mxu0 %v5862
      %5884 = vmatpush.bf16.msra.mxu0 %v5861
      %5885 = vmatmul.bf16.gmra.mxu0 %v5620
      %v5886 = vpop.f32.mrf.mxu0
      %v5887 = vadd.f32 0.0, %v5886
      %v5888 = vpop.f32.mrf.mxu0
      %v5889 = vadd.f32 0.0, %v5888
      %5890 = vmatmul.bf16.gmra.mxu0 %v5628
      %v5891 = vpop.f32.mrf.mxu0
      %v5892 = vadd.f32 0.0, %v5891
      %v5893 = vpop.f32.mrf.mxu0
      %v5894 = vadd.f32 0.0, %v5893
      %5895 = vmatmul.bf16.gmra.mxu0 %v5636
      %v5896 = vpop.f32.mrf.mxu0
      %v5897 = vadd.f32 0.0, %v5896
      %v5898 = vpop.f32.mrf.mxu0
      %v5899 = vadd.f32 0.0, %v5898
      %5900 = vmatmul.bf16.gmra.mxu0 %v5644
      %v5901 = vpop.f32.mrf.mxu0
      %v5902 = vadd.f32 0.0, %v5901
      %v5903 = vpop.f32.mrf.mxu0
      %v5904 = vadd.f32 0.0, %v5903
      %5905 = vmatmul.bf16.gmra.mxu0 %v5652
      %v5906 = vpop.f32.mrf.mxu0
      %v5907 = vadd.f32 0.0, %v5906
      %v5908 = vpop.f32.mrf.mxu0
      %v5909 = vadd.f32 0.0, %v5908
      %5910 = vmatmul.bf16.gmra.mxu0 %v5660
      %v5911 = vpop.f32.mrf.mxu0
      %v5912 = vadd.f32 0.0, %v5911
      %v5913 = vpop.f32.mrf.mxu0
      %v5914 = vadd.f32 0.0, %v5913
      %5915 = vmatmul.bf16.gmra.mxu0 %v5668
      %v5916 = vpop.f32.mrf.mxu0
      %v5917 = vadd.f32 0.0, %v5916
      %v5918 = vpop.f32.mrf.mxu0
      %v5919 = vadd.f32 0.0, %v5918
      %5920 = vmatmul.bf16.gmra.mxu0 %v5676
      %v5921 = vpop.f32.mrf.mxu0
      %v5922 = vadd.f32 0.0, %v5921
      %v5923 = vpop.f32.mrf.mxu0
      %v5924 = vadd.f32 0.0, %v5923
      %5925 = vmatmul.bf16.gmra.mxu0 %v5684
      %v5926 = vpop.f32.mrf.mxu0
      %v5927 = vadd.f32 0.0, %v5926
      %v5928 = vpop.f32.mrf.mxu0
      %v5929 = vadd.f32 0.0, %v5928
      %5930 = vmatmul.bf16.gmra.mxu0 %v5692
      %v5931 = vpop.f32.mrf.mxu0
      %v5932 = vadd.f32 0.0, %v5931
      %v5933 = vpop.f32.mrf.mxu0
      %v5934 = vadd.f32 0.0, %v5933
      %5935 = vmatmul.bf16.gmra.mxu0 %v5700
      %v5936 = vpop.f32.mrf.mxu0
      %v5937 = vadd.f32 0.0, %v5936
      %v5938 = vpop.f32.mrf.mxu0
      %v5939 = vadd.f32 0.0, %v5938
      %5940 = vmatmul.bf16.gmra.mxu0 %v5708
      %v5941 = vpop.f32.mrf.mxu0
      %v5942 = vadd.f32 0.0, %v5941
      %v5943 = vpop.f32.mrf.mxu0
      %v5944 = vadd.f32 0.0, %v5943
      %5945 = vmatmul.bf16.gmra.mxu0 %v5716
      %v5946 = vpop.f32.mrf.mxu0
      %v5947 = vadd.f32 0.0, %v5946
      %v5948 = vpop.f32.mrf.mxu0
      %v5949 = vadd.f32 0.0, %v5948
      %5950 = vmatmul.bf16.gmra.mxu0 %v5724
      %v5951 = vpop.f32.mrf.mxu0
      %v5952 = vadd.f32 0.0, %v5951
      %v5953 = vpop.f32.mrf.mxu0
      %v5954 = vadd.f32 0.0, %v5953
      %5955 = vmatmul.bf16.gmra.mxu0 %v5732
      %v5956 = vpop.f32.mrf.mxu0
      %v5957 = vadd.f32 0.0, %v5956
      %v5958 = vpop.f32.mrf.mxu0
      %v5959 = vadd.f32 0.0, %v5958
      %5960 = vmatmul.bf16.gmra.mxu0 %v5740
      %v5961 = vpop.f32.mrf.mxu0
      %v5962 = vadd.f32 0.0, %v5961
      %v5963 = vpop.f32.mrf.mxu0
      %v5964 = vadd.f32 0.0, %v5963
      %5965 = vmatmul.bf16.gmra.mxu0 %v5748
      %v5966 = vpop.f32.mrf.mxu0
      %v5967 = vadd.f32 0.0, %v5966
      %v5968 = vpop.f32.mrf.mxu0
      %v5969 = vadd.f32 0.0, %v5968
      %5970 = vmatmul.bf16.gmra.mxu0 %v5756
      %v5971 = vpop.f32.mrf.mxu0
      %v5972 = vadd.f32 0.0, %v5971
      %v5973 = vpop.f32.mrf.mxu0
      %v5974 = vadd.f32 0.0, %v5973
      %5975 = vmatmul.bf16.gmra.mxu0 %v5764
      %v5976 = vpop.f32.mrf.mxu0
      %v5977 = vadd.f32 0.0, %v5976
      %v5978 = vpop.f32.mrf.mxu0
      %v5979 = vadd.f32 0.0, %v5978
      %5980 = vmatmul.bf16.gmra.mxu0 %v5772
      %v5981 = vpop.f32.mrf.mxu0
      %v5982 = vadd.f32 0.0, %v5981
      %v5983 = vpop.f32.mrf.mxu0
      %v5984 = vadd.f32 0.0, %v5983
      %5985 = vmatmul.bf16.gmra.mxu0 %v5780
      %v5986 = vpop.f32.mrf.mxu0
      %v5987 = vadd.f32 0.0, %v5986
      %v5988 = vpop.f32.mrf.mxu0
      %v5989 = vadd.f32 0.0, %v5988
      %5990 = vmatmul.bf16.gmra.mxu0 %v5788
      %v5991 = vpop.f32.mrf.mxu0
      %v5992 = vadd.f32 0.0, %v5991
      %v5993 = vpop.f32.mrf.mxu0
      %v5994 = vadd.f32 0.0, %v5993
      %5995 = vmatmul.bf16.gmra.mxu0 %v5796
      %v5996 = vpop.f32.mrf.mxu0
      %v5997 = vadd.f32 0.0, %v5996
      %v5998 = vpop.f32.mrf.mxu0
      %v5999 = vadd.f32 0.0, %v5998
      %6000 = vmatmul.bf16.gmra.mxu0 %v5804
      %v6001 = vpop.f32.mrf.mxu0
      %v6002 = vadd.f32 0.0, %v6001
      %v6003 = vpop.f32.mrf.mxu0
      %v6004 = vadd.f32 0.0, %v6003
      %6005 = vdwg.mxu0
      %v6006 = vadd.f32 %v5301, %v5887
      %v6007 = vadd.f32 %v5303, %v5889
      %v6008 = vadd.f32 %v5306, %v5892
      %v6009 = vadd.f32 %v5308, %v5894
      %v6010 = vadd.f32 %v5311, %v5897
      %v6011 = vadd.f32 %v5313, %v5899
      %v6012 = vadd.f32 %v5316, %v5902
      %v6013 = vadd.f32 %v5318, %v5904
      %v6014 = vadd.f32 %v5321, %v5907
      %v6015 = vadd.f32 %v5323, %v5909
      %v6016 = vadd.f32 %v5326, %v5912
      %v6017 = vadd.f32 %v5328, %v5914
      %v6018 = vadd.f32 %v5331, %v5917
      %v6019 = vadd.f32 %v5333, %v5919
      %v6020 = vadd.f32 %v5336, %v5922
      %v6021 = vadd.f32 %v5338, %v5924
      %v6022 = vadd.f32 %v5341, %v5927
      %v6023 = vadd.f32 %v5343, %v5929
      %v6024 = vadd.f32 %v5346, %v5932
      %v6025 = vadd.f32 %v5348, %v5934
      %v6026 = vadd.f32 %v5351, %v5937
      %v6027 = vadd.f32 %v5353, %v5939
      %v6028 = vadd.f32 %v5356, %v5942
      %v6029 = vadd.f32 %v5358, %v5944
      %v6030 = vadd.f32 %v5361, %v5947
      %v6031 = vadd.f32 %v5363, %v5949
      %v6032 = vadd.f32 %v5366, %v5952
      %v6033 = vadd.f32 %v5368, %v5954
      %v6034 = vadd.f32 %v5371, %v5957
      %v6035 = vadd.f32 %v5373, %v5959
      %v6036 = vadd.f32 %v5376, %v5962
      %v6037 = vadd.f32 %v5378, %v5964
      %v6038 = vadd.f32 %v5381, %v5967
      %v6039 = vadd.f32 %v5383, %v5969
      %v6040 = vadd.f32 %v5386, %v5972
      %v6041 = vadd.f32 %v5388, %v5974
      %v6042 = vadd.f32 %v5391, %v5977
      %v6043 = vadd.f32 %v5393, %v5979
      %v6044 = vadd.f32 %v5396, %v5982
      %v6045 = vadd.f32 %v5398, %v5984
      %v6046 = vadd.f32 %v5401, %v5987
      %v6047 = vadd.f32 %v5403, %v5989
      %v6048 = vadd.f32 %v5406, %v5992
      %v6049 = vadd.f32 %v5408, %v5994
      %v6050 = vadd.f32 %v5411, %v5997
      %v6051 = vadd.f32 %v5413, %v5999
      %v6052 = vadd.f32 %v5416, %v6002
      %v6053 = vadd.f32 %v5418, %v6004
      %v6054 = vld [vmem:[#allocation4 + $0x10] sm:$0x8]
      %v6055 = vld [vmem:[#allocation4 + $0x14] sm:$0xf]
      %v6056 = vld [vmem:[#allocation4 + $0x18] sm:$0xf]
      %v6057 = vld [vmem:[#allocation4 + $0x1c] sm:$0xf]
      %v6058 = vld [vmem:[#allocation4 + $0x20] sm:$0xf]
      %v6059 = vld [vmem:[#allocation4 + $0x24] sm:$0xf]
      %v6060 = vld [vmem:[#allocation4 + $0x28] sm:$0xf]
      %v6061 = vld [vmem:[#allocation4 + $0x2c] sm:$0xf]
      %v6062 = vld [vmem:[#allocation4 + $0x30] sm:$0xf]
      %v6063 = vld [vmem:[#allocation4 + $0x34] sm:$0xf]
      %v6064 = vld [vmem:[#allocation4 + $0x38] sm:$0xf]
      %v6065 = vld [vmem:[#allocation4 + $0x3c] sm:$0xf]
      %v6066 = vld [vmem:[#allocation4 + $0x40] sm:$0xf]
      %v6067 = vld [vmem:[#allocation4 + $0x44] sm:$0xf]
      %v6068 = vld [vmem:[#allocation4 + $0x48] sm:$0xf]
      %v6069 = vld [vmem:[#allocation4 + $0x4c] sm:$0xf]
      %v6070 = vld [vmem:[#allocation4 + $0x50] sm:$0xf]
      %v6071 = vld [vmem:[#allocation4 + $0x54] sm:$0xf]
      %v6072 = vld [vmem:[#allocation4 + $0x58] sm:$0xf]
      %v6073 = vld [vmem:[#allocation4 + $0x5c] sm:$0xf]
      %v6074 = vld [vmem:[#allocation4 + $0x60] sm:$0xf]
      %v6075 = vld [vmem:[#allocation4 + $0x64] sm:$0xf]
      %v6076 = vld [vmem:[#allocation4 + $0x68] sm:$0xf]
      %v6077 = vld [vmem:[#allocation4 + $0x6c] sm:$0xf]
      %v6078 = vld [vmem:[#allocation4 + $0x70] sm:$0xf]
      %v6079 = vld [vmem:[#allocation4 + $0x74] sm:$0xf]
      %v6080 = vld [vmem:[#allocation4 + $0x78] sm:$0xf]
      %v6081 = vld [vmem:[#allocation4 + $0x7c] sm:$0xf]
      %v6082 = vld [vmem:[#allocation4 + $0x80] sm:$0xf]
      %v6083 = vld [vmem:[#allocation4 + $0x84] sm:$0xf]
      %v6084 = vld [vmem:[#allocation4 + $0x88] sm:$0xf]
      %v6085 = vld [vmem:[#allocation4 + $0x8c] sm:$0xf]
      %v6086 = vld [vmem:[#allocation4 + $0x90] sm:$0xf]
      %v6087 = vld [vmem:[#allocation4 + $0x94] sm:$0xf]
      %v6088 = vld [vmem:[#allocation4 + $0x98] sm:$0xf]
      %v6089 = vld [vmem:[#allocation4 + $0x9c] sm:$0xf]
      %v6090 = vld [vmem:[#allocation4 + $0xa0] sm:$0xf]
      %v6091 = vld [vmem:[#allocation4 + $0xa4] sm:$0xf]
      %v6092 = vld [vmem:[#allocation4 + $0xa8] sm:$0xf]
      %v6093 = vld [vmem:[#allocation4 + $0xac] sm:$0xf]
      %v6094 = vld [vmem:[#allocation4 + $0xb0] sm:$0xf]
      %v6095 = vld [vmem:[#allocation4 + $0xb4] sm:$0xf]
      %v6096 = vld [vmem:[#allocation4 + $0xb8] sm:$0xf]
      %v6097 = vld [vmem:[#allocation4 + $0xbc] sm:$0xf]
      %v6098 = vld [vmem:[#allocation4 + $0xc0] sm:$0xf]
      %v6099 = vld [vmem:[#allocation4 + $0xc4] sm:$0xf]
      %v6100 = vld [vmem:[#allocation4 + $0xc8] sm:$0xf]
      %v6101 = vld [vmem:[#allocation4 + $0xcc] sm:$0xf]
      %v6102 = vld [vmem:[#allocation4 + $0xd0] sm:$0xf]
      %s6103 = scalar_lea.vmem %s3, 192
      %v6104 = vld [vmem:[%s6103] sm:$0xf]
      %v6105 = vld [vmem:[%s6103 + $0x4] sm:$0xf]
      %v6106 = vld [vmem:[%s6103 + $0x8] sm:$0xf]
      %v6107 = vld [vmem:[%s6103 + $0xc] sm:$0xf]
      %v6108 = vld [vmem:[%s6103 + $0x10] sm:$0xf]
      %v6109 = vld [vmem:[%s6103 + $0x14] sm:$0xf]
      %v6110 = vld [vmem:[%s6103 + $0x18] sm:$0xf]
      %v6111 = vld [vmem:[%s6103 + $0x1c] sm:$0xf]
      %v6112 = vld [vmem:[%s6103 + $0x20] sm:$0xf]
      %v6113 = vld [vmem:[%s6103 + $0x24] sm:$0xf]
      %v6114 = vld [vmem:[%s6103 + $0x28] sm:$0xf]
      %v6115 = vld [vmem:[%s6103 + $0x2c] sm:$0xf]
      %v6116 = vld [vmem:[%s6103 + $0x30] sm:$0xf]
      %v6117 = vld [vmem:[%s6103 + $0x34] sm:$0xf]
      %v6118 = vld [vmem:[%s6103 + $0x38] sm:$0xf]
      %v6119 = vld [vmem:[%s6103 + $0x3c] sm:$0xf]
      %v6169 = vunpack.c.l.b16 %v6054
      %v6170 = vunpack.c.l.b16 %v6055
      %v6171 = vunpack.c.l.b16 %v6056
      %v6172 = vunpack.c.l.b16 %v6057
      %v6173 = vunpack.c.l.b16 %v6058
      %v6174 = vunpack.c.l.b16 %v6059
      %v6175 = vunpack.c.l.b16 %v6060
      %v6176 = vunpack.c.l.b16 %v6061
      %v6177 = vunpack.c.l.b16 %v6062
      %v6178 = vunpack.c.l.b16 %v6063
      %v6179 = vunpack.c.l.b16 %v6064
      %v6180 = vunpack.c.l.b16 %v6065
      %v6181 = vunpack.c.l.b16 %v6066
      %v6182 = vunpack.c.l.b16 %v6067
      %v6183 = vunpack.c.l.b16 %v6068
      %v6184 = vunpack.c.l.b16 %v6069
      %v6185 = vunpack.c.l.b16 %v6070
      %v6186 = vunpack.c.l.b16 %v6071
      %v6187 = vunpack.c.l.b16 %v6072
      %v6188 = vunpack.c.l.b16 %v6073
      %v6189 = vunpack.c.l.b16 %v6074
      %v6190 = vunpack.c.l.b16 %v6075
      %v6191 = vunpack.c.l.b16 %v6076
      %v6192 = vunpack.c.l.b16 %v6077
      %v6193 = vunpack.c.l.b16 %v6078
      %v6194 = vunpack.c.l.b16 %v6079
      %v6195 = vunpack.c.l.b16 %v6080
      %v6196 = vunpack.c.l.b16 %v6081
      %v6197 = vunpack.c.l.b16 %v6082
      %v6198 = vunpack.c.l.b16 %v6083
      %v6199 = vunpack.c.l.b16 %v6084
      %v6200 = vunpack.c.l.b16 %v6085
      %v6201 = vunpack.c.l.b16 %v6086
      %v6202 = vunpack.c.l.b16 %v6087
      %v6203 = vunpack.c.l.b16 %v6088
      %v6204 = vunpack.c.l.b16 %v6089
      %v6205 = vunpack.c.l.b16 %v6090
      %v6206 = vunpack.c.l.b16 %v6091
      %v6207 = vunpack.c.l.b16 %v6092
      %v6208 = vunpack.c.l.b16 %v6093
      %v6209 = vunpack.c.l.b16 %v6094
      %v6210 = vunpack.c.l.b16 %v6095
      %v6211 = vunpack.c.l.b16 %v6096
      %v6212 = vunpack.c.l.b16 %v6097
      %v6213 = vunpack.c.l.b16 %v6098
      %v6214 = vunpack.c.l.b16 %v6099
      %v6215 = vunpack.c.l.b16 %v6100
      %v6216 = vunpack.c.l.b16 %v6101
      %v6217 = vunpack.c.l.b16 %v6102
      %v6218 = vpack.c.b16 %v6170, %v6169
      %v6219 = vpack.c.b16 %v6172, %v6171
      %v6220 = vpack.c.b16 %v6174, %v6173
      %v6221 = vpack.c.b16 %v6176, %v6175
      %v6222 = vpack.c.b16 %v6178, %v6177
      %v6223 = vpack.c.b16 %v6180, %v6179
      %v6224 = vpack.c.b16 %v6182, %v6181
      %v6225 = vpack.c.b16 %v6184, %v6183
      %v6226 = vpack.c.b16 %v6186, %v6185
      %v6227 = vpack.c.b16 %v6188, %v6187
      %v6228 = vpack.c.b16 %v6190, %v6189
      %v6229 = vpack.c.b16 %v6192, %v6191
      %v6230 = vpack.c.b16 %v6194, %v6193
      %v6231 = vpack.c.b16 %v6196, %v6195
      %v6232 = vpack.c.b16 %v6198, %v6197
      %v6233 = vpack.c.b16 %v6200, %v6199
      %v6234 = vpack.c.b16 %v6202, %v6201
      %v6235 = vpack.c.b16 %v6204, %v6203
      %v6236 = vpack.c.b16 %v6206, %v6205
      %v6237 = vpack.c.b16 %v6208, %v6207
      %v6238 = vpack.c.b16 %v6210, %v6209
      %v6239 = vpack.c.b16 %v6212, %v6211
      %v6240 = vpack.c.b16 %v6214, %v6213
      %v6241 = vpack.c.b16 %v6216, %v6215
      %v6242 = vpack.c.b16 %v6217, %v6217
      %v6244 = vshrl.u32 %v6218, 16
      %v6246 = vrot.slane %v6244, 3
      %v6247 = vshll.u32 %v6218, 16
      %v6249 = vrot.slane %v6247, 4
      %v6250 = vor.u32 %v6246, %v6249
      %v6252 = vshrl.u32 %v6219, 16
      %v6254 = vrot.slane %v6252, 3
      %v6255 = vshll.u32 %v6219, 16
      %v6257 = vrot.slane %v6255, 4
      %v6258 = vor.u32 %v6254, %v6257
      %v6259 = vsel %vm1020, %v6250, %v6258
      %v6261 = vshrl.u32 %v6220, 16
      %v6263 = vrot.slane %v6261, 3
      %v6264 = vshll.u32 %v6220, 16
      %v6266 = vrot.slane %v6264, 4
      %v6267 = vor.u32 %v6263, %v6266
      %v6268 = vsel %vm1020, %v6258, %v6267
      %v6270 = vshrl.u32 %v6221, 16
      %v6272 = vrot.slane %v6270, 3
      %v6273 = vshll.u32 %v6221, 16
      %v6275 = vrot.slane %v6273, 4
      %v6276 = vor.u32 %v6272, %v6275
      %v6277 = vsel %vm1020, %v6267, %v6276
      %v6279 = vshrl.u32 %v6222, 16
      %v6281 = vrot.slane %v6279, 3
      %v6282 = vshll.u32 %v6222, 16
      %v6284 = vrot.slane %v6282, 4
      %v6285 = vor.u32 %v6281, %v6284
      %v6286 = vsel %vm1020, %v6276, %v6285
      %v6288 = vshrl.u32 %v6223, 16
      %v6290 = vrot.slane %v6288, 3
      %v6291 = vshll.u32 %v6223, 16
      %v6293 = vrot.slane %v6291, 4
      %v6294 = vor.u32 %v6290, %v6293
      %v6295 = vsel %vm1020, %v6285, %v6294
      %v6297 = vshrl.u32 %v6224, 16
      %v6299 = vrot.slane %v6297, 3
      %v6300 = vshll.u32 %v6224, 16
      %v6302 = vrot.slane %v6300, 4
      %v6303 = vor.u32 %v6299, %v6302
      %v6304 = vsel %vm1020, %v6294, %v6303
      %v6306 = vshrl.u32 %v6225, 16
      %v6308 = vrot.slane %v6306, 3
      %v6309 = vshll.u32 %v6225, 16
      %v6311 = vrot.slane %v6309, 4
      %v6312 = vor.u32 %v6308, %v6311
      %v6313 = vsel %vm1020, %v6303, %v6312
      %v6315 = vshrl.u32 %v6226, 16
      %v6317 = vrot.slane %v6315, 3
      %v6318 = vshll.u32 %v6226, 16
      %v6320 = vrot.slane %v6318, 4
      %v6321 = vor.u32 %v6317, %v6320
      %v6322 = vsel %vm1020, %v6312, %v6321
      %v6324 = vshrl.u32 %v6227, 16
      %v6326 = vrot.slane %v6324, 3
      %v6327 = vshll.u32 %v6227, 16
      %v6329 = vrot.slane %v6327, 4
      %v6330 = vor.u32 %v6326, %v6329
      %v6331 = vsel %vm1020, %v6321, %v6330
      %v6333 = vshrl.u32 %v6228, 16
      %v6335 = vrot.slane %v6333, 3
      %v6336 = vshll.u32 %v6228, 16
      %v6338 = vrot.slane %v6336, 4
      %v6339 = vor.u32 %v6335, %v6338
      %v6340 = vsel %vm1020, %v6330, %v6339
      %v6342 = vshrl.u32 %v6229, 16
      %v6344 = vrot.slane %v6342, 3
      %v6345 = vshll.u32 %v6229, 16
      %v6347 = vrot.slane %v6345, 4
      %v6348 = vor.u32 %v6344, %v6347
      %v6349 = vsel %vm1020, %v6339, %v6348
      %v6351 = vshrl.u32 %v6230, 16
      %v6353 = vrot.slane %v6351, 3
      %v6354 = vshll.u32 %v6230, 16
      %v6356 = vrot.slane %v6354, 4
      %v6357 = vor.u32 %v6353, %v6356
      %v6358 = vsel %vm1020, %v6348, %v6357
      %v6360 = vshrl.u32 %v6231, 16
      %v6362 = vrot.slane %v6360, 3
      %v6363 = vshll.u32 %v6231, 16
      %v6365 = vrot.slane %v6363, 4
      %v6366 = vor.u32 %v6362, %v6365
      %v6367 = vsel %vm1020, %v6357, %v6366
      %v6369 = vshrl.u32 %v6232, 16
      %v6371 = vrot.slane %v6369, 3
      %v6372 = vshll.u32 %v6232, 16
      %v6374 = vrot.slane %v6372, 4
      %v6375 = vor.u32 %v6371, %v6374
      %v6376 = vsel %vm1020, %v6366, %v6375
      %v6378 = vshrl.u32 %v6233, 16
      %v6380 = vrot.slane %v6378, 3
      %v6381 = vshll.u32 %v6233, 16
      %v6383 = vrot.slane %v6381, 4
      %v6384 = vor.u32 %v6380, %v6383
      %v6385 = vsel %vm1020, %v6375, %v6384
      %v6387 = vshrl.u32 %v6234, 16
      %v6389 = vrot.slane %v6387, 3
      %v6390 = vshll.u32 %v6234, 16
      %v6392 = vrot.slane %v6390, 4
      %v6393 = vor.u32 %v6389, %v6392
      %v6394 = vsel %vm1020, %v6384, %v6393
      %v6396 = vshrl.u32 %v6235, 16
      %v6398 = vrot.slane %v6396, 3
      %v6399 = vshll.u32 %v6235, 16
      %v6401 = vrot.slane %v6399, 4
      %v6402 = vor.u32 %v6398, %v6401
      %v6403 = vsel %vm1020, %v6393, %v6402
      %v6405 = vshrl.u32 %v6236, 16
      %v6407 = vrot.slane %v6405, 3
      %v6408 = vshll.u32 %v6236, 16
      %v6410 = vrot.slane %v6408, 4
      %v6411 = vor.u32 %v6407, %v6410
      %v6412 = vsel %vm1020, %v6402, %v6411
      %v6414 = vshrl.u32 %v6237, 16
      %v6416 = vrot.slane %v6414, 3
      %v6417 = vshll.u32 %v6237, 16
      %v6419 = vrot.slane %v6417, 4
      %v6420 = vor.u32 %v6416, %v6419
      %v6421 = vsel %vm1020, %v6411, %v6420
      %v6423 = vshrl.u32 %v6238, 16
      %v6425 = vrot.slane %v6423, 3
      %v6426 = vshll.u32 %v6238, 16
      %v6428 = vrot.slane %v6426, 4
      %v6429 = vor.u32 %v6425, %v6428
      %v6430 = vsel %vm1020, %v6420, %v6429
      %v6432 = vshrl.u32 %v6239, 16
      %v6434 = vrot.slane %v6432, 3
      %v6435 = vshll.u32 %v6239, 16
      %v6437 = vrot.slane %v6435, 4
      %v6438 = vor.u32 %v6434, %v6437
      %v6439 = vsel %vm1020, %v6429, %v6438
      %v6441 = vshrl.u32 %v6240, 16
      %v6443 = vrot.slane %v6441, 3
      %v6444 = vshll.u32 %v6240, 16
      %v6446 = vrot.slane %v6444, 4
      %v6447 = vor.u32 %v6443, %v6446
      %v6448 = vsel %vm1020, %v6438, %v6447
      %v6450 = vshrl.u32 %v6241, 16
      %v6452 = vrot.slane %v6450, 3
      %v6453 = vshll.u32 %v6241, 16
      %v6455 = vrot.slane %v6453, 4
      %v6456 = vor.u32 %v6452, %v6455
      %v6457 = vsel %vm1020, %v6447, %v6456
      %v6459 = vshrl.u32 %v6242, 16
      %v6461 = vrot.slane %v6459, 3
      %v6462 = vshll.u32 %v6242, 16
      %v6464 = vrot.slane %v6462, 4
      %v6465 = vor.u32 %v6461, %v6464
      %v6466 = vsel %vm1020, %v6456, %v6465
      %v6507 = vunpack.c.l.b16 %v6104
      %v6508 = vunpack.c.l.b16 %v6105
      %v6509 = vunpack.c.l.b16 %v6106
      %v6510 = vunpack.c.l.b16 %v6107
      %v6511 = vunpack.c.l.b16 %v6108
      %v6512 = vunpack.c.l.b16 %v6109
      %v6513 = vunpack.c.l.b16 %v6110
      %v6514 = vunpack.c.l.b16 %v6111
      %v6515 = vunpack.c.l.b16 %v6112
      %v6516 = vunpack.c.l.b16 %v6113
      %v6517 = vunpack.c.l.b16 %v6114
      %v6518 = vunpack.c.l.b16 %v6115
      %v6519 = vunpack.c.l.b16 %v6116
      %v6520 = vunpack.c.l.b16 %v6117
      %v6521 = vunpack.c.l.b16 %v6118
      %v6522 = vunpack.c.l.b16 %v6119
      %v6523 = vpack.c.b16 %v6508, %v6507
      %v6524 = vpack.c.b16 %v6510, %v6509
      %v6525 = vpack.c.b16 %v6512, %v6511
      %v6526 = vpack.c.b16 %v6514, %v6513
      %v6527 = vpack.c.b16 %v6516, %v6515
      %v6528 = vpack.c.b16 %v6518, %v6517
      %v6529 = vpack.c.b16 %v6520, %v6519
      %v6530 = vpack.c.b16 %v6522, %v6521
      %6539 = vmatpush.bf16.msra.mxu0 %v6530
      %6540 = vmatpush.bf16.msra.mxu0 %v6529
      %6541 = vmatpush.bf16.msra.mxu0 %v6528
      %6542 = vmatpush.bf16.msra.mxu0 %v6527
      %6543 = vmatpush.bf16.msra.mxu0 %v6526
      %6544 = vmatpush.bf16.msra.mxu0 %v6525
      %6545 = vmatpush.bf16.msra.mxu0 %v6524
      %6546 = vmatpush.bf16.msra.mxu0 %v6523
      %6547 = vmatmul.bf16.gmra.mxu0 %v6259
      %v6548 = vpop.f32.mrf.mxu0
      %v6549 = vadd.f32 0.0, %v6548
      %v6550 = vpop.f32.mrf.mxu0
      %v6551 = vadd.f32 0.0, %v6550
      %6552 = vmatmul.bf16.gmra.mxu0 %v6268
      %v6553 = vpop.f32.mrf.mxu0
      %v6554 = vadd.f32 0.0, %v6553
      %v6555 = vpop.f32.mrf.mxu0
      %v6556 = vadd.f32 0.0, %v6555
      %6557 = vmatmul.bf16.gmra.mxu0 %v6277
      %v6558 = vpop.f32.mrf.mxu0
      %v6559 = vadd.f32 0.0, %v6558
      %v6560 = vpop.f32.mrf.mxu0
      %v6561 = vadd.f32 0.0, %v6560
      %6562 = vmatmul.bf16.gmra.mxu0 %v6286
      %v6563 = vpop.f32.mrf.mxu0
      %v6564 = vadd.f32 0.0, %v6563
      %v6565 = vpop.f32.mrf.mxu0
      %v6566 = vadd.f32 0.0, %v6565
      %6567 = vmatmul.bf16.gmra.mxu0 %v6295
      %v6568 = vpop.f32.mrf.mxu0
      %v6569 = vadd.f32 0.0, %v6568
      %v6570 = vpop.f32.mrf.mxu0
      %v6571 = vadd.f32 0.0, %v6570
      %6572 = vmatmul.bf16.gmra.mxu0 %v6304
      %v6573 = vpop.f32.mrf.mxu0
      %v6574 = vadd.f32 0.0, %v6573
      %v6575 = vpop.f32.mrf.mxu0
      %v6576 = vadd.f32 0.0, %v6575
      %6577 = vmatmul.bf16.gmra.mxu0 %v6313
      %v6578 = vpop.f32.mrf.mxu0
      %v6579 = vadd.f32 0.0, %v6578
      %v6580 = vpop.f32.mrf.mxu0
      %v6581 = vadd.f32 0.0, %v6580
      %6582 = vmatmul.bf16.gmra.mxu0 %v6322
      %v6583 = vpop.f32.mrf.mxu0
      %v6584 = vadd.f32 0.0, %v6583
      %v6585 = vpop.f32.mrf.mxu0
      %v6586 = vadd.f32 0.0, %v6585
      %6587 = vmatmul.bf16.gmra.mxu0 %v6331
      %v6588 = vpop.f32.mrf.mxu0
      %v6589 = vadd.f32 0.0, %v6588
      %v6590 = vpop.f32.mrf.mxu0
      %v6591 = vadd.f32 0.0, %v6590
      %6592 = vmatmul.bf16.gmra.mxu0 %v6340
      %v6593 = vpop.f32.mrf.mxu0
      %v6594 = vadd.f32 0.0, %v6593
      %v6595 = vpop.f32.mrf.mxu0
      %v6596 = vadd.f32 0.0, %v6595
      %6597 = vmatmul.bf16.gmra.mxu0 %v6349
      %v6598 = vpop.f32.mrf.mxu0
      %v6599 = vadd.f32 0.0, %v6598
      %v6600 = vpop.f32.mrf.mxu0
      %v6601 = vadd.f32 0.0, %v6600
      %6602 = vmatmul.bf16.gmra.mxu0 %v6358
      %v6603 = vpop.f32.mrf.mxu0
      %v6604 = vadd.f32 0.0, %v6603
      %v6605 = vpop.f32.mrf.mxu0
      %v6606 = vadd.f32 0.0, %v6605
      %6607 = vmatmul.bf16.gmra.mxu0 %v6367
      %v6608 = vpop.f32.mrf.mxu0
      %v6609 = vadd.f32 0.0, %v6608
      %v6610 = vpop.f32.mrf.mxu0
      %v6611 = vadd.f32 0.0, %v6610
      %6612 = vmatmul.bf16.gmra.mxu0 %v6376
      %v6613 = vpop.f32.mrf.mxu0
      %v6614 = vadd.f32 0.0, %v6613
      %v6615 = vpop.f32.mrf.mxu0
      %v6616 = vadd.f32 0.0, %v6615
      %6617 = vmatmul.bf16.gmra.mxu0 %v6385
      %v6618 = vpop.f32.mrf.mxu0
      %v6619 = vadd.f32 0.0, %v6618
      %v6620 = vpop.f32.mrf.mxu0
      %v6621 = vadd.f32 0.0, %v6620
      %6622 = vmatmul.bf16.gmra.mxu0 %v6394
      %v6623 = vpop.f32.mrf.mxu0
      %v6624 = vadd.f32 0.0, %v6623
      %v6625 = vpop.f32.mrf.mxu0
      %v6626 = vadd.f32 0.0, %v6625
      %6627 = vmatmul.bf16.gmra.mxu0 %v6403
      %v6628 = vpop.f32.mrf.mxu0
      %v6629 = vadd.f32 0.0, %v6628
      %v6630 = vpop.f32.mrf.mxu0
      %v6631 = vadd.f32 0.0, %v6630
      %6632 = vmatmul.bf16.gmra.mxu0 %v6412
      %v6633 = vpop.f32.mrf.mxu0
      %v6634 = vadd.f32 0.0, %v6633
      %v6635 = vpop.f32.mrf.mxu0
      %v6636 = vadd.f32 0.0, %v6635
      %6637 = vmatmul.bf16.gmra.mxu0 %v6421
      %v6638 = vpop.f32.mrf.mxu0
      %v6639 = vadd.f32 0.0, %v6638
      %v6640 = vpop.f32.mrf.mxu0
      %v6641 = vadd.f32 0.0, %v6640
      %6642 = vmatmul.bf16.gmra.mxu0 %v6430
      %v6643 = vpop.f32.mrf.mxu0
      %v6644 = vadd.f32 0.0, %v6643
      %v6645 = vpop.f32.mrf.mxu0
      %v6646 = vadd.f32 0.0, %v6645
      %6647 = vmatmul.bf16.gmra.mxu0 %v6439
      %v6648 = vpop.f32.mrf.mxu0
      %v6649 = vadd.f32 0.0, %v6648
      %v6650 = vpop.f32.mrf.mxu0
      %v6651 = vadd.f32 0.0, %v6650
      %6652 = vmatmul.bf16.gmra.mxu0 %v6448
      %v6653 = vpop.f32.mrf.mxu0
      %v6654 = vadd.f32 0.0, %v6653
      %v6655 = vpop.f32.mrf.mxu0
      %v6656 = vadd.f32 0.0, %v6655
      %6657 = vmatmul.bf16.gmra.mxu0 %v6457
      %v6658 = vpop.f32.mrf.mxu0
      %v6659 = vadd.f32 0.0, %v6658
      %v6660 = vpop.f32.mrf.mxu0
      %v6661 = vadd.f32 0.0, %v6660
      %6662 = vmatmul.bf16.gmra.mxu0 %v6466
      %v6663 = vpop.f32.mrf.mxu0
      %v6664 = vadd.f32 0.0, %v6663
      %v6665 = vpop.f32.mrf.mxu0
      %v6666 = vadd.f32 0.0, %v6665
      %6667 = vdwg.mxu0
      %v6668 = vadd.f32 %v6006, %v6549
      %v6669 = vadd.f32 %v6007, %v6551
      %v6670 = vadd.f32 %v6008, %v6554
      %v6671 = vadd.f32 %v6009, %v6556
      %v6672 = vadd.f32 %v6010, %v6559
      %v6673 = vadd.f32 %v6011, %v6561
      %v6674 = vadd.f32 %v6012, %v6564
      %v6675 = vadd.f32 %v6013, %v6566
      %v6676 = vadd.f32 %v6014, %v6569
      %v6677 = vadd.f32 %v6015, %v6571
      %v6678 = vadd.f32 %v6016, %v6574
      %v6679 = vadd.f32 %v6017, %v6576
      %v6680 = vadd.f32 %v6018, %v6579
      %v6681 = vadd.f32 %v6019, %v6581
      %v6682 = vadd.f32 %v6020, %v6584
      %v6683 = vadd.f32 %v6021, %v6586
      %v6684 = vadd.f32 %v6022, %v6589
      %v6685 = vadd.f32 %v6023, %v6591
      %v6686 = vadd.f32 %v6024, %v6594
      %v6687 = vadd.f32 %v6025, %v6596
      %v6688 = vadd.f32 %v6026, %v6599
      %v6689 = vadd.f32 %v6027, %v6601
      %v6690 = vadd.f32 %v6028, %v6604
      %v6691 = vadd.f32 %v6029, %v6606
      %v6692 = vadd.f32 %v6030, %v6609
      %v6693 = vadd.f32 %v6031, %v6611
      %v6694 = vadd.f32 %v6032, %v6614
      %v6695 = vadd.f32 %v6033, %v6616
      %v6696 = vadd.f32 %v6034, %v6619
      %v6697 = vadd.f32 %v6035, %v6621
      %v6698 = vadd.f32 %v6036, %v6624
      %v6699 = vadd.f32 %v6037, %v6626
      %v6700 = vadd.f32 %v6038, %v6629
      %v6701 = vadd.f32 %v6039, %v6631
      %v6702 = vadd.f32 %v6040, %v6634
      %v6703 = vadd.f32 %v6041, %v6636
      %v6704 = vadd.f32 %v6042, %v6639
      %v6705 = vadd.f32 %v6043, %v6641
      %v6706 = vadd.f32 %v6044, %v6644
      %v6707 = vadd.f32 %v6045, %v6646
      %v6708 = vadd.f32 %v6046, %v6649
      %v6709 = vadd.f32 %v6047, %v6651
      %v6710 = vadd.f32 %v6048, %v6654
      %v6711 = vadd.f32 %v6049, %v6656
      %v6712 = vadd.f32 %v6050, %v6659
      %v6713 = vadd.f32 %v6051, %v6661
      %v6714 = vadd.f32 %v6052, %v6664
      %v6715 = vadd.f32 %v6053, %v6666
      %s6716 = scalar_lea.vmem %s3, 256
      %v6717 = vld [vmem:[%s6716] sm:$0xf]
      %v6718 = vld [vmem:[%s6716 + $0x4] sm:$0xf]
      %v6719 = vld [vmem:[%s6716 + $0x8] sm:$0xf]
      %v6720 = vld [vmem:[%s6716 + $0xc] sm:$0xf]
      %v6721 = vld [vmem:[%s6716 + $0x10] sm:$0xf]
      %v6722 = vld [vmem:[%s6716 + $0x14] sm:$0xf]
      %v6723 = vld [vmem:[%s6716 + $0x18] sm:$0xf]
      %v6724 = vld [vmem:[%s6716 + $0x1c] sm:$0xf]
      %v6725 = vld [vmem:[%s6716 + $0x20] sm:$0xf]
      %v6726 = vld [vmem:[%s6716 + $0x24] sm:$0xf]
      %v6727 = vld [vmem:[%s6716 + $0x28] sm:$0xf]
      %v6728 = vld [vmem:[%s6716 + $0x2c] sm:$0xf]
      %v6729 = vld [vmem:[%s6716 + $0x30] sm:$0xf]
      %v6730 = vld [vmem:[%s6716 + $0x34] sm:$0xf]
      %v6731 = vld [vmem:[%s6716 + $0x38] sm:$0xf]
      %v6732 = vld [vmem:[%s6716 + $0x3c] sm:$0xf]
      %v6733 = vpack.c.b16 %v6171, %v6170
      %v6734 = vpack.c.b16 %v6173, %v6172
      %v6735 = vpack.c.b16 %v6175, %v6174
      %v6736 = vpack.c.b16 %v6177, %v6176
      %v6737 = vpack.c.b16 %v6179, %v6178
      %v6738 = vpack.c.b16 %v6181, %v6180
      %v6739 = vpack.c.b16 %v6183, %v6182
      %v6740 = vpack.c.b16 %v6185, %v6184
      %v6741 = vpack.c.b16 %v6187, %v6186
      %v6742 = vpack.c.b16 %v6189, %v6188
      %v6743 = vpack.c.b16 %v6191, %v6190
      %v6744 = vpack.c.b16 %v6193, %v6192
      %v6745 = vpack.c.b16 %v6195, %v6194
      %v6746 = vpack.c.b16 %v6197, %v6196
      %v6747 = vpack.c.b16 %v6199, %v6198
      %v6748 = vpack.c.b16 %v6201, %v6200
      %v6749 = vpack.c.b16 %v6203, %v6202
      %v6750 = vpack.c.b16 %v6205, %v6204
      %v6751 = vpack.c.b16 %v6207, %v6206
      %v6752 = vpack.c.b16 %v6209, %v6208
      %v6753 = vpack.c.b16 %v6211, %v6210
      %v6754 = vpack.c.b16 %v6213, %v6212
      %v6755 = vpack.c.b16 %v6215, %v6214
      %v6756 = vpack.c.b16 %v6217, %v6216
      %v6797 = vunpack.c.l.b16 %v6717
      %v6798 = vunpack.c.l.b16 %v6718
      %v6799 = vunpack.c.l.b16 %v6719
      %v6800 = vunpack.c.l.b16 %v6720
      %v6801 = vunpack.c.l.b16 %v6721
      %v6802 = vunpack.c.l.b16 %v6722
      %v6803 = vunpack.c.l.b16 %v6723
      %v6804 = vunpack.c.l.b16 %v6724
      %v6805 = vunpack.c.l.b16 %v6725
      %v6806 = vunpack.c.l.b16 %v6726
      %v6807 = vunpack.c.l.b16 %v6727
      %v6808 = vunpack.c.l.b16 %v6728
      %v6809 = vunpack.c.l.b16 %v6729
      %v6810 = vunpack.c.l.b16 %v6730
      %v6811 = vunpack.c.l.b16 %v6731
      %v6812 = vunpack.c.l.b16 %v6732
      %v6813 = vpack.c.b16 %v6798, %v6797
      %v6814 = vpack.c.b16 %v6800, %v6799
      %v6815 = vpack.c.b16 %v6802, %v6801
      %v6816 = vpack.c.b16 %v6804, %v6803
      %v6817 = vpack.c.b16 %v6806, %v6805
      %v6818 = vpack.c.b16 %v6808, %v6807
      %v6819 = vpack.c.b16 %v6810, %v6809
      %v6820 = vpack.c.b16 %v6812, %v6811
      %6829 = vmatpush.bf16.msra.mxu0 %v6820
      %6830 = vmatpush.bf16.msra.mxu0 %v6819
      %6831 = vmatpush.bf16.msra.mxu0 %v6818
      %6832 = vmatpush.bf16.msra.mxu0 %v6817
      %6833 = vmatpush.bf16.msra.mxu0 %v6816
      %6834 = vmatpush.bf16.msra.mxu0 %v6815
      %6835 = vmatpush.bf16.msra.mxu0 %v6814
      %6836 = vmatpush.bf16.msra.mxu0 %v6813
      %6837 = vmatmul.bf16.gmra.mxu0 %v6733
      %v6838 = vpop.f32.mrf.mxu0
      %v6839 = vadd.f32 0.0, %v6838
      %v6840 = vpop.f32.mrf.mxu0
      %v6841 = vadd.f32 0.0, %v6840
      %6842 = vmatmul.bf16.gmra.mxu0 %v6734
      %v6843 = vpop.f32.mrf.mxu0
      %v6844 = vadd.f32 0.0, %v6843
      %v6845 = vpop.f32.mrf.mxu0
      %v6846 = vadd.f32 0.0, %v6845
      %6847 = vmatmul.bf16.gmra.mxu0 %v6735
      %v6848 = vpop.f32.mrf.mxu0
      %v6849 = vadd.f32 0.0, %v6848
      %v6850 = vpop.f32.mrf.mxu0
      %v6851 = vadd.f32 0.0, %v6850
      %6852 = vmatmul.bf16.gmra.mxu0 %v6736
      %v6853 = vpop.f32.mrf.mxu0
      %v6854 = vadd.f32 0.0, %v6853
      %v6855 = vpop.f32.mrf.mxu0
      %v6856 = vadd.f32 0.0, %v6855
      %6857 = vmatmul.bf16.gmra.mxu0 %v6737
      %v6858 = vpop.f32.mrf.mxu0
      %v6859 = vadd.f32 0.0, %v6858
      %v6860 = vpop.f32.mrf.mxu0
      %v6861 = vadd.f32 0.0, %v6860
      %6862 = vmatmul.bf16.gmra.mxu0 %v6738
      %v6863 = vpop.f32.mrf.mxu0
      %v6864 = vadd.f32 0.0, %v6863
      %v6865 = vpop.f32.mrf.mxu0
      %v6866 = vadd.f32 0.0, %v6865
      %6867 = vmatmul.bf16.gmra.mxu0 %v6739
      %v6868 = vpop.f32.mrf.mxu0
      %v6869 = vadd.f32 0.0, %v6868
      %v6870 = vpop.f32.mrf.mxu0
      %v6871 = vadd.f32 0.0, %v6870
      %6872 = vmatmul.bf16.gmra.mxu0 %v6740
      %v6873 = vpop.f32.mrf.mxu0
      %v6874 = vadd.f32 0.0, %v6873
      %v6875 = vpop.f32.mrf.mxu0
      %v6876 = vadd.f32 0.0, %v6875
      %6877 = vmatmul.bf16.gmra.mxu0 %v6741
      %v6878 = vpop.f32.mrf.mxu0
      %v6879 = vadd.f32 0.0, %v6878
      %v6880 = vpop.f32.mrf.mxu0
      %v6881 = vadd.f32 0.0, %v6880
      %6882 = vmatmul.bf16.gmra.mxu0 %v6742
      %v6883 = vpop.f32.mrf.mxu0
      %v6884 = vadd.f32 0.0, %v6883
      %v6885 = vpop.f32.mrf.mxu0
      %v6886 = vadd.f32 0.0, %v6885
      %6887 = vmatmul.bf16.gmra.mxu0 %v6743
      %v6888 = vpop.f32.mrf.mxu0
      %v6889 = vadd.f32 0.0, %v6888
      %v6890 = vpop.f32.mrf.mxu0
      %v6891 = vadd.f32 0.0, %v6890
      %6892 = vmatmul.bf16.gmra.mxu0 %v6744
      %v6893 = vpop.f32.mrf.mxu0
      %v6894 = vadd.f32 0.0, %v6893
      %v6895 = vpop.f32.mrf.mxu0
      %v6896 = vadd.f32 0.0, %v6895
      %6897 = vmatmul.bf16.gmra.mxu0 %v6745
      %v6898 = vpop.f32.mrf.mxu0
      %v6899 = vadd.f32 0.0, %v6898
      %v6900 = vpop.f32.mrf.mxu0
      %v6901 = vadd.f32 0.0, %v6900
      %6902 = vmatmul.bf16.gmra.mxu0 %v6746
      %v6903 = vpop.f32.mrf.mxu0
      %v6904 = vadd.f32 0.0, %v6903
      %v6905 = vpop.f32.mrf.mxu0
      %v6906 = vadd.f32 0.0, %v6905
      %6907 = vmatmul.bf16.gmra.mxu0 %v6747
      %v6908 = vpop.f32.mrf.mxu0
      %v6909 = vadd.f32 0.0, %v6908
      %v6910 = vpop.f32.mrf.mxu0
      %v6911 = vadd.f32 0.0, %v6910
      %6912 = vmatmul.bf16.gmra.mxu0 %v6748
      %v6913 = vpop.f32.mrf.mxu0
      %v6914 = vadd.f32 0.0, %v6913
      %v6915 = vpop.f32.mrf.mxu0
      %v6916 = vadd.f32 0.0, %v6915
      %6917 = vmatmul.bf16.gmra.mxu0 %v6749
      %v6918 = vpop.f32.mrf.mxu0
      %v6919 = vadd.f32 0.0, %v6918
      %v6920 = vpop.f32.mrf.mxu0
      %v6921 = vadd.f32 0.0, %v6920
      %6922 = vmatmul.bf16.gmra.mxu0 %v6750
      %v6923 = vpop.f32.mrf.mxu0
      %v6924 = vadd.f32 0.0, %v6923
      %v6925 = vpop.f32.mrf.mxu0
      %v6926 = vadd.f32 0.0, %v6925
      %6927 = vmatmul.bf16.gmra.mxu0 %v6751
      %v6928 = vpop.f32.mrf.mxu0
      %v6929 = vadd.f32 0.0, %v6928
      %v6930 = vpop.f32.mrf.mxu0
      %v6931 = vadd.f32 0.0, %v6930
      %6932 = vmatmul.bf16.gmra.mxu0 %v6752
      %v6933 = vpop.f32.mrf.mxu0
      %v6934 = vadd.f32 0.0, %v6933
      %v6935 = vpop.f32.mrf.mxu0
      %v6936 = vadd.f32 0.0, %v6935
      %6937 = vmatmul.bf16.gmra.mxu0 %v6753
      %v6938 = vpop.f32.mrf.mxu0
      %v6939 = vadd.f32 0.0, %v6938
      %v6940 = vpop.f32.mrf.mxu0
      %v6941 = vadd.f32 0.0, %v6940
      %6942 = vmatmul.bf16.gmra.mxu0 %v6754
      %v6943 = vpop.f32.mrf.mxu0
      %v6944 = vadd.f32 0.0, %v6943
      %v6945 = vpop.f32.mrf.mxu0
      %v6946 = vadd.f32 0.0, %v6945
      %6947 = vmatmul.bf16.gmra.mxu0 %v6755
      %v6948 = vpop.f32.mrf.mxu0
      %v6949 = vadd.f32 0.0, %v6948
      %v6950 = vpop.f32.mrf.mxu0
      %v6951 = vadd.f32 0.0, %v6950
      %6952 = vmatmul.bf16.gmra.mxu0 %v6756
      %v6953 = vpop.f32.mrf.mxu0
      %v6954 = vadd.f32 0.0, %v6953
      %v6955 = vpop.f32.mrf.mxu0
      %v6956 = vadd.f32 0.0, %v6955
      %6957 = vdwg.mxu0
      %v6958 = vadd.f32 %v6668, %v6839
      %v6959 = vadd.f32 %v6669, %v6841
      %v6960 = vadd.f32 %v6670, %v6844
      %v6961 = vadd.f32 %v6671, %v6846
      %v6962 = vadd.f32 %v6672, %v6849
      %v6963 = vadd.f32 %v6673, %v6851
      %v6964 = vadd.f32 %v6674, %v6854
      %v6965 = vadd.f32 %v6675, %v6856
      %v6966 = vadd.f32 %v6676, %v6859
      %v6967 = vadd.f32 %v6677, %v6861
      %v6968 = vadd.f32 %v6678, %v6864
      %v6969 = vadd.f32 %v6679, %v6866
      %v6970 = vadd.f32 %v6680, %v6869
      %v6971 = vadd.f32 %v6681, %v6871
      %v6972 = vadd.f32 %v6682, %v6874
      %v6973 = vadd.f32 %v6683, %v6876
      %v6974 = vadd.f32 %v6684, %v6879
      %v6975 = vadd.f32 %v6685, %v6881
      %v6976 = vadd.f32 %v6686, %v6884
      %v6977 = vadd.f32 %v6687, %v6886
      %v6978 = vadd.f32 %v6688, %v6889
      %v6979 = vadd.f32 %v6689, %v6891
      %v6980 = vadd.f32 %v6690, %v6894
      %v6981 = vadd.f32 %v6691, %v6896
      %v6982 = vadd.f32 %v6692, %v6899
      %v6983 = vadd.f32 %v6693, %v6901
      %v6984 = vadd.f32 %v6694, %v6904
      %v6985 = vadd.f32 %v6695, %v6906
      %v6986 = vadd.f32 %v6696, %v6909
      %v6987 = vadd.f32 %v6697, %v6911
      %v6988 = vadd.f32 %v6698, %v6914
      %v6989 = vadd.f32 %v6699, %v6916
      %v6990 = vadd.f32 %v6700, %v6919
      %v6991 = vadd.f32 %v6701, %v6921
      %v6992 = vadd.f32 %v6702, %v6924
      %v6993 = vadd.f32 %v6703, %v6926
      %v6994 = vadd.f32 %v6704, %v6929
      %v6995 = vadd.f32 %v6705, %v6931
      %v6996 = vadd.f32 %v6706, %v6934
      %v6997 = vadd.f32 %v6707, %v6936
      %v6998 = vadd.f32 %v6708, %v6939
      %v6999 = vadd.f32 %v6709, %v6941
      %v7000 = vadd.f32 %v6710, %v6944
      %v7001 = vadd.f32 %v6711, %v6946
      %v7002 = vadd.f32 %v6712, %v6949
      %v7003 = vadd.f32 %v6713, %v6951
      %v7004 = vadd.f32 %v6714, %v6954
      %v7005 = vadd.f32 %v6715, %v6956
      %v7006 = vld [vmem:[#allocation4 + $0x14] sm:$0xf]
      %v7007 = vld [vmem:[#allocation4 + $0x18] sm:$0xf]
      %v7008 = vld [vmem:[#allocation4 + $0x1c] sm:$0xf]
      %v7009 = vld [vmem:[#allocation4 + $0x20] sm:$0xf]
      %v7010 = vld [vmem:[#allocation4 + $0x24] sm:$0xf]
      %v7011 = vld [vmem:[#allocation4 + $0x28] sm:$0xf]
      %v7012 = vld [vmem:[#allocation4 + $0x2c] sm:$0xf]
      %v7013 = vld [vmem:[#allocation4 + $0x30] sm:$0xf]
      %v7014 = vld [vmem:[#allocation4 + $0x34] sm:$0xf]
      %v7015 = vld [vmem:[#allocation4 + $0x38] sm:$0xf]
      %v7016 = vld [vmem:[#allocation4 + $0x3c] sm:$0xf]
      %v7017 = vld [vmem:[#allocation4 + $0x40] sm:$0xf]
      %v7018 = vld [vmem:[#allocation4 + $0x44] sm:$0xf]
      %v7019 = vld [vmem:[#allocation4 + $0x48] sm:$0xf]
      %v7020 = vld [vmem:[#allocation4 + $0x4c] sm:$0xf]
      %v7021 = vld [vmem:[#allocation4 + $0x50] sm:$0xf]
      %v7022 = vld [vmem:[#allocation4 + $0x54] sm:$0xf]
      %v7023 = vld [vmem:[#allocation4 + $0x58] sm:$0xf]
      %v7024 = vld [vmem:[#allocation4 + $0x5c] sm:$0xf]
      %v7025 = vld [vmem:[#allocation4 + $0x60] sm:$0xf]
      %v7026 = vld [vmem:[#allocation4 + $0x64] sm:$0xf]
      %v7027 = vld [vmem:[#allocation4 + $0x68] sm:$0xf]
      %v7028 = vld [vmem:[#allocation4 + $0x6c] sm:$0xf]
      %v7029 = vld [vmem:[#allocation4 + $0x70] sm:$0xf]
      %v7030 = vld [vmem:[#allocation4 + $0x74] sm:$0xf]
      %v7031 = vld [vmem:[#allocation4 + $0x78] sm:$0xf]
      %v7032 = vld [vmem:[#allocation4 + $0x7c] sm:$0xf]
      %v7033 = vld [vmem:[#allocation4 + $0x80] sm:$0xf]
      %v7034 = vld [vmem:[#allocation4 + $0x84] sm:$0xf]
      %v7035 = vld [vmem:[#allocation4 + $0x88] sm:$0xf]
      %v7036 = vld [vmem:[#allocation4 + $0x8c] sm:$0xf]
      %v7037 = vld [vmem:[#allocation4 + $0x90] sm:$0xf]
      %v7038 = vld [vmem:[#allocation4 + $0x94] sm:$0xf]
      %v7039 = vld [vmem:[#allocation4 + $0x98] sm:$0xf]
      %v7040 = vld [vmem:[#allocation4 + $0x9c] sm:$0xf]
      %v7041 = vld [vmem:[#allocation4 + $0xa0] sm:$0xf]
      %v7042 = vld [vmem:[#allocation4 + $0xa4] sm:$0xf]
      %v7043 = vld [vmem:[#allocation4 + $0xa8] sm:$0xf]
      %v7044 = vld [vmem:[#allocation4 + $0xac] sm:$0xf]
      %v7045 = vld [vmem:[#allocation4 + $0xb0] sm:$0xf]
      %v7046 = vld [vmem:[#allocation4 + $0xb4] sm:$0xf]
      %v7047 = vld [vmem:[#allocation4 + $0xb8] sm:$0xf]
      %v7048 = vld [vmem:[#allocation4 + $0xbc] sm:$0xf]
      %v7049 = vld [vmem:[#allocation4 + $0xc0] sm:$0xf]
      %v7050 = vld [vmem:[#allocation4 + $0xc4] sm:$0xf]
      %v7051 = vld [vmem:[#allocation4 + $0xc8] sm:$0xf]
      %v7052 = vld [vmem:[#allocation4 + $0xcc] sm:$0xf]
      %v7053 = vld [vmem:[#allocation4 + $0xd0] sm:$0xf]
      %v7054 = vld [vmem:[#allocation4 + $0xd4] sm:$0x1]
      %s7055 = scalar_lea.vmem %s3, 320
      %v7056 = vld [vmem:[%s7055] sm:$0xf]
      %v7057 = vld [vmem:[%s7055 + $0x4] sm:$0xf]
      %v7058 = vld [vmem:[%s7055 + $0x8] sm:$0xf]
      %v7059 = vld [vmem:[%s7055 + $0xc] sm:$0xf]
      %v7060 = vld [vmem:[%s7055 + $0x10] sm:$0xf]
      %v7061 = vld [vmem:[%s7055 + $0x14] sm:$0xf]
      %v7062 = vld [vmem:[%s7055 + $0x18] sm:$0xf]
      %v7063 = vld [vmem:[%s7055 + $0x1c] sm:$0xf]
      %v7064 = vld [vmem:[%s7055 + $0x20] sm:$0xf]
      %v7065 = vld [vmem:[%s7055 + $0x24] sm:$0xf]
      %v7066 = vld [vmem:[%s7055 + $0x28] sm:$0xf]
      %v7067 = vld [vmem:[%s7055 + $0x2c] sm:$0xf]
      %v7068 = vld [vmem:[%s7055 + $0x30] sm:$0xf]
      %v7069 = vld [vmem:[%s7055 + $0x34] sm:$0xf]
      %v7070 = vld [vmem:[%s7055 + $0x38] sm:$0xf]
      %v7071 = vld [vmem:[%s7055 + $0x3c] sm:$0xf]
      %v7121 = vunpack.c.l.b16 %v7006
      %v7122 = vunpack.c.l.b16 %v7007
      %v7123 = vunpack.c.l.b16 %v7008
      %v7124 = vunpack.c.l.b16 %v7009
      %v7125 = vunpack.c.l.b16 %v7010
      %v7126 = vunpack.c.l.b16 %v7011
      %v7127 = vunpack.c.l.b16 %v7012
      %v7128 = vunpack.c.l.b16 %v7013
      %v7129 = vunpack.c.l.b16 %v7014
      %v7130 = vunpack.c.l.b16 %v7015
      %v7131 = vunpack.c.l.b16 %v7016
      %v7132 = vunpack.c.l.b16 %v7017
      %v7133 = vunpack.c.l.b16 %v7018
      %v7134 = vunpack.c.l.b16 %v7019
      %v7135 = vunpack.c.l.b16 %v7020
      %v7136 = vunpack.c.l.b16 %v7021
      %v7137 = vunpack.c.l.b16 %v7022
      %v7138 = vunpack.c.l.b16 %v7023
      %v7139 = vunpack.c.l.b16 %v7024
      %v7140 = vunpack.c.l.b16 %v7025
      %v7141 = vunpack.c.l.b16 %v7026
      %v7142 = vunpack.c.l.b16 %v7027
      %v7143 = vunpack.c.l.b16 %v7028
      %v7144 = vunpack.c.l.b16 %v7029
      %v7145 = vunpack.c.l.b16 %v7030
      %v7146 = vunpack.c.l.b16 %v7031
      %v7147 = vunpack.c.l.b16 %v7032
      %v7148 = vunpack.c.l.b16 %v7033
      %v7149 = vunpack.c.l.b16 %v7034
      %v7150 = vunpack.c.l.b16 %v7035
      %v7151 = vunpack.c.l.b16 %v7036
      %v7152 = vunpack.c.l.b16 %v7037
      %v7153 = vunpack.c.l.b16 %v7038
      %v7154 = vunpack.c.l.b16 %v7039
      %v7155 = vunpack.c.l.b16 %v7040
      %v7156 = vunpack.c.l.b16 %v7041
      %v7157 = vunpack.c.l.b16 %v7042
      %v7158 = vunpack.c.l.b16 %v7043
      %v7159 = vunpack.c.l.b16 %v7044
      %v7160 = vunpack.c.l.b16 %v7045
      %v7161 = vunpack.c.l.b16 %v7046
      %v7162 = vunpack.c.l.b16 %v7047
      %v7163 = vunpack.c.l.b16 %v7048
      %v7164 = vunpack.c.l.b16 %v7049
      %v7165 = vunpack.c.l.b16 %v7050
      %v7166 = vunpack.c.l.b16 %v7051
      %v7167 = vunpack.c.l.b16 %v7052
      %v7168 = vunpack.c.l.b16 %v7053
      %v7169 = vunpack.c.l.b16 %v7054
      %v7170 = vpack.c.b16 %v7122, %v7121
      %v7171 = vpack.c.b16 %v7124, %v7123
      %v7172 = vpack.c.b16 %v7126, %v7125
      %v7173 = vpack.c.b16 %v7128, %v7127
      %v7174 = vpack.c.b16 %v7130, %v7129
      %v7175 = vpack.c.b16 %v7132, %v7131
      %v7176 = vpack.c.b16 %v7134, %v7133
      %v7177 = vpack.c.b16 %v7136, %v7135
      %v7178 = vpack.c.b16 %v7138, %v7137
      %v7179 = vpack.c.b16 %v7140, %v7139
      %v7180 = vpack.c.b16 %v7142, %v7141
      %v7181 = vpack.c.b16 %v7144, %v7143
      %v7182 = vpack.c.b16 %v7146, %v7145
      %v7183 = vpack.c.b16 %v7148, %v7147
      %v7184 = vpack.c.b16 %v7150, %v7149
      %v7185 = vpack.c.b16 %v7152, %v7151
      %v7186 = vpack.c.b16 %v7154, %v7153
      %v7187 = vpack.c.b16 %v7156, %v7155
      %v7188 = vpack.c.b16 %v7158, %v7157
      %v7189 = vpack.c.b16 %v7160, %v7159
      %v7190 = vpack.c.b16 %v7162, %v7161
      %v7191 = vpack.c.b16 %v7164, %v7163
      %v7192 = vpack.c.b16 %v7166, %v7165
      %v7193 = vpack.c.b16 %v7168, %v7167
      %v7194 = vpack.c.b16 %v7169, %v7169
      %v7196 = vshrl.u32 %v7170, 16
      %v7198 = vshll.u32 %v7170, 16
      %v7200 = vrot.slane %v7198, 1
      %v7201 = vor.u32 %v7196, %v7200
      %v7203 = vshll.u32 %v7171, 16
      %v7205 = vrot.slane %v7203, 1
      %v7206 = vsel %vm1511, %v7201, %v7205
      %v7207 = vshrl.u32 %v7171, 16
      %v7209 = vor.u32 %v7207, %v7205
      %v7211 = vshll.u32 %v7172, 16
      %v7213 = vrot.slane %v7211, 1
      %v7214 = vsel %vm1511, %v7209, %v7213
      %v7215 = vshrl.u32 %v7172, 16
      %v7217 = vor.u32 %v7215, %v7213
      %v7219 = vshll.u32 %v7173, 16
      %v7221 = vrot.slane %v7219, 1
      %v7222 = vsel %vm1511, %v7217, %v7221
      %v7223 = vshrl.u32 %v7173, 16
      %v7225 = vor.u32 %v7223, %v7221
      %v7227 = vshll.u32 %v7174, 16
      %v7229 = vrot.slane %v7227, 1
      %v7230 = vsel %vm1511, %v7225, %v7229
      %v7231 = vshrl.u32 %v7174, 16
      %v7233 = vor.u32 %v7231, %v7229
      %v7235 = vshll.u32 %v7175, 16
      %v7237 = vrot.slane %v7235, 1
      %v7238 = vsel %vm1511, %v7233, %v7237
      %v7239 = vshrl.u32 %v7175, 16
      %v7241 = vor.u32 %v7239, %v7237
      %v7243 = vshll.u32 %v7176, 16
      %v7245 = vrot.slane %v7243, 1
      %v7246 = vsel %vm1511, %v7241, %v7245
      %v7247 = vshrl.u32 %v7176, 16
      %v7249 = vor.u32 %v7247, %v7245
      %v7251 = vshll.u32 %v7177, 16
      %v7253 = vrot.slane %v7251, 1
      %v7254 = vsel %vm1511, %v7249, %v7253
      %v7255 = vshrl.u32 %v7177, 16
      %v7257 = vor.u32 %v7255, %v7253
      %v7259 = vshll.u32 %v7178, 16
      %v7261 = vrot.slane %v7259, 1
      %v7262 = vsel %vm1511, %v7257, %v7261
      %v7263 = vshrl.u32 %v7178, 16
      %v7265 = vor.u32 %v7263, %v7261
      %v7267 = vshll.u32 %v7179, 16
      %v7269 = vrot.slane %v7267, 1
      %v7270 = vsel %vm1511, %v7265, %v7269
      %v7271 = vshrl.u32 %v7179, 16
      %v7273 = vor.u32 %v7271, %v7269
      %v7275 = vshll.u32 %v7180, 16
      %v7277 = vrot.slane %v7275, 1
      %v7278 = vsel %vm1511, %v7273, %v7277
      %v7279 = vshrl.u32 %v7180, 16
      %v7281 = vor.u32 %v7279, %v7277
      %v7283 = vshll.u32 %v7181, 16
      %v7285 = vrot.slane %v7283, 1
      %v7286 = vsel %vm1511, %v7281, %v7285
      %v7287 = vshrl.u32 %v7181, 16
      %v7289 = vor.u32 %v7287, %v7285
      %v7291 = vshll.u32 %v7182, 16
      %v7293 = vrot.slane %v7291, 1
      %v7294 = vsel %vm1511, %v7289, %v7293
      %v7295 = vshrl.u32 %v7182, 16
      %v7297 = vor.u32 %v7295, %v7293
      %v7299 = vshll.u32 %v7183, 16
      %v7301 = vrot.slane %v7299, 1
      %v7302 = vsel %vm1511, %v7297, %v7301
      %v7303 = vshrl.u32 %v7183, 16
      %v7305 = vor.u32 %v7303, %v7301
      %v7307 = vshll.u32 %v7184, 16
      %v7309 = vrot.slane %v7307, 1
      %v7310 = vsel %vm1511, %v7305, %v7309
      %v7311 = vshrl.u32 %v7184, 16
      %v7313 = vor.u32 %v7311, %v7309
      %v7315 = vshll.u32 %v7185, 16
      %v7317 = vrot.slane %v7315, 1
      %v7318 = vsel %vm1511, %v7313, %v7317
      %v7319 = vshrl.u32 %v7185, 16
      %v7321 = vor.u32 %v7319, %v7317
      %v7323 = vshll.u32 %v7186, 16
      %v7325 = vrot.slane %v7323, 1
      %v7326 = vsel %vm1511, %v7321, %v7325
      %v7327 = vshrl.u32 %v7186, 16
      %v7329 = vor.u32 %v7327, %v7325
      %v7331 = vshll.u32 %v7187, 16
      %v7333 = vrot.slane %v7331, 1
      %v7334 = vsel %vm1511, %v7329, %v7333
      %v7335 = vshrl.u32 %v7187, 16
      %v7337 = vor.u32 %v7335, %v7333
      %v7339 = vshll.u32 %v7188, 16
      %v7341 = vrot.slane %v7339, 1
      %v7342 = vsel %vm1511, %v7337, %v7341
      %v7343 = vshrl.u32 %v7188, 16
      %v7345 = vor.u32 %v7343, %v7341
      %v7347 = vshll.u32 %v7189, 16
      %v7349 = vrot.slane %v7347, 1
      %v7350 = vsel %vm1511, %v7345, %v7349
      %v7351 = vshrl.u32 %v7189, 16
      %v7353 = vor.u32 %v7351, %v7349
      %v7355 = vshll.u32 %v7190, 16
      %v7357 = vrot.slane %v7355, 1
      %v7358 = vsel %vm1511, %v7353, %v7357
      %v7359 = vshrl.u32 %v7190, 16
      %v7361 = vor.u32 %v7359, %v7357
      %v7363 = vshll.u32 %v7191, 16
      %v7365 = vrot.slane %v7363, 1
      %v7366 = vsel %vm1511, %v7361, %v7365
      %v7367 = vshrl.u32 %v7191, 16
      %v7369 = vor.u32 %v7367, %v7365
      %v7371 = vshll.u32 %v7192, 16
      %v7373 = vrot.slane %v7371, 1
      %v7374 = vsel %vm1511, %v7369, %v7373
      %v7375 = vshrl.u32 %v7192, 16
      %v7377 = vor.u32 %v7375, %v7373
      %v7379 = vshll.u32 %v7193, 16
      %v7381 = vrot.slane %v7379, 1
      %v7382 = vsel %vm1511, %v7377, %v7381
      %v7383 = vshrl.u32 %v7193, 16
      %v7385 = vor.u32 %v7383, %v7381
      %v7387 = vshll.u32 %v7194, 16
      %v7389 = vrot.slane %v7387, 1
      %v7390 = vsel %vm1511, %v7385, %v7389
      %v7431 = vunpack.c.l.b16 %v7056
      %v7432 = vunpack.c.l.b16 %v7057
      %v7433 = vunpack.c.l.b16 %v7058
      %v7434 = vunpack.c.l.b16 %v7059
      %v7435 = vunpack.c.l.b16 %v7060
      %v7436 = vunpack.c.l.b16 %v7061
      %v7437 = vunpack.c.l.b16 %v7062
      %v7438 = vunpack.c.l.b16 %v7063
      %v7439 = vunpack.c.l.b16 %v7064
      %v7440 = vunpack.c.l.b16 %v7065
      %v7441 = vunpack.c.l.b16 %v7066
      %v7442 = vunpack.c.l.b16 %v7067
      %v7443 = vunpack.c.l.b16 %v7068
      %v7444 = vunpack.c.l.b16 %v7069
      %v7445 = vunpack.c.l.b16 %v7070
      %v7446 = vunpack.c.l.b16 %v7071
      %v7447 = vpack.c.b16 %v7432, %v7431
      %v7448 = vpack.c.b16 %v7434, %v7433
      %v7449 = vpack.c.b16 %v7436, %v7435
      %v7450 = vpack.c.b16 %v7438, %v7437
      %v7451 = vpack.c.b16 %v7440, %v7439
      %v7452 = vpack.c.b16 %v7442, %v7441
      %v7453 = vpack.c.b16 %v7444, %v7443
      %v7454 = vpack.c.b16 %v7446, %v7445
      %7463 = vmatpush.bf16.msra.mxu0 %v7454
      %7464 = vmatpush.bf16.msra.mxu0 %v7453
      %7465 = vmatpush.bf16.msra.mxu0 %v7452
      %7466 = vmatpush.bf16.msra.mxu0 %v7451
      %7467 = vmatpush.bf16.msra.mxu0 %v7450
      %7468 = vmatpush.bf16.msra.mxu0 %v7449
      %7469 = vmatpush.bf16.msra.mxu0 %v7448
      %7470 = vmatpush.bf16.msra.mxu0 %v7447
      %7471 = vmatmul.bf16.gmra.mxu0 %v7206
      %v7472 = vpop.f32.mrf.mxu0
      %v7473 = vadd.f32 0.0, %v7472
      %v7474 = vpop.f32.mrf.mxu0
      %v7475 = vadd.f32 0.0, %v7474
      %7476 = vmatmul.bf16.gmra.mxu0 %v7214
      %v7477 = vpop.f32.mrf.mxu0
      %v7478 = vadd.f32 0.0, %v7477
      %v7479 = vpop.f32.mrf.mxu0
      %v7480 = vadd.f32 0.0, %v7479
      %7481 = vmatmul.bf16.gmra.mxu0 %v7222
      %v7482 = vpop.f32.mrf.mxu0
      %v7483 = vadd.f32 0.0, %v7482
      %v7484 = vpop.f32.mrf.mxu0
      %v7485 = vadd.f32 0.0, %v7484
      %7486 = vmatmul.bf16.gmra.mxu0 %v7230
      %v7487 = vpop.f32.mrf.mxu0
      %v7488 = vadd.f32 0.0, %v7487
      %v7489 = vpop.f32.mrf.mxu0
      %v7490 = vadd.f32 0.0, %v7489
      %7491 = vmatmul.bf16.gmra.mxu0 %v7238
      %v7492 = vpop.f32.mrf.mxu0
      %v7493 = vadd.f32 0.0, %v7492
      %v7494 = vpop.f32.mrf.mxu0
      %v7495 = vadd.f32 0.0, %v7494
      %7496 = vmatmul.bf16.gmra.mxu0 %v7246
      %v7497 = vpop.f32.mrf.mxu0
      %v7498 = vadd.f32 0.0, %v7497
      %v7499 = vpop.f32.mrf.mxu0
      %v7500 = vadd.f32 0.0, %v7499
      %7501 = vmatmul.bf16.gmra.mxu0 %v7254
      %v7502 = vpop.f32.mrf.mxu0
      %v7503 = vadd.f32 0.0, %v7502
      %v7504 = vpop.f32.mrf.mxu0
      %v7505 = vadd.f32 0.0, %v7504
      %7506 = vmatmul.bf16.gmra.mxu0 %v7262
      %v7507 = vpop.f32.mrf.mxu0
      %v7508 = vadd.f32 0.0, %v7507
      %v7509 = vpop.f32.mrf.mxu0
      %v7510 = vadd.f32 0.0, %v7509
      %7511 = vmatmul.bf16.gmra.mxu0 %v7270
      %v7512 = vpop.f32.mrf.mxu0
      %v7513 = vadd.f32 0.0, %v7512
      %v7514 = vpop.f32.mrf.mxu0
      %v7515 = vadd.f32 0.0, %v7514
      %7516 = vmatmul.bf16.gmra.mxu0 %v7278
      %v7517 = vpop.f32.mrf.mxu0
      %v7518 = vadd.f32 0.0, %v7517
      %v7519 = vpop.f32.mrf.mxu0
      %v7520 = vadd.f32 0.0, %v7519
      %7521 = vmatmul.bf16.gmra.mxu0 %v7286
      %v7522 = vpop.f32.mrf.mxu0
      %v7523 = vadd.f32 0.0, %v7522
      %v7524 = vpop.f32.mrf.mxu0
      %v7525 = vadd.f32 0.0, %v7524
      %7526 = vmatmul.bf16.gmra.mxu0 %v7294
      %v7527 = vpop.f32.mrf.mxu0
      %v7528 = vadd.f32 0.0, %v7527
      %v7529 = vpop.f32.mrf.mxu0
      %v7530 = vadd.f32 0.0, %v7529
      %7531 = vmatmul.bf16.gmra.mxu0 %v7302
      %v7532 = vpop.f32.mrf.mxu0
      %v7533 = vadd.f32 0.0, %v7532
      %v7534 = vpop.f32.mrf.mxu0
      %v7535 = vadd.f32 0.0, %v7534
      %7536 = vmatmul.bf16.gmra.mxu0 %v7310
      %v7537 = vpop.f32.mrf.mxu0
      %v7538 = vadd.f32 0.0, %v7537
      %v7539 = vpop.f32.mrf.mxu0
      %v7540 = vadd.f32 0.0, %v7539
      %7541 = vmatmul.bf16.gmra.mxu0 %v7318
      %v7542 = vpop.f32.mrf.mxu0
      %v7543 = vadd.f32 0.0, %v7542
      %v7544 = vpop.f32.mrf.mxu0
      %v7545 = vadd.f32 0.0, %v7544
      %7546 = vmatmul.bf16.gmra.mxu0 %v7326
      %v7547 = vpop.f32.mrf.mxu0
      %v7548 = vadd.f32 0.0, %v7547
      %v7549 = vpop.f32.mrf.mxu0
      %v7550 = vadd.f32 0.0, %v7549
      %7551 = vmatmul.bf16.gmra.mxu0 %v7334
      %v7552 = vpop.f32.mrf.mxu0
      %v7553 = vadd.f32 0.0, %v7552
      %v7554 = vpop.f32.mrf.mxu0
      %v7555 = vadd.f32 0.0, %v7554
      %7556 = vmatmul.bf16.gmra.mxu0 %v7342
      %v7557 = vpop.f32.mrf.mxu0
      %v7558 = vadd.f32 0.0, %v7557
      %v7559 = vpop.f32.mrf.mxu0
      %v7560 = vadd.f32 0.0, %v7559
      %7561 = vmatmul.bf16.gmra.mxu0 %v7350
      %v7562 = vpop.f32.mrf.mxu0
      %v7563 = vadd.f32 0.0, %v7562
      %v7564 = vpop.f32.mrf.mxu0
      %v7565 = vadd.f32 0.0, %v7564
      %7566 = vmatmul.bf16.gmra.mxu0 %v7358
      %v7567 = vpop.f32.mrf.mxu0
      %v7568 = vadd.f32 0.0, %v7567
      %v7569 = vpop.f32.mrf.mxu0
      %v7570 = vadd.f32 0.0, %v7569
      %7571 = vmatmul.bf16.gmra.mxu0 %v7366
      %v7572 = vpop.f32.mrf.mxu0
      %v7573 = vadd.f32 0.0, %v7572
      %v7574 = vpop.f32.mrf.mxu0
      %v7575 = vadd.f32 0.0, %v7574
      %7576 = vmatmul.bf16.gmra.mxu0 %v7374
      %v7577 = vpop.f32.mrf.mxu0
      %v7578 = vadd.f32 0.0, %v7577
      %v7579 = vpop.f32.mrf.mxu0
      %v7580 = vadd.f32 0.0, %v7579
      %7581 = vmatmul.bf16.gmra.mxu0 %v7382
      %v7582 = vpop.f32.mrf.mxu0
      %v7583 = vadd.f32 0.0, %v7582
      %v7584 = vpop.f32.mrf.mxu0
      %v7585 = vadd.f32 0.0, %v7584
      %7586 = vmatmul.bf16.gmra.mxu0 %v7390
      %v7587 = vpop.f32.mrf.mxu0
      %v7588 = vadd.f32 0.0, %v7587
      %v7589 = vpop.f32.mrf.mxu0
      %v7590 = vadd.f32 0.0, %v7589
      %7591 = vdwg.mxu0
      %v7592 = vadd.f32 %v6958, %v7473
      %v7593 = vadd.f32 %v6959, %v7475
      %v7594 = vadd.f32 %v6960, %v7478
      %v7595 = vadd.f32 %v6961, %v7480
      %v7596 = vadd.f32 %v6962, %v7483
      %v7597 = vadd.f32 %v6963, %v7485
      %v7598 = vadd.f32 %v6964, %v7488
      %v7599 = vadd.f32 %v6965, %v7490
      %v7600 = vadd.f32 %v6966, %v7493
      %v7601 = vadd.f32 %v6967, %v7495
      %v7602 = vadd.f32 %v6968, %v7498
      %v7603 = vadd.f32 %v6969, %v7500
      %v7604 = vadd.f32 %v6970, %v7503
      %v7605 = vadd.f32 %v6971, %v7505
      %v7606 = vadd.f32 %v6972, %v7508
      %v7607 = vadd.f32 %v6973, %v7510
      %v7608 = vadd.f32 %v6974, %v7513
      %v7609 = vadd.f32 %v6975, %v7515
      %v7610 = vadd.f32 %v6976, %v7518
      %v7611 = vadd.f32 %v6977, %v7520
      %v7612 = vadd.f32 %v6978, %v7523
      %v7613 = vadd.f32 %v6979, %v7525
      %v7614 = vadd.f32 %v6980, %v7528
      %v7615 = vadd.f32 %v6981, %v7530
      %v7616 = vadd.f32 %v6982, %v7533
      %v7617 = vadd.f32 %v6983, %v7535
      %v7618 = vadd.f32 %v6984, %v7538
      %v7619 = vadd.f32 %v6985, %v7540
      %v7620 = vadd.f32 %v6986, %v7543
      %v7621 = vadd.f32 %v6987, %v7545
      %v7622 = vadd.f32 %v6988, %v7548
      %v7623 = vadd.f32 %v6989, %v7550
      %v7624 = vadd.f32 %v6990, %v7553
      %v7625 = vadd.f32 %v6991, %v7555
      %v7626 = vadd.f32 %v6992, %v7558
      %v7627 = vadd.f32 %v6993, %v7560
      %v7628 = vadd.f32 %v6994, %v7563
      %v7629 = vadd.f32 %v6995, %v7565
      %v7630 = vadd.f32 %v6996, %v7568
      %v7631 = vadd.f32 %v6997, %v7570
      %v7632 = vadd.f32 %v6998, %v7573
      %v7633 = vadd.f32 %v6999, %v7575
      %v7634 = vadd.f32 %v7000, %v7578
      %v7635 = vadd.f32 %v7001, %v7580
      %v7636 = vadd.f32 %v7002, %v7583
      %v7637 = vadd.f32 %v7003, %v7585
      %v7638 = vadd.f32 %v7004, %v7588
      %v7639 = vadd.f32 %v7005, %v7590
      %v7640 = vld [vmem:[#allocation4 + $0x1c] sm:$0x8]
      %v7641 = vld [vmem:[#allocation4 + $0x20] sm:$0xf]
      %v7642 = vld [vmem:[#allocation4 + $0x24] sm:$0xf]
      %v7643 = vld [vmem:[#allocation4 + $0x28] sm:$0xf]
      %v7644 = vld [vmem:[#allocation4 + $0x2c] sm:$0xf]
      %v7645 = vld [vmem:[#allocation4 + $0x30] sm:$0xf]
      %v7646 = vld [vmem:[#allocation4 + $0x34] sm:$0xf]
      %v7647 = vld [vmem:[#allocation4 + $0x38] sm:$0xf]
      %v7648 = vld [vmem:[#allocation4 + $0x3c] sm:$0xf]
      %v7649 = vld [vmem:[#allocation4 + $0x40] sm:$0xf]
      %v7650 = vld [vmem:[#allocation4 + $0x44] sm:$0xf]
      %v7651 = vld [vmem:[#allocation4 + $0x48] sm:$0xf]
      %v7652 = vld [vmem:[#allocation4 + $0x4c] sm:$0xf]
      %v7653 = vld [vmem:[#allocation4 + $0x50] sm:$0xf]
      %v7654 = vld [vmem:[#allocation4 + $0x54] sm:$0xf]
      %v7655 = vld [vmem:[#allocation4 + $0x58] sm:$0xf]
      %v7656 = vld [vmem:[#allocation4 + $0x5c] sm:$0xf]
      %v7657 = vld [vmem:[#allocation4 + $0x60] sm:$0xf]
      %v7658 = vld [vmem:[#allocation4 + $0x64] sm:$0xf]
      %v7659 = vld [vmem:[#allocation4 + $0x68] sm:$0xf]
      %v7660 = vld [vmem:[#allocation4 + $0x6c] sm:$0xf]
      %v7661 = vld [vmem:[#allocation4 + $0x70] sm:$0xf]
      %v7662 = vld [vmem:[#allocation4 + $0x74] sm:$0xf]
      %v7663 = vld [vmem:[#allocation4 + $0x78] sm:$0xf]
      %v7664 = vld [vmem:[#allocation4 + $0x7c] sm:$0xf]
      %v7665 = vld [vmem:[#allocation4 + $0x80] sm:$0xf]
      %v7666 = vld [vmem:[#allocation4 + $0x84] sm:$0xf]
      %v7667 = vld [vmem:[#allocation4 + $0x88] sm:$0xf]
      %v7668 = vld [vmem:[#allocation4 + $0x8c] sm:$0xf]
      %v7669 = vld [vmem:[#allocation4 + $0x90] sm:$0xf]
      %v7670 = vld [vmem:[#allocation4 + $0x94] sm:$0xf]
      %v7671 = vld [vmem:[#allocation4 + $0x98] sm:$0xf]
      %v7672 = vld [vmem:[#allocation4 + $0x9c] sm:$0xf]
      %v7673 = vld [vmem:[#allocation4 + $0xa0] sm:$0xf]
      %v7674 = vld [vmem:[#allocation4 + $0xa4] sm:$0xf]
      %v7675 = vld [vmem:[#allocation4 + $0xa8] sm:$0xf]
      %v7676 = vld [vmem:[#allocation4 + $0xac] sm:$0xf]
      %v7677 = vld [vmem:[#allocation4 + $0xb0] sm:$0xf]
      %v7678 = vld [vmem:[#allocation4 + $0xb4] sm:$0xf]
      %v7679 = vld [vmem:[#allocation4 + $0xb8] sm:$0xf]
      %v7680 = vld [vmem:[#allocation4 + $0xbc] sm:$0xf]
      %v7681 = vld [vmem:[#allocation4 + $0xc0] sm:$0xf]
      %v7682 = vld [vmem:[#allocation4 + $0xc4] sm:$0xf]
      %v7683 = vld [vmem:[#allocation4 + $0xc8] sm:$0xf]
      %v7684 = vld [vmem:[#allocation4 + $0xcc] sm:$0xf]
      %v7685 = vld [vmem:[#allocation4 + $0xd0] sm:$0xf]
      %v7686 = vld [vmem:[#allocation4 + $0xd4] sm:$0xf]
      %v7687 = vld [vmem:[#allocation4 + $0xd8] sm:$0xf]
      %v7688 = vld [vmem:[#allocation4 + $0xdc] sm:$0xf]
      %s7689 = scalar_lea.vmem %s3, 384
      %v7690 = vld [vmem:[%s7689] sm:$0xf]
      %v7691 = vld [vmem:[%s7689 + $0x4] sm:$0xf]
      %v7692 = vld [vmem:[%s7689 + $0x8] sm:$0xf]
      %v7693 = vld [vmem:[%s7689 + $0xc] sm:$0xf]
      %v7694 = vld [vmem:[%s7689 + $0x10] sm:$0xf]
      %v7695 = vld [vmem:[%s7689 + $0x14] sm:$0xf]
      %v7696 = vld [vmem:[%s7689 + $0x18] sm:$0xf]
      %v7697 = vld [vmem:[%s7689 + $0x1c] sm:$0xf]
      %v7698 = vld [vmem:[%s7689 + $0x20] sm:$0xf]
      %v7699 = vld [vmem:[%s7689 + $0x24] sm:$0xf]
      %v7700 = vld [vmem:[%s7689 + $0x28] sm:$0xf]
      %v7701 = vld [vmem:[%s7689 + $0x2c] sm:$0xf]
      %v7702 = vld [vmem:[%s7689 + $0x30] sm:$0xf]
      %v7703 = vld [vmem:[%s7689 + $0x34] sm:$0xf]
      %v7704 = vld [vmem:[%s7689 + $0x38] sm:$0xf]
      %v7705 = vld [vmem:[%s7689 + $0x3c] sm:$0xf]
      %v7755 = vunpack.c.l.b16 %v7640
      %v7756 = vunpack.c.l.b16 %v7641
      %v7757 = vunpack.c.l.b16 %v7642
      %v7758 = vunpack.c.l.b16 %v7643
      %v7759 = vunpack.c.l.b16 %v7644
      %v7760 = vunpack.c.l.b16 %v7645
      %v7761 = vunpack.c.l.b16 %v7646
      %v7762 = vunpack.c.l.b16 %v7647
      %v7763 = vunpack.c.l.b16 %v7648
      %v7764 = vunpack.c.l.b16 %v7649
      %v7765 = vunpack.c.l.b16 %v7650
      %v7766 = vunpack.c.l.b16 %v7651
      %v7767 = vunpack.c.l.b16 %v7652
      %v7768 = vunpack.c.l.b16 %v7653
      %v7769 = vunpack.c.l.b16 %v7654
      %v7770 = vunpack.c.l.b16 %v7655
      %v7771 = vunpack.c.l.b16 %v7656
      %v7772 = vunpack.c.l.b16 %v7657
      %v7773 = vunpack.c.l.b16 %v7658
      %v7774 = vunpack.c.l.b16 %v7659
      %v7775 = vunpack.c.l.b16 %v7660
      %v7776 = vunpack.c.l.b16 %v7661
      %v7777 = vunpack.c.l.b16 %v7662
      %v7778 = vunpack.c.l.b16 %v7663
      %v7779 = vunpack.c.l.b16 %v7664
      %v7780 = vunpack.c.l.b16 %v7665
      %v7781 = vunpack.c.l.b16 %v7666
      %v7782 = vunpack.c.l.b16 %v7667
      %v7783 = vunpack.c.l.b16 %v7668
      %v7784 = vunpack.c.l.b16 %v7669
      %v7785 = vunpack.c.l.b16 %v7670
      %v7786 = vunpack.c.l.b16 %v7671
      %v7787 = vunpack.c.l.b16 %v7672
      %v7788 = vunpack.c.l.b16 %v7673
      %v7789 = vunpack.c.l.b16 %v7674
      %v7790 = vunpack.c.l.b16 %v7675
      %v7791 = vunpack.c.l.b16 %v7676
      %v7792 = vunpack.c.l.b16 %v7677
      %v7793 = vunpack.c.l.b16 %v7678
      %v7794 = vunpack.c.l.b16 %v7679
      %v7795 = vunpack.c.l.b16 %v7680
      %v7796 = vunpack.c.l.b16 %v7681
      %v7797 = vunpack.c.l.b16 %v7682
      %v7798 = vunpack.c.l.b16 %v7683
      %v7799 = vunpack.c.l.b16 %v7684
      %v7800 = vunpack.c.l.b16 %v7685
      %v7801 = vunpack.c.l.b16 %v7686
      %v7802 = vunpack.c.l.b16 %v7687
      %v7803 = vunpack.c.l.b16 %v7688
      %v7804 = vpack.c.b16 %v7756, %v7755
      %v7805 = vpack.c.b16 %v7758, %v7757
      %v7806 = vpack.c.b16 %v7760, %v7759
      %v7807 = vpack.c.b16 %v7762, %v7761
      %v7808 = vpack.c.b16 %v7764, %v7763
      %v7809 = vpack.c.b16 %v7766, %v7765
      %v7810 = vpack.c.b16 %v7768, %v7767
      %v7811 = vpack.c.b16 %v7770, %v7769
      %v7812 = vpack.c.b16 %v7772, %v7771
      %v7813 = vpack.c.b16 %v7774, %v7773
      %v7814 = vpack.c.b16 %v7776, %v7775
      %v7815 = vpack.c.b16 %v7778, %v7777
      %v7816 = vpack.c.b16 %v7780, %v7779
      %v7817 = vpack.c.b16 %v7782, %v7781
      %v7818 = vpack.c.b16 %v7784, %v7783
      %v7819 = vpack.c.b16 %v7786, %v7785
      %v7820 = vpack.c.b16 %v7788, %v7787
      %v7821 = vpack.c.b16 %v7790, %v7789
      %v7822 = vpack.c.b16 %v7792, %v7791
      %v7823 = vpack.c.b16 %v7794, %v7793
      %v7824 = vpack.c.b16 %v7796, %v7795
      %v7825 = vpack.c.b16 %v7798, %v7797
      %v7826 = vpack.c.b16 %v7800, %v7799
      %v7827 = vpack.c.b16 %v7802, %v7801
      %v7828 = vpack.c.b16 %v7803, %v7803
      %v7830 = vshrl.u32 %v7804, 16
      %v7832 = vrot.slane %v7830, 3
      %v7833 = vshll.u32 %v7804, 16
      %v7835 = vrot.slane %v7833, 4
      %v7836 = vor.u32 %v7832, %v7835
      %v7838 = vshrl.u32 %v7805, 16
      %v7840 = vrot.slane %v7838, 3
      %v7841 = vshll.u32 %v7805, 16
      %v7843 = vrot.slane %v7841, 4
      %v7844 = vor.u32 %v7840, %v7843
      %v7845 = vsel %vm1020, %v7836, %v7844
      %v7847 = vshrl.u32 %v7806, 16
      %v7849 = vrot.slane %v7847, 3
      %v7850 = vshll.u32 %v7806, 16
      %v7852 = vrot.slane %v7850, 4
      %v7853 = vor.u32 %v7849, %v7852
      %v7854 = vsel %vm1020, %v7844, %v7853
      %v7856 = vshrl.u32 %v7807, 16
      %v7858 = vrot.slane %v7856, 3
      %v7859 = vshll.u32 %v7807, 16
      %v7861 = vrot.slane %v7859, 4
      %v7862 = vor.u32 %v7858, %v7861
      %v7863 = vsel %vm1020, %v7853, %v7862
      %v7865 = vshrl.u32 %v7808, 16
      %v7867 = vrot.slane %v7865, 3
      %v7868 = vshll.u32 %v7808, 16
      %v7870 = vrot.slane %v7868, 4
      %v7871 = vor.u32 %v7867, %v7870
      %v7872 = vsel %vm1020, %v7862, %v7871
      %v7874 = vshrl.u32 %v7809, 16
      %v7876 = vrot.slane %v7874, 3
      %v7877 = vshll.u32 %v7809, 16
      %v7879 = vrot.slane %v7877, 4
      %v7880 = vor.u32 %v7876, %v7879
      %v7881 = vsel %vm1020, %v7871, %v7880
      %v7883 = vshrl.u32 %v7810, 16
      %v7885 = vrot.slane %v7883, 3
      %v7886 = vshll.u32 %v7810, 16
      %v7888 = vrot.slane %v7886, 4
      %v7889 = vor.u32 %v7885, %v7888
      %v7890 = vsel %vm1020, %v7880, %v7889
      %v7892 = vshrl.u32 %v7811, 16
      %v7894 = vrot.slane %v7892, 3
      %v7895 = vshll.u32 %v7811, 16
      %v7897 = vrot.slane %v7895, 4
      %v7898 = vor.u32 %v7894, %v7897
      %v7899 = vsel %vm1020, %v7889, %v7898
      %v7901 = vshrl.u32 %v7812, 16
      %v7903 = vrot.slane %v7901, 3
      %v7904 = vshll.u32 %v7812, 16
      %v7906 = vrot.slane %v7904, 4
      %v7907 = vor.u32 %v7903, %v7906
      %v7908 = vsel %vm1020, %v7898, %v7907
      %v7910 = vshrl.u32 %v7813, 16
      %v7912 = vrot.slane %v7910, 3
      %v7913 = vshll.u32 %v7813, 16
      %v7915 = vrot.slane %v7913, 4
      %v7916 = vor.u32 %v7912, %v7915
      %v7917 = vsel %vm1020, %v7907, %v7916
      %v7919 = vshrl.u32 %v7814, 16
      %v7921 = vrot.slane %v7919, 3
      %v7922 = vshll.u32 %v7814, 16
      %v7924 = vrot.slane %v7922, 4
      %v7925 = vor.u32 %v7921, %v7924
      %v7926 = vsel %vm1020, %v7916, %v7925
      %v7928 = vshrl.u32 %v7815, 16
      %v7930 = vrot.slane %v7928, 3
      %v7931 = vshll.u32 %v7815, 16
      %v7933 = vrot.slane %v7931, 4
      %v7934 = vor.u32 %v7930, %v7933
      %v7935 = vsel %vm1020, %v7925, %v7934
      %v7937 = vshrl.u32 %v7816, 16
      %v7939 = vrot.slane %v7937, 3
      %v7940 = vshll.u32 %v7816, 16
      %v7942 = vrot.slane %v7940, 4
      %v7943 = vor.u32 %v7939, %v7942
      %v7944 = vsel %vm1020, %v7934, %v7943
      %v7946 = vshrl.u32 %v7817, 16
      %v7948 = vrot.slane %v7946, 3
      %v7949 = vshll.u32 %v7817, 16
      %v7951 = vrot.slane %v7949, 4
      %v7952 = vor.u32 %v7948, %v7951
      %v7953 = vsel %vm1020, %v7943, %v7952
      %v7955 = vshrl.u32 %v7818, 16
      %v7957 = vrot.slane %v7955, 3
      %v7958 = vshll.u32 %v7818, 16
      %v7960 = vrot.slane %v7958, 4
      %v7961 = vor.u32 %v7957, %v7960
      %v7962 = vsel %vm1020, %v7952, %v7961
      %v7964 = vshrl.u32 %v7819, 16
      %v7966 = vrot.slane %v7964, 3
      %v7967 = vshll.u32 %v7819, 16
      %v7969 = vrot.slane %v7967, 4
      %v7970 = vor.u32 %v7966, %v7969
      %v7971 = vsel %vm1020, %v7961, %v7970
      %v7973 = vshrl.u32 %v7820, 16
      %v7975 = vrot.slane %v7973, 3
      %v7976 = vshll.u32 %v7820, 16
      %v7978 = vrot.slane %v7976, 4
      %v7979 = vor.u32 %v7975, %v7978
      %v7980 = vsel %vm1020, %v7970, %v7979
      %v7982 = vshrl.u32 %v7821, 16
      %v7984 = vrot.slane %v7982, 3
      %v7985 = vshll.u32 %v7821, 16
      %v7987 = vrot.slane %v7985, 4
      %v7988 = vor.u32 %v7984, %v7987
      %v7989 = vsel %vm1020, %v7979, %v7988
      %v7991 = vshrl.u32 %v7822, 16
      %v7993 = vrot.slane %v7991, 3
      %v7994 = vshll.u32 %v7822, 16
      %v7996 = vrot.slane %v7994, 4
      %v7997 = vor.u32 %v7993, %v7996
      %v7998 = vsel %vm1020, %v7988, %v7997
      %v8000 = vshrl.u32 %v7823, 16
      %v8002 = vrot.slane %v8000, 3
      %v8003 = vshll.u32 %v7823, 16
      %v8005 = vrot.slane %v8003, 4
      %v8006 = vor.u32 %v8002, %v8005
      %v8007 = vsel %vm1020, %v7997, %v8006
      %v8009 = vshrl.u32 %v7824, 16
      %v8011 = vrot.slane %v8009, 3
      %v8012 = vshll.u32 %v7824, 16
      %v8014 = vrot.slane %v8012, 4
      %v8015 = vor.u32 %v8011, %v8014
      %v8016 = vsel %vm1020, %v8006, %v8015
      %v8018 = vshrl.u32 %v7825, 16
      %v8020 = vrot.slane %v8018, 3
      %v8021 = vshll.u32 %v7825, 16
      %v8023 = vrot.slane %v8021, 4
      %v8024 = vor.u32 %v8020, %v8023
      %v8025 = vsel %vm1020, %v8015, %v8024
      %v8027 = vshrl.u32 %v7826, 16
      %v8029 = vrot.slane %v8027, 3
      %v8030 = vshll.u32 %v7826, 16
      %v8032 = vrot.slane %v8030, 4
      %v8033 = vor.u32 %v8029, %v8032
      %v8034 = vsel %vm1020, %v8024, %v8033
      %v8036 = vshrl.u32 %v7827, 16
      %v8038 = vrot.slane %v8036, 3
      %v8039 = vshll.u32 %v7827, 16
      %v8041 = vrot.slane %v8039, 4
      %v8042 = vor.u32 %v8038, %v8041
      %v8043 = vsel %vm1020, %v8033, %v8042
      %v8045 = vshrl.u32 %v7828, 16
      %v8047 = vrot.slane %v8045, 3
      %v8048 = vshll.u32 %v7828, 16
      %v8050 = vrot.slane %v8048, 4
      %v8051 = vor.u32 %v8047, %v8050
      %v8052 = vsel %vm1020, %v8042, %v8051
      %v8093 = vunpack.c.l.b16 %v7690
      %v8094 = vunpack.c.l.b16 %v7691
      %v8095 = vunpack.c.l.b16 %v7692
      %v8096 = vunpack.c.l.b16 %v7693
      %v8097 = vunpack.c.l.b16 %v7694
      %v8098 = vunpack.c.l.b16 %v7695
      %v8099 = vunpack.c.l.b16 %v7696
      %v8100 = vunpack.c.l.b16 %v7697
      %v8101 = vunpack.c.l.b16 %v7698
      %v8102 = vunpack.c.l.b16 %v7699
      %v8103 = vunpack.c.l.b16 %v7700
      %v8104 = vunpack.c.l.b16 %v7701
      %v8105 = vunpack.c.l.b16 %v7702
      %v8106 = vunpack.c.l.b16 %v7703
      %v8107 = vunpack.c.l.b16 %v7704
      %v8108 = vunpack.c.l.b16 %v7705
      %v8109 = vpack.c.b16 %v8094, %v8093
      %v8110 = vpack.c.b16 %v8096, %v8095
      %v8111 = vpack.c.b16 %v8098, %v8097
      %v8112 = vpack.c.b16 %v8100, %v8099
      %v8113 = vpack.c.b16 %v8102, %v8101
      %v8114 = vpack.c.b16 %v8104, %v8103
      %v8115 = vpack.c.b16 %v8106, %v8105
      %v8116 = vpack.c.b16 %v8108, %v8107
      %8125 = vmatpush.bf16.msra.mxu0 %v8116
      %8126 = vmatpush.bf16.msra.mxu0 %v8115
      %8127 = vmatpush.bf16.msra.mxu0 %v8114
      %8128 = vmatpush.bf16.msra.mxu0 %v8113
      %8129 = vmatpush.bf16.msra.mxu0 %v8112
      %8130 = vmatpush.bf16.msra.mxu0 %v8111
      %8131 = vmatpush.bf16.msra.mxu0 %v8110
      %8132 = vmatpush.bf16.msra.mxu0 %v8109
      %8133 = vmatmul.bf16.gmra.mxu0 %v7845
      %v8134 = vpop.f32.mrf.mxu0
      %v8135 = vadd.f32 0.0, %v8134
      %v8136 = vpop.f32.mrf.mxu0
      %v8137 = vadd.f32 0.0, %v8136
      %8138 = vmatmul.bf16.gmra.mxu0 %v7854
      %v8139 = vpop.f32.mrf.mxu0
      %v8140 = vadd.f32 0.0, %v8139
      %v8141 = vpop.f32.mrf.mxu0
      %v8142 = vadd.f32 0.0, %v8141
      %8143 = vmatmul.bf16.gmra.mxu0 %v7863
      %v8144 = vpop.f32.mrf.mxu0
      %v8145 = vadd.f32 0.0, %v8144
      %v8146 = vpop.f32.mrf.mxu0
      %v8147 = vadd.f32 0.0, %v8146
      %8148 = vmatmul.bf16.gmra.mxu0 %v7872
      %v8149 = vpop.f32.mrf.mxu0
      %v8150 = vadd.f32 0.0, %v8149
      %v8151 = vpop.f32.mrf.mxu0
      %v8152 = vadd.f32 0.0, %v8151
      %8153 = vmatmul.bf16.gmra.mxu0 %v7881
      %v8154 = vpop.f32.mrf.mxu0
      %v8155 = vadd.f32 0.0, %v8154
      %v8156 = vpop.f32.mrf.mxu0
      %v8157 = vadd.f32 0.0, %v8156
      %8158 = vmatmul.bf16.gmra.mxu0 %v7890
      %v8159 = vpop.f32.mrf.mxu0
      %v8160 = vadd.f32 0.0, %v8159
      %v8161 = vpop.f32.mrf.mxu0
      %v8162 = vadd.f32 0.0, %v8161
      %8163 = vmatmul.bf16.gmra.mxu0 %v7899
      %v8164 = vpop.f32.mrf.mxu0
      %v8165 = vadd.f32 0.0, %v8164
      %v8166 = vpop.f32.mrf.mxu0
      %v8167 = vadd.f32 0.0, %v8166
      %8168 = vmatmul.bf16.gmra.mxu0 %v7908
      %v8169 = vpop.f32.mrf.mxu0
      %v8170 = vadd.f32 0.0, %v8169
      %v8171 = vpop.f32.mrf.mxu0
      %v8172 = vadd.f32 0.0, %v8171
      %8173 = vmatmul.bf16.gmra.mxu0 %v7917
      %v8174 = vpop.f32.mrf.mxu0
      %v8175 = vadd.f32 0.0, %v8174
      %v8176 = vpop.f32.mrf.mxu0
      %v8177 = vadd.f32 0.0, %v8176
      %8178 = vmatmul.bf16.gmra.mxu0 %v7926
      %v8179 = vpop.f32.mrf.mxu0
      %v8180 = vadd.f32 0.0, %v8179
      %v8181 = vpop.f32.mrf.mxu0
      %v8182 = vadd.f32 0.0, %v8181
      %8183 = vmatmul.bf16.gmra.mxu0 %v7935
      %v8184 = vpop.f32.mrf.mxu0
      %v8185 = vadd.f32 0.0, %v8184
      %v8186 = vpop.f32.mrf.mxu0
      %v8187 = vadd.f32 0.0, %v8186
      %8188 = vmatmul.bf16.gmra.mxu0 %v7944
      %v8189 = vpop.f32.mrf.mxu0
      %v8190 = vadd.f32 0.0, %v8189
      %v8191 = vpop.f32.mrf.mxu0
      %v8192 = vadd.f32 0.0, %v8191
      %8193 = vmatmul.bf16.gmra.mxu0 %v7953
      %v8194 = vpop.f32.mrf.mxu0
      %v8195 = vadd.f32 0.0, %v8194
      %v8196 = vpop.f32.mrf.mxu0
      %v8197 = vadd.f32 0.0, %v8196
      %8198 = vmatmul.bf16.gmra.mxu0 %v7962
      %v8199 = vpop.f32.mrf.mxu0
      %v8200 = vadd.f32 0.0, %v8199
      %v8201 = vpop.f32.mrf.mxu0
      %v8202 = vadd.f32 0.0, %v8201
      %8203 = vmatmul.bf16.gmra.mxu0 %v7971
      %v8204 = vpop.f32.mrf.mxu0
      %v8205 = vadd.f32 0.0, %v8204
      %v8206 = vpop.f32.mrf.mxu0
      %v8207 = vadd.f32 0.0, %v8206
      %8208 = vmatmul.bf16.gmra.mxu0 %v7980
      %v8209 = vpop.f32.mrf.mxu0
      %v8210 = vadd.f32 0.0, %v8209
      %v8211 = vpop.f32.mrf.mxu0
      %v8212 = vadd.f32 0.0, %v8211
      %8213 = vmatmul.bf16.gmra.mxu0 %v7989
      %v8214 = vpop.f32.mrf.mxu0
      %v8215 = vadd.f32 0.0, %v8214
      %v8216 = vpop.f32.mrf.mxu0
      %v8217 = vadd.f32 0.0, %v8216
      %8218 = vmatmul.bf16.gmra.mxu0 %v7998
      %v8219 = vpop.f32.mrf.mxu0
      %v8220 = vadd.f32 0.0, %v8219
      %v8221 = vpop.f32.mrf.mxu0
      %v8222 = vadd.f32 0.0, %v8221
      %8223 = vmatmul.bf16.gmra.mxu0 %v8007
      %v8224 = vpop.f32.mrf.mxu0
      %v8225 = vadd.f32 0.0, %v8224
      %v8226 = vpop.f32.mrf.mxu0
      %v8227 = vadd.f32 0.0, %v8226
      %8228 = vmatmul.bf16.gmra.mxu0 %v8016
      %v8229 = vpop.f32.mrf.mxu0
      %v8230 = vadd.f32 0.0, %v8229
      %v8231 = vpop.f32.mrf.mxu0
      %v8232 = vadd.f32 0.0, %v8231
      %8233 = vmatmul.bf16.gmra.mxu0 %v8025
      %v8234 = vpop.f32.mrf.mxu0
      %v8235 = vadd.f32 0.0, %v8234
      %v8236 = vpop.f32.mrf.mxu0
      %v8237 = vadd.f32 0.0, %v8236
      %8238 = vmatmul.bf16.gmra.mxu0 %v8034
      %v8239 = vpop.f32.mrf.mxu0
      %v8240 = vadd.f32 0.0, %v8239
      %v8241 = vpop.f32.mrf.mxu0
      %v8242 = vadd.f32 0.0, %v8241
      %8243 = vmatmul.bf16.gmra.mxu0 %v8043
      %v8244 = vpop.f32.mrf.mxu0
      %v8245 = vadd.f32 0.0, %v8244
      %v8246 = vpop.f32.mrf.mxu0
      %v8247 = vadd.f32 0.0, %v8246
      %8248 = vmatmul.bf16.gmra.mxu0 %v8052
      %v8249 = vpop.f32.mrf.mxu0
      %v8250 = vadd.f32 0.0, %v8249
      %v8251 = vpop.f32.mrf.mxu0
      %v8252 = vadd.f32 0.0, %v8251
      %8253 = vdwg.mxu0
      %v8254 = vadd.f32 %v7592, %v8135
      %v8255 = vadd.f32 %v7593, %v8137
      %v8256 = vadd.f32 %v7594, %v8140
      %v8257 = vadd.f32 %v7595, %v8142
      %v8258 = vadd.f32 %v7596, %v8145
      %v8259 = vadd.f32 %v7597, %v8147
      %v8260 = vadd.f32 %v7598, %v8150
      %v8261 = vadd.f32 %v7599, %v8152
      %v8262 = vadd.f32 %v7600, %v8155
      %v8263 = vadd.f32 %v7601, %v8157
      %v8264 = vadd.f32 %v7602, %v8160
      %v8265 = vadd.f32 %v7603, %v8162
      %v8266 = vadd.f32 %v7604, %v8165
      %v8267 = vadd.f32 %v7605, %v8167
      %v8268 = vadd.f32 %v7606, %v8170
      %v8269 = vadd.f32 %v7607, %v8172
      %v8270 = vadd.f32 %v7608, %v8175
      %v8271 = vadd.f32 %v7609, %v8177
      %v8272 = vadd.f32 %v7610, %v8180
      %v8273 = vadd.f32 %v7611, %v8182
      %v8274 = vadd.f32 %v7612, %v8185
      %v8275 = vadd.f32 %v7613, %v8187
      %v8276 = vadd.f32 %v7614, %v8190
      %v8277 = vadd.f32 %v7615, %v8192
      %v8278 = vadd.f32 %v7616, %v8195
      %v8279 = vadd.f32 %v7617, %v8197
      %v8280 = vadd.f32 %v7618, %v8200
      %v8281 = vadd.f32 %v7619, %v8202
      %v8282 = vadd.f32 %v7620, %v8205
      %v8283 = vadd.f32 %v7621, %v8207
      %v8284 = vadd.f32 %v7622, %v8210
      %v8285 = vadd.f32 %v7623, %v8212
      %v8286 = vadd.f32 %v7624, %v8215
      %v8287 = vadd.f32 %v7625, %v8217
      %v8288 = vadd.f32 %v7626, %v8220
      %v8289 = vadd.f32 %v7627, %v8222
      %v8290 = vadd.f32 %v7628, %v8225
      %v8291 = vadd.f32 %v7629, %v8227
      %v8292 = vadd.f32 %v7630, %v8230
      %v8293 = vadd.f32 %v7631, %v8232
      %v8294 = vadd.f32 %v7632, %v8235
      %v8295 = vadd.f32 %v7633, %v8237
      %v8296 = vadd.f32 %v7634, %v8240
      %v8297 = vadd.f32 %v7635, %v8242
      %v8298 = vadd.f32 %v7636, %v8245
      %v8299 = vadd.f32 %v7637, %v8247
      %v8300 = vadd.f32 %v7638, %v8250
      %v8301 = vadd.f32 %v7639, %v8252
      %s8302 = scalar_lea.vmem %s3, 448
      %v8303 = vld [vmem:[%s8302] sm:$0xf]
      %v8304 = vld [vmem:[%s8302 + $0x4] sm:$0xf]
      %v8305 = vld [vmem:[%s8302 + $0x8] sm:$0xf]
      %v8306 = vld [vmem:[%s8302 + $0xc] sm:$0xf]
      %v8307 = vld [vmem:[%s8302 + $0x10] sm:$0xf]
      %v8308 = vld [vmem:[%s8302 + $0x14] sm:$0xf]
      %v8309 = vld [vmem:[%s8302 + $0x18] sm:$0xf]
      %v8310 = vld [vmem:[%s8302 + $0x1c] sm:$0xf]
      %v8311 = vld [vmem:[%s8302 + $0x20] sm:$0xf]
      %v8312 = vld [vmem:[%s8302 + $0x24] sm:$0xf]
      %v8313 = vld [vmem:[%s8302 + $0x28] sm:$0xf]
      %v8314 = vld [vmem:[%s8302 + $0x2c] sm:$0xf]
      %v8315 = vld [vmem:[%s8302 + $0x30] sm:$0xf]
      %v8316 = vld [vmem:[%s8302 + $0x34] sm:$0xf]
      %v8317 = vld [vmem:[%s8302 + $0x38] sm:$0xf]
      %v8318 = vld [vmem:[%s8302 + $0x3c] sm:$0xf]
      %v8319 = vpack.c.b16 %v7757, %v7756
      %v8320 = vpack.c.b16 %v7759, %v7758
      %v8321 = vpack.c.b16 %v7761, %v7760
      %v8322 = vpack.c.b16 %v7763, %v7762
      %v8323 = vpack.c.b16 %v7765, %v7764
      %v8324 = vpack.c.b16 %v7767, %v7766
      %v8325 = vpack.c.b16 %v7769, %v7768
      %v8326 = vpack.c.b16 %v7771, %v7770
      %v8327 = vpack.c.b16 %v7773, %v7772
      %v8328 = vpack.c.b16 %v7775, %v7774
      %v8329 = vpack.c.b16 %v7777, %v7776
      %v8330 = vpack.c.b16 %v7779, %v7778
      %v8331 = vpack.c.b16 %v7781, %v7780
      %v8332 = vpack.c.b16 %v7783, %v7782
      %v8333 = vpack.c.b16 %v7785, %v7784
      %v8334 = vpack.c.b16 %v7787, %v7786
      %v8335 = vpack.c.b16 %v7789, %v7788
      %v8336 = vpack.c.b16 %v7791, %v7790
      %v8337 = vpack.c.b16 %v7793, %v7792
      %v8338 = vpack.c.b16 %v7795, %v7794
      %v8339 = vpack.c.b16 %v7797, %v7796
      %v8340 = vpack.c.b16 %v7799, %v7798
      %v8341 = vpack.c.b16 %v7801, %v7800
      %v8342 = vpack.c.b16 %v7803, %v7802
      %v8383 = vunpack.c.l.b16 %v8303
      %v8384 = vunpack.c.l.b16 %v8304
      %v8385 = vunpack.c.l.b16 %v8305
      %v8386 = vunpack.c.l.b16 %v8306
      %v8387 = vunpack.c.l.b16 %v8307
      %v8388 = vunpack.c.l.b16 %v8308
      %v8389 = vunpack.c.l.b16 %v8309
      %v8390 = vunpack.c.l.b16 %v8310
      %v8391 = vunpack.c.l.b16 %v8311
      %v8392 = vunpack.c.l.b16 %v8312
      %v8393 = vunpack.c.l.b16 %v8313
      %v8394 = vunpack.c.l.b16 %v8314
      %v8395 = vunpack.c.l.b16 %v8315
      %v8396 = vunpack.c.l.b16 %v8316
      %v8397 = vunpack.c.l.b16 %v8317
      %v8398 = vunpack.c.l.b16 %v8318
      %v8399 = vpack.c.b16 %v8384, %v8383
      %v8400 = vpack.c.b16 %v8386, %v8385
      %v8401 = vpack.c.b16 %v8388, %v8387
      %v8402 = vpack.c.b16 %v8390, %v8389
      %v8403 = vpack.c.b16 %v8392, %v8391
      %v8404 = vpack.c.b16 %v8394, %v8393
      %v8405 = vpack.c.b16 %v8396, %v8395
      %v8406 = vpack.c.b16 %v8398, %v8397
      %8415 = vmatpush.bf16.msra.mxu0 %v8406
      %8416 = vmatpush.bf16.msra.mxu0 %v8405
      %8417 = vmatpush.bf16.msra.mxu0 %v8404
      %8418 = vmatpush.bf16.msra.mxu0 %v8403
      %8419 = vmatpush.bf16.msra.mxu0 %v8402
      %8420 = vmatpush.bf16.msra.mxu0 %v8401
      %8421 = vmatpush.bf16.msra.mxu0 %v8400
      %8422 = vmatpush.bf16.msra.mxu0 %v8399
      %8423 = vmatmul.bf16.gmra.mxu0 %v8319
      %v8424 = vpop.f32.mrf.mxu0
      %v8425 = vadd.f32 0.0, %v8424
      %v8426 = vpop.f32.mrf.mxu0
      %v8427 = vadd.f32 0.0, %v8426
      %8428 = vmatmul.bf16.gmra.mxu0 %v8320
      %v8429 = vpop.f32.mrf.mxu0
      %v8430 = vadd.f32 0.0, %v8429
      %v8431 = vpop.f32.mrf.mxu0
      %v8432 = vadd.f32 0.0, %v8431
      %8433 = vmatmul.bf16.gmra.mxu0 %v8321
      %v8434 = vpop.f32.mrf.mxu0
      %v8435 = vadd.f32 0.0, %v8434
      %v8436 = vpop.f32.mrf.mxu0
      %v8437 = vadd.f32 0.0, %v8436
      %8438 = vmatmul.bf16.gmra.mxu0 %v8322
      %v8439 = vpop.f32.mrf.mxu0
      %v8440 = vadd.f32 0.0, %v8439
      %v8441 = vpop.f32.mrf.mxu0
      %v8442 = vadd.f32 0.0, %v8441
      %8443 = vmatmul.bf16.gmra.mxu0 %v8323
      %v8444 = vpop.f32.mrf.mxu0
      %v8445 = vadd.f32 0.0, %v8444
      %v8446 = vpop.f32.mrf.mxu0
      %v8447 = vadd.f32 0.0, %v8446
      %8448 = vmatmul.bf16.gmra.mxu0 %v8324
      %v8449 = vpop.f32.mrf.mxu0
      %v8450 = vadd.f32 0.0, %v8449
      %v8451 = vpop.f32.mrf.mxu0
      %v8452 = vadd.f32 0.0, %v8451
      %8453 = vmatmul.bf16.gmra.mxu0 %v8325
      %v8454 = vpop.f32.mrf.mxu0
      %v8455 = vadd.f32 0.0, %v8454
      %v8456 = vpop.f32.mrf.mxu0
      %v8457 = vadd.f32 0.0, %v8456
      %8458 = vmatmul.bf16.gmra.mxu0 %v8326
      %v8459 = vpop.f32.mrf.mxu0
      %v8460 = vadd.f32 0.0, %v8459
      %v8461 = vpop.f32.mrf.mxu0
      %v8462 = vadd.f32 0.0, %v8461
      %8463 = vmatmul.bf16.gmra.mxu0 %v8327
      %v8464 = vpop.f32.mrf.mxu0
      %v8465 = vadd.f32 0.0, %v8464
      %v8466 = vpop.f32.mrf.mxu0
      %v8467 = vadd.f32 0.0, %v8466
      %8468 = vmatmul.bf16.gmra.mxu0 %v8328
      %v8469 = vpop.f32.mrf.mxu0
      %v8470 = vadd.f32 0.0, %v8469
      %v8471 = vpop.f32.mrf.mxu0
      %v8472 = vadd.f32 0.0, %v8471
      %8473 = vmatmul.bf16.gmra.mxu0 %v8329
      %v8474 = vpop.f32.mrf.mxu0
      %v8475 = vadd.f32 0.0, %v8474
      %v8476 = vpop.f32.mrf.mxu0
      %v8477 = vadd.f32 0.0, %v8476
      %8478 = vmatmul.bf16.gmra.mxu0 %v8330
      %v8479 = vpop.f32.mrf.mxu0
      %v8480 = vadd.f32 0.0, %v8479
      %v8481 = vpop.f32.mrf.mxu0
      %v8482 = vadd.f32 0.0, %v8481
      %8483 = vmatmul.bf16.gmra.mxu0 %v8331
      %v8484 = vpop.f32.mrf.mxu0
      %v8485 = vadd.f32 0.0, %v8484
      %v8486 = vpop.f32.mrf.mxu0
      %v8487 = vadd.f32 0.0, %v8486
      %8488 = vmatmul.bf16.gmra.mxu0 %v8332
      %v8489 = vpop.f32.mrf.mxu0
      %v8490 = vadd.f32 0.0, %v8489
      %v8491 = vpop.f32.mrf.mxu0
      %v8492 = vadd.f32 0.0, %v8491
      %8493 = vmatmul.bf16.gmra.mxu0 %v8333
      %v8494 = vpop.f32.mrf.mxu0
      %v8495 = vadd.f32 0.0, %v8494
      %v8496 = vpop.f32.mrf.mxu0
      %v8497 = vadd.f32 0.0, %v8496
      %8498 = vmatmul.bf16.gmra.mxu0 %v8334
      %v8499 = vpop.f32.mrf.mxu0
      %v8500 = vadd.f32 0.0, %v8499
      %v8501 = vpop.f32.mrf.mxu0
      %v8502 = vadd.f32 0.0, %v8501
      %8503 = vmatmul.bf16.gmra.mxu0 %v8335
      %v8504 = vpop.f32.mrf.mxu0
      %v8505 = vadd.f32 0.0, %v8504
      %v8506 = vpop.f32.mrf.mxu0
      %v8507 = vadd.f32 0.0, %v8506
      %8508 = vmatmul.bf16.gmra.mxu0 %v8336
      %v8509 = vpop.f32.mrf.mxu0
      %v8510 = vadd.f32 0.0, %v8509
      %v8511 = vpop.f32.mrf.mxu0
      %v8512 = vadd.f32 0.0, %v8511
      %8513 = vmatmul.bf16.gmra.mxu0 %v8337
      %v8514 = vpop.f32.mrf.mxu0
      %v8515 = vadd.f32 0.0, %v8514
      %v8516 = vpop.f32.mrf.mxu0
      %v8517 = vadd.f32 0.0, %v8516
      %8518 = vmatmul.bf16.gmra.mxu0 %v8338
      %v8519 = vpop.f32.mrf.mxu0
      %v8520 = vadd.f32 0.0, %v8519
      %v8521 = vpop.f32.mrf.mxu0
      %v8522 = vadd.f32 0.0, %v8521
      %8523 = vmatmul.bf16.gmra.mxu0 %v8339
      %v8524 = vpop.f32.mrf.mxu0
      %v8525 = vadd.f32 0.0, %v8524
      %v8526 = vpop.f32.mrf.mxu0
      %v8527 = vadd.f32 0.0, %v8526
      %8528 = vmatmul.bf16.gmra.mxu0 %v8340
      %v8529 = vpop.f32.mrf.mxu0
      %v8530 = vadd.f32 0.0, %v8529
      %v8531 = vpop.f32.mrf.mxu0
      %v8532 = vadd.f32 0.0, %v8531
      %8533 = vmatmul.bf16.gmra.mxu0 %v8341
      %v8534 = vpop.f32.mrf.mxu0
      %v8535 = vadd.f32 0.0, %v8534
      %v8536 = vpop.f32.mrf.mxu0
      %v8537 = vadd.f32 0.0, %v8536
      %8538 = vmatmul.bf16.gmra.mxu0 %v8342
      %v8539 = vpop.f32.mrf.mxu0
      %v8540 = vadd.f32 0.0, %v8539
      %v8541 = vpop.f32.mrf.mxu0
      %v8542 = vadd.f32 0.0, %v8541
      %8543 = vdwg.mxu0
      %v8544 = vadd.f32 %v8254, %v8425
      %v8545 = vadd.f32 %v8255, %v8427
      %v8546 = vadd.f32 %v8256, %v8430
      %v8547 = vadd.f32 %v8257, %v8432
      %v8548 = vadd.f32 %v8258, %v8435
      %v8549 = vadd.f32 %v8259, %v8437
      %v8550 = vadd.f32 %v8260, %v8440
      %v8551 = vadd.f32 %v8261, %v8442
      %v8552 = vadd.f32 %v8262, %v8445
      %v8553 = vadd.f32 %v8263, %v8447
      %v8554 = vadd.f32 %v8264, %v8450
      %v8555 = vadd.f32 %v8265, %v8452
      %v8556 = vadd.f32 %v8266, %v8455
      %v8557 = vadd.f32 %v8267, %v8457
      %v8558 = vadd.f32 %v8268, %v8460
      %v8559 = vadd.f32 %v8269, %v8462
      %v8560 = vadd.f32 %v8270, %v8465
      %v8561 = vadd.f32 %v8271, %v8467
      %v8562 = vadd.f32 %v8272, %v8470
      %v8563 = vadd.f32 %v8273, %v8472
      %v8564 = vadd.f32 %v8274, %v8475
      %v8565 = vadd.f32 %v8275, %v8477
      %v8566 = vadd.f32 %v8276, %v8480
      %v8567 = vadd.f32 %v8277, %v8482
      %v8568 = vadd.f32 %v8278, %v8485
      %v8569 = vadd.f32 %v8279, %v8487
      %v8570 = vadd.f32 %v8280, %v8490
      %v8571 = vadd.f32 %v8281, %v8492
      %v8572 = vadd.f32 %v8282, %v8495
      %v8573 = vadd.f32 %v8283, %v8497
      %v8574 = vadd.f32 %v8284, %v8500
      %v8575 = vadd.f32 %v8285, %v8502
      %v8576 = vadd.f32 %v8286, %v8505
      %v8577 = vadd.f32 %v8287, %v8507
      %v8578 = vadd.f32 %v8288, %v8510
      %v8579 = vadd.f32 %v8289, %v8512
      %v8580 = vadd.f32 %v8290, %v8515
      %v8581 = vadd.f32 %v8291, %v8517
      %v8582 = vadd.f32 %v8292, %v8520
      %v8583 = vadd.f32 %v8293, %v8522
      %v8584 = vadd.f32 %v8294, %v8525
      %v8585 = vadd.f32 %v8295, %v8527
      %v8586 = vadd.f32 %v8296, %v8530
      %v8587 = vadd.f32 %v8297, %v8532
      %v8588 = vadd.f32 %v8298, %v8535
      %v8589 = vadd.f32 %v8299, %v8537
      %v8590 = vadd.f32 %v8300, %v8540
      %v8591 = vadd.f32 %v8301, %v8542
      %v8592 = vld [vmem:[#allocation4 + $0x20] sm:$0xf]
      %v8593 = vld [vmem:[#allocation4 + $0x24] sm:$0xf]
      %v8594 = vld [vmem:[#allocation4 + $0x28] sm:$0xf]
      %v8595 = vld [vmem:[#allocation4 + $0x2c] sm:$0xf]
      %v8596 = vld [vmem:[#allocation4 + $0x30] sm:$0xf]
      %v8597 = vld [vmem:[#allocation4 + $0x34] sm:$0xf]
      %v8598 = vld [vmem:[#allocation4 + $0x38] sm:$0xf]
      %v8599 = vld [vmem:[#allocation4 + $0x3c] sm:$0xf]
      %v8600 = vld [vmem:[#allocation4 + $0x40] sm:$0xf]
      %v8601 = vld [vmem:[#allocation4 + $0x44] sm:$0xf]
      %v8602 = vld [vmem:[#allocation4 + $0x48] sm:$0xf]
      %v8603 = vld [vmem:[#allocation4 + $0x4c] sm:$0xf]
      %v8604 = vld [vmem:[#allocation4 + $0x50] sm:$0xf]
      %v8605 = vld [vmem:[#allocation4 + $0x54] sm:$0xf]
      %v8606 = vld [vmem:[#allocation4 + $0x58] sm:$0xf]
      %v8607 = vld [vmem:[#allocation4 + $0x5c] sm:$0xf]
      %v8608 = vld [vmem:[#allocation4 + $0x60] sm:$0xf]
      %v8609 = vld [vmem:[#allocation4 + $0x64] sm:$0xf]
      %v8610 = vld [vmem:[#allocation4 + $0x68] sm:$0xf]
      %v8611 = vld [vmem:[#allocation4 + $0x6c] sm:$0xf]
      %v8612 = vld [vmem:[#allocation4 + $0x70] sm:$0xf]
      %v8613 = vld [vmem:[#allocation4 + $0x74] sm:$0xf]
      %v8614 = vld [vmem:[#allocation4 + $0x78] sm:$0xf]
      %v8615 = vld [vmem:[#allocation4 + $0x7c] sm:$0xf]
      %v8616 = vld [vmem:[#allocation4 + $0x80] sm:$0xf]
      %v8617 = vld [vmem:[#allocation4 + $0x84] sm:$0xf]
      %v8618 = vld [vmem:[#allocation4 + $0x88] sm:$0xf]
      %v8619 = vld [vmem:[#allocation4 + $0x8c] sm:$0xf]
      %v8620 = vld [vmem:[#allocation4 + $0x90] sm:$0xf]
      %v8621 = vld [vmem:[#allocation4 + $0x94] sm:$0xf]
      %v8622 = vld [vmem:[#allocation4 + $0x98] sm:$0xf]
      %v8623 = vld [vmem:[#allocation4 + $0x9c] sm:$0xf]
      %v8624 = vld [vmem:[#allocation4 + $0xa0] sm:$0xf]
      %v8625 = vld [vmem:[#allocation4 + $0xa4] sm:$0xf]
      %v8626 = vld [vmem:[#allocation4 + $0xa8] sm:$0xf]
      %v8627 = vld [vmem:[#allocation4 + $0xac] sm:$0xf]
      %v8628 = vld [vmem:[#allocation4 + $0xb0] sm:$0xf]
      %v8629 = vld [vmem:[#allocation4 + $0xb4] sm:$0xf]
      %v8630 = vld [vmem:[#allocation4 + $0xb8] sm:$0xf]
      %v8631 = vld [vmem:[#allocation4 + $0xbc] sm:$0xf]
      %v8632 = vld [vmem:[#allocation4 + $0xc0] sm:$0xf]
      %v8633 = vld [vmem:[#allocation4 + $0xc4] sm:$0xf]
      %v8634 = vld [vmem:[#allocation4 + $0xc8] sm:$0xf]
      %v8635 = vld [vmem:[#allocation4 + $0xcc] sm:$0xf]
      %v8636 = vld [vmem:[#allocation4 + $0xd0] sm:$0xf]
      %v8637 = vld [vmem:[#allocation4 + $0xd4] sm:$0xf]
      %v8638 = vld [vmem:[#allocation4 + $0xd8] sm:$0xf]
      %v8639 = vld [vmem:[#allocation4 + $0xdc] sm:$0xf]
      %v8640 = vld [vmem:[#allocation4 + $0xe0] sm:$0x1]
      %s8641 = scalar_lea.vmem %s3, 512
      %v8642 = vld [vmem:[%s8641] sm:$0xf]
      %v8643 = vld [vmem:[%s8641 + $0x4] sm:$0xf]
      %v8644 = vld [vmem:[%s8641 + $0x8] sm:$0xf]
      %v8645 = vld [vmem:[%s8641 + $0xc] sm:$0xf]
      %v8646 = vld [vmem:[%s8641 + $0x10] sm:$0xf]
      %v8647 = vld [vmem:[%s8641 + $0x14] sm:$0xf]
      %v8648 = vld [vmem:[%s8641 + $0x18] sm:$0xf]
      %v8649 = vld [vmem:[%s8641 + $0x1c] sm:$0xf]
      %v8650 = vld [vmem:[%s8641 + $0x20] sm:$0xf]
      %v8651 = vld [vmem:[%s8641 + $0x24] sm:$0xf]
      %v8652 = vld [vmem:[%s8641 + $0x28] sm:$0xf]
      %v8653 = vld [vmem:[%s8641 + $0x2c] sm:$0xf]
      %v8654 = vld [vmem:[%s8641 + $0x30] sm:$0xf]
      %v8655 = vld [vmem:[%s8641 + $0x34] sm:$0xf]
      %v8656 = vld [vmem:[%s8641 + $0x38] sm:$0xf]
      %v8657 = vld [vmem:[%s8641 + $0x3c] sm:$0xf]
      %v8707 = vunpack.c.l.b16 %v8592
      %v8708 = vunpack.c.l.b16 %v8593
      %v8709 = vunpack.c.l.b16 %v8594
      %v8710 = vunpack.c.l.b16 %v8595
      %v8711 = vunpack.c.l.b16 %v8596
      %v8712 = vunpack.c.l.b16 %v8597
      %v8713 = vunpack.c.l.b16 %v8598
      %v8714 = vunpack.c.l.b16 %v8599
      %v8715 = vunpack.c.l.b16 %v8600
      %v8716 = vunpack.c.l.b16 %v8601
      %v8717 = vunpack.c.l.b16 %v8602
      %v8718 = vunpack.c.l.b16 %v8603
      %v8719 = vunpack.c.l.b16 %v8604
      %v8720 = vunpack.c.l.b16 %v8605
      %v8721 = vunpack.c.l.b16 %v8606
      %v8722 = vunpack.c.l.b16 %v8607
      %v8723 = vunpack.c.l.b16 %v8608
      %v8724 = vunpack.c.l.b16 %v8609
      %v8725 = vunpack.c.l.b16 %v8610
      %v8726 = vunpack.c.l.b16 %v8611
      %v8727 = vunpack.c.l.b16 %v8612
      %v8728 = vunpack.c.l.b16 %v8613
      %v8729 = vunpack.c.l.b16 %v8614
      %v8730 = vunpack.c.l.b16 %v8615
      %v8731 = vunpack.c.l.b16 %v8616
      %v8732 = vunpack.c.l.b16 %v8617
      %v8733 = vunpack.c.l.b16 %v8618
      %v8734 = vunpack.c.l.b16 %v8619
      %v8735 = vunpack.c.l.b16 %v8620
      %v8736 = vunpack.c.l.b16 %v8621
      %v8737 = vunpack.c.l.b16 %v8622
      %v8738 = vunpack.c.l.b16 %v8623
      %v8739 = vunpack.c.l.b16 %v8624
      %v8740 = vunpack.c.l.b16 %v8625
      %v8741 = vunpack.c.l.b16 %v8626
      %v8742 = vunpack.c.l.b16 %v8627
      %v8743 = vunpack.c.l.b16 %v8628
      %v8744 = vunpack.c.l.b16 %v8629
      %v8745 = vunpack.c.l.b16 %v8630
      %v8746 = vunpack.c.l.b16 %v8631
      %v8747 = vunpack.c.l.b16 %v8632
      %v8748 = vunpack.c.l.b16 %v8633
      %v8749 = vunpack.c.l.b16 %v8634
      %v8750 = vunpack.c.l.b16 %v8635
      %v8751 = vunpack.c.l.b16 %v8636
      %v8752 = vunpack.c.l.b16 %v8637
      %v8753 = vunpack.c.l.b16 %v8638
      %v8754 = vunpack.c.l.b16 %v8639
      %v8755 = vunpack.c.l.b16 %v8640
      %v8756 = vpack.c.b16 %v8708, %v8707
      %v8757 = vpack.c.b16 %v8710, %v8709
      %v8758 = vpack.c.b16 %v8712, %v8711
      %v8759 = vpack.c.b16 %v8714, %v8713
      %v8760 = vpack.c.b16 %v8716, %v8715
      %v8761 = vpack.c.b16 %v8718, %v8717
      %v8762 = vpack.c.b16 %v8720, %v8719
      %v8763 = vpack.c.b16 %v8722, %v8721
      %v8764 = vpack.c.b16 %v8724, %v8723
      %v8765 = vpack.c.b16 %v8726, %v8725
      %v8766 = vpack.c.b16 %v8728, %v8727
      %v8767 = vpack.c.b16 %v8730, %v8729
      %v8768 = vpack.c.b16 %v8732, %v8731
      %v8769 = vpack.c.b16 %v8734, %v8733
      %v8770 = vpack.c.b16 %v8736, %v8735
      %v8771 = vpack.c.b16 %v8738, %v8737
      %v8772 = vpack.c.b16 %v8740, %v8739
      %v8773 = vpack.c.b16 %v8742, %v8741
      %v8774 = vpack.c.b16 %v8744, %v8743
      %v8775 = vpack.c.b16 %v8746, %v8745
      %v8776 = vpack.c.b16 %v8748, %v8747
      %v8777 = vpack.c.b16 %v8750, %v8749
      %v8778 = vpack.c.b16 %v8752, %v8751
      %v8779 = vpack.c.b16 %v8754, %v8753
      %v8780 = vpack.c.b16 %v8755, %v8755
      %v8782 = vshrl.u32 %v8756, 16
      %v8784 = vshll.u32 %v8756, 16
      %v8786 = vrot.slane %v8784, 1
      %v8787 = vor.u32 %v8782, %v8786
      %v8789 = vshll.u32 %v8757, 16
      %v8791 = vrot.slane %v8789, 1
      %v8792 = vsel %vm1511, %v8787, %v8791
      %v8793 = vshrl.u32 %v8757, 16
      %v8795 = vor.u32 %v8793, %v8791
      %v8797 = vshll.u32 %v8758, 16
      %v8799 = vrot.slane %v8797, 1
      %v8800 = vsel %vm1511, %v8795, %v8799
      %v8801 = vshrl.u32 %v8758, 16
      %v8803 = vor.u32 %v8801, %v8799
      %v8805 = vshll.u32 %v8759, 16
      %v8807 = vrot.slane %v8805, 1
      %v8808 = vsel %vm1511, %v8803, %v8807
      %v8809 = vshrl.u32 %v8759, 16
      %v8811 = vor.u32 %v8809, %v8807
      %v8813 = vshll.u32 %v8760, 16
      %v8815 = vrot.slane %v8813, 1
      %v8816 = vsel %vm1511, %v8811, %v8815
      %v8817 = vshrl.u32 %v8760, 16
      %v8819 = vor.u32 %v8817, %v8815
      %v8821 = vshll.u32 %v8761, 16
      %v8823 = vrot.slane %v8821, 1
      %v8824 = vsel %vm1511, %v8819, %v8823
      %v8825 = vshrl.u32 %v8761, 16
      %v8827 = vor.u32 %v8825, %v8823
      %v8829 = vshll.u32 %v8762, 16
      %v8831 = vrot.slane %v8829, 1
      %v8832 = vsel %vm1511, %v8827, %v8831
      %v8833 = vshrl.u32 %v8762, 16
      %v8835 = vor.u32 %v8833, %v8831
      %v8837 = vshll.u32 %v8763, 16
      %v8839 = vrot.slane %v8837, 1
      %v8840 = vsel %vm1511, %v8835, %v8839
      %v8841 = vshrl.u32 %v8763, 16
      %v8843 = vor.u32 %v8841, %v8839
      %v8845 = vshll.u32 %v8764, 16
      %v8847 = vrot.slane %v8845, 1
      %v8848 = vsel %vm1511, %v8843, %v8847
      %v8849 = vshrl.u32 %v8764, 16
      %v8851 = vor.u32 %v8849, %v8847
      %v8853 = vshll.u32 %v8765, 16
      %v8855 = vrot.slane %v8853, 1
      %v8856 = vsel %vm1511, %v8851, %v8855
      %v8857 = vshrl.u32 %v8765, 16
      %v8859 = vor.u32 %v8857, %v8855
      %v8861 = vshll.u32 %v8766, 16
      %v8863 = vrot.slane %v8861, 1
      %v8864 = vsel %vm1511, %v8859, %v8863
      %v8865 = vshrl.u32 %v8766, 16
      %v8867 = vor.u32 %v8865, %v8863
      %v8869 = vshll.u32 %v8767, 16
      %v8871 = vrot.slane %v8869, 1
      %v8872 = vsel %vm1511, %v8867, %v8871
      %v8873 = vshrl.u32 %v8767, 16
      %v8875 = vor.u32 %v8873, %v8871
      %v8877 = vshll.u32 %v8768, 16
      %v8879 = vrot.slane %v8877, 1
      %v8880 = vsel %vm1511, %v8875, %v8879
      %v8881 = vshrl.u32 %v8768, 16
      %v8883 = vor.u32 %v8881, %v8879
      %v8885 = vshll.u32 %v8769, 16
      %v8887 = vrot.slane %v8885, 1
      %v8888 = vsel %vm1511, %v8883, %v8887
      %v8889 = vshrl.u32 %v8769, 16
      %v8891 = vor.u32 %v8889, %v8887
      %v8893 = vshll.u32 %v8770, 16
      %v8895 = vrot.slane %v8893, 1
      %v8896 = vsel %vm1511, %v8891, %v8895
      %v8897 = vshrl.u32 %v8770, 16
      %v8899 = vor.u32 %v8897, %v8895
      %v8901 = vshll.u32 %v8771, 16
      %v8903 = vrot.slane %v8901, 1
      %v8904 = vsel %vm1511, %v8899, %v8903
      %v8905 = vshrl.u32 %v8771, 16
      %v8907 = vor.u32 %v8905, %v8903
      %v8909 = vshll.u32 %v8772, 16
      %v8911 = vrot.slane %v8909, 1
      %v8912 = vsel %vm1511, %v8907, %v8911
      %v8913 = vshrl.u32 %v8772, 16
      %v8915 = vor.u32 %v8913, %v8911
      %v8917 = vshll.u32 %v8773, 16
      %v8919 = vrot.slane %v8917, 1
      %v8920 = vsel %vm1511, %v8915, %v8919
      %v8921 = vshrl.u32 %v8773, 16
      %v8923 = vor.u32 %v8921, %v8919
      %v8925 = vshll.u32 %v8774, 16
      %v8927 = vrot.slane %v8925, 1
      %v8928 = vsel %vm1511, %v8923, %v8927
      %v8929 = vshrl.u32 %v8774, 16
      %v8931 = vor.u32 %v8929, %v8927
      %v8933 = vshll.u32 %v8775, 16
      %v8935 = vrot.slane %v8933, 1
      %v8936 = vsel %vm1511, %v8931, %v8935
      %v8937 = vshrl.u32 %v8775, 16
      %v8939 = vor.u32 %v8937, %v8935
      %v8941 = vshll.u32 %v8776, 16
      %v8943 = vrot.slane %v8941, 1
      %v8944 = vsel %vm1511, %v8939, %v8943
      %v8945 = vshrl.u32 %v8776, 16
      %v8947 = vor.u32 %v8945, %v8943
      %v8949 = vshll.u32 %v8777, 16
      %v8951 = vrot.slane %v8949, 1
      %v8952 = vsel %vm1511, %v8947, %v8951
      %v8953 = vshrl.u32 %v8777, 16
      %v8955 = vor.u32 %v8953, %v8951
      %v8957 = vshll.u32 %v8778, 16
      %v8959 = vrot.slane %v8957, 1
      %v8960 = vsel %vm1511, %v8955, %v8959
      %v8961 = vshrl.u32 %v8778, 16
      %v8963 = vor.u32 %v8961, %v8959
      %v8965 = vshll.u32 %v8779, 16
      %v8967 = vrot.slane %v8965, 1
      %v8968 = vsel %vm1511, %v8963, %v8967
      %v8969 = vshrl.u32 %v8779, 16
      %v8971 = vor.u32 %v8969, %v8967
      %v8973 = vshll.u32 %v8780, 16
      %v8975 = vrot.slane %v8973, 1
      %v8976 = vsel %vm1511, %v8971, %v8975
      %v9017 = vunpack.c.l.b16 %v8642
      %v9018 = vunpack.c.l.b16 %v8643
      %v9019 = vunpack.c.l.b16 %v8644
      %v9020 = vunpack.c.l.b16 %v8645
      %v9021 = vunpack.c.l.b16 %v8646
      %v9022 = vunpack.c.l.b16 %v8647
      %v9023 = vunpack.c.l.b16 %v8648
      %v9024 = vunpack.c.l.b16 %v8649
      %v9025 = vunpack.c.l.b16 %v8650
      %v9026 = vunpack.c.l.b16 %v8651
      %v9027 = vunpack.c.l.b16 %v8652
      %v9028 = vunpack.c.l.b16 %v8653
      %v9029 = vunpack.c.l.b16 %v8654
      %v9030 = vunpack.c.l.b16 %v8655
      %v9031 = vunpack.c.l.b16 %v8656
      %v9032 = vunpack.c.l.b16 %v8657
      %v9033 = vpack.c.b16 %v9018, %v9017
      %v9034 = vpack.c.b16 %v9020, %v9019
      %v9035 = vpack.c.b16 %v9022, %v9021
      %v9036 = vpack.c.b16 %v9024, %v9023
      %v9037 = vpack.c.b16 %v9026, %v9025
      %v9038 = vpack.c.b16 %v9028, %v9027
      %v9039 = vpack.c.b16 %v9030, %v9029
      %v9040 = vpack.c.b16 %v9032, %v9031
      %9049 = vmatpush.bf16.msra.mxu0 %v9040
      %9050 = vmatpush.bf16.msra.mxu0 %v9039
      %9051 = vmatpush.bf16.msra.mxu0 %v9038
      %9052 = vmatpush.bf16.msra.mxu0 %v9037
      %9053 = vmatpush.bf16.msra.mxu0 %v9036
      %9054 = vmatpush.bf16.msra.mxu0 %v9035
      %9055 = vmatpush.bf16.msra.mxu0 %v9034
      %9056 = vmatpush.bf16.msra.mxu0 %v9033
      %9057 = vmatmul.bf16.gmra.mxu0 %v8792
      %v9058 = vpop.f32.mrf.mxu0
      %v9059 = vadd.f32 0.0, %v9058
      %v9060 = vpop.f32.mrf.mxu0
      %v9061 = vadd.f32 0.0, %v9060
      %9062 = vmatmul.bf16.gmra.mxu0 %v8800
      %v9063 = vpop.f32.mrf.mxu0
      %v9064 = vadd.f32 0.0, %v9063
      %v9065 = vpop.f32.mrf.mxu0
      %v9066 = vadd.f32 0.0, %v9065
      %9067 = vmatmul.bf16.gmra.mxu0 %v8808
      %v9068 = vpop.f32.mrf.mxu0
      %v9069 = vadd.f32 0.0, %v9068
      %v9070 = vpop.f32.mrf.mxu0
      %v9071 = vadd.f32 0.0, %v9070
      %9072 = vmatmul.bf16.gmra.mxu0 %v8816
      %v9073 = vpop.f32.mrf.mxu0
      %v9074 = vadd.f32 0.0, %v9073
      %v9075 = vpop.f32.mrf.mxu0
      %v9076 = vadd.f32 0.0, %v9075
      %9077 = vmatmul.bf16.gmra.mxu0 %v8824
      %v9078 = vpop.f32.mrf.mxu0
      %v9079 = vadd.f32 0.0, %v9078
      %v9080 = vpop.f32.mrf.mxu0
      %v9081 = vadd.f32 0.0, %v9080
      %9082 = vmatmul.bf16.gmra.mxu0 %v8832
      %v9083 = vpop.f32.mrf.mxu0
      %v9084 = vadd.f32 0.0, %v9083
      %v9085 = vpop.f32.mrf.mxu0
      %v9086 = vadd.f32 0.0, %v9085
      %9087 = vmatmul.bf16.gmra.mxu0 %v8840
      %v9088 = vpop.f32.mrf.mxu0
      %v9089 = vadd.f32 0.0, %v9088
      %v9090 = vpop.f32.mrf.mxu0
      %v9091 = vadd.f32 0.0, %v9090
      %9092 = vmatmul.bf16.gmra.mxu0 %v8848
      %v9093 = vpop.f32.mrf.mxu0
      %v9094 = vadd.f32 0.0, %v9093
      %v9095 = vpop.f32.mrf.mxu0
      %v9096 = vadd.f32 0.0, %v9095
      %9097 = vmatmul.bf16.gmra.mxu0 %v8856
      %v9098 = vpop.f32.mrf.mxu0
      %v9099 = vadd.f32 0.0, %v9098
      %v9100 = vpop.f32.mrf.mxu0
      %v9101 = vadd.f32 0.0, %v9100
      %9102 = vmatmul.bf16.gmra.mxu0 %v8864
      %v9103 = vpop.f32.mrf.mxu0
      %v9104 = vadd.f32 0.0, %v9103
      %v9105 = vpop.f32.mrf.mxu0
      %v9106 = vadd.f32 0.0, %v9105
      %9107 = vmatmul.bf16.gmra.mxu0 %v8872
      %v9108 = vpop.f32.mrf.mxu0
      %v9109 = vadd.f32 0.0, %v9108
      %v9110 = vpop.f32.mrf.mxu0
      %v9111 = vadd.f32 0.0, %v9110
      %9112 = vmatmul.bf16.gmra.mxu0 %v8880
      %v9113 = vpop.f32.mrf.mxu0
      %v9114 = vadd.f32 0.0, %v9113
      %v9115 = vpop.f32.mrf.mxu0
      %v9116 = vadd.f32 0.0, %v9115
      %9117 = vmatmul.bf16.gmra.mxu0 %v8888
      %v9118 = vpop.f32.mrf.mxu0
      %v9119 = vadd.f32 0.0, %v9118
      %v9120 = vpop.f32.mrf.mxu0
      %v9121 = vadd.f32 0.0, %v9120
      %9122 = vmatmul.bf16.gmra.mxu0 %v8896
      %v9123 = vpop.f32.mrf.mxu0
      %v9124 = vadd.f32 0.0, %v9123
      %v9125 = vpop.f32.mrf.mxu0
      %v9126 = vadd.f32 0.0, %v9125
      %9127 = vmatmul.bf16.gmra.mxu0 %v8904
      %v9128 = vpop.f32.mrf.mxu0
      %v9129 = vadd.f32 0.0, %v9128
      %v9130 = vpop.f32.mrf.mxu0
      %v9131 = vadd.f32 0.0, %v9130
      %9132 = vmatmul.bf16.gmra.mxu0 %v8912
      %v9133 = vpop.f32.mrf.mxu0
      %v9134 = vadd.f32 0.0, %v9133
      %v9135 = vpop.f32.mrf.mxu0
      %v9136 = vadd.f32 0.0, %v9135
      %9137 = vmatmul.bf16.gmra.mxu0 %v8920
      %v9138 = vpop.f32.mrf.mxu0
      %v9139 = vadd.f32 0.0, %v9138
      %v9140 = vpop.f32.mrf.mxu0
      %v9141 = vadd.f32 0.0, %v9140
      %9142 = vmatmul.bf16.gmra.mxu0 %v8928
      %v9143 = vpop.f32.mrf.mxu0
      %v9144 = vadd.f32 0.0, %v9143
      %v9145 = vpop.f32.mrf.mxu0
      %v9146 = vadd.f32 0.0, %v9145
      %9147 = vmatmul.bf16.gmra.mxu0 %v8936
      %v9148 = vpop.f32.mrf.mxu0
      %v9149 = vadd.f32 0.0, %v9148
      %v9150 = vpop.f32.mrf.mxu0
      %v9151 = vadd.f32 0.0, %v9150
      %9152 = vmatmul.bf16.gmra.mxu0 %v8944
      %v9153 = vpop.f32.mrf.mxu0
      %v9154 = vadd.f32 0.0, %v9153
      %v9155 = vpop.f32.mrf.mxu0
      %v9156 = vadd.f32 0.0, %v9155
      %9157 = vmatmul.bf16.gmra.mxu0 %v8952
      %v9158 = vpop.f32.mrf.mxu0
      %v9159 = vadd.f32 0.0, %v9158
      %v9160 = vpop.f32.mrf.mxu0
      %v9161 = vadd.f32 0.0, %v9160
      %9162 = vmatmul.bf16.gmra.mxu0 %v8960
      %v9163 = vpop.f32.mrf.mxu0
      %v9164 = vadd.f32 0.0, %v9163
      %v9165 = vpop.f32.mrf.mxu0
      %v9166 = vadd.f32 0.0, %v9165
      %9167 = vmatmul.bf16.gmra.mxu0 %v8968
      %v9168 = vpop.f32.mrf.mxu0
      %v9169 = vadd.f32 0.0, %v9168
      %v9170 = vpop.f32.mrf.mxu0
      %v9171 = vadd.f32 0.0, %v9170
      %9172 = vmatmul.bf16.gmra.mxu0 %v8976
      %v9173 = vpop.f32.mrf.mxu0
      %v9174 = vadd.f32 0.0, %v9173
      %v9175 = vpop.f32.mrf.mxu0
      %v9176 = vadd.f32 0.0, %v9175
      %9177 = vdwg.mxu0
      %v9178 = vadd.f32 %v8544, %v9059
      %v9179 = vadd.f32 %v8545, %v9061
      %v9180 = vadd.f32 %v8546, %v9064
      %v9181 = vadd.f32 %v8547, %v9066
      %v9182 = vadd.f32 %v8548, %v9069
      %v9183 = vadd.f32 %v8549, %v9071
      %v9184 = vadd.f32 %v8550, %v9074
      %v9185 = vadd.f32 %v8551, %v9076
      %v9186 = vadd.f32 %v8552, %v9079
      %v9187 = vadd.f32 %v8553, %v9081
      %v9188 = vadd.f32 %v8554, %v9084
      %v9189 = vadd.f32 %v8555, %v9086
      %v9190 = vadd.f32 %v8556, %v9089
      %v9191 = vadd.f32 %v8557, %v9091
      %v9192 = vadd.f32 %v8558, %v9094
      %v9193 = vadd.f32 %v8559, %v9096
      %v9194 = vadd.f32 %v8560, %v9099
      %v9195 = vadd.f32 %v8561, %v9101
      %v9196 = vadd.f32 %v8562, %v9104
      %v9197 = vadd.f32 %v8563, %v9106
      %v9198 = vadd.f32 %v8564, %v9109
      %v9199 = vadd.f32 %v8565, %v9111
      %v9200 = vadd.f32 %v8566, %v9114
      %v9201 = vadd.f32 %v8567, %v9116
      %v9202 = vadd.f32 %v8568, %v9119
      %v9203 = vadd.f32 %v8569, %v9121
      %v9204 = vadd.f32 %v8570, %v9124
      %v9205 = vadd.f32 %v8571, %v9126
      %v9206 = vadd.f32 %v8572, %v9129
      %v9207 = vadd.f32 %v8573, %v9131
      %v9208 = vadd.f32 %v8574, %v9134
      %v9209 = vadd.f32 %v8575, %v9136
      %v9210 = vadd.f32 %v8576, %v9139
      %v9211 = vadd.f32 %v8577, %v9141
      %v9212 = vadd.f32 %v8578, %v9144
      %v9213 = vadd.f32 %v8579, %v9146
      %v9214 = vadd.f32 %v8580, %v9149
      %v9215 = vadd.f32 %v8581, %v9151
      %v9216 = vadd.f32 %v8582, %v9154
      %v9217 = vadd.f32 %v8583, %v9156
      %v9218 = vadd.f32 %v8584, %v9159
      %v9219 = vadd.f32 %v8585, %v9161
      %v9220 = vadd.f32 %v8586, %v9164
      %v9221 = vadd.f32 %v8587, %v9166
      %v9222 = vadd.f32 %v8588, %v9169
      %v9223 = vadd.f32 %v8589, %v9171
      %v9224 = vadd.f32 %v8590, %v9174
      %v9225 = vadd.f32 %v8591, %v9176
      %v9226 = vld [vmem:[%s5] sm:$0xf]
      %v9227 = vld [vmem:[%s5 + $0x4] sm:$0xf]
      %v9228 = vld [vmem:[%s5 + $0x8] sm:$0xf]
      %v9229 = vld [vmem:[%s5 + $0xc] sm:$0xf]
      %v9230 = vld [vmem:[%s5 + $0x10] sm:$0xf]
      %v9231 = vld [vmem:[%s5 + $0x14] sm:$0xf]
      %v9232 = vld [vmem:[%s5 + $0x18] sm:$0xf]
      %v9233 = vld [vmem:[%s5 + $0x1c] sm:$0xf]
      %v9234 = vld [vmem:[%s5 + $0x20] sm:$0xf]
      %v9235 = vld [vmem:[%s5 + $0x24] sm:$0xf]
      %v9236 = vld [vmem:[%s5 + $0x28] sm:$0xf]
      %v9237 = vld [vmem:[%s5 + $0x2c] sm:$0xf]
      %v9238 = vld [vmem:[%s5 + $0x30] sm:$0xf]
      %v9239 = vld [vmem:[%s5 + $0x34] sm:$0xf]
      %v9240 = vld [vmem:[%s5 + $0x38] sm:$0xf]
      %v9241 = vld [vmem:[%s5 + $0x3c] sm:$0xf]
      %v9258 = vunpack.c.l.b16 %v9226
      %v9259 = vunpack.c.l.b16 %v9227
      %v9260 = vunpack.c.l.b16 %v9228
      %v9261 = vunpack.c.l.b16 %v9229
      %v9262 = vunpack.c.l.b16 %v9230
      %v9263 = vunpack.c.l.b16 %v9231
      %v9264 = vunpack.c.l.b16 %v9232
      %v9265 = vunpack.c.l.b16 %v9233
      %v9266 = vunpack.c.l.b16 %v9234
      %v9267 = vunpack.c.l.b16 %v9235
      %v9268 = vunpack.c.l.b16 %v9236
      %v9269 = vunpack.c.l.b16 %v9237
      %v9270 = vunpack.c.l.b16 %v9238
      %v9271 = vunpack.c.l.b16 %v9239
      %v9272 = vunpack.c.l.b16 %v9240
      %v9273 = vunpack.c.l.b16 %v9241
      %v9274 = vpack.c.b16 %v9259, %v9258
      %v9275 = vpack.c.b16 %v9261, %v9260
      %v9276 = vpack.c.b16 %v9263, %v9262
      %v9277 = vpack.c.b16 %v9265, %v9264
      %v9278 = vpack.c.b16 %v9267, %v9266
      %v9279 = vpack.c.b16 %v9269, %v9268
      %v9280 = vpack.c.b16 %v9271, %v9270
      %v9281 = vpack.c.b16 %v9273, %v9272
      %9290 = vmatpush.bf16.msra.mxu0 %v9281
      %9291 = vmatpush.bf16.msra.mxu0 %v9280
      %9292 = vmatpush.bf16.msra.mxu0 %v9279
      %9293 = vmatpush.bf16.msra.mxu0 %v9278
      %9294 = vmatpush.bf16.msra.mxu0 %v9277
      %9295 = vmatpush.bf16.msra.mxu0 %v9276
      %9296 = vmatpush.bf16.msra.mxu0 %v9275
      %9297 = vmatpush.bf16.msra.mxu0 %v9274
      %9298 = vmatmul.bf16.gmra.mxu0 %v747
      %v9299 = vpop.f32.mrf.mxu0
      %v9300 = vadd.f32 0.0, %v9299
      %v9301 = vpop.f32.mrf.mxu0
      %v9302 = vadd.f32 0.0, %v9301
      %9303 = vmatmul.bf16.gmra.mxu0 %v748
      %v9304 = vpop.f32.mrf.mxu0
      %v9305 = vadd.f32 0.0, %v9304
      %v9306 = vpop.f32.mrf.mxu0
      %v9307 = vadd.f32 0.0, %v9306
      %9308 = vmatmul.bf16.gmra.mxu0 %v749
      %v9309 = vpop.f32.mrf.mxu0
      %v9310 = vadd.f32 0.0, %v9309
      %v9311 = vpop.f32.mrf.mxu0
      %v9312 = vadd.f32 0.0, %v9311
      %9313 = vmatmul.bf16.gmra.mxu0 %v750
      %v9314 = vpop.f32.mrf.mxu0
      %v9315 = vadd.f32 0.0, %v9314
      %v9316 = vpop.f32.mrf.mxu0
      %v9317 = vadd.f32 0.0, %v9316
      %9318 = vmatmul.bf16.gmra.mxu0 %v751
      %v9319 = vpop.f32.mrf.mxu0
      %v9320 = vadd.f32 0.0, %v9319
      %v9321 = vpop.f32.mrf.mxu0
      %v9322 = vadd.f32 0.0, %v9321
      %9323 = vmatmul.bf16.gmra.mxu0 %v752
      %v9324 = vpop.f32.mrf.mxu0
      %v9325 = vadd.f32 0.0, %v9324
      %v9326 = vpop.f32.mrf.mxu0
      %v9327 = vadd.f32 0.0, %v9326
      %9328 = vmatmul.bf16.gmra.mxu0 %v753
      %v9329 = vpop.f32.mrf.mxu0
      %v9330 = vadd.f32 0.0, %v9329
      %v9331 = vpop.f32.mrf.mxu0
      %v9332 = vadd.f32 0.0, %v9331
      %9333 = vmatmul.bf16.gmra.mxu0 %v754
      %v9334 = vpop.f32.mrf.mxu0
      %v9335 = vadd.f32 0.0, %v9334
      %v9336 = vpop.f32.mrf.mxu0
      %v9337 = vadd.f32 0.0, %v9336
      %9338 = vmatmul.bf16.gmra.mxu0 %v755
      %v9339 = vpop.f32.mrf.mxu0
      %v9340 = vadd.f32 0.0, %v9339
      %v9341 = vpop.f32.mrf.mxu0
      %v9342 = vadd.f32 0.0, %v9341
      %9343 = vmatmul.bf16.gmra.mxu0 %v756
      %v9344 = vpop.f32.mrf.mxu0
      %v9345 = vadd.f32 0.0, %v9344
      %v9346 = vpop.f32.mrf.mxu0
      %v9347 = vadd.f32 0.0, %v9346
      %9348 = vmatmul.bf16.gmra.mxu0 %v757
      %v9349 = vpop.f32.mrf.mxu0
      %v9350 = vadd.f32 0.0, %v9349
      %v9351 = vpop.f32.mrf.mxu0
      %v9352 = vadd.f32 0.0, %v9351
      %9353 = vmatmul.bf16.gmra.mxu0 %v758
      %v9354 = vpop.f32.mrf.mxu0
      %v9355 = vadd.f32 0.0, %v9354
      %v9356 = vpop.f32.mrf.mxu0
      %v9357 = vadd.f32 0.0, %v9356
      %9358 = vmatmul.bf16.gmra.mxu0 %v759
      %v9359 = vpop.f32.mrf.mxu0
      %v9360 = vadd.f32 0.0, %v9359
      %v9361 = vpop.f32.mrf.mxu0
      %v9362 = vadd.f32 0.0, %v9361
      %9363 = vmatmul.bf16.gmra.mxu0 %v760
      %v9364 = vpop.f32.mrf.mxu0
      %v9365 = vadd.f32 0.0, %v9364
      %v9366 = vpop.f32.mrf.mxu0
      %v9367 = vadd.f32 0.0, %v9366
      %9368 = vmatmul.bf16.gmra.mxu0 %v761
      %v9369 = vpop.f32.mrf.mxu0
      %v9370 = vadd.f32 0.0, %v9369
      %v9371 = vpop.f32.mrf.mxu0
      %v9372 = vadd.f32 0.0, %v9371
      %9373 = vmatmul.bf16.gmra.mxu0 %v762
      %v9374 = vpop.f32.mrf.mxu0
      %v9375 = vadd.f32 0.0, %v9374
      %v9376 = vpop.f32.mrf.mxu0
      %v9377 = vadd.f32 0.0, %v9376
      %9378 = vmatmul.bf16.gmra.mxu0 %v763
      %v9379 = vpop.f32.mrf.mxu0
      %v9380 = vadd.f32 0.0, %v9379
      %v9381 = vpop.f32.mrf.mxu0
      %v9382 = vadd.f32 0.0, %v9381
      %9383 = vmatmul.bf16.gmra.mxu0 %v764
      %v9384 = vpop.f32.mrf.mxu0
      %v9385 = vadd.f32 0.0, %v9384
      %v9386 = vpop.f32.mrf.mxu0
      %v9387 = vadd.f32 0.0, %v9386
      %9388 = vmatmul.bf16.gmra.mxu0 %v765
      %v9389 = vpop.f32.mrf.mxu0
      %v9390 = vadd.f32 0.0, %v9389
      %v9391 = vpop.f32.mrf.mxu0
      %v9392 = vadd.f32 0.0, %v9391
      %9393 = vmatmul.bf16.gmra.mxu0 %v766
      %v9394 = vpop.f32.mrf.mxu0
      %v9395 = vadd.f32 0.0, %v9394
      %v9396 = vpop.f32.mrf.mxu0
      %v9397 = vadd.f32 0.0, %v9396
      %9398 = vmatmul.bf16.gmra.mxu0 %v767
      %v9399 = vpop.f32.mrf.mxu0
      %v9400 = vadd.f32 0.0, %v9399
      %v9401 = vpop.f32.mrf.mxu0
      %v9402 = vadd.f32 0.0, %v9401
      %9403 = vmatmul.bf16.gmra.mxu0 %v768
      %v9404 = vpop.f32.mrf.mxu0
      %v9405 = vadd.f32 0.0, %v9404
      %v9406 = vpop.f32.mrf.mxu0
      %v9407 = vadd.f32 0.0, %v9406
      %9408 = vmatmul.bf16.gmra.mxu0 %v769
      %v9409 = vpop.f32.mrf.mxu0
      %v9410 = vadd.f32 0.0, %v9409
      %v9411 = vpop.f32.mrf.mxu0
      %v9412 = vadd.f32 0.0, %v9411
      %9413 = vmatmul.bf16.gmra.mxu0 %v770
      %v9414 = vpop.f32.mrf.mxu0
      %v9415 = vadd.f32 0.0, %v9414
      %v9416 = vpop.f32.mrf.mxu0
      %v9417 = vadd.f32 0.0, %v9416
      %9418 = vdwg.mxu0
      %v9419 = vld [vmem:[%s4] sm:$0x1]
      %v9421 = vperm.slane %v9419, 0
      %v9423 = vadd.f32 %v9178, %v9421
      %v9424 = vadd.f32 %v9179, %v9421
      %v9425 = vadd.f32 %v9180, %v9421
      %v9426 = vadd.f32 %v9181, %v9421
      %v9427 = vadd.f32 %v9182, %v9421
      %v9428 = vadd.f32 %v9183, %v9421
      %v9429 = vadd.f32 %v9184, %v9421
      %v9430 = vadd.f32 %v9185, %v9421
      %v9431 = vadd.f32 %v9186, %v9421
      %v9432 = vadd.f32 %v9187, %v9421
      %v9433 = vadd.f32 %v9188, %v9421
      %v9434 = vadd.f32 %v9189, %v9421
      %v9435 = vadd.f32 %v9190, %v9421
      %v9436 = vadd.f32 %v9191, %v9421
      %v9437 = vadd.f32 %v9192, %v9421
      %v9438 = vadd.f32 %v9193, %v9421
      %v9439 = vadd.f32 %v9194, %v9421
      %v9440 = vadd.f32 %v9195, %v9421
      %v9441 = vadd.f32 %v9196, %v9421
      %v9442 = vadd.f32 %v9197, %v9421
      %v9443 = vadd.f32 %v9198, %v9421
      %v9444 = vadd.f32 %v9199, %v9421
      %v9445 = vadd.f32 %v9200, %v9421
      %v9446 = vadd.f32 %v9201, %v9421
      %v9447 = vadd.f32 %v9202, %v9421
      %v9448 = vadd.f32 %v9203, %v9421
      %v9449 = vadd.f32 %v9204, %v9421
      %v9450 = vadd.f32 %v9205, %v9421
      %v9451 = vadd.f32 %v9206, %v9421
      %v9452 = vadd.f32 %v9207, %v9421
      %v9453 = vadd.f32 %v9208, %v9421
      %v9454 = vadd.f32 %v9209, %v9421
      %v9455 = vadd.f32 %v9210, %v9421
      %v9456 = vadd.f32 %v9211, %v9421
      %v9457 = vadd.f32 %v9212, %v9421
      %v9458 = vadd.f32 %v9213, %v9421
      %v9459 = vadd.f32 %v9214, %v9421
      %v9460 = vadd.f32 %v9215, %v9421
      %v9461 = vadd.f32 %v9216, %v9421
      %v9462 = vadd.f32 %v9217, %v9421
      %v9463 = vadd.f32 %v9218, %v9421
      %v9464 = vadd.f32 %v9219, %v9421
      %v9465 = vadd.f32 %v9220, %v9421
      %v9466 = vadd.f32 %v9221, %v9421
      %v9467 = vadd.f32 %v9222, %v9421
      %v9468 = vadd.f32 %v9223, %v9421
      %v9469 = vadd.f32 %v9224, %v9421
      %v9470 = vadd.f32 %v9225, %v9421
      %v9471 = vadd.f32 %v9423, %v9300
      %v9472 = vadd.f32 %v9424, %v9302
      %v9473 = vadd.f32 %v9425, %v9305
      %v9474 = vadd.f32 %v9426, %v9307
      %v9475 = vadd.f32 %v9427, %v9310
      %v9476 = vadd.f32 %v9428, %v9312
      %v9477 = vadd.f32 %v9429, %v9315
      %v9478 = vadd.f32 %v9430, %v9317
      %v9479 = vadd.f32 %v9431, %v9320
      %v9480 = vadd.f32 %v9432, %v9322
      %v9481 = vadd.f32 %v9433, %v9325
      %v9482 = vadd.f32 %v9434, %v9327
      %v9483 = vadd.f32 %v9435, %v9330
      %v9484 = vadd.f32 %v9436, %v9332
      %v9485 = vadd.f32 %v9437, %v9335
      %v9486 = vadd.f32 %v9438, %v9337
      %v9487 = vadd.f32 %v9439, %v9340
      %v9488 = vadd.f32 %v9440, %v9342
      %v9489 = vadd.f32 %v9441, %v9345
      %v9490 = vadd.f32 %v9442, %v9347
      %v9491 = vadd.f32 %v9443, %v9350
      %v9492 = vadd.f32 %v9444, %v9352
      %v9493 = vadd.f32 %v9445, %v9355
      %v9494 = vadd.f32 %v9446, %v9357
      %v9495 = vadd.f32 %v9447, %v9360
      %v9496 = vadd.f32 %v9448, %v9362
      %v9497 = vadd.f32 %v9449, %v9365
      %v9498 = vadd.f32 %v9450, %v9367
      %v9499 = vadd.f32 %v9451, %v9370
      %v9500 = vadd.f32 %v9452, %v9372
      %v9501 = vadd.f32 %v9453, %v9375
      %v9502 = vadd.f32 %v9454, %v9377
      %v9503 = vadd.f32 %v9455, %v9380
      %v9504 = vadd.f32 %v9456, %v9382
      %v9505 = vadd.f32 %v9457, %v9385
      %v9506 = vadd.f32 %v9458, %v9387
      %v9507 = vadd.f32 %v9459, %v9390
      %v9508 = vadd.f32 %v9460, %v9392
      %v9509 = vadd.f32 %v9461, %v9395
      %v9510 = vadd.f32 %v9462, %v9397
      %v9511 = vadd.f32 %v9463, %v9400
      %v9512 = vadd.f32 %v9464, %v9402
      %v9513 = vadd.f32 %v9465, %v9405
      %v9514 = vadd.f32 %v9466, %v9407
      %v9515 = vadd.f32 %v9467, %v9410
      %v9516 = vadd.f32 %v9468, %v9412
      %v9517 = vadd.f32 %v9469, %v9415
      %v9518 = vadd.f32 %v9470, %v9417
      %v9519 = vld [vmem:[%s6] sm:$0x1]
      %v9521 = vperm.slane %v9519, 0
      %v9523 = vadd.f32 %v9471, %v9521
      %v9524 = vadd.f32 %v9472, %v9521
      %v9525 = vadd.f32 %v9473, %v9521
      %v9526 = vadd.f32 %v9474, %v9521
      %v9527 = vadd.f32 %v9475, %v9521
      %v9528 = vadd.f32 %v9476, %v9521
      %v9529 = vadd.f32 %v9477, %v9521
      %v9530 = vadd.f32 %v9478, %v9521
      %v9531 = vadd.f32 %v9479, %v9521
      %v9532 = vadd.f32 %v9480, %v9521
      %v9533 = vadd.f32 %v9481, %v9521
      %v9534 = vadd.f32 %v9482, %v9521
      %v9535 = vadd.f32 %v9483, %v9521
      %v9536 = vadd.f32 %v9484, %v9521
      %v9537 = vadd.f32 %v9485, %v9521
      %v9538 = vadd.f32 %v9486, %v9521
      %v9539 = vadd.f32 %v9487, %v9521
      %v9540 = vadd.f32 %v9488, %v9521
      %v9541 = vadd.f32 %v9489, %v9521
      %v9542 = vadd.f32 %v9490, %v9521
      %v9543 = vadd.f32 %v9491, %v9521
      %v9544 = vadd.f32 %v9492, %v9521
      %v9545 = vadd.f32 %v9493, %v9521
      %v9546 = vadd.f32 %v9494, %v9521
      %v9547 = vadd.f32 %v9495, %v9521
      %v9548 = vadd.f32 %v9496, %v9521
      %v9549 = vadd.f32 %v9497, %v9521
      %v9550 = vadd.f32 %v9498, %v9521
      %v9551 = vadd.f32 %v9499, %v9521
      %v9552 = vadd.f32 %v9500, %v9521
      %v9553 = vadd.f32 %v9501, %v9521
      %v9554 = vadd.f32 %v9502, %v9521
      %v9555 = vadd.f32 %v9503, %v9521
      %v9556 = vadd.f32 %v9504, %v9521
      %v9557 = vadd.f32 %v9505, %v9521
      %v9558 = vadd.f32 %v9506, %v9521
      %v9559 = vadd.f32 %v9507, %v9521
      %v9560 = vadd.f32 %v9508, %v9521
      %v9561 = vadd.f32 %v9509, %v9521
      %v9562 = vadd.f32 %v9510, %v9521
      %v9563 = vadd.f32 %v9511, %v9521
      %v9564 = vadd.f32 %v9512, %v9521
      %v9565 = vadd.f32 %v9513, %v9521
      %v9566 = vadd.f32 %v9514, %v9521
      %v9567 = vadd.f32 %v9515, %v9521
      %v9568 = vadd.f32 %v9516, %v9521
      %v9569 = vadd.f32 %v9517, %v9521
      %v9570 = vadd.f32 %v9518, %v9521
      %v9571 = vmax.f32 %v9523, 0.0
      %v9572 = vmax.f32 %v9524, 0.0
      %v9573 = vmax.f32 %v9525, 0.0
      %v9574 = vmax.f32 %v9526, 0.0
      %v9575 = vmax.f32 %v9527, 0.0
      %v9576 = vmax.f32 %v9528, 0.0
      %v9577 = vmax.f32 %v9529, 0.0
      %v9578 = vmax.f32 %v9530, 0.0
      %v9579 = vmax.f32 %v9531, 0.0
      %v9580 = vmax.f32 %v9532, 0.0
      %v9581 = vmax.f32 %v9533, 0.0
      %v9582 = vmax.f32 %v9534, 0.0
      %v9583 = vmax.f32 %v9535, 0.0
      %v9584 = vmax.f32 %v9536, 0.0
      %v9585 = vmax.f32 %v9537, 0.0
      %v9586 = vmax.f32 %v9538, 0.0
      %v9587 = vmax.f32 %v9539, 0.0
      %v9588 = vmax.f32 %v9540, 0.0
      %v9589 = vmax.f32 %v9541, 0.0
      %v9590 = vmax.f32 %v9542, 0.0
      %v9591 = vmax.f32 %v9543, 0.0
      %v9592 = vmax.f32 %v9544, 0.0
      %v9593 = vmax.f32 %v9545, 0.0
      %v9594 = vmax.f32 %v9546, 0.0
      %v9595 = vmax.f32 %v9547, 0.0
      %v9596 = vmax.f32 %v9548, 0.0
      %v9597 = vmax.f32 %v9549, 0.0
      %v9598 = vmax.f32 %v9550, 0.0
      %v9599 = vmax.f32 %v9551, 0.0
      %v9600 = vmax.f32 %v9552, 0.0
      %v9601 = vmax.f32 %v9553, 0.0
      %v9602 = vmax.f32 %v9554, 0.0
      %v9603 = vmax.f32 %v9555, 0.0
      %v9604 = vmax.f32 %v9556, 0.0
      %v9605 = vmax.f32 %v9557, 0.0
      %v9606 = vmax.f32 %v9558, 0.0
      %v9607 = vmax.f32 %v9559, 0.0
      %v9608 = vmax.f32 %v9560, 0.0
      %v9609 = vmax.f32 %v9561, 0.0
      %v9610 = vmax.f32 %v9562, 0.0
      %v9611 = vmax.f32 %v9563, 0.0
      %v9612 = vmax.f32 %v9564, 0.0
      %v9613 = vmax.f32 %v9565, 0.0
      %v9614 = vmax.f32 %v9566, 0.0
      %v9615 = vmax.f32 %v9567, 0.0
      %v9616 = vmax.f32 %v9568, 0.0
      %v9617 = vmax.f32 %v9569, 0.0
      %v9618 = vmax.f32 %v9570, 0.0
      %v9619 = vpack.c.bf16 %v9571, %v9571
      %v9620 = vpack.c.bf16 %v9572, %v9572
      %v9621 = vpack.c.bf16 %v9573, %v9573
      %v9622 = vpack.c.bf16 %v9574, %v9574
      %v9623 = vpack.c.bf16 %v9575, %v9575
      %v9624 = vpack.c.bf16 %v9576, %v9576
      %v9625 = vpack.c.bf16 %v9577, %v9577
      %v9626 = vpack.c.bf16 %v9578, %v9578
      %v9627 = vpack.c.bf16 %v9579, %v9579
      %v9628 = vpack.c.bf16 %v9580, %v9580
      %v9629 = vpack.c.bf16 %v9581, %v9581
      %v9630 = vpack.c.bf16 %v9582, %v9582
      %v9631 = vpack.c.bf16 %v9583, %v9583
      %v9632 = vpack.c.bf16 %v9584, %v9584
      %v9633 = vpack.c.bf16 %v9585, %v9585
      %v9634 = vpack.c.bf16 %v9586, %v9586
      %v9635 = vpack.c.bf16 %v9587, %v9587
      %v9636 = vpack.c.bf16 %v9588, %v9588
      %v9637 = vpack.c.bf16 %v9589, %v9589
      %v9638 = vpack.c.bf16 %v9590, %v9590
      %v9639 = vpack.c.bf16 %v9591, %v9591
      %v9640 = vpack.c.bf16 %v9592, %v9592
      %v9641 = vpack.c.bf16 %v9593, %v9593
      %v9642 = vpack.c.bf16 %v9594, %v9594
      %v9643 = vpack.c.bf16 %v9595, %v9595
      %v9644 = vpack.c.bf16 %v9596, %v9596
      %v9645 = vpack.c.bf16 %v9597, %v9597
      %v9646 = vpack.c.bf16 %v9598, %v9598
      %v9647 = vpack.c.bf16 %v9599, %v9599
      %v9648 = vpack.c.bf16 %v9600, %v9600
      %v9649 = vpack.c.bf16 %v9601, %v9601
      %v9650 = vpack.c.bf16 %v9602, %v9602
      %v9651 = vpack.c.bf16 %v9603, %v9603
      %v9652 = vpack.c.bf16 %v9604, %v9604
      %v9653 = vpack.c.bf16 %v9605, %v9605
      %v9654 = vpack.c.bf16 %v9606, %v9606
      %v9655 = vpack.c.bf16 %v9607, %v9607
      %v9656 = vpack.c.bf16 %v9608, %v9608
      %v9657 = vpack.c.bf16 %v9609, %v9609
      %v9658 = vpack.c.bf16 %v9610, %v9610
      %v9659 = vpack.c.bf16 %v9611, %v9611
      %v9660 = vpack.c.bf16 %v9612, %v9612
      %v9661 = vpack.c.bf16 %v9613, %v9613
      %v9662 = vpack.c.bf16 %v9614, %v9614
      %v9663 = vpack.c.bf16 %v9615, %v9615
      %v9664 = vpack.c.bf16 %v9616, %v9616
      %v9665 = vpack.c.bf16 %v9617, %v9617
      %v9666 = vpack.c.bf16 %v9618, %v9618
      %9667 = vst [vmem:[%s301] sm:$0xf] %v9619
      %9668 = vst [vmem:[%s301 + $0x4] sm:$0xf] %v9620
      %9669 = vst [vmem:[%s301 + $0x8] sm:$0xf] %v9621
      %9670 = vst [vmem:[%s301 + $0xc] sm:$0xf] %v9622
      %9671 = vst [vmem:[%s301 + $0x10] sm:$0xf] %v9623
      %9672 = vst [vmem:[%s301 + $0x14] sm:$0xf] %v9624
      %9673 = vst [vmem:[%s301 + $0x18] sm:$0xf] %v9625
      %9674 = vst [vmem:[%s301 + $0x1c] sm:$0xf] %v9626
      %9675 = vst [vmem:[%s301 + $0x20] sm:$0xf] %v9627
      %9676 = vst [vmem:[%s301 + $0x24] sm:$0xf] %v9628
      %9677 = vst [vmem:[%s301 + $0x28] sm:$0xf] %v9629
      %9678 = vst [vmem:[%s301 + $0x2c] sm:$0xf] %v9630
      %9679 = vst [vmem:[%s301 + $0x30] sm:$0xf] %v9631
      %9680 = vst [vmem:[%s301 + $0x34] sm:$0xf] %v9632
      %9681 = vst [vmem:[%s301 + $0x38] sm:$0xf] %v9633
      %9682 = vst [vmem:[%s301 + $0x3c] sm:$0xf] %v9634
      %9683 = vst [vmem:[%s301 + $0x40] sm:$0xf] %v9635
      %9684 = vst [vmem:[%s301 + $0x44] sm:$0xf] %v9636
      %9685 = vst [vmem:[%s301 + $0x48] sm:$0xf] %v9637
      %9686 = vst [vmem:[%s301 + $0x4c] sm:$0xf] %v9638
      %9687 = vst [vmem:[%s301 + $0x50] sm:$0xf] %v9639
      %9688 = vst [vmem:[%s301 + $0x54] sm:$0xf] %v9640
      %9689 = vst [vmem:[%s301 + $0x58] sm:$0xf] %v9641
      %9690 = vst [vmem:[%s301 + $0x5c] sm:$0xf] %v9642
      %9691 = vst [vmem:[%s301 + $0x60] sm:$0xf] %v9643
      %9692 = vst [vmem:[%s301 + $0x64] sm:$0xf] %v9644
      %9693 = vst [vmem:[%s301 + $0x68] sm:$0xf] %v9645
      %9694 = vst [vmem:[%s301 + $0x6c] sm:$0xf] %v9646
      %9695 = vst [vmem:[%s301 + $0x70] sm:$0xf] %v9647
      %9696 = vst [vmem:[%s301 + $0x74] sm:$0xf] %v9648
      %9697 = vst [vmem:[%s301 + $0x78] sm:$0xf] %v9649
      %9698 = vst [vmem:[%s301 + $0x7c] sm:$0xf] %v9650
      %9699 = vst [vmem:[%s301 + $0x80] sm:$0xf] %v9651
      %9700 = vst [vmem:[%s301 + $0x84] sm:$0xf] %v9652
      %9701 = vst [vmem:[%s301 + $0x88] sm:$0xf] %v9653
      %9702 = vst [vmem:[%s301 + $0x8c] sm:$0xf] %v9654
      %9703 = vst [vmem:[%s301 + $0x90] sm:$0xf] %v9655
      %9704 = vst [vmem:[%s301 + $0x94] sm:$0xf] %v9656
      %9705 = vst [vmem:[%s301 + $0x98] sm:$0xf] %v9657
      %9706 = vst [vmem:[%s301 + $0x9c] sm:$0xf] %v9658
      %9707 = vst [vmem:[%s301 + $0xa0] sm:$0xf] %v9659
      %9708 = vst [vmem:[%s301 + $0xa4] sm:$0xf] %v9660
      %9709 = vst [vmem:[%s301 + $0xa8] sm:$0xf] %v9661
      %9710 = vst [vmem:[%s301 + $0xac] sm:$0xf] %v9662
      %9711 = vst [vmem:[%s301 + $0xb0] sm:$0xf] %v9663
      %9712 = vst [vmem:[%s301 + $0xb4] sm:$0xf] %v9664
      %9713 = vst [vmem:[%s301 + $0xb8] sm:$0xf] %v9665
      %9714 = vst [vmem:[%s301 + $0xbc] sm:$0xf] %v9666
      %s9715 = smul.u32 48, %s24
      %p9716 = scmp.lt.s32.totalorder %s23, 1
      %s9717 = scalar_select %p9716, %s23, 1
      %p9718 = scmp.lt.s32.totalorder %s9715, 47
      %s9719 = scalar_select %p9718, %s9715, 47
      %s9720 = smul.addr %s9717, 48
      %s9721 = sadd.s32 %s9719, %s9720
      %s9722 = smul.addr %s9721, 4
      %s9723 = scalar_lea.vmem %s8, %s9722
      // Predicated region
      $region101: #{basic_block_forward.1} parent=47 // pred_check
        %p9724 = pneg %p203
      $region102: #{basic_block_forward.1} parent=47 // pred_check_branch
        %9726 = sbr.rel (%p9724) target = $region104
      $region103: #{basic_block_forward.1} parent=47 // pred_region
        %s9727 = smul.u32 48, %s24
      $region104: #{basic_block_forward.1} parent=47 // pred_fallthru
        _
    $region48: #{basic_block_forward.1} parent=5 // pred_fallthru
      _
    %p9728 = scmp.le.s32.totalorder 2, %s14
    // Predicated region
    $region105: #{basic_block_forward.1} parent=5 // pred_check
      %p9729 = pneg %p9728
    $region106: #{basic_block_forward.1} parent=5 // pred_check_branch
      %9731 = sbr.rel (%p9729) target = $region108
    $region107: #{basic_block_forward.1} parent=5 // pred_region
      %s9732 = ssub.s32 %s14, 2
      // Predicated region
      $region109: #{basic_block_forward.1} parent=107 // pred_check
        %p9733 = pneg %p209
      $region110: #{basic_block_forward.1} parent=107 // pred_check_branch
        %9735 = sbr.rel (%p9733) target = $region112
      $region111: #{basic_block_forward.1} parent=107 // pred_region
        %s9736 = smul.u32 48, %s26
        %p9737 = scmp.lt.s32.totalorder %s25, 1
        %s9738 = scalar_select %p9737, %s25, 1
        %p9739 = scmp.lt.s32.totalorder %s9736, 47
        %s9740 = scalar_select %p9739, %s9736, 47
        %s9741 = smul.addr %s9738, 48
        %s9742 = sadd.s32 %s9740, %s9741
        %s9743 = smul.addr %s9742, 4
        %s9744 = scalar_lea.vmem %s8, %s9743
      $region112: #{basic_block_forward.1} parent=107 // pred_fallthru
        _
    $region108: #{basic_block_forward.1} parent=5 // pred_fallthru
      _
  $region6: #{basic_block_forward.1} parent=0 // loop_footer
    %s18 = sadd.s32 1, %s14
  $region7: #{basic_block_forward.1} parent=0 // loop_footer_branch
    %13 = sbr.rel target = $region3
  $region8: #{basic_block_forward.1} parent=0 // loop_exit
    _
  %9745 = vsyncmov [#allocation3]
  %s9746 = vpop.sfrf %9745
  %p9747 = scmp.eq.s32.totalorder %s9746, 0
  %p9748 = pneg %p9747
  %9750 = shalt.err (%p9748)
  %s9751 = scalar_lea.sflag [#allocation3], 1
  %9752 = vsyncmov %s9751
  %s9753 = vpop.sfrf %9752
  %p9754 = scmp.eq.s32.totalorder %s9753, 0
  %p9755 = pneg %p9754
  %9757 = shalt.err (%p9755)

</llo_original>
